<compile_context>
chip_gen: v7x
topology: tpu7x:2x2x1
jax: 0.10.0
libtpu: 0.0.40
codegen_flags: <defaults>
</compile_context>

<pallas_src>
import functools

import numpy as np
import jax
import jax.numpy as jnp
from jax.experimental import pallas as pl
from jax.experimental.pallas import tpu as pltpu


def _round_up(x, m):
    return ((x + m - 1) // m) * m


def _tree_sum(xs):
    """Pairwise (tree) sum to avoid a serialized accumulate chain."""
    xs = list(xs)
    while len(xs) > 1:
        nxt = [xs[i] + xs[i + 1] for i in range(0, len(xs) - 1, 2)]
        if len(xs) % 2:
            nxt.append(xs[-1])
        xs = nxt
    return xs[0]


# ------------------------------ fused kernel -------------------------------

def _fused_kernel(p1_ref, w1_ref, b1_ref, w2_ref, b2_ref, w3_ref, b3_ref,
                  w4_ref, b4_ref, w5_ref, b5_ref, o_ref, h1_ref, *, nt):
    """Whole network for one batch tile of `nt` samples (nt is a multiple of 16).

    p1_ref: (4*49*nt, 128) bf16  conv1 im2col patches, rows ordered (tap, oh, ow, n),
                                 K padded 27->128 with zeros
    w1_ref: (128, 128) bf16 (rows 27.. are zero),  b1_ref: (1,128) f32
    w2_ref: (9, 128, 256) bf16 (per conv2 tap),    b2_ref: (1,256) f32
    w3_ref: (9, 256, 512) bf16 (per conv3 tap),    b3_ref: (1,512) f32
    w4_ref: (512, 256) bf16,                       b4_ref: (1,256) f32
    w5_ref: (256, 128) bf16 (10 cols valid),       b5_ref: (1,128) f32
    o_ref : (nt, 128) f32   padded logits (first 10 cols valid)
    h1_ref: (49*nt, 128) bf16 VMEM scratch, rows ordered (oh, ow, n)
    """
    M = 49 * nt

    # conv1: one MXU matmul over all 4 pool taps, then max-reduce (= 2x2 maxpool,
    # commutes with the shared bias add and monotonic ReLU), bias, ReLU.
    d = jnp.dot(p1_ref[...], w1_ref[...], preferred_element_type=jnp.float32)  # (4M,128)
    m = jnp.maximum(jnp.maximum(d[0:M], d[M:2 * M]),
                    jnp.maximum(d[2 * M:3 * M], d[3 * M:4 * M]))
    h1_ref[...] = jnp.maximum(m + b1_ref[...], 0.0).astype(jnp.bfloat16)

    # conv2: 9 per-tap matmuls (K=128 each) over stride-2 slices of VMEM-resident h1.
    contribs = []
    for p in range(9):
        kh, kw = p // 3, p % 3
        blocks = []
        for i in range(3):            # i = oh2
            for j in range(3):        # j = ow2
                s = ((kh + 2 * i) * 7 + (kw + 2 * j)) * nt   # static, 16-row aligned
                blocks.append(h1_ref[s:s + nt, :])
        tap = jnp.concatenate(blocks, axis=0)                # (9*nt,128), rows (oh2,ow2,n)
        contribs.append(jnp.dot(tap, w2_ref[p], preferred_element_type=jnp.float32))
    h2 = jnp.maximum(_tree_sum(contribs) + b2_ref[...], 0.0).astype(jnp.bfloat16)

    # conv3 (3x3 -> 1x1): tree-sum of 9 per-position matmuls (all slices 16-aligned).
    c3 = [jnp.dot(h2[p * nt:(p + 1) * nt, :], w3_ref[p],
                  preferred_element_type=jnp.float32) for p in range(9)]
    h3 = jnp.maximum(_tree_sum(c3) + b3_ref[...], 0.0).astype(jnp.bfloat16)   # (nt,512)

    # dense1 + ReLU
    h4 = jnp.dot(h3, w4_ref[...], preferred_element_type=jnp.float32)
    h4 = jnp.maximum(h4 + b4_ref[...], 0.0).astype(jnp.bfloat16)

    # dense2 (lane-dense 128-wide padded output)
    o_ref[...] = (jnp.dot(h4, w5_ref[...], preferred_element_type=jnp.float32)
                  + b5_ref[...])


def _fused_call(p1, kp, *, nt, nb):
    R = 4 * 49 * nt
    n_pad = nb * nt
    weight_keys = ('w1', 'b1', 'w2', 'b2', 'w3', 'b3', 'w4', 'b4', 'w5', 'b5')

    def resident(arr):
        shape = tuple(arr.shape)
        # Full-array block, constant index_map -> DMA'd once, VMEM-resident across grid.
        return pl.BlockSpec(shape, lambda b, _n=len(shape): (0,) * _n)

    in_specs = [pl.BlockSpec((R, 128), lambda b: (b, 0))]
    in_specs += [resident(kp[k]) for k in weight_keys]
    out_specs = pl.BlockSpec((nt, 128), lambda b: (b, 0))

    flops = 2 * n_pad * (4 * 49 * 128 * 128      # conv1 (K lane-padded)
                         + 81 * 128 * 256        # conv2 (9 taps x 9 positions)
                         + 9 * 256 * 512         # conv3
                         + 512 * 256             # dense1
                         + 256 * 128)            # dense2 (lane-padded)
    weight_bytes = sum(int(kp[k].size) * kp[k].dtype.itemsize for k in weight_keys)
    bytes_accessed = int(p1.size) * 2 + weight_bytes + n_pad * 128 * 4

    grid_spec = pltpu.PrefetchScalarGridSpec(
        num_scalar_prefetch=0, grid=(nb,),
        in_specs=in_specs, out_specs=out_specs,
        scratch_shapes=[pltpu.VMEM((49 * nt, 128), jnp.bfloat16)])

    return pl.pallas_call(
        functools.partial(_fused_kernel, nt=nt),
        out_shape=jax.ShapeDtypeStruct((n_pad, 128), jnp.float32),
        grid_spec=grid_spec,
        compiler_params=pltpu.CompilerParams(
            dimension_semantics=("parallel",),          # batch tiles -> v7x megacore
            vmem_limit_bytes=32 * 1024 * 1024),         # sized for v7x 64 MiB VMEM
        cost_estimate=pl.CostEstimate(flops=flops, transcendentals=0,
                                      bytes_accessed=bytes_accessed),
    )(p1, *[kp[k] for k in weight_keys])


# ------------------------------- forward -----------------------------------

def forward(kp, x_nchw):
    N = x_nchw.shape[0]
    nt = min(32, _round_up(N, 16))          # 16-aligned batch tile (bf16 packed sublanes)
    n_pad = _round_up(N, nt)
    nb = n_pad // nt

    x = jnp.transpose(x_nchw, (0, 2, 3, 1)).astype(jnp.bfloat16)        # (N,32,32,3)

    # conv1 im2col over the 15x15 conv1 output grid; patch column order (kh, kw, cin).
    cols = [x[:, kh:kh + 29:2, kw:kw + 29:2, :]
            for kh in range(3) for kw in range(3)]
    patches = jnp.concatenate(cols, axis=-1)                            # (N,15,15,27)
    # 4 max-pool taps over the 7x7 pooled grid (row/col 14 dropped, = floor pool).
    taps = [patches[:, di:di + 13:2, dj:dj + 13:2, :]
            for di in (0, 1) for dj in (0, 1)]
    p1 = jnp.stack(taps, axis=0)                                        # (4,N,7,7,27)
    # pad batch N -> n_pad, K 27 -> 128 (lane-dense); rows -> (tile, tap, oh, ow, n).
    p1 = jnp.pad(p1, ((0, 0), (0, n_pad - N), (0, 0), (0, 0), (0, 101)))
    p1 = p1.reshape(4, nb, nt, 7, 7, 128).transpose(1, 0, 3, 4, 2, 5)
    p1 = p1.reshape(nb * 4 * 49 * nt, 128)

    out = _fused_call(p1, kp, nt=nt, nb=nb)                             # (n_pad,128) f32
    return out[:N, :10]                                                 # unpad logits


# ----------------------- deterministic parameter init ----------------------

def init_params(key):
    def uinit(k, shape, fan_in):
        bound = 1.0 / float(np.sqrt(fan_in))
        return jax.random.uniform(k, shape, jnp.float32, -bound, bound)

    ks = jax.random.split(key, 10)
    p = {}
    p['conv1_w'] = uinit(ks[0], (128, 3, 3, 3), 3 * 3 * 3)      # OIHW, like PyTorch
    p['conv1_b'] = uinit(ks[1], (128,), 3 * 3 * 3)
    p['conv2_w'] = uinit(ks[2], (256, 128, 3, 3), 128 * 3 * 3)
    p['conv2_b'] = uinit(ks[3], (256,), 128 * 3 * 3)
    p['conv3_w'] = uinit(ks[4], (512, 256, 3, 3), 256 * 3 * 3)
    p['conv3_b'] = uinit(ks[5], (512,), 256 * 3 * 3)
    p['dense1_w'] = uinit(ks[6], (256, 512), 512)               # (out, in), like nn.Linear
    p['dense1_b'] = uinit(ks[7], (256,), 512)
    p['dense2_w'] = uinit(ks[8], (10, 256), 256)
    p['dense2_b'] = uinit(ks[9], (10,), 256)
    return p


def prepare_kernel_params(p):
    """One-time (hoisted out of forward) weight layout transforms + bf16 cast."""
    kp = {}
    w1 = jnp.transpose(p['conv1_w'], (2, 3, 1, 0)).reshape(27, 128)       # (kh,kw,cin)
    kp['w1'] = jnp.zeros((128, 128), jnp.float32).at[:27, :].set(w1).astype(jnp.bfloat16)
    kp['b1'] = p['conv1_b'].reshape(1, 128)
    kp['w2'] = jnp.transpose(p['conv2_w'], (2, 3, 1, 0)).reshape(9, 128, 256).astype(jnp.bfloat16)
    kp['b2'] = p['conv2_b'].reshape(1, 256)
    kp['w3'] = jnp.transpose(p['conv3_w'], (2, 3, 1, 0)).reshape(9, 256, 512).astype(jnp.bfloat16)
    kp['b3'] = p['conv3_b'].reshape(1, 512)
    kp['w4'] = p['dense1_w'].T.astype(jnp.bfloat16)                       # (512, 256)
    kp['b4'] = p['dense1_b'].reshape(1, 256)
    # dense2: pad 10 -> 128 output lanes (lane-dense store); wrapper slices [:, :10].
    w5 = jnp.zeros((256, 128), jnp.float32).at[:, :10].set(p['dense2_w'].T)
    b5 = jnp.zeros((1, 128), jnp.float32).at[0, :10].set(p['dense2_b'])
    kp['w5'] = w5.astype(jnp.bfloat16)
    kp['b5'] = b5
    return kp


# ----------------------------- pure-JAX reference ---------------------------

def reference_forward(params, x_nchw):
    def conv(x, w, b, stride):
        y = jax.lax.conv_general_dilated(
            x, w, (stride, stride), 'VALID',
            dimension_numbers=('NCHW', 'OIHW', 'NCHW'))
        return jax.nn.relu(y + b[None, :, None, None])

    x = conv(x_nchw, params['conv1_w'], params['conv1_b'], 2)
    x = jax.lax.reduce_window(x, -jnp.inf, jax.lax.max,
                              (1, 1, 2, 2), (1, 1, 2, 2), 'VALID')
    x = conv(x, params['conv2_w'], params['conv2_b'], 2)
    x = conv(x, params['conv3_w'], params['conv3_b'], 2)
    x = x.reshape(x.shape[0], -1)
    x = jax.nn.relu(x @ params['dense1_w'].T + params['dense1_b'])
    x = x @ params['dense2_w'].T + params['dense2_b']
    return x


if __name__ == "__main__":
    key = jax.random.PRNGKey(0)
    pkey, xkey = jax.random.split(key)
    params = init_params(pkey)
    kparams = prepare_kernel_params(params)      # hoisted weight layout prep

    # Input spatial size 32 is forced by the model's `view(-1, 1*1*512)` flatten.
    x = jax.random.normal(xkey, (2, 3, 32, 32), jnp.float32)

    fwd = jax.jit(forward)
    out = jax.block_until_ready(fwd(kparams, x))
    assert out.shape == (2, 10), out.shape

    ref = reference_forward(params, x)
    # Tolerance accounts for bf16 MXU inputs (f32 accumulation); structural bugs
    # would produce errors orders of magnitude larger.
    np.testing.assert_allclose(np.asarray(out), np.asarray(ref),
                               rtol=3e-2, atol=3e-2)
    print("KERNEL_OK")
</pallas_src>

<mosaic_0001>
module attributes {stable_mosaic.version = 11 : i64} {
  func.func @_fused_kernel(%arg0: i32, %arg1: memref<3136x128xbf16, #tpu.memory_space<vmem>>, %arg2: memref<128x128xbf16, #tpu.memory_space<vmem>>, %arg3: memref<1x128xf32, #tpu.memory_space<vmem>>, %arg4: memref<9x128x256xbf16, #tpu.memory_space<vmem>>, %arg5: memref<1x256xf32, #tpu.memory_space<vmem>>, %arg6: memref<9x256x512xbf16, #tpu.memory_space<vmem>>, %arg7: memref<1x512xf32, #tpu.memory_space<vmem>>, %arg8: memref<512x256xbf16, #tpu.memory_space<vmem>>, %arg9: memref<1x256xf32, #tpu.memory_space<vmem>>, %arg10: memref<256x128xbf16, #tpu.memory_space<vmem>>, %arg11: memref<1x128xf32, #tpu.memory_space<vmem>>, %arg12: memref<16x128xf32, #tpu.memory_space<vmem>>, %arg13: memref<784x128xbf16, #tpu.memory_space<vmem>>) attributes {dimension_semantics = [#tpu.dimension_semantics<parallel>], iteration_bounds = array<i64: 1>, scalar_prefetch = 0 : i64, scratch_operands = 1 : i64, tpu.core_type = #tpu.core_type<tc>, window_params = [{transform_indices = @transform_0, window_bounds = array<i64: 3136, 128>}, {pipeline_mode = #tpu.pipeline_mode<synchronous>, transform_indices = @transform_1, window_bounds = array<i64: 128, 128>}, {pipeline_mode = #tpu.pipeline_mode<synchronous>, transform_indices = @transform_2, window_bounds = array<i64: 1, 128>}, {pipeline_mode = #tpu.pipeline_mode<synchronous>, transform_indices = @transform_3, window_bounds = array<i64: 9, 128, 256>}, {pipeline_mode = #tpu.pipeline_mode<synchronous>, transform_indices = @transform_4, window_bounds = array<i64: 1, 256>}, {pipeline_mode = #tpu.pipeline_mode<synchronous>, transform_indices = @transform_5, window_bounds = array<i64: 9, 256, 512>}, {pipeline_mode = #tpu.pipeline_mode<synchronous>, transform_indices = @transform_6, window_bounds = array<i64: 1, 512>}, {pipeline_mode = #tpu.pipeline_mode<synchronous>, transform_indices = @transform_7, window_bounds = array<i64: 512, 256>}, {pipeline_mode = #tpu.pipeline_mode<synchronous>, transform_indices = @transform_8, window_bounds = array<i64: 1, 256>}, {pipeline_mode = #tpu.pipeline_mode<synchronous>, transform_indices = @transform_9, window_bounds = array<i64: 256, 128>}, {pipeline_mode = #tpu.pipeline_mode<synchronous>, transform_indices = @transform_10, window_bounds = array<i64: 1, 128>}, {transform_indices = @transform_11, window_bounds = array<i64: 16, 128>}]} {
    %c0 = arith.constant 0 : index
    %c0_0 = arith.constant 0 : index
    %0 = vector.load %arg1[%c0, %c0_0] : memref<3136x128xbf16, #tpu.memory_space<vmem>>, vector<3136x128xbf16>
    %c0_1 = arith.constant 0 : index
    %c0_2 = arith.constant 0 : index
    %1 = vector.load %arg2[%c0_1, %c0_2] : memref<128x128xbf16, #tpu.memory_space<vmem>>, vector<128x128xbf16>
    %cst = arith.constant dense<0.000000e+00> : vector<3136x128xf32>
    %2 = tpu.matmul %0, %1, %cst {dimension_numbers = #tpu.dot_dimension_numbers<[1], [0], [0], [1], [0, 0, 1, 1], [], []>} : vector<3136x128xbf16>, vector<128x128xbf16>, vector<3136x128xf32> -> vector<3136x128xf32>
    %3 = vector.extract_strided_slice %2 {offsets = [0, 0], sizes = [784, 128], strides = [1, 1]} : vector<3136x128xf32> to vector<784x128xf32>
    %4 = vector.extract_strided_slice %2 {offsets = [784, 0], sizes = [784, 128], strides = [1, 1]} : vector<3136x128xf32> to vector<784x128xf32>
    %5 = arith.maximumf %3, %4 : vector<784x128xf32>
    %6 = vector.extract_strided_slice %2 {offsets = [1568, 0], sizes = [784, 128], strides = [1, 1]} : vector<3136x128xf32> to vector<784x128xf32>
    %7 = vector.extract_strided_slice %2 {offsets = [2352, 0], sizes = [784, 128], strides = [1, 1]} : vector<3136x128xf32> to vector<784x128xf32>
    %8 = arith.maximumf %6, %7 : vector<784x128xf32>
    %9 = arith.maximumf %5, %8 : vector<784x128xf32>
    %c0_3 = arith.constant 0 : index
    %c0_4 = arith.constant 0 : index
    %10 = vector.load %arg3[%c0_3, %c0_4] : memref<1x128xf32, #tpu.memory_space<vmem>>, vector<1x128xf32>
    %11 = vector.broadcast %10 : vector<1x128xf32> to vector<784x128xf32>
    %12 = arith.addf %9, %11 : vector<784x128xf32>
    %cst_5 = arith.constant 0.000000e+00 : f32
    %13 = vector.broadcast %cst_5 : f32 to vector<784x128xf32>
    %14 = arith.maximumf %12, %13 : vector<784x128xf32>
    %15 = arith.truncf %14 : vector<784x128xf32> to vector<784x128xbf16>
    %c0_6 = arith.constant 0 : index
    %c0_7 = arith.constant 0 : index
    %16 = vector.load %arg13[%c0_6, %c0_7] : memref<784x128xbf16, #tpu.memory_space<vmem>>, vector<784x128xbf16>
    tpu.vector_store %arg13[%c0_6, %c0_7], %15 {strides = array<i32>} : memref<784x128xbf16, #tpu.memory_space<vmem>>, vector<784x128xbf16>,
    %c0_8 = arith.constant 0 : index
    %c0_9 = arith.constant 0 : index
    %17 = vector.load %arg13[%c0_8, %c0_9] : memref<784x128xbf16, #tpu.memory_space<vmem>>, vector<16x128xbf16>
    %c32 = arith.constant 32 : index
    %c0_10 = arith.constant 0 : index
    %18 = vector.load %arg13[%c32, %c0_10] : memref<784x128xbf16, #tpu.memory_space<vmem>>, vector<16x128xbf16>
    %c64 = arith.constant 64 : index
    %c0_11 = arith.constant 0 : index
    %19 = vector.load %arg13[%c64, %c0_11] : memref<784x128xbf16, #tpu.memory_space<vmem>>, vector<16x128xbf16>
    %c224 = arith.constant 224 : index
    %c0_12 = arith.constant 0 : index
    %20 = vector.load %arg13[%c224, %c0_12] : memref<784x128xbf16, #tpu.memory_space<vmem>>, vector<16x128xbf16>
    %c256 = arith.constant 256 : index
    %c0_13 = arith.constant 0 : index
    %21 = vector.load %arg13[%c256, %c0_13] : memref<784x128xbf16, #tpu.memory_space<vmem>>, vector<16x128xbf16>
    %c288 = arith.constant 288 : index
    %c0_14 = arith.constant 0 : index
    %22 = vector.load %arg13[%c288, %c0_14] : memref<784x128xbf16, #tpu.memory_space<vmem>>, vector<16x128xbf16>
    %c448 = arith.constant 448 : index
    %c0_15 = arith.constant 0 : index
    %23 = vector.load %arg13[%c448, %c0_15] : memref<784x128xbf16, #tpu.memory_space<vmem>>, vector<16x128xbf16>
    %c480 = arith.constant 480 : index
    %c0_16 = arith.constant 0 : index
    %24 = vector.load %arg13[%c480, %c0_16] : memref<784x128xbf16, #tpu.memory_space<vmem>>, vector<16x128xbf16>
    %c512 = arith.constant 512 : index
    %c0_17 = arith.constant 0 : index
    %25 = vector.load %arg13[%c512, %c0_17] : memref<784x128xbf16, #tpu.memory_space<vmem>>, vector<16x128xbf16>
    %26 = tpu.concatenate %17, %18, %19, %20, %21, %22, %23, %24, %25 in 0 : vector<16x128xbf16>, vector<16x128xbf16>, vector<16x128xbf16>, vector<16x128xbf16>, vector<16x128xbf16>, vector<16x128xbf16>, vector<16x128xbf16>, vector<16x128xbf16>, vector<16x128xbf16> -> vector<144x128xbf16>
    %c0_18 = arith.constant 0 : index
    %c0_19 = arith.constant 0 : index
    %c0_20 = arith.constant 0 : index
    %27 = vector.load %arg4[%c0_18, %c0_19, %c0_20] : memref<9x128x256xbf16, #tpu.memory_space<vmem>>, vector<1x128x256xbf16>
    %28 = vector.shape_cast %27 : vector<1x128x256xbf16> to vector<128x256xbf16>
    %cst_21 = arith.constant dense<0.000000e+00> : vector<144x256xf32>
    %29 = tpu.matmul %26, %28, %cst_21 {dimension_numbers = #tpu.dot_dimension_numbers<[1], [0], [0], [1], [0, 0, 1, 1], [], []>} : vector<144x128xbf16>, vector<128x256xbf16>, vector<144x256xf32> -> vector<144x256xf32>
    %c16 = arith.constant 16 : index
    %c0_22 = arith.constant 0 : index
    %30 = vector.load %arg13[%c16, %c0_22] : memref<784x128xbf16, #tpu.memory_space<vmem>>, vector<16x128xbf16>
    %c48 = arith.constant 48 : index
    %c0_23 = arith.constant 0 : index
    %31 = vector.load %arg13[%c48, %c0_23] : memref<784x128xbf16, #tpu.memory_space<vmem>>, vector<16x128xbf16>
    %c80 = arith.constant 80 : index
    %c0_24 = arith.constant 0 : index
    %32 = vector.load %arg13[%c80, %c0_24] : memref<784x128xbf16, #tpu.memory_space<vmem>>, vector<16x128xbf16>
    %c240 = arith.constant 240 : index
    %c0_25 = arith.constant 0 : index
    %33 = vector.load %arg13[%c240, %c0_25] : memref<784x128xbf16, #tpu.memory_space<vmem>>, vector<16x128xbf16>
    %c272 = arith.constant 272 : index
    %c0_26 = arith.constant 0 : index
    %34 = vector.load %arg13[%c272, %c0_26] : memref<784x128xbf16, #tpu.memory_space<vmem>>, vector<16x128xbf16>
    %c304 = arith.constant 304 : index
    %c0_27 = arith.constant 0 : index
    %35 = vector.load %arg13[%c304, %c0_27] : memref<784x128xbf16, #tpu.memory_space<vmem>>, vector<16x128xbf16>
    %c464 = arith.constant 464 : index
    %c0_28 = arith.constant 0 : index
    %36 = vector.load %arg13[%c464, %c0_28] : memref<784x128xbf16, #tpu.memory_space<vmem>>, vector<16x128xbf16>
    %c496 = arith.constant 496 : index
    %c0_29 = arith.constant 0 : index
    %37 = vector.load %arg13[%c496, %c0_29] : memref<784x128xbf16, #tpu.memory_space<vmem>>, vector<16x128xbf16>
    %c528 = arith.constant 528 : index
    %c0_30 = arith.constant 0 : index
    %38 = vector.load %arg13[%c528, %c0_30] : memref<784x128xbf16, #tpu.memory_space<vmem>>, vector<16x128xbf16>
    %39 = tpu.concatenate %30, %31, %32, %33, %34, %35, %36, %37, %38 in 0 : vector<16x128xbf16>, vector<16x128xbf16>, vector<16x128xbf16>, vector<16x128xbf16>, vector<16x128xbf16>, vector<16x128xbf16>, vector<16x128xbf16>, vector<16x128xbf16>, vector<16x128xbf16> -> vector<144x128xbf16>
    %c1 = arith.constant 1 : index
    %c0_31 = arith.constant 0 : index
    %c0_32 = arith.constant 0 : index
    %40 = vector.load %arg4[%c1, %c0_31, %c0_32] : memref<9x128x256xbf16, #tpu.memory_space<vmem>>, vector<1x128x256xbf16>
    %41 = vector.shape_cast %40 : vector<1x128x256xbf16> to vector<128x256xbf16>
    %cst_33 = arith.constant dense<0.000000e+00> : vector<144x256xf32>
    %42 = tpu.matmul %39, %41, %cst_33 {dimension_numbers = #tpu.dot_dimension_numbers<[1], [0], [0], [1], [0, 0, 1, 1], [], []>} : vector<144x128xbf16>, vector<128x256xbf16>, vector<144x256xf32> -> vector<144x256xf32>
    %c32_34 = arith.constant 32 : index
    %c0_35 = arith.constant 0 : index
    %43 = vector.load %arg13[%c32_34, %c0_35] : memref<784x128xbf16, #tpu.memory_space<vmem>>, vector<16x128xbf16>
    %c64_36 = arith.constant 64 : index
    %c0_37 = arith.constant 0 : index
    %44 = vector.load %arg13[%c64_36, %c0_37] : memref<784x128xbf16, #tpu.memory_space<vmem>>, vector<16x128xbf16>
    %c96 = arith.constant 96 : index
    %c0_38 = arith.constant 0 : index
    %45 = vector.load %arg13[%c96, %c0_38] : memref<784x128xbf16, #tpu.memory_space<vmem>>, vector<16x128xbf16>
    %c256_39 = arith.constant 256 : index
    %c0_40 = arith.constant 0 : index
    %46 = vector.load %arg13[%c256_39, %c0_40] : memref<784x128xbf16, #tpu.memory_space<vmem>>, vector<16x128xbf16>
    %c288_41 = arith.constant 288 : index
    %c0_42 = arith.constant 0 : index
    %47 = vector.load %arg13[%c288_41, %c0_42] : memref<784x128xbf16, #tpu.memory_space<vmem>>, vector<16x128xbf16>
    %c320 = arith.constant 320 : index
    %c0_43 = arith.constant 0 : index
    %48 = vector.load %arg13[%c320, %c0_43] : memref<784x128xbf16, #tpu.memory_space<vmem>>, vector<16x128xbf16>
    %c480_44 = arith.constant 480 : index
    %c0_45 = arith.constant 0 : index
    %49 = vector.load %arg13[%c480_44, %c0_45] : memref<784x128xbf16, #tpu.memory_space<vmem>>, vector<16x128xbf16>
    %c512_46 = arith.constant 512 : index
    %c0_47 = arith.constant 0 : index
    %50 = vector.load %arg13[%c512_46, %c0_47] : memref<784x128xbf16, #tpu.memory_space<vmem>>, vector<16x128xbf16>
    %c544 = arith.constant 544 : index
    %c0_48 = arith.constant 0 : index
    %51 = vector.load %arg13[%c544, %c0_48] : memref<784x128xbf16, #tpu.memory_space<vmem>>, vector<16x128xbf16>
    %52 = tpu.concatenate %43, %44, %45, %46, %47, %48, %49, %50, %51 in 0 : vector<16x128xbf16>, vector<16x128xbf16>, vector<16x128xbf16>, vector<16x128xbf16>, vector<16x128xbf16>, vector<16x128xbf16>, vector<16x128xbf16>, vector<16x128xbf16>, vector<16x128xbf16> -> vector<144x128xbf16>
    %c2 = arith.constant 2 : index
    %c0_49 = arith.constant 0 : index
    %c0_50 = arith.constant 0 : index
    %53 = vector.load %arg4[%c2, %c0_49, %c0_50] : memref<9x128x256xbf16, #tpu.memory_space<vmem>>, vector<1x128x256xbf16>
    %54 = vector.shape_cast %53 : vector<1x128x256xbf16> to vector<128x256xbf16>
    %cst_51 = arith.constant dense<0.000000e+00> : vector<144x256xf32>
    %55 = tpu.matmul %52, %54, %cst_51 {dimension_numbers = #tpu.dot_dimension_numbers<[1], [0], [0], [1], [0, 0, 1, 1], [], []>} : vector<144x128xbf16>, vector<128x256xbf16>, vector<144x256xf32> -> vector<144x256xf32>
    %c112 = arith.constant 112 : index
    %c0_52 = arith.constant 0 : index
    %56 = vector.load %arg13[%c112, %c0_52] : memref<784x128xbf16, #tpu.memory_space<vmem>>, vector<16x128xbf16>
    %c144 = arith.constant 144 : index
    %c0_53 = arith.constant 0 : index
    %57 = vector.load %arg13[%c144, %c0_53] : memref<784x128xbf16, #tpu.memory_space<vmem>>, vector<16x128xbf16>
    %c176 = arith.constant 176 : index
    %c0_54 = arith.constant 0 : index
    %58 = vector.load %arg13[%c176, %c0_54] : memref<784x128xbf16, #tpu.memory_space<vmem>>, vector<16x128xbf16>
    %c336 = arith.constant 336 : index
    %c0_55 = arith.constant 0 : index
    %59 = vector.load %arg13[%c336, %c0_55] : memref<784x128xbf16, #tpu.memory_space<vmem>>, vector<16x128xbf16>
    %c368 = arith.constant 368 : index
    %c0_56 = arith.constant 0 : index
    %60 = vector.load %arg13[%c368, %c0_56] : memref<784x128xbf16, #tpu.memory_space<vmem>>, vector<16x128xbf16>
    %c400 = arith.constant 400 : index
    %c0_57 = arith.constant 0 : index
    %61 = vector.load %arg13[%c400, %c0_57] : memref<784x128xbf16, #tpu.memory_space<vmem>>, vector<16x128xbf16>
    %c560 = arith.constant 560 : index
    %c0_58 = arith.constant 0 : index
    %62 = vector.load %arg13[%c560, %c0_58] : memref<784x128xbf16, #tpu.memory_space<vmem>>, vector<16x128xbf16>
    %c592 = arith.constant 592 : index
    %c0_59 = arith.constant 0 : index
    %63 = vector.load %arg13[%c592, %c0_59] : memref<784x128xbf16, #tpu.memory_space<vmem>>, vector<16x128xbf16>
    %c624 = arith.constant 624 : index
    %c0_60 = arith.constant 0 : index
    %64 = vector.load %arg13[%c624, %c0_60] : memref<784x128xbf16, #tpu.memory_space<vmem>>, vector<16x128xbf16>
    %65 = tpu.concatenate %56, %57, %58, %59, %60, %61, %62, %63, %64 in 0 : vector<16x128xbf16>, vector<16x128xbf16>, vector<16x128xbf16>, vector<16x128xbf16>, vector<16x128xbf16>, vector<16x128xbf16>, vector<16x128xbf16>, vector<16x128xbf16>, vector<16x128xbf16> -> vector<144x128xbf16>
    %c3 = arith.constant 3 : index
    %c0_61 = arith.constant 0 : index
    %c0_62 = arith.constant 0 : index
    %66 = vector.load %arg4[%c3, %c0_61, %c0_62] : memref<9x128x256xbf16, #tpu.memory_space<vmem>>, vector<1x128x256xbf16>
    %67 = vector.shape_cast %66 : vector<1x128x256xbf16> to vector<128x256xbf16>
    %cst_63 = arith.constant dense<0.000000e+00> : vector<144x256xf32>
    %68 = tpu.matmul %65, %67, %cst_63 {dimension_numbers = #tpu.dot_dimension_numbers<[1], [0], [0], [1], [0, 0, 1, 1], [], []>} : vector<144x128xbf16>, vector<128x256xbf16>, vector<144x256xf32> -> vector<144x256xf32>
    %c128 = arith.constant 128 : index
    %c0_64 = arith.constant 0 : index
    %69 = vector.load %arg13[%c128, %c0_64] : memref<784x128xbf16, #tpu.memory_space<vmem>>, vector<16x128xbf16>
    %c160 = arith.constant 160 : index
    %c0_65 = arith.constant 0 : index
    %70 = vector.load %arg13[%c160, %c0_65] : memref<784x128xbf16, #tpu.memory_space<vmem>>, vector<16x128xbf16>
    %c192 = arith.constant 192 : index
    %c0_66 = arith.constant 0 : index
    %71 = vector.load %arg13[%c192, %c0_66] : memref<784x128xbf16, #tpu.memory_space<vmem>>, vector<16x128xbf16>
    %c352 = arith.constant 352 : index
    %c0_67 = arith.constant 0 : index
    %72 = vector.load %arg13[%c352, %c0_67] : memref<784x128xbf16, #tpu.memory_space<vmem>>, vector<16x128xbf16>
    %c384 = arith.constant 384 : index
    %c0_68 = arith.constant 0 : index
    %73 = vector.load %arg13[%c384, %c0_68] : memref<784x128xbf16, #tpu.memory_space<vmem>>, vector<16x128xbf16>
    %c416 = arith.constant 416 : index
    %c0_69 = arith.constant 0 : index
    %74 = vector.load %arg13[%c416, %c0_69] : memref<784x128xbf16, #tpu.memory_space<vmem>>, vector<16x128xbf16>
    %c576 = arith.constant 576 : index
    %c0_70 = arith.constant 0 : index
    %75 = vector.load %arg13[%c576, %c0_70] : memref<784x128xbf16, #tpu.memory_space<vmem>>, vector<16x128xbf16>
    %c608 = arith.constant 608 : index
    %c0_71 = arith.constant 0 : index
    %76 = vector.load %arg13[%c608, %c0_71] : memref<784x128xbf16, #tpu.memory_space<vmem>>, vector<16x128xbf16>
    %c640 = arith.constant 640 : index
    %c0_72 = arith.constant 0 : index
    %77 = vector.load %arg13[%c640, %c0_72] : memref<784x128xbf16, #tpu.memory_space<vmem>>, vector<16x128xbf16>
    %78 = tpu.concatenate %69, %70, %71, %72, %73, %74, %75, %76, %77 in 0 : vector<16x128xbf16>, vector<16x128xbf16>, vector<16x128xbf16>, vector<16x128xbf16>, vector<16x128xbf16>, vector<16x128xbf16>, vector<16x128xbf16>, vector<16x128xbf16>, vector<16x128xbf16> -> vector<144x128xbf16>
    %c4 = arith.constant 4 : index
    %c0_73 = arith.constant 0 : index
    %c0_74 = arith.constant 0 : index
    %79 = vector.load %arg4[%c4, %c0_73, %c0_74] : memref<9x128x256xbf16, #tpu.memory_space<vmem>>, vector<1x128x256xbf16>
    %80 = vector.shape_cast %79 : vector<1x128x256xbf16> to vector<128x256xbf16>
    %cst_75 = arith.constant dense<0.000000e+00> : vector<144x256xf32>
    %81 = tpu.matmul %78, %80, %cst_75 {dimension_numbers = #tpu.dot_dimension_numbers<[1], [0], [0], [1], [0, 0, 1, 1], [], []>} : vector<144x128xbf16>, vector<128x256xbf16>, vector<144x256xf32> -> vector<144x256xf32>
    %c144_76 = arith.constant 144 : index
    %c0_77 = arith.constant 0 : index
    %82 = vector.load %arg13[%c144_76, %c0_77] : memref<784x128xbf16, #tpu.memory_space<vmem>>, vector<16x128xbf16>
    %c176_78 = arith.constant 176 : index
    %c0_79 = arith.constant 0 : index
    %83 = vector.load %arg13[%c176_78, %c0_79] : memref<784x128xbf16, #tpu.memory_space<vmem>>, vector<16x128xbf16>
    %c208 = arith.constant 208 : index
    %c0_80 = arith.constant 0 : index
    %84 = vector.load %arg13[%c208, %c0_80] : memref<784x128xbf16, #tpu.memory_space<vmem>>, vector<16x128xbf16>
    %c368_81 = arith.constant 368 : index
    %c0_82 = arith.constant 0 : index
    %85 = vector.load %arg13[%c368_81, %c0_82] : memref<784x128xbf16, #tpu.memory_space<vmem>>, vector<16x128xbf16>
    %c400_83 = arith.constant 400 : index
    %c0_84 = arith.constant 0 : index
    %86 = vector.load %arg13[%c400_83, %c0_84] : memref<784x128xbf16, #tpu.memory_space<vmem>>, vector<16x128xbf16>
    %c432 = arith.constant 432 : index
    %c0_85 = arith.constant 0 : index
    %87 = vector.load %arg13[%c432, %c0_85] : memref<784x128xbf16, #tpu.memory_space<vmem>>, vector<16x128xbf16>
    %c592_86 = arith.constant 592 : index
    %c0_87 = arith.constant 0 : index
    %88 = vector.load %arg13[%c592_86, %c0_87] : memref<784x128xbf16, #tpu.memory_space<vmem>>, vector<16x128xbf16>
    %c624_88 = arith.constant 624 : index
    %c0_89 = arith.constant 0 : index
    %89 = vector.load %arg13[%c624_88, %c0_89] : memref<784x128xbf16, #tpu.memory_space<vmem>>, vector<16x128xbf16>
    %c656 = arith.constant 656 : index
    %c0_90 = arith.constant 0 : index
    %90 = vector.load %arg13[%c656, %c0_90] : memref<784x128xbf16, #tpu.memory_space<vmem>>, vector<16x128xbf16>
    %91 = tpu.concatenate %82, %83, %84, %85, %86, %87, %88, %89, %90 in 0 : vector<16x128xbf16>, vector<16x128xbf16>, vector<16x128xbf16>, vector<16x128xbf16>, vector<16x128xbf16>, vector<16x128xbf16>, vector<16x128xbf16>, vector<16x128xbf16>, vector<16x128xbf16> -> vector<144x128xbf16>
    %c5 = arith.constant 5 : index
    %c0_91 = arith.constant 0 : index
    %c0_92 = arith.constant 0 : index
    %92 = vector.load %arg4[%c5, %c0_91, %c0_92] : memref<9x128x256xbf16, #tpu.memory_space<vmem>>, vector<1x128x256xbf16>
    %93 = vector.shape_cast %92 : vector<1x128x256xbf16> to vector<128x256xbf16>
    %cst_93 = arith.constant dense<0.000000e+00> : vector<144x256xf32>
    %94 = tpu.matmul %91, %93, %cst_93 {dimension_numbers = #tpu.dot_dimension_numbers<[1], [0], [0], [1], [0, 0, 1, 1], [], []>} : vector<144x128xbf16>, vector<128x256xbf16>, vector<144x256xf32> -> vector<144x256xf32>
    %c224_94 = arith.constant 224 : index
    %c0_95 = arith.constant 0 : index
    %95 = vector.load %arg13[%c224_94, %c0_95] : memref<784x128xbf16, #tpu.memory_space<vmem>>, vector<16x128xbf16>
    %c256_96 = arith.constant 256 : index
    %c0_97 = arith.constant 0 : index
    %96 = vector.load %arg13[%c256_96, %c0_97] : memref<784x128xbf16, #tpu.memory_space<vmem>>, vector<16x128xbf16>
    %c288_98 = arith.constant 288 : index
    %c0_99 = arith.constant 0 : index
    %97 = vector.load %arg13[%c288_98, %c0_99] : memref<784x128xbf16, #tpu.memory_space<vmem>>, vector<16x128xbf16>
    %c448_100 = arith.constant 448 : index
    %c0_101 = arith.constant 0 : index
    %98 = vector.load %arg13[%c448_100, %c0_101] : memref<784x128xbf16, #tpu.memory_space<vmem>>, vector<16x128xbf16>
    %c480_102 = arith.constant 480 : index
    %c0_103 = arith.constant 0 : index
    %99 = vector.load %arg13[%c480_102, %c0_103] : memref<784x128xbf16, #tpu.memory_space<vmem>>, vector<16x128xbf16>
    %c512_104 = arith.constant 512 : index
    %c0_105 = arith.constant 0 : index
    %100 = vector.load %arg13[%c512_104, %c0_105] : memref<784x128xbf16, #tpu.memory_space<vmem>>, vector<16x128xbf16>
    %c672 = arith.constant 672 : index
    %c0_106 = arith.constant 0 : index
    %101 = vector.load %arg13[%c672, %c0_106] : memref<784x128xbf16, #tpu.memory_space<vmem>>, vector<16x128xbf16>
    %c704 = arith.constant 704 : index
    %c0_107 = arith.constant 0 : index
    %102 = vector.load %arg13[%c704, %c0_107] : memref<784x128xbf16, #tpu.memory_space<vmem>>, vector<16x128xbf16>
    %c736 = arith.constant 736 : index
    %c0_108 = arith.constant 0 : index
    %103 = vector.load %arg13[%c736, %c0_108] : memref<784x128xbf16, #tpu.memory_space<vmem>>, vector<16x128xbf16>
    %104 = tpu.concatenate %95, %96, %97, %98, %99, %100, %101, %102, %103 in 0 : vector<16x128xbf16>, vector<16x128xbf16>, vector<16x128xbf16>, vector<16x128xbf16>, vector<16x128xbf16>, vector<16x128xbf16>, vector<16x128xbf16>, vector<16x128xbf16>, vector<16x128xbf16> -> vector<144x128xbf16>
    %c6 = arith.constant 6 : index
    %c0_109 = arith.constant 0 : index
    %c0_110 = arith.constant 0 : index
    %105 = vector.load %arg4[%c6, %c0_109, %c0_110] : memref<9x128x256xbf16, #tpu.memory_space<vmem>>, vector<1x128x256xbf16>
    %106 = vector.shape_cast %105 : vector<1x128x256xbf16> to vector<128x256xbf16>
    %cst_111 = arith.constant dense<0.000000e+00> : vector<144x256xf32>
    %107 = tpu.matmul %104, %106, %cst_111 {dimension_numbers = #tpu.dot_dimension_numbers<[1], [0], [0], [1], [0, 0, 1, 1], [], []>} : vector<144x128xbf16>, vector<128x256xbf16>, vector<144x256xf32> -> vector<144x256xf32>
    %c240_112 = arith.constant 240 : index
    %c0_113 = arith.constant 0 : index
    %108 = vector.load %arg13[%c240_112, %c0_113] : memref<784x128xbf16, #tpu.memory_space<vmem>>, vector<16x128xbf16>
    %c272_114 = arith.constant 272 : index
    %c0_115 = arith.constant 0 : index
    %109 = vector.load %arg13[%c272_114, %c0_115] : memref<784x128xbf16, #tpu.memory_space<vmem>>, vector<16x128xbf16>
    %c304_116 = arith.constant 304 : index
    %c0_117 = arith.constant 0 : index
    %110 = vector.load %arg13[%c304_116, %c0_117] : memref<784x128xbf16, #tpu.memory_space<vmem>>, vector<16x128xbf16>
    %c464_118 = arith.constant 464 : index
    %c0_119 = arith.constant 0 : index
    %111 = vector.load %arg13[%c464_118, %c0_119] : memref<784x128xbf16, #tpu.memory_space<vmem>>, vector<16x128xbf16>
    %c496_120 = arith.constant 496 : index
    %c0_121 = arith.constant 0 : index
    %112 = vector.load %arg13[%c496_120, %c0_121] : memref<784x128xbf16, #tpu.memory_space<vmem>>, vector<16x128xbf16>
    %c528_122 = arith.constant 528 : index
    %c0_123 = arith.constant 0 : index
    %113 = vector.load %arg13[%c528_122, %c0_123] : memref<784x128xbf16, #tpu.memory_space<vmem>>, vector<16x128xbf16>
    %c688 = arith.constant 688 : index
    %c0_124 = arith.constant 0 : index
    %114 = vector.load %arg13[%c688, %c0_124] : memref<784x128xbf16, #tpu.memory_space<vmem>>, vector<16x128xbf16>
    %c720 = arith.constant 720 : index
    %c0_125 = arith.constant 0 : index
    %115 = vector.load %arg13[%c720, %c0_125] : memref<784x128xbf16, #tpu.memory_space<vmem>>, vector<16x128xbf16>
    %c752 = arith.constant 752 : index
    %c0_126 = arith.constant 0 : index
    %116 = vector.load %arg13[%c752, %c0_126] : memref<784x128xbf16, #tpu.memory_space<vmem>>, vector<16x128xbf16>
    %117 = tpu.concatenate %108, %109, %110, %111, %112, %113, %114, %115, %116 in 0 : vector<16x128xbf16>, vector<16x128xbf16>, vector<16x128xbf16>, vector<16x128xbf16>, vector<16x128xbf16>, vector<16x128xbf16>, vector<16x128xbf16>, vector<16x128xbf16>, vector<16x128xbf16> -> vector<144x128xbf16>
    %c7 = arith.constant 7 : index
    %c0_127 = arith.constant 0 : index
    %c0_128 = arith.constant 0 : index
    %118 = vector.load %arg4[%c7, %c0_127, %c0_128] : memref<9x128x256xbf16, #tpu.memory_space<vmem>>, vector<1x128x256xbf16>
    %119 = vector.shape_cast %118 : vector<1x128x256xbf16> to vector<128x256xbf16>
    %cst_129 = arith.constant dense<0.000000e+00> : vector<144x256xf32>
    %120 = tpu.matmul %117, %119, %cst_129 {dimension_numbers = #tpu.dot_dimension_numbers<[1], [0], [0], [1], [0, 0, 1, 1], [], []>} : vector<144x128xbf16>, vector<128x256xbf16>, vector<144x256xf32> -> vector<144x256xf32>
    %c256_130 = arith.constant 256 : index
    %c0_131 = arith.constant 0 : index
    %121 = vector.load %arg13[%c256_130, %c0_131] : memref<784x128xbf16, #tpu.memory_space<vmem>>, vector<16x128xbf16>
    %c288_132 = arith.constant 288 : index
    %c0_133 = arith.constant 0 : index
    %122 = vector.load %arg13[%c288_132, %c0_133] : memref<784x128xbf16, #tpu.memory_space<vmem>>, vector<16x128xbf16>
    %c320_134 = arith.constant 320 : index
    %c0_135 = arith.constant 0 : index
    %123 = vector.load %arg13[%c320_134, %c0_135] : memref<784x128xbf16, #tpu.memory_space<vmem>>, vector<16x128xbf16>
    %c480_136 = arith.constant 480 : index
    %c0_137 = arith.constant 0 : index
    %124 = vector.load %arg13[%c480_136, %c0_137] : memref<784x128xbf16, #tpu.memory_space<vmem>>, vector<16x128xbf16>
    %c512_138 = arith.constant 512 : index
    %c0_139 = arith.constant 0 : index
    %125 = vector.load %arg13[%c512_138, %c0_139] : memref<784x128xbf16, #tpu.memory_space<vmem>>, vector<16x128xbf16>
    %c544_140 = arith.constant 544 : index
    %c0_141 = arith.constant 0 : index
    %126 = vector.load %arg13[%c544_140, %c0_141] : memref<784x128xbf16, #tpu.memory_space<vmem>>, vector<16x128xbf16>
    %c704_142 = arith.constant 704 : index
    %c0_143 = arith.constant 0 : index
    %127 = vector.load %arg13[%c704_142, %c0_143] : memref<784x128xbf16, #tpu.memory_space<vmem>>, vector<16x128xbf16>
    %c736_144 = arith.constant 736 : index
    %c0_145 = arith.constant 0 : index
    %128 = vector.load %arg13[%c736_144, %c0_145] : memref<784x128xbf16, #tpu.memory_space<vmem>>, vector<16x128xbf16>
    %c768 = arith.constant 768 : index
    %c0_146 = arith.constant 0 : index
    %129 = vector.load %arg13[%c768, %c0_146] : memref<784x128xbf16, #tpu.memory_space<vmem>>, vector<16x128xbf16>
    %130 = tpu.concatenate %121, %122, %123, %124, %125, %126, %127, %128, %129 in 0 : vector<16x128xbf16>, vector<16x128xbf16>, vector<16x128xbf16>, vector<16x128xbf16>, vector<16x128xbf16>, vector<16x128xbf16>, vector<16x128xbf16>, vector<16x128xbf16>, vector<16x128xbf16> -> vector<144x128xbf16>
    %c8 = arith.constant 8 : index
    %c0_147 = arith.constant 0 : index
    %c0_148 = arith.constant 0 : index
    %131 = vector.load %arg4[%c8, %c0_147, %c0_148] : memref<9x128x256xbf16, #tpu.memory_space<vmem>>, vector<1x128x256xbf16>
    %132 = vector.shape_cast %131 : vector<1x128x256xbf16> to vector<128x256xbf16>
    %cst_149 = arith.constant dense<0.000000e+00> : vector<144x256xf32>
    %133 = tpu.matmul %130, %132, %cst_149 {dimension_numbers = #tpu.dot_dimension_numbers<[1], [0], [0], [1], [0, 0, 1, 1], [], []>} : vector<144x128xbf16>, vector<128x256xbf16>, vector<144x256xf32> -> vector<144x256xf32>
    %134 = arith.addf %29, %42 : vector<144x256xf32>
    %135 = arith.addf %55, %68 : vector<144x256xf32>
    %136 = arith.addf %81, %94 : vector<144x256xf32>
    %137 = arith.addf %107, %120 : vector<144x256xf32>
    %138 = arith.addf %134, %135 : vector<144x256xf32>
    %139 = arith.addf %136, %137 : vector<144x256xf32>
    %140 = arith.addf %138, %139 : vector<144x256xf32>
    %141 = arith.addf %140, %133 : vector<144x256xf32>
    %c0_150 = arith.constant 0 : index
    %c0_151 = arith.constant 0 : index
    %142 = vector.load %arg5[%c0_150, %c0_151] : memref<1x256xf32, #tpu.memory_space<vmem>>, vector<1x256xf32>
    %143 = vector.broadcast %142 : vector<1x256xf32> to vector<144x256xf32>
    %144 = arith.addf %141, %143 : vector<144x256xf32>
    %cst_152 = arith.constant 0.000000e+00 : f32
    %145 = vector.broadcast %cst_152 : f32 to vector<144x256xf32>
    %146 = arith.maximumf %144, %145 : vector<144x256xf32>
    %147 = arith.truncf %146 : vector<144x256xf32> to vector<144x256xbf16>
    %148 = vector.extract_strided_slice %147 {offsets = [0, 0], sizes = [16, 256], strides = [1, 1]} : vector<144x256xbf16> to vector<16x256xbf16>
    %c0_153 = arith.constant 0 : index
    %c0_154 = arith.constant 0 : index
    %c0_155 = arith.constant 0 : index
    %149 = vector.load %arg6[%c0_153, %c0_154, %c0_155] : memref<9x256x512xbf16, #tpu.memory_space<vmem>>, vector<1x256x512xbf16>
    %150 = vector.shape_cast %149 : vector<1x256x512xbf16> to vector<256x512xbf16>
    %cst_156 = arith.constant dense<0.000000e+00> : vector<16x512xf32>
    %151 = tpu.matmul %148, %150, %cst_156 {dimension_numbers = #tpu.dot_dimension_numbers<[1], [0], [0], [1], [0, 0, 1, 1], [], []>} : vector<16x256xbf16>, vector<256x512xbf16>, vector<16x512xf32> -> vector<16x512xf32>
    %152 = vector.extract_strided_slice %147 {offsets = [16, 0], sizes = [16, 256], strides = [1, 1]} : vector<144x256xbf16> to vector<16x256xbf16>
    %c1_157 = arith.constant 1 : index
    %c0_158 = arith.constant 0 : index
    %c0_159 = arith.constant 0 : index
    %153 = vector.load %arg6[%c1_157, %c0_158, %c0_159] : memref<9x256x512xbf16, #tpu.memory_space<vmem>>, vector<1x256x512xbf16>
    %154 = vector.shape_cast %153 : vector<1x256x512xbf16> to vector<256x512xbf16>
    %cst_160 = arith.constant dense<0.000000e+00> : vector<16x512xf32>
    %155 = tpu.matmul %152, %154, %cst_160 {dimension_numbers = #tpu.dot_dimension_numbers<[1], [0], [0], [1], [0, 0, 1, 1], [], []>} : vector<16x256xbf16>, vector<256x512xbf16>, vector<16x512xf32> -> vector<16x512xf32>
    %156 = vector.extract_strided_slice %147 {offsets = [32, 0], sizes = [16, 256], strides = [1, 1]} : vector<144x256xbf16> to vector<16x256xbf16>
    %c2_161 = arith.constant 2 : index
    %c0_162 = arith.constant 0 : index
    %c0_163 = arith.constant 0 : index
    %157 = vector.load %arg6[%c2_161, %c0_162, %c0_163] : memref<9x256x512xbf16, #tpu.memory_space<vmem>>, vector<1x256x512xbf16>
    %158 = vector.shape_cast %157 : vector<1x256x512xbf16> to vector<256x512xbf16>
    %cst_164 = arith.constant dense<0.000000e+00> : vector<16x512xf32>
    %159 = tpu.matmul %156, %158, %cst_164 {dimension_numbers = #tpu.dot_dimension_numbers<[1], [0], [0], [1], [0, 0, 1, 1], [], []>} : vector<16x256xbf16>, vector<256x512xbf16>, vector<16x512xf32> -> vector<16x512xf32>
    %160 = vector.extract_strided_slice %147 {offsets = [48, 0], sizes = [16, 256], strides = [1, 1]} : vector<144x256xbf16> to vector<16x256xbf16>
    %c3_165 = arith.constant 3 : index
    %c0_166 = arith.constant 0 : index
    %c0_167 = arith.constant 0 : index
    %161 = vector.load %arg6[%c3_165, %c0_166, %c0_167] : memref<9x256x512xbf16, #tpu.memory_space<vmem>>, vector<1x256x512xbf16>
    %162 = vector.shape_cast %161 : vector<1x256x512xbf16> to vector<256x512xbf16>
    %cst_168 = arith.constant dense<0.000000e+00> : vector<16x512xf32>
    %163 = tpu.matmul %160, %162, %cst_168 {dimension_numbers = #tpu.dot_dimension_numbers<[1], [0], [0], [1], [0, 0, 1, 1], [], []>} : vector<16x256xbf16>, vector<256x512xbf16>, vector<16x512xf32> -> vector<16x512xf32>
    %164 = vector.extract_strided_slice %147 {offsets = [64, 0], sizes = [16, 256], strides = [1, 1]} : vector<144x256xbf16> to vector<16x256xbf16>
    %c4_169 = arith.constant 4 : index
    %c0_170 = arith.constant 0 : index
    %c0_171 = arith.constant 0 : index
    %165 = vector.load %arg6[%c4_169, %c0_170, %c0_171] : memref<9x256x512xbf16, #tpu.memory_space<vmem>>, vector<1x256x512xbf16>
    %166 = vector.shape_cast %165 : vector<1x256x512xbf16> to vector<256x512xbf16>
    %cst_172 = arith.constant dense<0.000000e+00> : vector<16x512xf32>
    %167 = tpu.matmul %164, %166, %cst_172 {dimension_numbers = #tpu.dot_dimension_numbers<[1], [0], [0], [1], [0, 0, 1, 1], [], []>} : vector<16x256xbf16>, vector<256x512xbf16>, vector<16x512xf32> -> vector<16x512xf32>
    %168 = vector.extract_strided_slice %147 {offsets = [80, 0], sizes = [16, 256], strides = [1, 1]} : vector<144x256xbf16> to vector<16x256xbf16>
    %c5_173 = arith.constant 5 : index
    %c0_174 = arith.constant 0 : index
    %c0_175 = arith.constant 0 : index
    %169 = vector.load %arg6[%c5_173, %c0_174, %c0_175] : memref<9x256x512xbf16, #tpu.memory_space<vmem>>, vector<1x256x512xbf16>
    %170 = vector.shape_cast %169 : vector<1x256x512xbf16> to vector<256x512xbf16>
    %cst_176 = arith.constant dense<0.000000e+00> : vector<16x512xf32>
    %171 = tpu.matmul %168, %170, %cst_176 {dimension_numbers = #tpu.dot_dimension_numbers<[1], [0], [0], [1], [0, 0, 1, 1], [], []>} : vector<16x256xbf16>, vector<256x512xbf16>, vector<16x512xf32> -> vector<16x512xf32>
    %172 = vector.extract_strided_slice %147 {offsets = [96, 0], sizes = [16, 256], strides = [1, 1]} : vector<144x256xbf16> to vector<16x256xbf16>
    %c6_177 = arith.constant 6 : index
    %c0_178 = arith.constant 0 : index
    %c0_179 = arith.constant 0 : index
    %173 = vector.load %arg6[%c6_177, %c0_178, %c0_179] : memref<9x256x512xbf16, #tpu.memory_space<vmem>>, vector<1x256x512xbf16>
    %174 = vector.shape_cast %173 : vector<1x256x512xbf16> to vector<256x512xbf16>
    %cst_180 = arith.constant dense<0.000000e+00> : vector<16x512xf32>
    %175 = tpu.matmul %172, %174, %cst_180 {dimension_numbers = #tpu.dot_dimension_numbers<[1], [0], [0], [1], [0, 0, 1, 1], [], []>} : vector<16x256xbf16>, vector<256x512xbf16>, vector<16x512xf32> -> vector<16x512xf32>
    %176 = vector.extract_strided_slice %147 {offsets = [112, 0], sizes = [16, 256], strides = [1, 1]} : vector<144x256xbf16> to vector<16x256xbf16>
    %c7_181 = arith.constant 7 : index
    %c0_182 = arith.constant 0 : index
    %c0_183 = arith.constant 0 : index
    %177 = vector.load %arg6[%c7_181, %c0_182, %c0_183] : memref<9x256x512xbf16, #tpu.memory_space<vmem>>, vector<1x256x512xbf16>
    %178 = vector.shape_cast %177 : vector<1x256x512xbf16> to vector<256x512xbf16>
    %cst_184 = arith.constant dense<0.000000e+00> : vector<16x512xf32>
    %179 = tpu.matmul %176, %178, %cst_184 {dimension_numbers = #tpu.dot_dimension_numbers<[1], [0], [0], [1], [0, 0, 1, 1], [], []>} : vector<16x256xbf16>, vector<256x512xbf16>, vector<16x512xf32> -> vector<16x512xf32>
    %180 = vector.extract_strided_slice %147 {offsets = [128, 0], sizes = [16, 256], strides = [1, 1]} : vector<144x256xbf16> to vector<16x256xbf16>
    %c8_185 = arith.constant 8 : index
    %c0_186 = arith.constant 0 : index
    %c0_187 = arith.constant 0 : index
    %181 = vector.load %arg6[%c8_185, %c0_186, %c0_187] : memref<9x256x512xbf16, #tpu.memory_space<vmem>>, vector<1x256x512xbf16>
    %182 = vector.shape_cast %181 : vector<1x256x512xbf16> to vector<256x512xbf16>
    %cst_188 = arith.constant dense<0.000000e+00> : vector<16x512xf32>
    %183 = tpu.matmul %180, %182, %cst_188 {dimension_numbers = #tpu.dot_dimension_numbers<[1], [0], [0], [1], [0, 0, 1, 1], [], []>} : vector<16x256xbf16>, vector<256x512xbf16>, vector<16x512xf32> -> vector<16x512xf32>
    %184 = arith.addf %151, %155 : vector<16x512xf32>
    %185 = arith.addf %159, %163 : vector<16x512xf32>
    %186 = arith.addf %167, %171 : vector<16x512xf32>
    %187 = arith.addf %175, %179 : vector<16x512xf32>
    %188 = arith.addf %184, %185 : vector<16x512xf32>
    %189 = arith.addf %186, %187 : vector<16x512xf32>
    %190 = arith.addf %188, %189 : vector<16x512xf32>
    %191 = arith.addf %190, %183 : vector<16x512xf32>
    %c0_189 = arith.constant 0 : index
    %c0_190 = arith.constant 0 : index
    %192 = vector.load %arg7[%c0_189, %c0_190] : memref<1x512xf32, #tpu.memory_space<vmem>>, vector<1x512xf32>
    %193 = vector.broadcast %192 : vector<1x512xf32> to vector<16x512xf32>
    %194 = arith.addf %191, %193 : vector<16x512xf32>
    %cst_191 = arith.constant 0.000000e+00 : f32
    %195 = vector.broadcast %cst_191 : f32 to vector<16x512xf32>
    %196 = arith.maximumf %194, %195 : vector<16x512xf32>
    %197 = arith.truncf %196 : vector<16x512xf32> to vector<16x512xbf16>
    %c0_192 = arith.constant 0 : index
    %c0_193 = arith.constant 0 : index
    %198 = vector.load %arg8[%c0_192, %c0_193] : memref<512x256xbf16, #tpu.memory_space<vmem>>, vector<512x256xbf16>
    %cst_194 = arith.constant dense<0.000000e+00> : vector<16x256xf32>
    %199 = tpu.matmul %197, %198, %cst_194 {dimension_numbers = #tpu.dot_dimension_numbers<[1], [0], [0], [1], [0, 0, 1, 1], [], []>} : vector<16x512xbf16>, vector<512x256xbf16>, vector<16x256xf32> -> vector<16x256xf32>
    %c0_195 = arith.constant 0 : index
    %c0_196 = arith.constant 0 : index
    %200 = vector.load %arg9[%c0_195, %c0_196] : memref<1x256xf32, #tpu.memory_space<vmem>>, vector<1x256xf32>
    %201 = vector.broadcast %200 : vector<1x256xf32> to vector<16x256xf32>
    %202 = arith.addf %199, %201 : vector<16x256xf32>
    %cst_197 = arith.constant 0.000000e+00 : f32
    %203 = vector.broadcast %cst_197 : f32 to vector<16x256xf32>
    %204 = arith.maximumf %202, %203 : vector<16x256xf32>
    %205 = arith.truncf %204 : vector<16x256xf32> to vector<16x256xbf16>
    %c0_198 = arith.constant 0 : index
    %c0_199 = arith.constant 0 : index
    %206 = vector.load %arg10[%c0_198, %c0_199] : memref<256x128xbf16, #tpu.memory_space<vmem>>, vector<256x128xbf16>
    %cst_200 = arith.constant dense<0.000000e+00> : vector<16x128xf32>
    %207 = tpu.matmul %205, %206, %cst_200 {dimension_numbers = #tpu.dot_dimension_numbers<[1], [0], [0], [1], [0, 0, 1, 1], [], []>} : vector<16x256xbf16>, vector<256x128xbf16>, vector<16x128xf32> -> vector<16x128xf32>
    %c0_201 = arith.constant 0 : index
    %c0_202 = arith.constant 0 : index
    %208 = vector.load %arg11[%c0_201, %c0_202] : memref<1x128xf32, #tpu.memory_space<vmem>>, vector<1x128xf32>
    %209 = vector.broadcast %208 : vector<1x128xf32> to vector<16x128xf32>
    %210 = arith.addf %207, %209 : vector<16x128xf32>
    %c0_203 = arith.constant 0 : index
    %c0_204 = arith.constant 0 : index
    %211 = vector.load %arg12[%c0_203, %c0_204] : memref<16x128xf32, #tpu.memory_space<vmem>>, vector<16x128xf32>
    tpu.vector_store %arg12[%c0_203, %c0_204], %210 {strides = array<i32>} : memref<16x128xf32, #tpu.memory_space<vmem>>, vector<16x128xf32>,
    return
  }
  func.func @transform_0(%arg0: i32) -> (i32, i32) {
    %c0_i32 = arith.constant 0 : i32
    %c0_i32_0 = arith.constant 0 : i32
    return %arg0, %c0_i32 : i32, i32
  }
  func.func @transform_1(%arg0: i32) -> (i32, i32) {
    %c0_i32 = arith.constant 0 : i32
    %c0_i32_0 = arith.constant 0 : i32
    %c0_i32_1 = arith.constant 0 : i32
    return %c0_i32, %c0_i32_0 : i32, i32
  }
  func.func @transform_2(%arg0: i32) -> (i32, i32) {
    %c0_i32 = arith.constant 0 : i32
    %c0_i32_0 = arith.constant 0 : i32
    %c0_i32_1 = arith.constant 0 : i32
    return %c0_i32, %c0_i32_0 : i32, i32
  }
  func.func @transform_3(%arg0: i32) -> (i32, i32, i32) {
    %c0_i32 = arith.constant 0 : i32
    %c0_i32_0 = arith.constant 0 : i32
    %c0_i32_1 = arith.constant 0 : i32
    %c0_i32_2 = arith.constant 0 : i32
    return %c0_i32, %c0_i32_0, %c0_i32_1 : i32, i32, i32
  }
  func.func @transform_4(%arg0: i32) -> (i32, i32) {
    %c0_i32 = arith.constant 0 : i32
    %c0_i32_0 = arith.constant 0 : i32
    %c0_i32_1 = arith.constant 0 : i32
    return %c0_i32, %c0_i32_0 : i32, i32
  }
  func.func @transform_5(%arg0: i32) -> (i32, i32, i32) {
    %c0_i32 = arith.constant 0 : i32
    %c0_i32_0 = arith.constant 0 : i32
    %c0_i32_1 = arith.constant 0 : i32
    %c0_i32_2 = arith.constant 0 : i32
    return %c0_i32, %c0_i32_0, %c0_i32_1 : i32, i32, i32
  }
  func.func @transform_6(%arg0: i32) -> (i32, i32) {
    %c0_i32 = arith.constant 0 : i32
    %c0_i32_0 = arith.constant 0 : i32
    %c0_i32_1 = arith.constant 0 : i32
    return %c0_i32, %c0_i32_0 : i32, i32
  }
  func.func @transform_7(%arg0: i32) -> (i32, i32) {
    %c0_i32 = arith.constant 0 : i32
    %c0_i32_0 = arith.constant 0 : i32
    %c0_i32_1 = arith.constant 0 : i32
    return %c0_i32, %c0_i32_0 : i32, i32
  }
  func.func @transform_8(%arg0: i32) -> (i32, i32) {
    %c0_i32 = arith.constant 0 : i32
    %c0_i32_0 = arith.constant 0 : i32
    %c0_i32_1 = arith.constant 0 : i32
    return %c0_i32, %c0_i32_0 : i32, i32
  }
  func.func @transform_9(%arg0: i32) -> (i32, i32) {
    %c0_i32 = arith.constant 0 : i32
    %c0_i32_0 = arith.constant 0 : i32
    %c0_i32_1 = arith.constant 0 : i32
    return %c0_i32, %c0_i32_0 : i32, i32
  }
  func.func @transform_10(%arg0: i32) -> (i32, i32) {
    %c0_i32 = arith.constant 0 : i32
    %c0_i32_0 = arith.constant 0 : i32
    %c0_i32_1 = arith.constant 0 : i32
    return %c0_i32, %c0_i32_0 : i32, i32
  }
  func.func @transform_11(%arg0: i32) -> (i32, i32) {
    %c0_i32 = arith.constant 0 : i32
    %c0_i32_0 = arith.constant 0 : i32
    return %arg0, %c0_i32 : i32, i32
  }
}

</mosaic_0001>

<llo_original>
// kernel: forward.1
$region0: #{forward.1}
  #allocation0 [shape = 'u32[]', space=smem, size = 0x4, offset = 0x4, fixed_abs, tag = 'smem constant byte address 0x4 - core index']
  #allocation1 [shape = 'u32[144,128]{1,0:T(1,128)}', space=vmem, size = 0x12000, scoped, tag = 'internal scratch']
  #allocation2 [shape = 'bf16[784,128]{1,0:T(16,128)(2,1)}', space=vmem, size = 0x31000, scoped, tag = 'scratch operand']
  %s0 = inlined_call_operand.vmem [shape: bf16[3136,128], index: 0, kind: input, shape index: {}]
  %s1 = inlined_call_operand.vmem [shape: bf16[128,128], index: 1, kind: input, shape index: {}]
  %s2 = inlined_call_operand.vmem [shape: f32[1,128], index: 2, kind: input, shape index: {}]
  %s3 = inlined_call_operand.vmem [shape: bf16[9,128,256], index: 3, kind: input, shape index: {}]
  %s4 = inlined_call_operand.vmem [shape: f32[1,256], index: 4, kind: input, shape index: {}]
  %s5 = inlined_call_operand.vmem [shape: bf16[9,256,512], index: 5, kind: input, shape index: {}]
  %s6 = inlined_call_operand.vmem [shape: f32[1,512], index: 6, kind: input, shape index: {}]
  %s7 = inlined_call_operand.vmem [shape: bf16[512,256], index: 7, kind: input, shape index: {}]
  %s8 = inlined_call_operand.vmem [shape: f32[1,256], index: 8, kind: input, shape index: {}]
  %s9 = inlined_call_operand.vmem [shape: bf16[256,128], index: 9, kind: input, shape index: {}]
  %s10 = inlined_call_operand.vmem [shape: f32[1,128], index: 10, kind: input, shape index: {}]
  %s11 = inlined_call_operand.vmem [shape: f32[16,128], index: 11, kind: output, shape index: {}]
  %s12 = sld [smem:[#allocation0]]
  $region54: #{forward.1} parent=0
    _
  %s14 = ssub.s32 1, %s12
  %s15 = scalar_select 0, %s14, %s12
  // Predicated region
  $region2: #{forward.1} parent=0 // pred_check
    _
  $region3: #{forward.1} parent=0 // pred_check_branch
    %17 = sbr.rel (0) target = $region5
  $region4: #{forward.1} parent=0 // pred_region
    _
  $region5: #{forward.1} parent=0 // pred_fallthru
    _
  // Predicated region
  $region6: #{forward.1} parent=0 // pred_check
    _
  $region7: #{forward.1} parent=0 // pred_check_branch
    %19 = sbr.rel (0) target = $region9
  $region8: #{forward.1} parent=0 // pred_region
    _
  $region9: #{forward.1} parent=0 // pred_fallthru
    _
  // Predicated region
  $region10: #{forward.1} parent=0 // pred_check
    _
  $region11: #{forward.1} parent=0 // pred_check_branch
    %21 = sbr.rel (0) target = $region13
  $region12: #{forward.1} parent=0 // pred_region
    _
  $region13: #{forward.1} parent=0 // pred_fallthru
    _
  // Predicated region
  $region14: #{forward.1} parent=0 // pred_check
    _
  $region15: #{forward.1} parent=0 // pred_check_branch
    %23 = sbr.rel (0) target = $region17
  $region16: #{forward.1} parent=0 // pred_region
    _
  $region17: #{forward.1} parent=0 // pred_fallthru
    _
  // Predicated region
  $region18: #{forward.1} parent=0 // pred_check
    _
  $region19: #{forward.1} parent=0 // pred_check_branch
    %25 = sbr.rel (0) target = $region21
  $region20: #{forward.1} parent=0 // pred_region
    _
  $region21: #{forward.1} parent=0 // pred_fallthru
    _
  // Predicated region
  $region22: #{forward.1} parent=0 // pred_check
    _
  $region23: #{forward.1} parent=0 // pred_check_branch
    %27 = sbr.rel (0) target = $region25
  $region24: #{forward.1} parent=0 // pred_region
    _
  $region25: #{forward.1} parent=0 // pred_fallthru
    _
  // Predicated region
  $region26: #{forward.1} parent=0 // pred_check
    _
  $region27: #{forward.1} parent=0 // pred_check_branch
    %29 = sbr.rel (0) target = $region29
  $region28: #{forward.1} parent=0 // pred_region
    _
  $region29: #{forward.1} parent=0 // pred_fallthru
    _
  // Predicated region
  $region30: #{forward.1} parent=0 // pred_check
    _
  $region31: #{forward.1} parent=0 // pred_check_branch
    %31 = sbr.rel (0) target = $region33
  $region32: #{forward.1} parent=0 // pred_region
    _
  $region33: #{forward.1} parent=0 // pred_fallthru
    _
  // Predicated region
  $region34: #{forward.1} parent=0 // pred_check
    _
  $region35: #{forward.1} parent=0 // pred_check_branch
    %33 = sbr.rel (0) target = $region37
  $region36: #{forward.1} parent=0 // pred_region
    _
  $region37: #{forward.1} parent=0 // pred_fallthru
    _
  // Predicated region
  $region38: #{forward.1} parent=0 // pred_check
    _
  $region39: #{forward.1} parent=0 // pred_check_branch
    %35 = sbr.rel (0) target = $region41
  $region40: #{forward.1} parent=0 // pred_region
    _
  $region41: #{forward.1} parent=0 // pred_fallthru
    _
  // Predicated region
  $region42: #{forward.1} parent=0 // pred_check
    _
  $region43: #{forward.1} parent=0 // pred_check_branch
    %37 = sbr.rel (0) target = $region45
  $region44: #{forward.1} parent=0 // pred_region
    _
  $region45: #{forward.1} parent=0 // pred_fallthru
    _
  %v39 = vld [vmem:[%s0] sm:$0xf]
  %v40 = vld [vmem:[%s0 + $0x4] sm:$0xf]
  %v41 = vld [vmem:[%s0 + $0x8] sm:$0xf]
  %v42 = vld [vmem:[%s0 + $0xc] sm:$0xf]
  %v43 = vld [vmem:[%s0 + $0x10] sm:$0xf]
  %v44 = vld [vmem:[%s0 + $0x14] sm:$0xf]
  %v45 = vld [vmem:[%s0 + $0x18] sm:$0xf]
  %v46 = vld [vmem:[%s0 + $0x1c] sm:$0xf]
  %v47 = vld [vmem:[%s0 + $0x20] sm:$0xf]
  %v48 = vld [vmem:[%s0 + $0x24] sm:$0xf]
  %v49 = vld [vmem:[%s0 + $0x28] sm:$0xf]
  %v50 = vld [vmem:[%s0 + $0x2c] sm:$0xf]
  %v51 = vld [vmem:[%s0 + $0x30] sm:$0xf]
  %v52 = vld [vmem:[%s0 + $0x34] sm:$0xf]
  %v53 = vld [vmem:[%s0 + $0x38] sm:$0xf]
  %v54 = vld [vmem:[%s0 + $0x3c] sm:$0xf]
  %v55 = vld [vmem:[%s0 + $0x40] sm:$0xf]
  %v56 = vld [vmem:[%s0 + $0x44] sm:$0xf]
  %v57 = vld [vmem:[%s0 + $0x48] sm:$0xf]
  %v58 = vld [vmem:[%s0 + $0x4c] sm:$0xf]
  %v59 = vld [vmem:[%s0 + $0x50] sm:$0xf]
  %v60 = vld [vmem:[%s0 + $0x54] sm:$0xf]
  %v61 = vld [vmem:[%s0 + $0x58] sm:$0xf]
  %v62 = vld [vmem:[%s0 + $0x5c] sm:$0xf]
  %v63 = vld [vmem:[%s0 + $0x60] sm:$0xf]
  %v64 = vld [vmem:[%s0 + $0x64] sm:$0xf]
  %v65 = vld [vmem:[%s0 + $0x68] sm:$0xf]
  %v66 = vld [vmem:[%s0 + $0x6c] sm:$0xf]
  %v67 = vld [vmem:[%s0 + $0x70] sm:$0xf]
  %v68 = vld [vmem:[%s0 + $0x74] sm:$0xf]
  %v69 = vld [vmem:[%s0 + $0x78] sm:$0xf]
  %v70 = vld [vmem:[%s0 + $0x7c] sm:$0xf]
  %v71 = vld [vmem:[%s0 + $0x80] sm:$0xf]
  %v72 = vld [vmem:[%s0 + $0x84] sm:$0xf]
  %v73 = vld [vmem:[%s0 + $0x88] sm:$0xf]
  %v74 = vld [vmem:[%s0 + $0x8c] sm:$0xf]
  %v75 = vld [vmem:[%s0 + $0x90] sm:$0xf]
  %v76 = vld [vmem:[%s0 + $0x94] sm:$0xf]
  %v77 = vld [vmem:[%s0 + $0x98] sm:$0xf]
  %v78 = vld [vmem:[%s0 + $0x9c] sm:$0xf]
  %v79 = vld [vmem:[%s0 + $0xa0] sm:$0xf]
  %v80 = vld [vmem:[%s0 + $0xa4] sm:$0xf]
  %v81 = vld [vmem:[%s0 + $0xa8] sm:$0xf]
  %v82 = vld [vmem:[%s0 + $0xac] sm:$0xf]
  %v83 = vld [vmem:[%s0 + $0xb0] sm:$0xf]
  %v84 = vld [vmem:[%s0 + $0xb4] sm:$0xf]
  %v85 = vld [vmem:[%s0 + $0xb8] sm:$0xf]
  %v86 = vld [vmem:[%s0 + $0xbc] sm:$0xf]
  %v87 = vld [vmem:[%s0 + $0xc0] sm:$0xf]
  %v88 = vld [vmem:[%s0 + $0xc4] sm:$0xf]
  %v89 = vld [vmem:[%s0 + $0xc8] sm:$0xf]
  %v90 = vld [vmem:[%s0 + $0xcc] sm:$0xf]
  %v91 = vld [vmem:[%s0 + $0xd0] sm:$0xf]
  %v92 = vld [vmem:[%s0 + $0xd4] sm:$0xf]
  %v93 = vld [vmem:[%s0 + $0xd8] sm:$0xf]
  %v94 = vld [vmem:[%s0 + $0xdc] sm:$0xf]
  %v95 = vld [vmem:[%s0 + $0xe0] sm:$0xf]
  %v96 = vld [vmem:[%s0 + $0xe4] sm:$0xf]
  %v97 = vld [vmem:[%s0 + $0xe8] sm:$0xf]
  %v98 = vld [vmem:[%s0 + $0xec] sm:$0xf]
  %v99 = vld [vmem:[%s0 + $0xf0] sm:$0xf]
  %v100 = vld [vmem:[%s0 + $0xf4] sm:$0xf]
  %v101 = vld [vmem:[%s0 + $0xf8] sm:$0xf]
  %v102 = vld [vmem:[%s0 + $0xfc] sm:$0xf]
  %v103 = vld [vmem:[%s0 + $0x100] sm:$0xf]
  %v104 = vld [vmem:[%s0 + $0x104] sm:$0xf]
  %v105 = vld [vmem:[%s0 + $0x108] sm:$0xf]
  %v106 = vld [vmem:[%s0 + $0x10c] sm:$0xf]
  %v107 = vld [vmem:[%s0 + $0x110] sm:$0xf]
  %v108 = vld [vmem:[%s0 + $0x114] sm:$0xf]
  %v109 = vld [vmem:[%s0 + $0x118] sm:$0xf]
  %v110 = vld [vmem:[%s0 + $0x11c] sm:$0xf]
  %v111 = vld [vmem:[%s0 + $0x120] sm:$0xf]
  %v112 = vld [vmem:[%s0 + $0x124] sm:$0xf]
  %v113 = vld [vmem:[%s0 + $0x128] sm:$0xf]
  %v114 = vld [vmem:[%s0 + $0x12c] sm:$0xf]
  %v115 = vld [vmem:[%s0 + $0x130] sm:$0xf]
  %v116 = vld [vmem:[%s0 + $0x134] sm:$0xf]
  %v117 = vld [vmem:[%s0 + $0x138] sm:$0xf]
  %v118 = vld [vmem:[%s0 + $0x13c] sm:$0xf]
  %v119 = vld [vmem:[%s0 + $0x140] sm:$0xf]
  %v120 = vld [vmem:[%s0 + $0x144] sm:$0xf]
  %v121 = vld [vmem:[%s0 + $0x148] sm:$0xf]
  %v122 = vld [vmem:[%s0 + $0x14c] sm:$0xf]
  %v123 = vld [vmem:[%s0 + $0x150] sm:$0xf]
  %v124 = vld [vmem:[%s0 + $0x154] sm:$0xf]
  %v125 = vld [vmem:[%s0 + $0x158] sm:$0xf]
  %v126 = vld [vmem:[%s0 + $0x15c] sm:$0xf]
  %v127 = vld [vmem:[%s0 + $0x160] sm:$0xf]
  %v128 = vld [vmem:[%s0 + $0x164] sm:$0xf]
  %v129 = vld [vmem:[%s0 + $0x168] sm:$0xf]
  %v130 = vld [vmem:[%s0 + $0x16c] sm:$0xf]
  %v131 = vld [vmem:[%s0 + $0x170] sm:$0xf]
  %v132 = vld [vmem:[%s0 + $0x174] sm:$0xf]
  %v133 = vld [vmem:[%s0 + $0x178] sm:$0xf]
  %v134 = vld [vmem:[%s0 + $0x17c] sm:$0xf]
  %v135 = vld [vmem:[%s0 + $0x180] sm:$0xf]
  %v136 = vld [vmem:[%s0 + $0x184] sm:$0xf]
  %v137 = vld [vmem:[%s0 + $0x188] sm:$0xf]
  %v138 = vld [vmem:[%s0 + $0x18c] sm:$0xf]
  %v139 = vld [vmem:[%s0 + $0x190] sm:$0xf]
  %v140 = vld [vmem:[%s0 + $0x194] sm:$0xf]
  %v141 = vld [vmem:[%s0 + $0x198] sm:$0xf]
  %v142 = vld [vmem:[%s0 + $0x19c] sm:$0xf]
  %v143 = vld [vmem:[%s0 + $0x1a0] sm:$0xf]
  %v144 = vld [vmem:[%s0 + $0x1a4] sm:$0xf]
  %v145 = vld [vmem:[%s0 + $0x1a8] sm:$0xf]
  %v146 = vld [vmem:[%s0 + $0x1ac] sm:$0xf]
  %v147 = vld [vmem:[%s0 + $0x1b0] sm:$0xf]
  %v148 = vld [vmem:[%s0 + $0x1b4] sm:$0xf]
  %v149 = vld [vmem:[%s0 + $0x1b8] sm:$0xf]
  %v150 = vld [vmem:[%s0 + $0x1bc] sm:$0xf]
  %v151 = vld [vmem:[%s0 + $0x1c0] sm:$0xf]
  %v152 = vld [vmem:[%s0 + $0x1c4] sm:$0xf]
  %v153 = vld [vmem:[%s0 + $0x1c8] sm:$0xf]
  %v154 = vld [vmem:[%s0 + $0x1cc] sm:$0xf]
  %v155 = vld [vmem:[%s0 + $0x1d0] sm:$0xf]
  %v156 = vld [vmem:[%s0 + $0x1d4] sm:$0xf]
  %v157 = vld [vmem:[%s0 + $0x1d8] sm:$0xf]
  %v158 = vld [vmem:[%s0 + $0x1dc] sm:$0xf]
  %v159 = vld [vmem:[%s0 + $0x1e0] sm:$0xf]
  %v160 = vld [vmem:[%s0 + $0x1e4] sm:$0xf]
  %v161 = vld [vmem:[%s0 + $0x1e8] sm:$0xf]
  %v162 = vld [vmem:[%s0 + $0x1ec] sm:$0xf]
  %v163 = vld [vmem:[%s0 + $0x1f0] sm:$0xf]
  %v164 = vld [vmem:[%s0 + $0x1f4] sm:$0xf]
  %v165 = vld [vmem:[%s0 + $0x1f8] sm:$0xf]
  %v166 = vld [vmem:[%s0 + $0x1fc] sm:$0xf]
  %v167 = vld [vmem:[%s0 + $0x200] sm:$0xf]
  %v168 = vld [vmem:[%s0 + $0x204] sm:$0xf]
  %v169 = vld [vmem:[%s0 + $0x208] sm:$0xf]
  %v170 = vld [vmem:[%s0 + $0x20c] sm:$0xf]
  %v171 = vld [vmem:[%s0 + $0x210] sm:$0xf]
  %v172 = vld [vmem:[%s0 + $0x214] sm:$0xf]
  %v173 = vld [vmem:[%s0 + $0x218] sm:$0xf]
  %v174 = vld [vmem:[%s0 + $0x21c] sm:$0xf]
  %v175 = vld [vmem:[%s0 + $0x220] sm:$0xf]
  %v176 = vld [vmem:[%s0 + $0x224] sm:$0xf]
  %v177 = vld [vmem:[%s0 + $0x228] sm:$0xf]
  %v178 = vld [vmem:[%s0 + $0x22c] sm:$0xf]
  %v179 = vld [vmem:[%s0 + $0x230] sm:$0xf]
  %v180 = vld [vmem:[%s0 + $0x234] sm:$0xf]
  %v181 = vld [vmem:[%s0 + $0x238] sm:$0xf]
  %v182 = vld [vmem:[%s0 + $0x23c] sm:$0xf]
  %v183 = vld [vmem:[%s0 + $0x240] sm:$0xf]
  %v184 = vld [vmem:[%s0 + $0x244] sm:$0xf]
  %v185 = vld [vmem:[%s0 + $0x248] sm:$0xf]
  %v186 = vld [vmem:[%s0 + $0x24c] sm:$0xf]
  %v187 = vld [vmem:[%s0 + $0x250] sm:$0xf]
  %v188 = vld [vmem:[%s0 + $0x254] sm:$0xf]
  %v189 = vld [vmem:[%s0 + $0x258] sm:$0xf]
  %v190 = vld [vmem:[%s0 + $0x25c] sm:$0xf]
  %v191 = vld [vmem:[%s0 + $0x260] sm:$0xf]
  %v192 = vld [vmem:[%s0 + $0x264] sm:$0xf]
  %v193 = vld [vmem:[%s0 + $0x268] sm:$0xf]
  %v194 = vld [vmem:[%s0 + $0x26c] sm:$0xf]
  %v195 = vld [vmem:[%s0 + $0x270] sm:$0xf]
  %v196 = vld [vmem:[%s0 + $0x274] sm:$0xf]
  %v197 = vld [vmem:[%s0 + $0x278] sm:$0xf]
  %v198 = vld [vmem:[%s0 + $0x27c] sm:$0xf]
  %v199 = vld [vmem:[%s0 + $0x280] sm:$0xf]
  %v200 = vld [vmem:[%s0 + $0x284] sm:$0xf]
  %v201 = vld [vmem:[%s0 + $0x288] sm:$0xf]
  %v202 = vld [vmem:[%s0 + $0x28c] sm:$0xf]
  %v203 = vld [vmem:[%s0 + $0x290] sm:$0xf]
  %v204 = vld [vmem:[%s0 + $0x294] sm:$0xf]
  %v205 = vld [vmem:[%s0 + $0x298] sm:$0xf]
  %v206 = vld [vmem:[%s0 + $0x29c] sm:$0xf]
  %v207 = vld [vmem:[%s0 + $0x2a0] sm:$0xf]
  %v208 = vld [vmem:[%s0 + $0x2a4] sm:$0xf]
  %v209 = vld [vmem:[%s0 + $0x2a8] sm:$0xf]
  %v210 = vld [vmem:[%s0 + $0x2ac] sm:$0xf]
  %v211 = vld [vmem:[%s0 + $0x2b0] sm:$0xf]
  %v212 = vld [vmem:[%s0 + $0x2b4] sm:$0xf]
  %v213 = vld [vmem:[%s0 + $0x2b8] sm:$0xf]
  %v214 = vld [vmem:[%s0 + $0x2bc] sm:$0xf]
  %v215 = vld [vmem:[%s0 + $0x2c0] sm:$0xf]
  %v216 = vld [vmem:[%s0 + $0x2c4] sm:$0xf]
  %v217 = vld [vmem:[%s0 + $0x2c8] sm:$0xf]
  %v218 = vld [vmem:[%s0 + $0x2cc] sm:$0xf]
  %v219 = vld [vmem:[%s0 + $0x2d0] sm:$0xf]
  %v220 = vld [vmem:[%s0 + $0x2d4] sm:$0xf]
  %v221 = vld [vmem:[%s0 + $0x2d8] sm:$0xf]
  %v222 = vld [vmem:[%s0 + $0x2dc] sm:$0xf]
  %v223 = vld [vmem:[%s0 + $0x2e0] sm:$0xf]
  %v224 = vld [vmem:[%s0 + $0x2e4] sm:$0xf]
  %v225 = vld [vmem:[%s0 + $0x2e8] sm:$0xf]
  %v226 = vld [vmem:[%s0 + $0x2ec] sm:$0xf]
  %v227 = vld [vmem:[%s0 + $0x2f0] sm:$0xf]
  %v228 = vld [vmem:[%s0 + $0x2f4] sm:$0xf]
  %v229 = vld [vmem:[%s0 + $0x2f8] sm:$0xf]
  %v230 = vld [vmem:[%s0 + $0x2fc] sm:$0xf]
  %v231 = vld [vmem:[%s0 + $0x300] sm:$0xf]
  %v232 = vld [vmem:[%s0 + $0x304] sm:$0xf]
  %v233 = vld [vmem:[%s0 + $0x308] sm:$0xf]
  %v234 = vld [vmem:[%s0 + $0x30c] sm:$0xf]
  %v235 = vld [vmem:[%s0 + $0x310] sm:$0xf]
  %v236 = vld [vmem:[%s0 + $0x314] sm:$0xf]
  %v237 = vld [vmem:[%s0 + $0x318] sm:$0xf]
  %v238 = vld [vmem:[%s0 + $0x31c] sm:$0xf]
  %v239 = vld [vmem:[%s0 + $0x320] sm:$0xf]
  %v240 = vld [vmem:[%s0 + $0x324] sm:$0xf]
  %v241 = vld [vmem:[%s0 + $0x328] sm:$0xf]
  %v242 = vld [vmem:[%s0 + $0x32c] sm:$0xf]
  %v243 = vld [vmem:[%s0 + $0x330] sm:$0xf]
  %v244 = vld [vmem:[%s0 + $0x334] sm:$0xf]
  %v245 = vld [vmem:[%s0 + $0x338] sm:$0xf]
  %v246 = vld [vmem:[%s0 + $0x33c] sm:$0xf]
  %v247 = vld [vmem:[%s0 + $0x340] sm:$0xf]
  %v248 = vld [vmem:[%s0 + $0x344] sm:$0xf]
  %v249 = vld [vmem:[%s0 + $0x348] sm:$0xf]
  %v250 = vld [vmem:[%s0 + $0x34c] sm:$0xf]
  %v251 = vld [vmem:[%s0 + $0x350] sm:$0xf]
  %v252 = vld [vmem:[%s0 + $0x354] sm:$0xf]
  %v253 = vld [vmem:[%s0 + $0x358] sm:$0xf]
  %v254 = vld [vmem:[%s0 + $0x35c] sm:$0xf]
  %v255 = vld [vmem:[%s0 + $0x360] sm:$0xf]
  %v256 = vld [vmem:[%s0 + $0x364] sm:$0xf]
  %v257 = vld [vmem:[%s0 + $0x368] sm:$0xf]
  %v258 = vld [vmem:[%s0 + $0x36c] sm:$0xf]
  %v259 = vld [vmem:[%s0 + $0x370] sm:$0xf]
  %v260 = vld [vmem:[%s0 + $0x374] sm:$0xf]
  %v261 = vld [vmem:[%s0 + $0x378] sm:$0xf]
  %v262 = vld [vmem:[%s0 + $0x37c] sm:$0xf]
  %v263 = vld [vmem:[%s0 + $0x380] sm:$0xf]
  %v264 = vld [vmem:[%s0 + $0x384] sm:$0xf]
  %v265 = vld [vmem:[%s0 + $0x388] sm:$0xf]
  %v266 = vld [vmem:[%s0 + $0x38c] sm:$0xf]
  %v267 = vld [vmem:[%s0 + $0x390] sm:$0xf]
  %v268 = vld [vmem:[%s0 + $0x394] sm:$0xf]
  %v269 = vld [vmem:[%s0 + $0x398] sm:$0xf]
  %v270 = vld [vmem:[%s0 + $0x39c] sm:$0xf]
  %v271 = vld [vmem:[%s0 + $0x3a0] sm:$0xf]
  %v272 = vld [vmem:[%s0 + $0x3a4] sm:$0xf]
  %v273 = vld [vmem:[%s0 + $0x3a8] sm:$0xf]
  %v274 = vld [vmem:[%s0 + $0x3ac] sm:$0xf]
  %v275 = vld [vmem:[%s0 + $0x3b0] sm:$0xf]
  %v276 = vld [vmem:[%s0 + $0x3b4] sm:$0xf]
  %v277 = vld [vmem:[%s0 + $0x3b8] sm:$0xf]
  %v278 = vld [vmem:[%s0 + $0x3bc] sm:$0xf]
  %v279 = vld [vmem:[%s0 + $0x3c0] sm:$0xf]
  %v280 = vld [vmem:[%s0 + $0x3c4] sm:$0xf]
  %v281 = vld [vmem:[%s0 + $0x3c8] sm:$0xf]
  %v282 = vld [vmem:[%s0 + $0x3cc] sm:$0xf]
  %v283 = vld [vmem:[%s0 + $0x3d0] sm:$0xf]
  %v284 = vld [vmem:[%s0 + $0x3d4] sm:$0xf]
  %v285 = vld [vmem:[%s0 + $0x3d8] sm:$0xf]
  %v286 = vld [vmem:[%s0 + $0x3dc] sm:$0xf]
  %v287 = vld [vmem:[%s0 + $0x3e0] sm:$0xf]
  %v288 = vld [vmem:[%s0 + $0x3e4] sm:$0xf]
  %v289 = vld [vmem:[%s0 + $0x3e8] sm:$0xf]
  %v290 = vld [vmem:[%s0 + $0x3ec] sm:$0xf]
  %v291 = vld [vmem:[%s0 + $0x3f0] sm:$0xf]
  %v292 = vld [vmem:[%s0 + $0x3f4] sm:$0xf]
  %v293 = vld [vmem:[%s0 + $0x3f8] sm:$0xf]
  %v294 = vld [vmem:[%s0 + $0x3fc] sm:$0xf]
  %v295 = vld [vmem:[%s0 + $0x400] sm:$0xf]
  %v296 = vld [vmem:[%s0 + $0x404] sm:$0xf]
  %v297 = vld [vmem:[%s0 + $0x408] sm:$0xf]
  %v298 = vld [vmem:[%s0 + $0x40c] sm:$0xf]
  %v299 = vld [vmem:[%s0 + $0x410] sm:$0xf]
  %v300 = vld [vmem:[%s0 + $0x414] sm:$0xf]
  %v301 = vld [vmem:[%s0 + $0x418] sm:$0xf]
  %v302 = vld [vmem:[%s0 + $0x41c] sm:$0xf]
  %v303 = vld [vmem:[%s0 + $0x420] sm:$0xf]
  %v304 = vld [vmem:[%s0 + $0x424] sm:$0xf]
  %v305 = vld [vmem:[%s0 + $0x428] sm:$0xf]
  %v306 = vld [vmem:[%s0 + $0x42c] sm:$0xf]
  %v307 = vld [vmem:[%s0 + $0x430] sm:$0xf]
  %v308 = vld [vmem:[%s0 + $0x434] sm:$0xf]
  %v309 = vld [vmem:[%s0 + $0x438] sm:$0xf]
  %v310 = vld [vmem:[%s0 + $0x43c] sm:$0xf]
  %v311 = vld [vmem:[%s0 + $0x440] sm:$0xf]
  %v312 = vld [vmem:[%s0 + $0x444] sm:$0xf]
  %v313 = vld [vmem:[%s0 + $0x448] sm:$0xf]
  %v314 = vld [vmem:[%s0 + $0x44c] sm:$0xf]
  %v315 = vld [vmem:[%s0 + $0x450] sm:$0xf]
  %v316 = vld [vmem:[%s0 + $0x454] sm:$0xf]
  %v317 = vld [vmem:[%s0 + $0x458] sm:$0xf]
  %v318 = vld [vmem:[%s0 + $0x45c] sm:$0xf]
  %v319 = vld [vmem:[%s0 + $0x460] sm:$0xf]
  %v320 = vld [vmem:[%s0 + $0x464] sm:$0xf]
  %v321 = vld [vmem:[%s0 + $0x468] sm:$0xf]
  %v322 = vld [vmem:[%s0 + $0x46c] sm:$0xf]
  %v323 = vld [vmem:[%s0 + $0x470] sm:$0xf]
  %v324 = vld [vmem:[%s0 + $0x474] sm:$0xf]
  %v325 = vld [vmem:[%s0 + $0x478] sm:$0xf]
  %v326 = vld [vmem:[%s0 + $0x47c] sm:$0xf]
  %v327 = vld [vmem:[%s0 + $0x480] sm:$0xf]
  %v328 = vld [vmem:[%s0 + $0x484] sm:$0xf]
  %v329 = vld [vmem:[%s0 + $0x488] sm:$0xf]
  %v330 = vld [vmem:[%s0 + $0x48c] sm:$0xf]
  %v331 = vld [vmem:[%s0 + $0x490] sm:$0xf]
  %v332 = vld [vmem:[%s0 + $0x494] sm:$0xf]
  %v333 = vld [vmem:[%s0 + $0x498] sm:$0xf]
  %v334 = vld [vmem:[%s0 + $0x49c] sm:$0xf]
  %v335 = vld [vmem:[%s0 + $0x4a0] sm:$0xf]
  %v336 = vld [vmem:[%s0 + $0x4a4] sm:$0xf]
  %v337 = vld [vmem:[%s0 + $0x4a8] sm:$0xf]
  %v338 = vld [vmem:[%s0 + $0x4ac] sm:$0xf]
  %v339 = vld [vmem:[%s0 + $0x4b0] sm:$0xf]
  %v340 = vld [vmem:[%s0 + $0x4b4] sm:$0xf]
  %v341 = vld [vmem:[%s0 + $0x4b8] sm:$0xf]
  %v342 = vld [vmem:[%s0 + $0x4bc] sm:$0xf]
  %v343 = vld [vmem:[%s0 + $0x4c0] sm:$0xf]
  %v344 = vld [vmem:[%s0 + $0x4c4] sm:$0xf]
  %v345 = vld [vmem:[%s0 + $0x4c8] sm:$0xf]
  %v346 = vld [vmem:[%s0 + $0x4cc] sm:$0xf]
  %v347 = vld [vmem:[%s0 + $0x4d0] sm:$0xf]
  %v348 = vld [vmem:[%s0 + $0x4d4] sm:$0xf]
  %v349 = vld [vmem:[%s0 + $0x4d8] sm:$0xf]
  %v350 = vld [vmem:[%s0 + $0x4dc] sm:$0xf]
  %v351 = vld [vmem:[%s0 + $0x4e0] sm:$0xf]
  %v352 = vld [vmem:[%s0 + $0x4e4] sm:$0xf]
  %v353 = vld [vmem:[%s0 + $0x4e8] sm:$0xf]
  %v354 = vld [vmem:[%s0 + $0x4ec] sm:$0xf]
  %v355 = vld [vmem:[%s0 + $0x4f0] sm:$0xf]
  %v356 = vld [vmem:[%s0 + $0x4f4] sm:$0xf]
  %v357 = vld [vmem:[%s0 + $0x4f8] sm:$0xf]
  %v358 = vld [vmem:[%s0 + $0x4fc] sm:$0xf]
  %v359 = vld [vmem:[%s0 + $0x500] sm:$0xf]
  %v360 = vld [vmem:[%s0 + $0x504] sm:$0xf]
  %v361 = vld [vmem:[%s0 + $0x508] sm:$0xf]
  %v362 = vld [vmem:[%s0 + $0x50c] sm:$0xf]
  %v363 = vld [vmem:[%s0 + $0x510] sm:$0xf]
  %v364 = vld [vmem:[%s0 + $0x514] sm:$0xf]
  %v365 = vld [vmem:[%s0 + $0x518] sm:$0xf]
  %v366 = vld [vmem:[%s0 + $0x51c] sm:$0xf]
  %v367 = vld [vmem:[%s0 + $0x520] sm:$0xf]
  %v368 = vld [vmem:[%s0 + $0x524] sm:$0xf]
  %v369 = vld [vmem:[%s0 + $0x528] sm:$0xf]
  %v370 = vld [vmem:[%s0 + $0x52c] sm:$0xf]
  %v371 = vld [vmem:[%s0 + $0x530] sm:$0xf]
  %v372 = vld [vmem:[%s0 + $0x534] sm:$0xf]
  %v373 = vld [vmem:[%s0 + $0x538] sm:$0xf]
  %v374 = vld [vmem:[%s0 + $0x53c] sm:$0xf]
  %v375 = vld [vmem:[%s0 + $0x540] sm:$0xf]
  %v376 = vld [vmem:[%s0 + $0x544] sm:$0xf]
  %v377 = vld [vmem:[%s0 + $0x548] sm:$0xf]
  %v378 = vld [vmem:[%s0 + $0x54c] sm:$0xf]
  %v379 = vld [vmem:[%s0 + $0x550] sm:$0xf]
  %v380 = vld [vmem:[%s0 + $0x554] sm:$0xf]
  %v381 = vld [vmem:[%s0 + $0x558] sm:$0xf]
  %v382 = vld [vmem:[%s0 + $0x55c] sm:$0xf]
  %v383 = vld [vmem:[%s0 + $0x560] sm:$0xf]
  %v384 = vld [vmem:[%s0 + $0x564] sm:$0xf]
  %v385 = vld [vmem:[%s0 + $0x568] sm:$0xf]
  %v386 = vld [vmem:[%s0 + $0x56c] sm:$0xf]
  %v387 = vld [vmem:[%s0 + $0x570] sm:$0xf]
  %v388 = vld [vmem:[%s0 + $0x574] sm:$0xf]
  %v389 = vld [vmem:[%s0 + $0x578] sm:$0xf]
  %v390 = vld [vmem:[%s0 + $0x57c] sm:$0xf]
  %v391 = vld [vmem:[%s0 + $0x580] sm:$0xf]
  %v392 = vld [vmem:[%s0 + $0x584] sm:$0xf]
  %v393 = vld [vmem:[%s0 + $0x588] sm:$0xf]
  %v394 = vld [vmem:[%s0 + $0x58c] sm:$0xf]
  %v395 = vld [vmem:[%s0 + $0x590] sm:$0xf]
  %v396 = vld [vmem:[%s0 + $0x594] sm:$0xf]
  %v397 = vld [vmem:[%s0 + $0x598] sm:$0xf]
  %v398 = vld [vmem:[%s0 + $0x59c] sm:$0xf]
  %v399 = vld [vmem:[%s0 + $0x5a0] sm:$0xf]
  %v400 = vld [vmem:[%s0 + $0x5a4] sm:$0xf]
  %v401 = vld [vmem:[%s0 + $0x5a8] sm:$0xf]
  %v402 = vld [vmem:[%s0 + $0x5ac] sm:$0xf]
  %v403 = vld [vmem:[%s0 + $0x5b0] sm:$0xf]
  %v404 = vld [vmem:[%s0 + $0x5b4] sm:$0xf]
  %v405 = vld [vmem:[%s0 + $0x5b8] sm:$0xf]
  %v406 = vld [vmem:[%s0 + $0x5bc] sm:$0xf]
  %v407 = vld [vmem:[%s0 + $0x5c0] sm:$0xf]
  %v408 = vld [vmem:[%s0 + $0x5c4] sm:$0xf]
  %v409 = vld [vmem:[%s0 + $0x5c8] sm:$0xf]
  %v410 = vld [vmem:[%s0 + $0x5cc] sm:$0xf]
  %v411 = vld [vmem:[%s0 + $0x5d0] sm:$0xf]
  %v412 = vld [vmem:[%s0 + $0x5d4] sm:$0xf]
  %v413 = vld [vmem:[%s0 + $0x5d8] sm:$0xf]
  %v414 = vld [vmem:[%s0 + $0x5dc] sm:$0xf]
  %v415 = vld [vmem:[%s0 + $0x5e0] sm:$0xf]
  %v416 = vld [vmem:[%s0 + $0x5e4] sm:$0xf]
  %v417 = vld [vmem:[%s0 + $0x5e8] sm:$0xf]
  %v418 = vld [vmem:[%s0 + $0x5ec] sm:$0xf]
  %v419 = vld [vmem:[%s0 + $0x5f0] sm:$0xf]
  %v420 = vld [vmem:[%s0 + $0x5f4] sm:$0xf]
  %v421 = vld [vmem:[%s0 + $0x5f8] sm:$0xf]
  %v422 = vld [vmem:[%s0 + $0x5fc] sm:$0xf]
  %v423 = vld [vmem:[%s0 + $0x600] sm:$0xf]
  %v424 = vld [vmem:[%s0 + $0x604] sm:$0xf]
  %v425 = vld [vmem:[%s0 + $0x608] sm:$0xf]
  %v426 = vld [vmem:[%s0 + $0x60c] sm:$0xf]
  %v427 = vld [vmem:[%s0 + $0x610] sm:$0xf]
  %v428 = vld [vmem:[%s0 + $0x614] sm:$0xf]
  %v429 = vld [vmem:[%s0 + $0x618] sm:$0xf]
  %v430 = vld [vmem:[%s0 + $0x61c] sm:$0xf]
  %v431 = vld [vmem:[%s1] sm:$0xf]
  %v432 = vld [vmem:[%s1 + $0x4] sm:$0xf]
  %v433 = vld [vmem:[%s1 + $0x8] sm:$0xf]
  %v434 = vld [vmem:[%s1 + $0xc] sm:$0xf]
  %v435 = vld [vmem:[%s1 + $0x10] sm:$0xf]
  %v436 = vld [vmem:[%s1 + $0x14] sm:$0xf]
  %v437 = vld [vmem:[%s1 + $0x18] sm:$0xf]
  %v438 = vld [vmem:[%s1 + $0x1c] sm:$0xf]
  %v439 = vld [vmem:[%s1 + $0x20] sm:$0xf]
  %v440 = vld [vmem:[%s1 + $0x24] sm:$0xf]
  %v441 = vld [vmem:[%s1 + $0x28] sm:$0xf]
  %v442 = vld [vmem:[%s1 + $0x2c] sm:$0xf]
  %v443 = vld [vmem:[%s1 + $0x30] sm:$0xf]
  %v444 = vld [vmem:[%s1 + $0x34] sm:$0xf]
  %v445 = vld [vmem:[%s1 + $0x38] sm:$0xf]
  %v446 = vld [vmem:[%s1 + $0x3c] sm:$0xf]
  %v839 = vunpack.c.l.b16 %v39
  %v840 = vunpack.c.l.b16 %v40
  %v841 = vunpack.c.l.b16 %v41
  %v842 = vunpack.c.l.b16 %v42
  %v843 = vunpack.c.l.b16 %v43
  %v844 = vunpack.c.l.b16 %v44
  %v845 = vunpack.c.l.b16 %v45
  %v846 = vunpack.c.l.b16 %v46
  %v847 = vunpack.c.l.b16 %v47
  %v848 = vunpack.c.l.b16 %v48
  %v849 = vunpack.c.l.b16 %v49
  %v850 = vunpack.c.l.b16 %v50
  %v851 = vunpack.c.l.b16 %v51
  %v852 = vunpack.c.l.b16 %v52
  %v853 = vunpack.c.l.b16 %v53
  %v854 = vunpack.c.l.b16 %v54
  %v855 = vunpack.c.l.b16 %v55
  %v856 = vunpack.c.l.b16 %v56
  %v857 = vunpack.c.l.b16 %v57
  %v858 = vunpack.c.l.b16 %v58
  %v859 = vunpack.c.l.b16 %v59
  %v860 = vunpack.c.l.b16 %v60
  %v861 = vunpack.c.l.b16 %v61
  %v862 = vunpack.c.l.b16 %v62
  %v863 = vunpack.c.l.b16 %v63
  %v864 = vunpack.c.l.b16 %v64
  %v865 = vunpack.c.l.b16 %v65
  %v866 = vunpack.c.l.b16 %v66
  %v867 = vunpack.c.l.b16 %v67
  %v868 = vunpack.c.l.b16 %v68
  %v869 = vunpack.c.l.b16 %v69
  %v870 = vunpack.c.l.b16 %v70
  %v871 = vunpack.c.l.b16 %v71
  %v872 = vunpack.c.l.b16 %v72
  %v873 = vunpack.c.l.b16 %v73
  %v874 = vunpack.c.l.b16 %v74
  %v875 = vunpack.c.l.b16 %v75
  %v876 = vunpack.c.l.b16 %v76
  %v877 = vunpack.c.l.b16 %v77
  %v878 = vunpack.c.l.b16 %v78
  %v879 = vunpack.c.l.b16 %v79
  %v880 = vunpack.c.l.b16 %v80
  %v881 = vunpack.c.l.b16 %v81
  %v882 = vunpack.c.l.b16 %v82
  %v883 = vunpack.c.l.b16 %v83
  %v884 = vunpack.c.l.b16 %v84
  %v885 = vunpack.c.l.b16 %v85
  %v886 = vunpack.c.l.b16 %v86
  %v887 = vunpack.c.l.b16 %v87
  %v888 = vunpack.c.l.b16 %v88
  %v889 = vunpack.c.l.b16 %v89
  %v890 = vunpack.c.l.b16 %v90
  %v891 = vunpack.c.l.b16 %v91
  %v892 = vunpack.c.l.b16 %v92
  %v893 = vunpack.c.l.b16 %v93
  %v894 = vunpack.c.l.b16 %v94
  %v895 = vunpack.c.l.b16 %v95
  %v896 = vunpack.c.l.b16 %v96
  %v897 = vunpack.c.l.b16 %v97
  %v898 = vunpack.c.l.b16 %v98
  %v899 = vunpack.c.l.b16 %v99
  %v900 = vunpack.c.l.b16 %v100
  %v901 = vunpack.c.l.b16 %v101
  %v902 = vunpack.c.l.b16 %v102
  %v903 = vunpack.c.l.b16 %v103
  %v904 = vunpack.c.l.b16 %v104
  %v905 = vunpack.c.l.b16 %v105
  %v906 = vunpack.c.l.b16 %v106
  %v907 = vunpack.c.l.b16 %v107
  %v908 = vunpack.c.l.b16 %v108
  %v909 = vunpack.c.l.b16 %v109
  %v910 = vunpack.c.l.b16 %v110
  %v911 = vunpack.c.l.b16 %v111
  %v912 = vunpack.c.l.b16 %v112
  %v913 = vunpack.c.l.b16 %v113
  %v914 = vunpack.c.l.b16 %v114
  %v915 = vunpack.c.l.b16 %v115
  %v916 = vunpack.c.l.b16 %v116
  %v917 = vunpack.c.l.b16 %v117
  %v918 = vunpack.c.l.b16 %v118
  %v919 = vunpack.c.l.b16 %v119
  %v920 = vunpack.c.l.b16 %v120
  %v921 = vunpack.c.l.b16 %v121
  %v922 = vunpack.c.l.b16 %v122
  %v923 = vunpack.c.l.b16 %v123
  %v924 = vunpack.c.l.b16 %v124
  %v925 = vunpack.c.l.b16 %v125
  %v926 = vunpack.c.l.b16 %v126
  %v927 = vunpack.c.l.b16 %v127
  %v928 = vunpack.c.l.b16 %v128
  %v929 = vunpack.c.l.b16 %v129
  %v930 = vunpack.c.l.b16 %v130
  %v931 = vunpack.c.l.b16 %v131
  %v932 = vunpack.c.l.b16 %v132
  %v933 = vunpack.c.l.b16 %v133
  %v934 = vunpack.c.l.b16 %v134
  %v935 = vunpack.c.l.b16 %v135
  %v936 = vunpack.c.l.b16 %v136
  %v937 = vunpack.c.l.b16 %v137
  %v938 = vunpack.c.l.b16 %v138
  %v939 = vunpack.c.l.b16 %v139
  %v940 = vunpack.c.l.b16 %v140
  %v941 = vunpack.c.l.b16 %v141
  %v942 = vunpack.c.l.b16 %v142
  %v943 = vunpack.c.l.b16 %v143
  %v944 = vunpack.c.l.b16 %v144
  %v945 = vunpack.c.l.b16 %v145
  %v946 = vunpack.c.l.b16 %v146
  %v947 = vunpack.c.l.b16 %v147
  %v948 = vunpack.c.l.b16 %v148
  %v949 = vunpack.c.l.b16 %v149
  %v950 = vunpack.c.l.b16 %v150
  %v951 = vunpack.c.l.b16 %v151
  %v952 = vunpack.c.l.b16 %v152
  %v953 = vunpack.c.l.b16 %v153
  %v954 = vunpack.c.l.b16 %v154
  %v955 = vunpack.c.l.b16 %v155
  %v956 = vunpack.c.l.b16 %v156
  %v957 = vunpack.c.l.b16 %v157
  %v958 = vunpack.c.l.b16 %v158
  %v959 = vunpack.c.l.b16 %v159
  %v960 = vunpack.c.l.b16 %v160
  %v961 = vunpack.c.l.b16 %v161
  %v962 = vunpack.c.l.b16 %v162
  %v963 = vunpack.c.l.b16 %v163
  %v964 = vunpack.c.l.b16 %v164
  %v965 = vunpack.c.l.b16 %v165
  %v966 = vunpack.c.l.b16 %v166
  %v967 = vunpack.c.l.b16 %v167
  %v968 = vunpack.c.l.b16 %v168
  %v969 = vunpack.c.l.b16 %v169
  %v970 = vunpack.c.l.b16 %v170
  %v971 = vunpack.c.l.b16 %v171
  %v972 = vunpack.c.l.b16 %v172
  %v973 = vunpack.c.l.b16 %v173
  %v974 = vunpack.c.l.b16 %v174
  %v975 = vunpack.c.l.b16 %v175
  %v976 = vunpack.c.l.b16 %v176
  %v977 = vunpack.c.l.b16 %v177
  %v978 = vunpack.c.l.b16 %v178
  %v979 = vunpack.c.l.b16 %v179
  %v980 = vunpack.c.l.b16 %v180
  %v981 = vunpack.c.l.b16 %v181
  %v982 = vunpack.c.l.b16 %v182
  %v983 = vunpack.c.l.b16 %v183
  %v984 = vunpack.c.l.b16 %v184
  %v985 = vunpack.c.l.b16 %v185
  %v986 = vunpack.c.l.b16 %v186
  %v987 = vunpack.c.l.b16 %v187
  %v988 = vunpack.c.l.b16 %v188
  %v989 = vunpack.c.l.b16 %v189
  %v990 = vunpack.c.l.b16 %v190
  %v991 = vunpack.c.l.b16 %v191
  %v992 = vunpack.c.l.b16 %v192
  %v993 = vunpack.c.l.b16 %v193
  %v994 = vunpack.c.l.b16 %v194
  %v995 = vunpack.c.l.b16 %v195
  %v996 = vunpack.c.l.b16 %v196
  %v997 = vunpack.c.l.b16 %v197
  %v998 = vunpack.c.l.b16 %v198
  %v999 = vunpack.c.l.b16 %v199
  %v1000 = vunpack.c.l.b16 %v200
  %v1001 = vunpack.c.l.b16 %v201
  %v1002 = vunpack.c.l.b16 %v202
  %v1003 = vunpack.c.l.b16 %v203
  %v1004 = vunpack.c.l.b16 %v204
  %v1005 = vunpack.c.l.b16 %v205
  %v1006 = vunpack.c.l.b16 %v206
  %v1007 = vunpack.c.l.b16 %v207
  %v1008 = vunpack.c.l.b16 %v208
  %v1009 = vunpack.c.l.b16 %v209
  %v1010 = vunpack.c.l.b16 %v210
  %v1011 = vunpack.c.l.b16 %v211
  %v1012 = vunpack.c.l.b16 %v212
  %v1013 = vunpack.c.l.b16 %v213
  %v1014 = vunpack.c.l.b16 %v214
  %v1015 = vunpack.c.l.b16 %v215
  %v1016 = vunpack.c.l.b16 %v216
  %v1017 = vunpack.c.l.b16 %v217
  %v1018 = vunpack.c.l.b16 %v218
  %v1019 = vunpack.c.l.b16 %v219
  %v1020 = vunpack.c.l.b16 %v220
  %v1021 = vunpack.c.l.b16 %v221
  %v1022 = vunpack.c.l.b16 %v222
  %v1023 = vunpack.c.l.b16 %v223
  %v1024 = vunpack.c.l.b16 %v224
  %v1025 = vunpack.c.l.b16 %v225
  %v1026 = vunpack.c.l.b16 %v226
  %v1027 = vunpack.c.l.b16 %v227
  %v1028 = vunpack.c.l.b16 %v228
  %v1029 = vunpack.c.l.b16 %v229
  %v1030 = vunpack.c.l.b16 %v230
  %v1031 = vunpack.c.l.b16 %v231
  %v1032 = vunpack.c.l.b16 %v232
  %v1033 = vunpack.c.l.b16 %v233
  %v1034 = vunpack.c.l.b16 %v234
  %v1035 = vunpack.c.l.b16 %v235
  %v1036 = vunpack.c.l.b16 %v236
  %v1037 = vunpack.c.l.b16 %v237
  %v1038 = vunpack.c.l.b16 %v238
  %v1039 = vunpack.c.l.b16 %v239
  %v1040 = vunpack.c.l.b16 %v240
  %v1041 = vunpack.c.l.b16 %v241
  %v1042 = vunpack.c.l.b16 %v242
  %v1043 = vunpack.c.l.b16 %v243
  %v1044 = vunpack.c.l.b16 %v244
  %v1045 = vunpack.c.l.b16 %v245
  %v1046 = vunpack.c.l.b16 %v246
  %v1047 = vunpack.c.l.b16 %v247
  %v1048 = vunpack.c.l.b16 %v248
  %v1049 = vunpack.c.l.b16 %v249
  %v1050 = vunpack.c.l.b16 %v250
  %v1051 = vunpack.c.l.b16 %v251
  %v1052 = vunpack.c.l.b16 %v252
  %v1053 = vunpack.c.l.b16 %v253
  %v1054 = vunpack.c.l.b16 %v254
  %v1055 = vunpack.c.l.b16 %v255
  %v1056 = vunpack.c.l.b16 %v256
  %v1057 = vunpack.c.l.b16 %v257
  %v1058 = vunpack.c.l.b16 %v258
  %v1059 = vunpack.c.l.b16 %v259
  %v1060 = vunpack.c.l.b16 %v260
  %v1061 = vunpack.c.l.b16 %v261
  %v1062 = vunpack.c.l.b16 %v262
  %v1063 = vunpack.c.l.b16 %v263
  %v1064 = vunpack.c.l.b16 %v264
  %v1065 = vunpack.c.l.b16 %v265
  %v1066 = vunpack.c.l.b16 %v266
  %v1067 = vunpack.c.l.b16 %v267
  %v1068 = vunpack.c.l.b16 %v268
  %v1069 = vunpack.c.l.b16 %v269
  %v1070 = vunpack.c.l.b16 %v270
  %v1071 = vunpack.c.l.b16 %v271
  %v1072 = vunpack.c.l.b16 %v272
  %v1073 = vunpack.c.l.b16 %v273
  %v1074 = vunpack.c.l.b16 %v274
  %v1075 = vunpack.c.l.b16 %v275
  %v1076 = vunpack.c.l.b16 %v276
  %v1077 = vunpack.c.l.b16 %v277
  %v1078 = vunpack.c.l.b16 %v278
  %v1079 = vunpack.c.l.b16 %v279
  %v1080 = vunpack.c.l.b16 %v280
  %v1081 = vunpack.c.l.b16 %v281
  %v1082 = vunpack.c.l.b16 %v282
  %v1083 = vunpack.c.l.b16 %v283
  %v1084 = vunpack.c.l.b16 %v284
  %v1085 = vunpack.c.l.b16 %v285
  %v1086 = vunpack.c.l.b16 %v286
  %v1087 = vunpack.c.l.b16 %v287
  %v1088 = vunpack.c.l.b16 %v288
  %v1089 = vunpack.c.l.b16 %v289
  %v1090 = vunpack.c.l.b16 %v290
  %v1091 = vunpack.c.l.b16 %v291
  %v1092 = vunpack.c.l.b16 %v292
  %v1093 = vunpack.c.l.b16 %v293
  %v1094 = vunpack.c.l.b16 %v294
  %v1095 = vunpack.c.l.b16 %v295
  %v1096 = vunpack.c.l.b16 %v296
  %v1097 = vunpack.c.l.b16 %v297
  %v1098 = vunpack.c.l.b16 %v298
  %v1099 = vunpack.c.l.b16 %v299
  %v1100 = vunpack.c.l.b16 %v300
  %v1101 = vunpack.c.l.b16 %v301
  %v1102 = vunpack.c.l.b16 %v302
  %v1103 = vunpack.c.l.b16 %v303
  %v1104 = vunpack.c.l.b16 %v304
  %v1105 = vunpack.c.l.b16 %v305
  %v1106 = vunpack.c.l.b16 %v306
  %v1107 = vunpack.c.l.b16 %v307
  %v1108 = vunpack.c.l.b16 %v308
  %v1109 = vunpack.c.l.b16 %v309
  %v1110 = vunpack.c.l.b16 %v310
  %v1111 = vunpack.c.l.b16 %v311
  %v1112 = vunpack.c.l.b16 %v312
  %v1113 = vunpack.c.l.b16 %v313
  %v1114 = vunpack.c.l.b16 %v314
  %v1115 = vunpack.c.l.b16 %v315
  %v1116 = vunpack.c.l.b16 %v316
  %v1117 = vunpack.c.l.b16 %v317
  %v1118 = vunpack.c.l.b16 %v318
  %v1119 = vunpack.c.l.b16 %v319
  %v1120 = vunpack.c.l.b16 %v320
  %v1121 = vunpack.c.l.b16 %v321
  %v1122 = vunpack.c.l.b16 %v322
  %v1123 = vunpack.c.l.b16 %v323
  %v1124 = vunpack.c.l.b16 %v324
  %v1125 = vunpack.c.l.b16 %v325
  %v1126 = vunpack.c.l.b16 %v326
  %v1127 = vunpack.c.l.b16 %v327
  %v1128 = vunpack.c.l.b16 %v328
  %v1129 = vunpack.c.l.b16 %v329
  %v1130 = vunpack.c.l.b16 %v330
  %v1131 = vunpack.c.l.b16 %v331
  %v1132 = vunpack.c.l.b16 %v332
  %v1133 = vunpack.c.l.b16 %v333
  %v1134 = vunpack.c.l.b16 %v334
  %v1135 = vunpack.c.l.b16 %v335
  %v1136 = vunpack.c.l.b16 %v336
  %v1137 = vunpack.c.l.b16 %v337
  %v1138 = vunpack.c.l.b16 %v338
  %v1139 = vunpack.c.l.b16 %v339
  %v1140 = vunpack.c.l.b16 %v340
  %v1141 = vunpack.c.l.b16 %v341
  %v1142 = vunpack.c.l.b16 %v342
  %v1143 = vunpack.c.l.b16 %v343
  %v1144 = vunpack.c.l.b16 %v344
  %v1145 = vunpack.c.l.b16 %v345
  %v1146 = vunpack.c.l.b16 %v346
  %v1147 = vunpack.c.l.b16 %v347
  %v1148 = vunpack.c.l.b16 %v348
  %v1149 = vunpack.c.l.b16 %v349
  %v1150 = vunpack.c.l.b16 %v350
  %v1151 = vunpack.c.l.b16 %v351
  %v1152 = vunpack.c.l.b16 %v352
  %v1153 = vunpack.c.l.b16 %v353
  %v1154 = vunpack.c.l.b16 %v354
  %v1155 = vunpack.c.l.b16 %v355
  %v1156 = vunpack.c.l.b16 %v356
  %v1157 = vunpack.c.l.b16 %v357
  %v1158 = vunpack.c.l.b16 %v358
  %v1159 = vunpack.c.l.b16 %v359
  %v1160 = vunpack.c.l.b16 %v360
  %v1161 = vunpack.c.l.b16 %v361
  %v1162 = vunpack.c.l.b16 %v362
  %v1163 = vunpack.c.l.b16 %v363
  %v1164 = vunpack.c.l.b16 %v364
  %v1165 = vunpack.c.l.b16 %v365
  %v1166 = vunpack.c.l.b16 %v366
  %v1167 = vunpack.c.l.b16 %v367
  %v1168 = vunpack.c.l.b16 %v368
  %v1169 = vunpack.c.l.b16 %v369
  %v1170 = vunpack.c.l.b16 %v370
  %v1171 = vunpack.c.l.b16 %v371
  %v1172 = vunpack.c.l.b16 %v372
  %v1173 = vunpack.c.l.b16 %v373
  %v1174 = vunpack.c.l.b16 %v374
  %v1175 = vunpack.c.l.b16 %v375
  %v1176 = vunpack.c.l.b16 %v376
  %v1177 = vunpack.c.l.b16 %v377
  %v1178 = vunpack.c.l.b16 %v378
  %v1179 = vunpack.c.l.b16 %v379
  %v1180 = vunpack.c.l.b16 %v380
  %v1181 = vunpack.c.l.b16 %v381
  %v1182 = vunpack.c.l.b16 %v382
  %v1183 = vunpack.c.l.b16 %v383
  %v1184 = vunpack.c.l.b16 %v384
  %v1185 = vunpack.c.l.b16 %v385
  %v1186 = vunpack.c.l.b16 %v386
  %v1187 = vunpack.c.l.b16 %v387
  %v1188 = vunpack.c.l.b16 %v388
  %v1189 = vunpack.c.l.b16 %v389
  %v1190 = vunpack.c.l.b16 %v390
  %v1191 = vunpack.c.l.b16 %v391
  %v1192 = vunpack.c.l.b16 %v392
  %v1193 = vunpack.c.l.b16 %v393
  %v1194 = vunpack.c.l.b16 %v394
  %v1195 = vunpack.c.l.b16 %v395
  %v1196 = vunpack.c.l.b16 %v396
  %v1197 = vunpack.c.l.b16 %v397
  %v1198 = vunpack.c.l.b16 %v398
  %v1199 = vunpack.c.l.b16 %v399
  %v1200 = vunpack.c.l.b16 %v400
  %v1201 = vunpack.c.l.b16 %v401
  %v1202 = vunpack.c.l.b16 %v402
  %v1203 = vunpack.c.l.b16 %v403
  %v1204 = vunpack.c.l.b16 %v404
  %v1205 = vunpack.c.l.b16 %v405
  %v1206 = vunpack.c.l.b16 %v406
  %v1207 = vunpack.c.l.b16 %v407
  %v1208 = vunpack.c.l.b16 %v408
  %v1209 = vunpack.c.l.b16 %v409
  %v1210 = vunpack.c.l.b16 %v410
  %v1211 = vunpack.c.l.b16 %v411
  %v1212 = vunpack.c.l.b16 %v412
  %v1213 = vunpack.c.l.b16 %v413
  %v1214 = vunpack.c.l.b16 %v414
  %v1215 = vunpack.c.l.b16 %v415
  %v1216 = vunpack.c.l.b16 %v416
  %v1217 = vunpack.c.l.b16 %v417
  %v1218 = vunpack.c.l.b16 %v418
  %v1219 = vunpack.c.l.b16 %v419
  %v1220 = vunpack.c.l.b16 %v420
  %v1221 = vunpack.c.l.b16 %v421
  %v1222 = vunpack.c.l.b16 %v422
  %v1223 = vunpack.c.l.b16 %v423
  %v1224 = vunpack.c.l.b16 %v424
  %v1225 = vunpack.c.l.b16 %v425
  %v1226 = vunpack.c.l.b16 %v426
  %v1227 = vunpack.c.l.b16 %v427
  %v1228 = vunpack.c.l.b16 %v428
  %v1229 = vunpack.c.l.b16 %v429
  %v1230 = vunpack.c.l.b16 %v430
  %v1231 = vpack.c.b16 %v840, %v839
  %v1232 = vpack.c.b16 %v842, %v841
  %v1233 = vpack.c.b16 %v844, %v843
  %v1234 = vpack.c.b16 %v846, %v845
  %v1235 = vpack.c.b16 %v848, %v847
  %v1236 = vpack.c.b16 %v850, %v849
  %v1237 = vpack.c.b16 %v852, %v851
  %v1238 = vpack.c.b16 %v854, %v853
  %v1239 = vpack.c.b16 %v856, %v855
  %v1240 = vpack.c.b16 %v858, %v857
  %v1241 = vpack.c.b16 %v860, %v859
  %v1242 = vpack.c.b16 %v862, %v861
  %v1243 = vpack.c.b16 %v864, %v863
  %v1244 = vpack.c.b16 %v866, %v865
  %v1245 = vpack.c.b16 %v868, %v867
  %v1246 = vpack.c.b16 %v870, %v869
  %v1247 = vpack.c.b16 %v872, %v871
  %v1248 = vpack.c.b16 %v874, %v873
  %v1249 = vpack.c.b16 %v876, %v875
  %v1250 = vpack.c.b16 %v878, %v877
  %v1251 = vpack.c.b16 %v880, %v879
  %v1252 = vpack.c.b16 %v882, %v881
  %v1253 = vpack.c.b16 %v884, %v883
  %v1254 = vpack.c.b16 %v886, %v885
  %v1255 = vpack.c.b16 %v888, %v887
  %v1256 = vpack.c.b16 %v890, %v889
  %v1257 = vpack.c.b16 %v892, %v891
  %v1258 = vpack.c.b16 %v894, %v893
  %v1259 = vpack.c.b16 %v896, %v895
  %v1260 = vpack.c.b16 %v898, %v897
  %v1261 = vpack.c.b16 %v900, %v899
  %v1262 = vpack.c.b16 %v902, %v901
  %v1263 = vpack.c.b16 %v904, %v903
  %v1264 = vpack.c.b16 %v906, %v905
  %v1265 = vpack.c.b16 %v908, %v907
  %v1266 = vpack.c.b16 %v910, %v909
  %v1267 = vpack.c.b16 %v912, %v911
  %v1268 = vpack.c.b16 %v914, %v913
  %v1269 = vpack.c.b16 %v916, %v915
  %v1270 = vpack.c.b16 %v918, %v917
  %v1271 = vpack.c.b16 %v920, %v919
  %v1272 = vpack.c.b16 %v922, %v921
  %v1273 = vpack.c.b16 %v924, %v923
  %v1274 = vpack.c.b16 %v926, %v925
  %v1275 = vpack.c.b16 %v928, %v927
  %v1276 = vpack.c.b16 %v930, %v929
  %v1277 = vpack.c.b16 %v932, %v931
  %v1278 = vpack.c.b16 %v934, %v933
  %v1279 = vpack.c.b16 %v936, %v935
  %v1280 = vpack.c.b16 %v938, %v937
  %v1281 = vpack.c.b16 %v940, %v939
  %v1282 = vpack.c.b16 %v942, %v941
  %v1283 = vpack.c.b16 %v944, %v943
  %v1284 = vpack.c.b16 %v946, %v945
  %v1285 = vpack.c.b16 %v948, %v947
  %v1286 = vpack.c.b16 %v950, %v949
  %v1287 = vpack.c.b16 %v952, %v951
  %v1288 = vpack.c.b16 %v954, %v953
  %v1289 = vpack.c.b16 %v956, %v955
  %v1290 = vpack.c.b16 %v958, %v957
  %v1291 = vpack.c.b16 %v960, %v959
  %v1292 = vpack.c.b16 %v962, %v961
  %v1293 = vpack.c.b16 %v964, %v963
  %v1294 = vpack.c.b16 %v966, %v965
  %v1295 = vpack.c.b16 %v968, %v967
  %v1296 = vpack.c.b16 %v970, %v969
  %v1297 = vpack.c.b16 %v972, %v971
  %v1298 = vpack.c.b16 %v974, %v973
  %v1299 = vpack.c.b16 %v976, %v975
  %v1300 = vpack.c.b16 %v978, %v977
  %v1301 = vpack.c.b16 %v980, %v979
  %v1302 = vpack.c.b16 %v982, %v981
  %v1303 = vpack.c.b16 %v984, %v983
  %v1304 = vpack.c.b16 %v986, %v985
  %v1305 = vpack.c.b16 %v988, %v987
  %v1306 = vpack.c.b16 %v990, %v989
  %v1307 = vpack.c.b16 %v992, %v991
  %v1308 = vpack.c.b16 %v994, %v993
  %v1309 = vpack.c.b16 %v996, %v995
  %v1310 = vpack.c.b16 %v998, %v997
  %v1311 = vpack.c.b16 %v1000, %v999
  %v1312 = vpack.c.b16 %v1002, %v1001
  %v1313 = vpack.c.b16 %v1004, %v1003
  %v1314 = vpack.c.b16 %v1006, %v1005
  %v1315 = vpack.c.b16 %v1008, %v1007
  %v1316 = vpack.c.b16 %v1010, %v1009
  %v1317 = vpack.c.b16 %v1012, %v1011
  %v1318 = vpack.c.b16 %v1014, %v1013
  %v1319 = vpack.c.b16 %v1016, %v1015
  %v1320 = vpack.c.b16 %v1018, %v1017
  %v1321 = vpack.c.b16 %v1020, %v1019
  %v1322 = vpack.c.b16 %v1022, %v1021
  %v1323 = vpack.c.b16 %v1024, %v1023
  %v1324 = vpack.c.b16 %v1026, %v1025
  %v1325 = vpack.c.b16 %v1028, %v1027
  %v1326 = vpack.c.b16 %v1030, %v1029
  %v1327 = vpack.c.b16 %v1032, %v1031
  %v1328 = vpack.c.b16 %v1034, %v1033
  %v1329 = vpack.c.b16 %v1036, %v1035
  %v1330 = vpack.c.b16 %v1038, %v1037
  %v1331 = vpack.c.b16 %v1040, %v1039
  %v1332 = vpack.c.b16 %v1042, %v1041
  %v1333 = vpack.c.b16 %v1044, %v1043
  %v1334 = vpack.c.b16 %v1046, %v1045
  %v1335 = vpack.c.b16 %v1048, %v1047
  %v1336 = vpack.c.b16 %v1050, %v1049
  %v1337 = vpack.c.b16 %v1052, %v1051
  %v1338 = vpack.c.b16 %v1054, %v1053
  %v1339 = vpack.c.b16 %v1056, %v1055
  %v1340 = vpack.c.b16 %v1058, %v1057
  %v1341 = vpack.c.b16 %v1060, %v1059
  %v1342 = vpack.c.b16 %v1062, %v1061
  %v1343 = vpack.c.b16 %v1064, %v1063
  %v1344 = vpack.c.b16 %v1066, %v1065
  %v1345 = vpack.c.b16 %v1068, %v1067
  %v1346 = vpack.c.b16 %v1070, %v1069
  %v1347 = vpack.c.b16 %v1072, %v1071
  %v1348 = vpack.c.b16 %v1074, %v1073
  %v1349 = vpack.c.b16 %v1076, %v1075
  %v1350 = vpack.c.b16 %v1078, %v1077
  %v1351 = vpack.c.b16 %v1080, %v1079
  %v1352 = vpack.c.b16 %v1082, %v1081
  %v1353 = vpack.c.b16 %v1084, %v1083
  %v1354 = vpack.c.b16 %v1086, %v1085
  %v1355 = vpack.c.b16 %v1088, %v1087
  %v1356 = vpack.c.b16 %v1090, %v1089
  %v1357 = vpack.c.b16 %v1092, %v1091
  %v1358 = vpack.c.b16 %v1094, %v1093
  %v1359 = vpack.c.b16 %v1096, %v1095
  %v1360 = vpack.c.b16 %v1098, %v1097
  %v1361 = vpack.c.b16 %v1100, %v1099
  %v1362 = vpack.c.b16 %v1102, %v1101
  %v1363 = vpack.c.b16 %v1104, %v1103
  %v1364 = vpack.c.b16 %v1106, %v1105
  %v1365 = vpack.c.b16 %v1108, %v1107
  %v1366 = vpack.c.b16 %v1110, %v1109
  %v1367 = vpack.c.b16 %v1112, %v1111
  %v1368 = vpack.c.b16 %v1114, %v1113
  %v1369 = vpack.c.b16 %v1116, %v1115
  %v1370 = vpack.c.b16 %v1118, %v1117
  %v1371 = vpack.c.b16 %v1120, %v1119
  %v1372 = vpack.c.b16 %v1122, %v1121
  %v1373 = vpack.c.b16 %v1124, %v1123
  %v1374 = vpack.c.b16 %v1126, %v1125
  %v1375 = vpack.c.b16 %v1128, %v1127
  %v1376 = vpack.c.b16 %v1130, %v1129
  %v1377 = vpack.c.b16 %v1132, %v1131
  %v1378 = vpack.c.b16 %v1134, %v1133
  %v1379 = vpack.c.b16 %v1136, %v1135
  %v1380 = vpack.c.b16 %v1138, %v1137
  %v1381 = vpack.c.b16 %v1140, %v1139
  %v1382 = vpack.c.b16 %v1142, %v1141
  %v1383 = vpack.c.b16 %v1144, %v1143
  %v1384 = vpack.c.b16 %v1146, %v1145
  %v1385 = vpack.c.b16 %v1148, %v1147
  %v1386 = vpack.c.b16 %v1150, %v1149
  %v1387 = vpack.c.b16 %v1152, %v1151
  %v1388 = vpack.c.b16 %v1154, %v1153
  %v1389 = vpack.c.b16 %v1156, %v1155
  %v1390 = vpack.c.b16 %v1158, %v1157
  %v1391 = vpack.c.b16 %v1160, %v1159
  %v1392 = vpack.c.b16 %v1162, %v1161
  %v1393 = vpack.c.b16 %v1164, %v1163
  %v1394 = vpack.c.b16 %v1166, %v1165
  %v1395 = vpack.c.b16 %v1168, %v1167
  %v1396 = vpack.c.b16 %v1170, %v1169
  %v1397 = vpack.c.b16 %v1172, %v1171
  %v1398 = vpack.c.b16 %v1174, %v1173
  %v1399 = vpack.c.b16 %v1176, %v1175
  %v1400 = vpack.c.b16 %v1178, %v1177
  %v1401 = vpack.c.b16 %v1180, %v1179
  %v1402 = vpack.c.b16 %v1182, %v1181
  %v1403 = vpack.c.b16 %v1184, %v1183
  %v1404 = vpack.c.b16 %v1186, %v1185
  %v1405 = vpack.c.b16 %v1188, %v1187
  %v1406 = vpack.c.b16 %v1190, %v1189
  %v1407 = vpack.c.b16 %v1192, %v1191
  %v1408 = vpack.c.b16 %v1194, %v1193
  %v1409 = vpack.c.b16 %v1196, %v1195
  %v1410 = vpack.c.b16 %v1198, %v1197
  %v1411 = vpack.c.b16 %v1200, %v1199
  %v1412 = vpack.c.b16 %v1202, %v1201
  %v1413 = vpack.c.b16 %v1204, %v1203
  %v1414 = vpack.c.b16 %v1206, %v1205
  %v1415 = vpack.c.b16 %v1208, %v1207
  %v1416 = vpack.c.b16 %v1210, %v1209
  %v1417 = vpack.c.b16 %v1212, %v1211
  %v1418 = vpack.c.b16 %v1214, %v1213
  %v1419 = vpack.c.b16 %v1216, %v1215
  %v1420 = vpack.c.b16 %v1218, %v1217
  %v1421 = vpack.c.b16 %v1220, %v1219
  %v1422 = vpack.c.b16 %v1222, %v1221
  %v1423 = vpack.c.b16 %v1224, %v1223
  %v1424 = vpack.c.b16 %v1226, %v1225
  %v1425 = vpack.c.b16 %v1228, %v1227
  %v1426 = vpack.c.b16 %v1230, %v1229
  %v1639 = vunpack.c.l.b16 %v431
  %v1640 = vunpack.c.l.b16 %v432
  %v1641 = vunpack.c.l.b16 %v433
  %v1642 = vunpack.c.l.b16 %v434
  %v1643 = vunpack.c.l.b16 %v435
  %v1644 = vunpack.c.l.b16 %v436
  %v1645 = vunpack.c.l.b16 %v437
  %v1646 = vunpack.c.l.b16 %v438
  %v1647 = vunpack.c.l.b16 %v439
  %v1648 = vunpack.c.l.b16 %v440
  %v1649 = vunpack.c.l.b16 %v441
  %v1650 = vunpack.c.l.b16 %v442
  %v1651 = vunpack.c.l.b16 %v443
  %v1652 = vunpack.c.l.b16 %v444
  %v1653 = vunpack.c.l.b16 %v445
  %v1654 = vunpack.c.l.b16 %v446
  %v1655 = vpack.c.b16 %v1640, %v1639
  %v1656 = vpack.c.b16 %v1642, %v1641
  %v1657 = vpack.c.b16 %v1644, %v1643
  %v1658 = vpack.c.b16 %v1646, %v1645
  %v1659 = vpack.c.b16 %v1648, %v1647
  %v1660 = vpack.c.b16 %v1650, %v1649
  %v1661 = vpack.c.b16 %v1652, %v1651
  %v1662 = vpack.c.b16 %v1654, %v1653
  %1671 = vmatprep.subr.bf16.mxu0 0
  %1672 = vmatpush1.bf16.msra.mxu0 %v1655
  %1673 = vmatprep.subr.bf16.mxu0 0
  %1674 = vmatpush1.bf16.msra.mxu0 %v1656
  %1675 = vmatprep.subr.bf16.mxu0 0
  %1676 = vmatpush1.bf16.msra.mxu0 %v1657
  %1677 = vmatprep.subr.bf16.mxu0 0
  %1678 = vmatpush1.bf16.msra.mxu0 %v1658
  %1679 = vmatprep.subr.bf16.mxu0 0
  %1680 = vmatpush1.bf16.msra.mxu0 %v1659
  %1681 = vmatprep.subr.bf16.mxu0 0
  %1682 = vmatpush1.bf16.msra.mxu0 %v1660
  %1683 = vmatprep.subr.bf16.mxu0 0
  %1684 = vmatpush1.bf16.msra.mxu0 %v1661
  %1685 = vmatprep.subr.bf16.mxu0 0
  %1686 = vmatpush1.bf16.msra.mxu0 %v1662
  %1687 = vmatprep.subr.bf16.mxu0 0
  %1688 = vmatpush1.bf16.msra.mxu0 0
  %1689 = vmatprep.subr.bf16.mxu0 0
  %1690 = vmatpush1.bf16.msra.mxu0 0
  %1691 = vmatprep.subr.bf16.mxu0 0
  %1692 = vmatpush1.bf16.msra.mxu0 0
  %1693 = vmatprep.subr.bf16.mxu0 0
  %1694 = vmatpush1.bf16.msra.mxu0 0
  %1695 = vmatprep.subr.bf16.mxu0 0
  %1696 = vmatpush1.bf16.msra.mxu0 0
  %1697 = vmatprep.subr.bf16.mxu0 0
  %1698 = vmatpush1.bf16.msra.mxu0 0
  %1699 = vmatprep.subr.bf16.mxu0 0
  %1700 = vmatpush1.bf16.msra.mxu0 0
  %1701 = vmatprep.subr.bf16.mxu0 0
  %1702 = vmatpush1.bf16.msra.mxu0 0
  %1703 = vmatprep.mubr.bf16.mxu0 0
  %1704 = vmatmul.mubr.bf16.gmra.mrb[0].mxu0 %v1231
  %v1705 = vpop.f32.mrb[0].mxu0
  %v1706 = vadd.f32 0.0, %v1705
  %v1707 = vpop.f32.mrb[0].mxu0
  %v1708 = vpop.f32.mrb[0].mxu0
  %v1709 = vadd.f32 0.0, %v1708
  %v1710 = vpop.f32.mrb[0].mxu0
  %1711 = vmatprep.mubr.bf16.mxu0 0
  %1712 = vmatmul.mubr.bf16.gmra.mrb[0].mxu0 %v1232
  %v1713 = vpop.f32.mrb[0].mxu0
  %v1714 = vadd.f32 0.0, %v1713
  %v1715 = vpop.f32.mrb[0].mxu0
  %v1716 = vpop.f32.mrb[0].mxu0
  %v1717 = vadd.f32 0.0, %v1716
  %v1718 = vpop.f32.mrb[0].mxu0
  %1719 = vmatprep.mubr.bf16.mxu0 0
  %1720 = vmatmul.mubr.bf16.gmra.mrb[0].mxu0 %v1233
  %v1721 = vpop.f32.mrb[0].mxu0
  %v1722 = vadd.f32 0.0, %v1721
  %v1723 = vpop.f32.mrb[0].mxu0
  %v1724 = vpop.f32.mrb[0].mxu0
  %v1725 = vadd.f32 0.0, %v1724
  %v1726 = vpop.f32.mrb[0].mxu0
  %1727 = vmatprep.mubr.bf16.mxu0 0
  %1728 = vmatmul.mubr.bf16.gmra.mrb[0].mxu0 %v1234
  %v1729 = vpop.f32.mrb[0].mxu0
  %v1730 = vadd.f32 0.0, %v1729
  %v1731 = vpop.f32.mrb[0].mxu0
  %v1732 = vpop.f32.mrb[0].mxu0
  %v1733 = vadd.f32 0.0, %v1732
  %v1734 = vpop.f32.mrb[0].mxu0
  %1735 = vmatprep.mubr.bf16.mxu0 0
  %1736 = vmatmul.mubr.bf16.gmra.mrb[0].mxu0 %v1235
  %v1737 = vpop.f32.mrb[0].mxu0
  %v1738 = vadd.f32 0.0, %v1737
  %v1739 = vpop.f32.mrb[0].mxu0
  %v1740 = vpop.f32.mrb[0].mxu0
  %v1741 = vadd.f32 0.0, %v1740
  %v1742 = vpop.f32.mrb[0].mxu0
  %1743 = vmatprep.mubr.bf16.mxu0 0
  %1744 = vmatmul.mubr.bf16.gmra.mrb[0].mxu0 %v1236
  %v1745 = vpop.f32.mrb[0].mxu0
  %v1746 = vadd.f32 0.0, %v1745
  %v1747 = vpop.f32.mrb[0].mxu0
  %v1748 = vpop.f32.mrb[0].mxu0
  %v1749 = vadd.f32 0.0, %v1748
  %v1750 = vpop.f32.mrb[0].mxu0
  %1751 = vmatprep.mubr.bf16.mxu0 0
  %1752 = vmatmul.mubr.bf16.gmra.mrb[0].mxu0 %v1237
  %v1753 = vpop.f32.mrb[0].mxu0
  %v1754 = vadd.f32 0.0, %v1753
  %v1755 = vpop.f32.mrb[0].mxu0
  %v1756 = vpop.f32.mrb[0].mxu0
  %v1757 = vadd.f32 0.0, %v1756
  %v1758 = vpop.f32.mrb[0].mxu0
  %1759 = vmatprep.mubr.bf16.mxu0 0
  %1760 = vmatmul.mubr.bf16.gmra.mrb[0].mxu0 %v1238
  %v1761 = vpop.f32.mrb[0].mxu0
  %v1762 = vadd.f32 0.0, %v1761
  %v1763 = vpop.f32.mrb[0].mxu0
  %v1764 = vpop.f32.mrb[0].mxu0
  %v1765 = vadd.f32 0.0, %v1764
  %v1766 = vpop.f32.mrb[0].mxu0
  %1767 = vmatprep.mubr.bf16.mxu0 0
  %1768 = vmatmul.mubr.bf16.gmra.mrb[0].mxu0 %v1239
  %v1769 = vpop.f32.mrb[0].mxu0
  %v1770 = vadd.f32 0.0, %v1769
  %v1771 = vpop.f32.mrb[0].mxu0
  %v1772 = vpop.f32.mrb[0].mxu0
  %v1773 = vadd.f32 0.0, %v1772
  %v1774 = vpop.f32.mrb[0].mxu0
  %1775 = vmatprep.mubr.bf16.mxu0 0
  %1776 = vmatmul.mubr.bf16.gmra.mrb[0].mxu0 %v1240
  %v1777 = vpop.f32.mrb[0].mxu0
  %v1778 = vadd.f32 0.0, %v1777
  %v1779 = vpop.f32.mrb[0].mxu0
  %v1780 = vpop.f32.mrb[0].mxu0
  %v1781 = vadd.f32 0.0, %v1780
  %v1782 = vpop.f32.mrb[0].mxu0
  %1783 = vmatprep.mubr.bf16.mxu0 0
  %1784 = vmatmul.mubr.bf16.gmra.mrb[0].mxu0 %v1241
  %v1785 = vpop.f32.mrb[0].mxu0
  %v1786 = vadd.f32 0.0, %v1785
  %v1787 = vpop.f32.mrb[0].mxu0
  %v1788 = vpop.f32.mrb[0].mxu0
  %v1789 = vadd.f32 0.0, %v1788
  %v1790 = vpop.f32.mrb[0].mxu0
  %1791 = vmatprep.mubr.bf16.mxu0 0
  %1792 = vmatmul.mubr.bf16.gmra.mrb[0].mxu0 %v1242
  %v1793 = vpop.f32.mrb[0].mxu0
  %v1794 = vadd.f32 0.0, %v1793
  %v1795 = vpop.f32.mrb[0].mxu0
  %v1796 = vpop.f32.mrb[0].mxu0
  %v1797 = vadd.f32 0.0, %v1796
  %v1798 = vpop.f32.mrb[0].mxu0
  %1799 = vmatprep.mubr.bf16.mxu0 0
  %1800 = vmatmul.mubr.bf16.gmra.mrb[0].mxu0 %v1243
  %v1801 = vpop.f32.mrb[0].mxu0
  %v1802 = vadd.f32 0.0, %v1801
  %v1803 = vpop.f32.mrb[0].mxu0
  %v1804 = vpop.f32.mrb[0].mxu0
  %v1805 = vadd.f32 0.0, %v1804
  %v1806 = vpop.f32.mrb[0].mxu0
  %1807 = vmatprep.mubr.bf16.mxu0 0
  %1808 = vmatmul.mubr.bf16.gmra.mrb[0].mxu0 %v1244
  %v1809 = vpop.f32.mrb[0].mxu0
  %v1810 = vadd.f32 0.0, %v1809
  %v1811 = vpop.f32.mrb[0].mxu0
  %v1812 = vpop.f32.mrb[0].mxu0
  %v1813 = vadd.f32 0.0, %v1812
  %v1814 = vpop.f32.mrb[0].mxu0
  %1815 = vmatprep.mubr.bf16.mxu0 0
  %1816 = vmatmul.mubr.bf16.gmra.mrb[0].mxu0 %v1245
  %v1817 = vpop.f32.mrb[0].mxu0
  %v1818 = vadd.f32 0.0, %v1817
  %v1819 = vpop.f32.mrb[0].mxu0
  %v1820 = vpop.f32.mrb[0].mxu0
  %v1821 = vadd.f32 0.0, %v1820
  %v1822 = vpop.f32.mrb[0].mxu0
  %1823 = vmatprep.mubr.bf16.mxu0 0
  %1824 = vmatmul.mubr.bf16.gmra.mrb[0].mxu0 %v1246
  %v1825 = vpop.f32.mrb[0].mxu0
  %v1826 = vadd.f32 0.0, %v1825
  %v1827 = vpop.f32.mrb[0].mxu0
  %v1828 = vpop.f32.mrb[0].mxu0
  %v1829 = vadd.f32 0.0, %v1828
  %v1830 = vpop.f32.mrb[0].mxu0
  %1831 = vmatprep.mubr.bf16.mxu0 0
  %1832 = vmatmul.mubr.bf16.gmra.mrb[0].mxu0 %v1247
  %v1833 = vpop.f32.mrb[0].mxu0
  %v1834 = vadd.f32 0.0, %v1833
  %v1835 = vpop.f32.mrb[0].mxu0
  %v1836 = vpop.f32.mrb[0].mxu0
  %v1837 = vadd.f32 0.0, %v1836
  %v1838 = vpop.f32.mrb[0].mxu0
  %1839 = vmatprep.mubr.bf16.mxu0 0
  %1840 = vmatmul.mubr.bf16.gmra.mrb[0].mxu0 %v1248
  %v1841 = vpop.f32.mrb[0].mxu0
  %v1842 = vadd.f32 0.0, %v1841
  %v1843 = vpop.f32.mrb[0].mxu0
  %v1844 = vpop.f32.mrb[0].mxu0
  %v1845 = vadd.f32 0.0, %v1844
  %v1846 = vpop.f32.mrb[0].mxu0
  %1847 = vmatprep.mubr.bf16.mxu0 0
  %1848 = vmatmul.mubr.bf16.gmra.mrb[0].mxu0 %v1249
  %v1849 = vpop.f32.mrb[0].mxu0
  %v1850 = vadd.f32 0.0, %v1849
  %v1851 = vpop.f32.mrb[0].mxu0
  %v1852 = vpop.f32.mrb[0].mxu0
  %v1853 = vadd.f32 0.0, %v1852
  %v1854 = vpop.f32.mrb[0].mxu0
  %1855 = vmatprep.mubr.bf16.mxu0 0
  %1856 = vmatmul.mubr.bf16.gmra.mrb[0].mxu0 %v1250
  %v1857 = vpop.f32.mrb[0].mxu0
  %v1858 = vadd.f32 0.0, %v1857
  %v1859 = vpop.f32.mrb[0].mxu0
  %v1860 = vpop.f32.mrb[0].mxu0
  %v1861 = vadd.f32 0.0, %v1860
  %v1862 = vpop.f32.mrb[0].mxu0
  %1863 = vmatprep.mubr.bf16.mxu0 0
  %1864 = vmatmul.mubr.bf16.gmra.mrb[0].mxu0 %v1251
  %v1865 = vpop.f32.mrb[0].mxu0
  %v1866 = vadd.f32 0.0, %v1865
  %v1867 = vpop.f32.mrb[0].mxu0
  %v1868 = vpop.f32.mrb[0].mxu0
  %v1869 = vadd.f32 0.0, %v1868
  %v1870 = vpop.f32.mrb[0].mxu0
  %1871 = vmatprep.mubr.bf16.mxu0 0
  %1872 = vmatmul.mubr.bf16.gmra.mrb[0].mxu0 %v1252
  %v1873 = vpop.f32.mrb[0].mxu0
  %v1874 = vadd.f32 0.0, %v1873
  %v1875 = vpop.f32.mrb[0].mxu0
  %v1876 = vpop.f32.mrb[0].mxu0
  %v1877 = vadd.f32 0.0, %v1876
  %v1878 = vpop.f32.mrb[0].mxu0
  %1879 = vmatprep.mubr.bf16.mxu0 0
  %1880 = vmatmul.mubr.bf16.gmra.mrb[0].mxu0 %v1253
  %v1881 = vpop.f32.mrb[0].mxu0
  %v1882 = vadd.f32 0.0, %v1881
  %v1883 = vpop.f32.mrb[0].mxu0
  %v1884 = vpop.f32.mrb[0].mxu0
  %v1885 = vadd.f32 0.0, %v1884
  %v1886 = vpop.f32.mrb[0].mxu0
  %1887 = vmatprep.mubr.bf16.mxu0 0
  %1888 = vmatmul.mubr.bf16.gmra.mrb[0].mxu0 %v1254
  %v1889 = vpop.f32.mrb[0].mxu0
  %v1890 = vadd.f32 0.0, %v1889
  %v1891 = vpop.f32.mrb[0].mxu0
  %v1892 = vpop.f32.mrb[0].mxu0
  %v1893 = vadd.f32 0.0, %v1892
  %v1894 = vpop.f32.mrb[0].mxu0
  %1895 = vmatprep.mubr.bf16.mxu0 0
  %1896 = vmatmul.mubr.bf16.gmra.mrb[0].mxu0 %v1255
  %v1897 = vpop.f32.mrb[0].mxu0
  %v1898 = vadd.f32 0.0, %v1897
  %v1899 = vpop.f32.mrb[0].mxu0
  %v1900 = vpop.f32.mrb[0].mxu0
  %v1901 = vadd.f32 0.0, %v1900
  %v1902 = vpop.f32.mrb[0].mxu0
  %1903 = vmatprep.mubr.bf16.mxu0 0
  %1904 = vmatmul.mubr.bf16.gmra.mrb[0].mxu0 %v1256
  %v1905 = vpop.f32.mrb[0].mxu0
  %v1906 = vadd.f32 0.0, %v1905
  %v1907 = vpop.f32.mrb[0].mxu0
  %v1908 = vpop.f32.mrb[0].mxu0
  %v1909 = vadd.f32 0.0, %v1908
  %v1910 = vpop.f32.mrb[0].mxu0
  %1911 = vmatprep.mubr.bf16.mxu0 0
  %1912 = vmatmul.mubr.bf16.gmra.mrb[0].mxu0 %v1257
  %v1913 = vpop.f32.mrb[0].mxu0
  %v1914 = vadd.f32 0.0, %v1913
  %v1915 = vpop.f32.mrb[0].mxu0
  %v1916 = vpop.f32.mrb[0].mxu0
  %v1917 = vadd.f32 0.0, %v1916
  %v1918 = vpop.f32.mrb[0].mxu0
  %1919 = vmatprep.mubr.bf16.mxu0 0
  %1920 = vmatmul.mubr.bf16.gmra.mrb[0].mxu0 %v1258
  %v1921 = vpop.f32.mrb[0].mxu0
  %v1922 = vadd.f32 0.0, %v1921
  %v1923 = vpop.f32.mrb[0].mxu0
  %v1924 = vpop.f32.mrb[0].mxu0
  %v1925 = vadd.f32 0.0, %v1924
  %v1926 = vpop.f32.mrb[0].mxu0
  %1927 = vmatprep.mubr.bf16.mxu0 0
  %1928 = vmatmul.mubr.bf16.gmra.mrb[0].mxu0 %v1259
  %v1929 = vpop.f32.mrb[0].mxu0
  %v1930 = vadd.f32 0.0, %v1929
  %v1931 = vpop.f32.mrb[0].mxu0
  %v1932 = vpop.f32.mrb[0].mxu0
  %v1933 = vadd.f32 0.0, %v1932
  %v1934 = vpop.f32.mrb[0].mxu0
  %1935 = vmatprep.mubr.bf16.mxu0 0
  %1936 = vmatmul.mubr.bf16.gmra.mrb[0].mxu0 %v1260
  %v1937 = vpop.f32.mrb[0].mxu0
  %v1938 = vadd.f32 0.0, %v1937
  %v1939 = vpop.f32.mrb[0].mxu0
  %v1940 = vpop.f32.mrb[0].mxu0
  %v1941 = vadd.f32 0.0, %v1940
  %v1942 = vpop.f32.mrb[0].mxu0
  %1943 = vmatprep.mubr.bf16.mxu0 0
  %1944 = vmatmul.mubr.bf16.gmra.mrb[0].mxu0 %v1261
  %v1945 = vpop.f32.mrb[0].mxu0
  %v1946 = vadd.f32 0.0, %v1945
  %v1947 = vpop.f32.mrb[0].mxu0
  %v1948 = vpop.f32.mrb[0].mxu0
  %v1949 = vadd.f32 0.0, %v1948
  %v1950 = vpop.f32.mrb[0].mxu0
  %1951 = vmatprep.mubr.bf16.mxu0 0
  %1952 = vmatmul.mubr.bf16.gmra.mrb[0].mxu0 %v1262
  %v1953 = vpop.f32.mrb[0].mxu0
  %v1954 = vadd.f32 0.0, %v1953
  %v1955 = vpop.f32.mrb[0].mxu0
  %v1956 = vpop.f32.mrb[0].mxu0
  %v1957 = vadd.f32 0.0, %v1956
  %v1958 = vpop.f32.mrb[0].mxu0
  %1959 = vmatprep.mubr.bf16.mxu0 0
  %1960 = vmatmul.mubr.bf16.gmra.mrb[0].mxu0 %v1263
  %v1961 = vpop.f32.mrb[0].mxu0
  %v1962 = vadd.f32 0.0, %v1961
  %v1963 = vpop.f32.mrb[0].mxu0
  %v1964 = vpop.f32.mrb[0].mxu0
  %v1965 = vadd.f32 0.0, %v1964
  %v1966 = vpop.f32.mrb[0].mxu0
  %1967 = vmatprep.mubr.bf16.mxu0 0
  %1968 = vmatmul.mubr.bf16.gmra.mrb[0].mxu0 %v1264
  %v1969 = vpop.f32.mrb[0].mxu0
  %v1970 = vadd.f32 0.0, %v1969
  %v1971 = vpop.f32.mrb[0].mxu0
  %v1972 = vpop.f32.mrb[0].mxu0
  %v1973 = vadd.f32 0.0, %v1972
  %v1974 = vpop.f32.mrb[0].mxu0
  %1975 = vmatprep.mubr.bf16.mxu0 0
  %1976 = vmatmul.mubr.bf16.gmra.mrb[0].mxu0 %v1265
  %v1977 = vpop.f32.mrb[0].mxu0
  %v1978 = vadd.f32 0.0, %v1977
  %v1979 = vpop.f32.mrb[0].mxu0
  %v1980 = vpop.f32.mrb[0].mxu0
  %v1981 = vadd.f32 0.0, %v1980
  %v1982 = vpop.f32.mrb[0].mxu0
  %1983 = vmatprep.mubr.bf16.mxu0 0
  %1984 = vmatmul.mubr.bf16.gmra.mrb[0].mxu0 %v1266
  %v1985 = vpop.f32.mrb[0].mxu0
  %v1986 = vadd.f32 0.0, %v1985
  %v1987 = vpop.f32.mrb[0].mxu0
  %v1988 = vpop.f32.mrb[0].mxu0
  %v1989 = vadd.f32 0.0, %v1988
  %v1990 = vpop.f32.mrb[0].mxu0
  %1991 = vmatprep.mubr.bf16.mxu0 0
  %1992 = vmatmul.mubr.bf16.gmra.mrb[0].mxu0 %v1267
  %v1993 = vpop.f32.mrb[0].mxu0
  %v1994 = vadd.f32 0.0, %v1993
  %v1995 = vpop.f32.mrb[0].mxu0
  %v1996 = vpop.f32.mrb[0].mxu0
  %v1997 = vadd.f32 0.0, %v1996
  %v1998 = vpop.f32.mrb[0].mxu0
  %1999 = vmatprep.mubr.bf16.mxu0 0
  %2000 = vmatmul.mubr.bf16.gmra.mrb[0].mxu0 %v1268
  %v2001 = vpop.f32.mrb[0].mxu0
  %v2002 = vadd.f32 0.0, %v2001
  %v2003 = vpop.f32.mrb[0].mxu0
  %v2004 = vpop.f32.mrb[0].mxu0
  %v2005 = vadd.f32 0.0, %v2004
  %v2006 = vpop.f32.mrb[0].mxu0
  %2007 = vmatprep.mubr.bf16.mxu0 0
  %2008 = vmatmul.mubr.bf16.gmra.mrb[0].mxu0 %v1269
  %v2009 = vpop.f32.mrb[0].mxu0
  %v2010 = vadd.f32 0.0, %v2009
  %v2011 = vpop.f32.mrb[0].mxu0
  %v2012 = vpop.f32.mrb[0].mxu0
  %v2013 = vadd.f32 0.0, %v2012
  %v2014 = vpop.f32.mrb[0].mxu0
  %2015 = vmatprep.mubr.bf16.mxu0 0
  %2016 = vmatmul.mubr.bf16.gmra.mrb[0].mxu0 %v1270
  %v2017 = vpop.f32.mrb[0].mxu0
  %v2018 = vadd.f32 0.0, %v2017
  %v2019 = vpop.f32.mrb[0].mxu0
  %v2020 = vpop.f32.mrb[0].mxu0
  %v2021 = vadd.f32 0.0, %v2020
  %v2022 = vpop.f32.mrb[0].mxu0
  %2023 = vmatprep.mubr.bf16.mxu0 0
  %2024 = vmatmul.mubr.bf16.gmra.mrb[0].mxu0 %v1271
  %v2025 = vpop.f32.mrb[0].mxu0
  %v2026 = vadd.f32 0.0, %v2025
  %v2027 = vpop.f32.mrb[0].mxu0
  %v2028 = vpop.f32.mrb[0].mxu0
  %v2029 = vadd.f32 0.0, %v2028
  %v2030 = vpop.f32.mrb[0].mxu0
  %2031 = vmatprep.mubr.bf16.mxu0 0
  %2032 = vmatmul.mubr.bf16.gmra.mrb[0].mxu0 %v1272
  %v2033 = vpop.f32.mrb[0].mxu0
  %v2034 = vadd.f32 0.0, %v2033
  %v2035 = vpop.f32.mrb[0].mxu0
  %v2036 = vpop.f32.mrb[0].mxu0
  %v2037 = vadd.f32 0.0, %v2036
  %v2038 = vpop.f32.mrb[0].mxu0
  %2039 = vmatprep.mubr.bf16.mxu0 0
  %2040 = vmatmul.mubr.bf16.gmra.mrb[0].mxu0 %v1273
  %v2041 = vpop.f32.mrb[0].mxu0
  %v2042 = vadd.f32 0.0, %v2041
  %v2043 = vpop.f32.mrb[0].mxu0
  %v2044 = vpop.f32.mrb[0].mxu0
  %v2045 = vadd.f32 0.0, %v2044
  %v2046 = vpop.f32.mrb[0].mxu0
  %2047 = vmatprep.mubr.bf16.mxu0 0
  %2048 = vmatmul.mubr.bf16.gmra.mrb[0].mxu0 %v1274
  %v2049 = vpop.f32.mrb[0].mxu0
  %v2050 = vadd.f32 0.0, %v2049
  %v2051 = vpop.f32.mrb[0].mxu0
  %v2052 = vpop.f32.mrb[0].mxu0
  %v2053 = vadd.f32 0.0, %v2052
  %v2054 = vpop.f32.mrb[0].mxu0
  %2055 = vmatprep.mubr.bf16.mxu0 0
  %2056 = vmatmul.mubr.bf16.gmra.mrb[0].mxu0 %v1275
  %v2057 = vpop.f32.mrb[0].mxu0
  %v2058 = vadd.f32 0.0, %v2057
  %v2059 = vpop.f32.mrb[0].mxu0
  %v2060 = vpop.f32.mrb[0].mxu0
  %v2061 = vadd.f32 0.0, %v2060
  %v2062 = vpop.f32.mrb[0].mxu0
  %2063 = vmatprep.mubr.bf16.mxu0 0
  %2064 = vmatmul.mubr.bf16.gmra.mrb[0].mxu0 %v1276
  %v2065 = vpop.f32.mrb[0].mxu0
  %v2066 = vadd.f32 0.0, %v2065
  %v2067 = vpop.f32.mrb[0].mxu0
  %v2068 = vpop.f32.mrb[0].mxu0
  %v2069 = vadd.f32 0.0, %v2068
  %v2070 = vpop.f32.mrb[0].mxu0
  %2071 = vmatprep.mubr.bf16.mxu0 0
  %2072 = vmatmul.mubr.bf16.gmra.mrb[0].mxu0 %v1277
  %v2073 = vpop.f32.mrb[0].mxu0
  %v2074 = vadd.f32 0.0, %v2073
  %v2075 = vpop.f32.mrb[0].mxu0
  %v2076 = vpop.f32.mrb[0].mxu0
  %v2077 = vadd.f32 0.0, %v2076
  %v2078 = vpop.f32.mrb[0].mxu0
  %2079 = vmatprep.mubr.bf16.mxu0 0
  %2080 = vmatmul.mubr.bf16.gmra.mrb[0].mxu0 %v1278
  %v2081 = vpop.f32.mrb[0].mxu0
  %v2082 = vadd.f32 0.0, %v2081
  %v2083 = vpop.f32.mrb[0].mxu0
  %v2084 = vpop.f32.mrb[0].mxu0
  %v2085 = vadd.f32 0.0, %v2084
  %v2086 = vpop.f32.mrb[0].mxu0
  %2087 = vmatprep.mubr.bf16.mxu0 0
  %2088 = vmatmul.mubr.bf16.gmra.mrb[0].mxu0 %v1279
  %v2089 = vpop.f32.mrb[0].mxu0
  %v2090 = vadd.f32 0.0, %v2089
  %v2091 = vpop.f32.mrb[0].mxu0
  %v2092 = vpop.f32.mrb[0].mxu0
  %v2093 = vadd.f32 0.0, %v2092
  %v2094 = vpop.f32.mrb[0].mxu0
  %2095 = vmatprep.mubr.bf16.mxu0 0
  %2096 = vmatmul.mubr.bf16.gmra.mrb[0].mxu0 %v1280
  %v2097 = vpop.f32.mrb[0].mxu0
  %v2098 = vadd.f32 0.0, %v2097
  %v2099 = vpop.f32.mrb[0].mxu0
  %v2100 = vpop.f32.mrb[0].mxu0
  %v2101 = vadd.f32 0.0, %v2100
  %v2102 = vpop.f32.mrb[0].mxu0
  %2103 = vmatprep.mubr.bf16.mxu0 0
  %2104 = vmatmul.mubr.bf16.gmra.mrb[0].mxu0 %v1281
  %v2105 = vpop.f32.mrb[0].mxu0
  %v2106 = vadd.f32 0.0, %v2105
  %v2107 = vpop.f32.mrb[0].mxu0
  %v2108 = vpop.f32.mrb[0].mxu0
  %v2109 = vadd.f32 0.0, %v2108
  %v2110 = vpop.f32.mrb[0].mxu0
  %2111 = vmatprep.mubr.bf16.mxu0 0
  %2112 = vmatmul.mubr.bf16.gmra.mrb[0].mxu0 %v1282
  %v2113 = vpop.f32.mrb[0].mxu0
  %v2114 = vadd.f32 0.0, %v2113
  %v2115 = vpop.f32.mrb[0].mxu0
  %v2116 = vpop.f32.mrb[0].mxu0
  %v2117 = vadd.f32 0.0, %v2116
  %v2118 = vpop.f32.mrb[0].mxu0
  %2119 = vmatprep.mubr.bf16.mxu0 0
  %2120 = vmatmul.mubr.bf16.gmra.mrb[0].mxu0 %v1283
  %v2121 = vpop.f32.mrb[0].mxu0
  %v2122 = vadd.f32 0.0, %v2121
  %v2123 = vpop.f32.mrb[0].mxu0
  %v2124 = vpop.f32.mrb[0].mxu0
  %v2125 = vadd.f32 0.0, %v2124
  %v2126 = vpop.f32.mrb[0].mxu0
  %2127 = vmatprep.mubr.bf16.mxu0 0
  %2128 = vmatmul.mubr.bf16.gmra.mrb[0].mxu0 %v1284
  %v2129 = vpop.f32.mrb[0].mxu0
  %v2130 = vadd.f32 0.0, %v2129
  %v2131 = vpop.f32.mrb[0].mxu0
  %v2132 = vpop.f32.mrb[0].mxu0
  %v2133 = vadd.f32 0.0, %v2132
  %v2134 = vpop.f32.mrb[0].mxu0
  %2135 = vmatprep.mubr.bf16.mxu0 0
  %2136 = vmatmul.mubr.bf16.gmra.mrb[0].mxu0 %v1285
  %v2137 = vpop.f32.mrb[0].mxu0
  %v2138 = vadd.f32 0.0, %v2137
  %v2139 = vpop.f32.mrb[0].mxu0
  %v2140 = vpop.f32.mrb[0].mxu0
  %v2141 = vadd.f32 0.0, %v2140
  %v2142 = vpop.f32.mrb[0].mxu0
  %2143 = vmatprep.mubr.bf16.mxu0 0
  %2144 = vmatmul.mubr.bf16.gmra.mrb[0].mxu0 %v1286
  %v2145 = vpop.f32.mrb[0].mxu0
  %v2146 = vadd.f32 0.0, %v2145
  %v2147 = vpop.f32.mrb[0].mxu0
  %v2148 = vpop.f32.mrb[0].mxu0
  %v2149 = vadd.f32 0.0, %v2148
  %v2150 = vpop.f32.mrb[0].mxu0
  %2151 = vmatprep.mubr.bf16.mxu0 0
  %2152 = vmatmul.mubr.bf16.gmra.mrb[0].mxu0 %v1287
  %v2153 = vpop.f32.mrb[0].mxu0
  %v2154 = vadd.f32 0.0, %v2153
  %v2155 = vpop.f32.mrb[0].mxu0
  %v2156 = vpop.f32.mrb[0].mxu0
  %v2157 = vadd.f32 0.0, %v2156
  %v2158 = vpop.f32.mrb[0].mxu0
  %2159 = vmatprep.mubr.bf16.mxu0 0
  %2160 = vmatmul.mubr.bf16.gmra.mrb[0].mxu0 %v1288
  %v2161 = vpop.f32.mrb[0].mxu0
  %v2162 = vadd.f32 0.0, %v2161
  %v2163 = vpop.f32.mrb[0].mxu0
  %v2164 = vpop.f32.mrb[0].mxu0
  %v2165 = vadd.f32 0.0, %v2164
  %v2166 = vpop.f32.mrb[0].mxu0
  %2167 = vmatprep.mubr.bf16.mxu0 0
  %2168 = vmatmul.mubr.bf16.gmra.mrb[0].mxu0 %v1289
  %v2169 = vpop.f32.mrb[0].mxu0
  %v2170 = vadd.f32 0.0, %v2169
  %v2171 = vpop.f32.mrb[0].mxu0
  %v2172 = vpop.f32.mrb[0].mxu0
  %v2173 = vadd.f32 0.0, %v2172
  %v2174 = vpop.f32.mrb[0].mxu0
  %2175 = vmatprep.mubr.bf16.mxu0 0
  %2176 = vmatmul.mubr.bf16.gmra.mrb[0].mxu0 %v1290
  %v2177 = vpop.f32.mrb[0].mxu0
  %v2178 = vadd.f32 0.0, %v2177
  %v2179 = vpop.f32.mrb[0].mxu0
  %v2180 = vpop.f32.mrb[0].mxu0
  %v2181 = vadd.f32 0.0, %v2180
  %v2182 = vpop.f32.mrb[0].mxu0
  %2183 = vmatprep.mubr.bf16.mxu0 0
  %2184 = vmatmul.mubr.bf16.gmra.mrb[0].mxu0 %v1291
  %v2185 = vpop.f32.mrb[0].mxu0
  %v2186 = vadd.f32 0.0, %v2185
  %v2187 = vpop.f32.mrb[0].mxu0
  %v2188 = vpop.f32.mrb[0].mxu0
  %v2189 = vadd.f32 0.0, %v2188
  %v2190 = vpop.f32.mrb[0].mxu0
  %2191 = vmatprep.mubr.bf16.mxu0 0
  %2192 = vmatmul.mubr.bf16.gmra.mrb[0].mxu0 %v1292
  %v2193 = vpop.f32.mrb[0].mxu0
  %v2194 = vadd.f32 0.0, %v2193
  %v2195 = vpop.f32.mrb[0].mxu0
  %v2196 = vpop.f32.mrb[0].mxu0
  %v2197 = vadd.f32 0.0, %v2196
  %v2198 = vpop.f32.mrb[0].mxu0
  %2199 = vmatprep.mubr.bf16.mxu0 0
  %2200 = vmatmul.mubr.bf16.gmra.mrb[0].mxu0 %v1293
  %v2201 = vpop.f32.mrb[0].mxu0
  %v2202 = vadd.f32 0.0, %v2201
  %v2203 = vpop.f32.mrb[0].mxu0
  %v2204 = vpop.f32.mrb[0].mxu0
  %v2205 = vadd.f32 0.0, %v2204
  %v2206 = vpop.f32.mrb[0].mxu0
  %2207 = vmatprep.mubr.bf16.mxu0 0
  %2208 = vmatmul.mubr.bf16.gmra.mrb[0].mxu0 %v1294
  %v2209 = vpop.f32.mrb[0].mxu0
  %v2210 = vadd.f32 0.0, %v2209
  %v2211 = vpop.f32.mrb[0].mxu0
  %v2212 = vpop.f32.mrb[0].mxu0
  %v2213 = vadd.f32 0.0, %v2212
  %v2214 = vpop.f32.mrb[0].mxu0
  %2215 = vmatprep.mubr.bf16.mxu0 0
  %2216 = vmatmul.mubr.bf16.gmra.mrb[0].mxu0 %v1295
  %v2217 = vpop.f32.mrb[0].mxu0
  %v2218 = vadd.f32 0.0, %v2217
  %v2219 = vpop.f32.mrb[0].mxu0
  %v2220 = vpop.f32.mrb[0].mxu0
  %v2221 = vadd.f32 0.0, %v2220
  %v2222 = vpop.f32.mrb[0].mxu0
  %2223 = vmatprep.mubr.bf16.mxu0 0
  %2224 = vmatmul.mubr.bf16.gmra.mrb[0].mxu0 %v1296
  %v2225 = vpop.f32.mrb[0].mxu0
  %v2226 = vadd.f32 0.0, %v2225
  %v2227 = vpop.f32.mrb[0].mxu0
  %v2228 = vpop.f32.mrb[0].mxu0
  %v2229 = vadd.f32 0.0, %v2228
  %v2230 = vpop.f32.mrb[0].mxu0
  %2231 = vmatprep.mubr.bf16.mxu0 0
  %2232 = vmatmul.mubr.bf16.gmra.mrb[0].mxu0 %v1297
  %v2233 = vpop.f32.mrb[0].mxu0
  %v2234 = vadd.f32 0.0, %v2233
  %v2235 = vpop.f32.mrb[0].mxu0
  %v2236 = vpop.f32.mrb[0].mxu0
  %v2237 = vadd.f32 0.0, %v2236
  %v2238 = vpop.f32.mrb[0].mxu0
  %2239 = vmatprep.mubr.bf16.mxu0 0
  %2240 = vmatmul.mubr.bf16.gmra.mrb[0].mxu0 %v1298
  %v2241 = vpop.f32.mrb[0].mxu0
  %v2242 = vadd.f32 0.0, %v2241
  %v2243 = vpop.f32.mrb[0].mxu0
  %v2244 = vpop.f32.mrb[0].mxu0
  %v2245 = vadd.f32 0.0, %v2244
  %v2246 = vpop.f32.mrb[0].mxu0
  %2247 = vmatprep.mubr.bf16.mxu0 0
  %2248 = vmatmul.mubr.bf16.gmra.mrb[0].mxu0 %v1299
  %v2249 = vpop.f32.mrb[0].mxu0
  %v2250 = vadd.f32 0.0, %v2249
  %v2251 = vpop.f32.mrb[0].mxu0
  %v2252 = vpop.f32.mrb[0].mxu0
  %v2253 = vadd.f32 0.0, %v2252
  %v2254 = vpop.f32.mrb[0].mxu0
  %2255 = vmatprep.mubr.bf16.mxu0 0
  %2256 = vmatmul.mubr.bf16.gmra.mrb[0].mxu0 %v1300
  %v2257 = vpop.f32.mrb[0].mxu0
  %v2258 = vadd.f32 0.0, %v2257
  %v2259 = vpop.f32.mrb[0].mxu0
  %v2260 = vpop.f32.mrb[0].mxu0
  %v2261 = vadd.f32 0.0, %v2260
  %v2262 = vpop.f32.mrb[0].mxu0
  %2263 = vmatprep.mubr.bf16.mxu0 0
  %2264 = vmatmul.mubr.bf16.gmra.mrb[0].mxu0 %v1301
  %v2265 = vpop.f32.mrb[0].mxu0
  %v2266 = vadd.f32 0.0, %v2265
  %v2267 = vpop.f32.mrb[0].mxu0
  %v2268 = vpop.f32.mrb[0].mxu0
  %v2269 = vadd.f32 0.0, %v2268
  %v2270 = vpop.f32.mrb[0].mxu0
  %2271 = vmatprep.mubr.bf16.mxu0 0
  %2272 = vmatmul.mubr.bf16.gmra.mrb[0].mxu0 %v1302
  %v2273 = vpop.f32.mrb[0].mxu0
  %v2274 = vadd.f32 0.0, %v2273
  %v2275 = vpop.f32.mrb[0].mxu0
  %v2276 = vpop.f32.mrb[0].mxu0
  %v2277 = vadd.f32 0.0, %v2276
  %v2278 = vpop.f32.mrb[0].mxu0
  %2279 = vmatprep.mubr.bf16.mxu0 0
  %2280 = vmatmul.mubr.bf16.gmra.mrb[0].mxu0 %v1303
  %v2281 = vpop.f32.mrb[0].mxu0
  %v2282 = vadd.f32 0.0, %v2281
  %v2283 = vpop.f32.mrb[0].mxu0
  %v2284 = vpop.f32.mrb[0].mxu0
  %v2285 = vadd.f32 0.0, %v2284
  %v2286 = vpop.f32.mrb[0].mxu0
  %2287 = vmatprep.mubr.bf16.mxu0 0
  %2288 = vmatmul.mubr.bf16.gmra.mrb[0].mxu0 %v1304
  %v2289 = vpop.f32.mrb[0].mxu0
  %v2290 = vadd.f32 0.0, %v2289
  %v2291 = vpop.f32.mrb[0].mxu0
  %v2292 = vpop.f32.mrb[0].mxu0
  %v2293 = vadd.f32 0.0, %v2292
  %v2294 = vpop.f32.mrb[0].mxu0
  %2295 = vmatprep.mubr.bf16.mxu0 0
  %2296 = vmatmul.mubr.bf16.gmra.mrb[0].mxu0 %v1305
  %v2297 = vpop.f32.mrb[0].mxu0
  %v2298 = vadd.f32 0.0, %v2297
  %v2299 = vpop.f32.mrb[0].mxu0
  %v2300 = vpop.f32.mrb[0].mxu0
  %v2301 = vadd.f32 0.0, %v2300
  %v2302 = vpop.f32.mrb[0].mxu0
  %2303 = vmatprep.mubr.bf16.mxu0 0
  %2304 = vmatmul.mubr.bf16.gmra.mrb[0].mxu0 %v1306
  %v2305 = vpop.f32.mrb[0].mxu0
  %v2306 = vadd.f32 0.0, %v2305
  %v2307 = vpop.f32.mrb[0].mxu0
  %v2308 = vpop.f32.mrb[0].mxu0
  %v2309 = vadd.f32 0.0, %v2308
  %v2310 = vpop.f32.mrb[0].mxu0
  %2311 = vmatprep.mubr.bf16.mxu0 0
  %2312 = vmatmul.mubr.bf16.gmra.mrb[0].mxu0 %v1307
  %v2313 = vpop.f32.mrb[0].mxu0
  %v2314 = vadd.f32 0.0, %v2313
  %v2315 = vpop.f32.mrb[0].mxu0
  %v2316 = vpop.f32.mrb[0].mxu0
  %v2317 = vadd.f32 0.0, %v2316
  %v2318 = vpop.f32.mrb[0].mxu0
  %2319 = vmatprep.mubr.bf16.mxu0 0
  %2320 = vmatmul.mubr.bf16.gmra.mrb[0].mxu0 %v1308
  %v2321 = vpop.f32.mrb[0].mxu0
  %v2322 = vadd.f32 0.0, %v2321
  %v2323 = vpop.f32.mrb[0].mxu0
  %v2324 = vpop.f32.mrb[0].mxu0
  %v2325 = vadd.f32 0.0, %v2324
  %v2326 = vpop.f32.mrb[0].mxu0
  %2327 = vmatprep.mubr.bf16.mxu0 0
  %2328 = vmatmul.mubr.bf16.gmra.mrb[0].mxu0 %v1309
  %v2329 = vpop.f32.mrb[0].mxu0
  %v2330 = vadd.f32 0.0, %v2329
  %v2331 = vpop.f32.mrb[0].mxu0
  %v2332 = vpop.f32.mrb[0].mxu0
  %v2333 = vadd.f32 0.0, %v2332
  %v2334 = vpop.f32.mrb[0].mxu0
  %2335 = vmatprep.mubr.bf16.mxu0 0
  %2336 = vmatmul.mubr.bf16.gmra.mrb[0].mxu0 %v1310
  %v2337 = vpop.f32.mrb[0].mxu0
  %v2338 = vadd.f32 0.0, %v2337
  %v2339 = vpop.f32.mrb[0].mxu0
  %v2340 = vpop.f32.mrb[0].mxu0
  %v2341 = vadd.f32 0.0, %v2340
  %v2342 = vpop.f32.mrb[0].mxu0
  %2343 = vmatprep.mubr.bf16.mxu0 0
  %2344 = vmatmul.mubr.bf16.gmra.mrb[0].mxu0 %v1311
  %v2345 = vpop.f32.mrb[0].mxu0
  %v2346 = vadd.f32 0.0, %v2345
  %v2347 = vpop.f32.mrb[0].mxu0
  %v2348 = vpop.f32.mrb[0].mxu0
  %v2349 = vadd.f32 0.0, %v2348
  %v2350 = vpop.f32.mrb[0].mxu0
  %2351 = vmatprep.mubr.bf16.mxu0 0
  %2352 = vmatmul.mubr.bf16.gmra.mrb[0].mxu0 %v1312
  %v2353 = vpop.f32.mrb[0].mxu0
  %v2354 = vadd.f32 0.0, %v2353
  %v2355 = vpop.f32.mrb[0].mxu0
  %v2356 = vpop.f32.mrb[0].mxu0
  %v2357 = vadd.f32 0.0, %v2356
  %v2358 = vpop.f32.mrb[0].mxu0
  %2359 = vmatprep.mubr.bf16.mxu0 0
  %2360 = vmatmul.mubr.bf16.gmra.mrb[0].mxu0 %v1313
  %v2361 = vpop.f32.mrb[0].mxu0
  %v2362 = vadd.f32 0.0, %v2361
  %v2363 = vpop.f32.mrb[0].mxu0
  %v2364 = vpop.f32.mrb[0].mxu0
  %v2365 = vadd.f32 0.0, %v2364
  %v2366 = vpop.f32.mrb[0].mxu0
  %2367 = vmatprep.mubr.bf16.mxu0 0
  %2368 = vmatmul.mubr.bf16.gmra.mrb[0].mxu0 %v1314
  %v2369 = vpop.f32.mrb[0].mxu0
  %v2370 = vadd.f32 0.0, %v2369
  %v2371 = vpop.f32.mrb[0].mxu0
  %v2372 = vpop.f32.mrb[0].mxu0
  %v2373 = vadd.f32 0.0, %v2372
  %v2374 = vpop.f32.mrb[0].mxu0
  %2375 = vmatprep.mubr.bf16.mxu0 0
  %2376 = vmatmul.mubr.bf16.gmra.mrb[0].mxu0 %v1315
  %v2377 = vpop.f32.mrb[0].mxu0
  %v2378 = vadd.f32 0.0, %v2377
  %v2379 = vpop.f32.mrb[0].mxu0
  %v2380 = vpop.f32.mrb[0].mxu0
  %v2381 = vadd.f32 0.0, %v2380
  %v2382 = vpop.f32.mrb[0].mxu0
  %2383 = vmatprep.mubr.bf16.mxu0 0
  %2384 = vmatmul.mubr.bf16.gmra.mrb[0].mxu0 %v1316
  %v2385 = vpop.f32.mrb[0].mxu0
  %v2386 = vadd.f32 0.0, %v2385
  %v2387 = vpop.f32.mrb[0].mxu0
  %v2388 = vpop.f32.mrb[0].mxu0
  %v2389 = vadd.f32 0.0, %v2388
  %v2390 = vpop.f32.mrb[0].mxu0
  %2391 = vmatprep.mubr.bf16.mxu0 0
  %2392 = vmatmul.mubr.bf16.gmra.mrb[0].mxu0 %v1317
  %v2393 = vpop.f32.mrb[0].mxu0
  %v2394 = vadd.f32 0.0, %v2393
  %v2395 = vpop.f32.mrb[0].mxu0
  %v2396 = vpop.f32.mrb[0].mxu0
  %v2397 = vadd.f32 0.0, %v2396
  %v2398 = vpop.f32.mrb[0].mxu0
  %2399 = vmatprep.mubr.bf16.mxu0 0
  %2400 = vmatmul.mubr.bf16.gmra.mrb[0].mxu0 %v1318
  %v2401 = vpop.f32.mrb[0].mxu0
  %v2402 = vadd.f32 0.0, %v2401
  %v2403 = vpop.f32.mrb[0].mxu0
  %v2404 = vpop.f32.mrb[0].mxu0
  %v2405 = vadd.f32 0.0, %v2404
  %v2406 = vpop.f32.mrb[0].mxu0
  %2407 = vmatprep.mubr.bf16.mxu0 0
  %2408 = vmatmul.mubr.bf16.gmra.mrb[0].mxu0 %v1319
  %v2409 = vpop.f32.mrb[0].mxu0
  %v2410 = vadd.f32 0.0, %v2409
  %v2411 = vpop.f32.mrb[0].mxu0
  %v2412 = vpop.f32.mrb[0].mxu0
  %v2413 = vadd.f32 0.0, %v2412
  %v2414 = vpop.f32.mrb[0].mxu0
  %2415 = vmatprep.mubr.bf16.mxu0 0
  %2416 = vmatmul.mubr.bf16.gmra.mrb[0].mxu0 %v1320
  %v2417 = vpop.f32.mrb[0].mxu0
  %v2418 = vadd.f32 0.0, %v2417
  %v2419 = vpop.f32.mrb[0].mxu0
  %v2420 = vpop.f32.mrb[0].mxu0
  %v2421 = vadd.f32 0.0, %v2420
  %v2422 = vpop.f32.mrb[0].mxu0
  %2423 = vmatprep.mubr.bf16.mxu0 0
  %2424 = vmatmul.mubr.bf16.gmra.mrb[0].mxu0 %v1321
  %v2425 = vpop.f32.mrb[0].mxu0
  %v2426 = vadd.f32 0.0, %v2425
  %v2427 = vpop.f32.mrb[0].mxu0
  %v2428 = vpop.f32.mrb[0].mxu0
  %v2429 = vadd.f32 0.0, %v2428
  %v2430 = vpop.f32.mrb[0].mxu0
  %2431 = vmatprep.mubr.bf16.mxu0 0
  %2432 = vmatmul.mubr.bf16.gmra.mrb[0].mxu0 %v1322
  %v2433 = vpop.f32.mrb[0].mxu0
  %v2434 = vadd.f32 0.0, %v2433
  %v2435 = vpop.f32.mrb[0].mxu0
  %v2436 = vpop.f32.mrb[0].mxu0
  %v2437 = vadd.f32 0.0, %v2436
  %v2438 = vpop.f32.mrb[0].mxu0
  %2439 = vmatprep.mubr.bf16.mxu0 0
  %2440 = vmatmul.mubr.bf16.gmra.mrb[0].mxu0 %v1323
  %v2441 = vpop.f32.mrb[0].mxu0
  %v2442 = vadd.f32 0.0, %v2441
  %v2443 = vpop.f32.mrb[0].mxu0
  %v2444 = vpop.f32.mrb[0].mxu0
  %v2445 = vadd.f32 0.0, %v2444
  %v2446 = vpop.f32.mrb[0].mxu0
  %2447 = vmatprep.mubr.bf16.mxu0 0
  %2448 = vmatmul.mubr.bf16.gmra.mrb[0].mxu0 %v1324
  %v2449 = vpop.f32.mrb[0].mxu0
  %v2450 = vadd.f32 0.0, %v2449
  %v2451 = vpop.f32.mrb[0].mxu0
  %v2452 = vpop.f32.mrb[0].mxu0
  %v2453 = vadd.f32 0.0, %v2452
  %v2454 = vpop.f32.mrb[0].mxu0
  %2455 = vmatprep.mubr.bf16.mxu0 0
  %2456 = vmatmul.mubr.bf16.gmra.mrb[0].mxu0 %v1325
  %v2457 = vpop.f32.mrb[0].mxu0
  %v2458 = vadd.f32 0.0, %v2457
  %v2459 = vpop.f32.mrb[0].mxu0
  %v2460 = vpop.f32.mrb[0].mxu0
  %v2461 = vadd.f32 0.0, %v2460
  %v2462 = vpop.f32.mrb[0].mxu0
  %2463 = vmatprep.mubr.bf16.mxu0 0
  %2464 = vmatmul.mubr.bf16.gmra.mrb[0].mxu0 %v1326
  %v2465 = vpop.f32.mrb[0].mxu0
  %v2466 = vadd.f32 0.0, %v2465
  %v2467 = vpop.f32.mrb[0].mxu0
  %v2468 = vpop.f32.mrb[0].mxu0
  %v2469 = vadd.f32 0.0, %v2468
  %v2470 = vpop.f32.mrb[0].mxu0
  %2471 = vmatprep.mubr.bf16.mxu0 0
  %2472 = vmatmul.mubr.bf16.gmra.mrb[0].mxu0 %v1327
  %v2473 = vpop.f32.mrb[0].mxu0
  %v2474 = vadd.f32 0.0, %v2473
  %v2475 = vpop.f32.mrb[0].mxu0
  %v2476 = vpop.f32.mrb[0].mxu0
  %v2477 = vadd.f32 0.0, %v2476
  %v2478 = vpop.f32.mrb[0].mxu0
  %2479 = vmatprep.mubr.bf16.mxu0 0
  %2480 = vmatmul.mubr.bf16.gmra.mrb[0].mxu0 %v1328
  %v2481 = vpop.f32.mrb[0].mxu0
  %v2482 = vadd.f32 0.0, %v2481
  %v2483 = vpop.f32.mrb[0].mxu0
  %v2484 = vpop.f32.mrb[0].mxu0
  %v2485 = vadd.f32 0.0, %v2484
  %v2486 = vpop.f32.mrb[0].mxu0
  %2487 = vmatprep.mubr.bf16.mxu0 0
  %2488 = vmatmul.mubr.bf16.gmra.mrb[0].mxu0 %v1329
  %v2489 = vpop.f32.mrb[0].mxu0
  %v2490 = vadd.f32 0.0, %v2489
  %v2491 = vpop.f32.mrb[0].mxu0
  %v2492 = vpop.f32.mrb[0].mxu0
  %v2493 = vadd.f32 0.0, %v2492
  %v2494 = vpop.f32.mrb[0].mxu0
  %2495 = vmatprep.mubr.bf16.mxu0 0
  %2496 = vmatmul.mubr.bf16.gmra.mrb[0].mxu0 %v1330
  %v2497 = vpop.f32.mrb[0].mxu0
  %v2498 = vadd.f32 0.0, %v2497
  %v2499 = vpop.f32.mrb[0].mxu0
  %v2500 = vpop.f32.mrb[0].mxu0
  %v2501 = vadd.f32 0.0, %v2500
  %v2502 = vpop.f32.mrb[0].mxu0
  %2503 = vmatprep.mubr.bf16.mxu0 0
  %2504 = vmatmul.mubr.bf16.gmra.mrb[0].mxu0 %v1331
  %v2505 = vpop.f32.mrb[0].mxu0
  %v2506 = vadd.f32 0.0, %v2505
  %v2507 = vpop.f32.mrb[0].mxu0
  %v2508 = vpop.f32.mrb[0].mxu0
  %v2509 = vadd.f32 0.0, %v2508
  %v2510 = vpop.f32.mrb[0].mxu0
  %2511 = vmatprep.mubr.bf16.mxu0 0
  %2512 = vmatmul.mubr.bf16.gmra.mrb[0].mxu0 %v1332
  %v2513 = vpop.f32.mrb[0].mxu0
  %v2514 = vadd.f32 0.0, %v2513
  %v2515 = vpop.f32.mrb[0].mxu0
  %v2516 = vpop.f32.mrb[0].mxu0
  %v2517 = vadd.f32 0.0, %v2516
  %v2518 = vpop.f32.mrb[0].mxu0
  %2519 = vmatprep.mubr.bf16.mxu0 0
  %2520 = vmatmul.mubr.bf16.gmra.mrb[0].mxu0 %v1333
  %v2521 = vpop.f32.mrb[0].mxu0
  %v2522 = vadd.f32 0.0, %v2521
  %v2523 = vpop.f32.mrb[0].mxu0
  %v2524 = vpop.f32.mrb[0].mxu0
  %v2525 = vadd.f32 0.0, %v2524
  %v2526 = vpop.f32.mrb[0].mxu0
  %2527 = vmatprep.mubr.bf16.mxu0 0
  %2528 = vmatmul.mubr.bf16.gmra.mrb[0].mxu0 %v1334
  %v2529 = vpop.f32.mrb[0].mxu0
  %v2530 = vadd.f32 0.0, %v2529
  %v2531 = vpop.f32.mrb[0].mxu0
  %v2532 = vpop.f32.mrb[0].mxu0
  %v2533 = vadd.f32 0.0, %v2532
  %v2534 = vpop.f32.mrb[0].mxu0
  %2535 = vmatprep.mubr.bf16.mxu0 0
  %2536 = vmatmul.mubr.bf16.gmra.mrb[0].mxu0 %v1335
  %v2537 = vpop.f32.mrb[0].mxu0
  %v2538 = vadd.f32 0.0, %v2537
  %v2539 = vpop.f32.mrb[0].mxu0
  %v2540 = vpop.f32.mrb[0].mxu0
  %v2541 = vadd.f32 0.0, %v2540
  %v2542 = vpop.f32.mrb[0].mxu0
  %2543 = vmatprep.mubr.bf16.mxu0 0
  %2544 = vmatmul.mubr.bf16.gmra.mrb[0].mxu0 %v1336
  %v2545 = vpop.f32.mrb[0].mxu0
  %v2546 = vadd.f32 0.0, %v2545
  %v2547 = vpop.f32.mrb[0].mxu0
  %v2548 = vpop.f32.mrb[0].mxu0
  %v2549 = vadd.f32 0.0, %v2548
  %v2550 = vpop.f32.mrb[0].mxu0
  %2551 = vmatprep.mubr.bf16.mxu0 0
  %2552 = vmatmul.mubr.bf16.gmra.mrb[0].mxu0 %v1337
  %v2553 = vpop.f32.mrb[0].mxu0
  %v2554 = vadd.f32 0.0, %v2553
  %v2555 = vpop.f32.mrb[0].mxu0
  %v2556 = vpop.f32.mrb[0].mxu0
  %v2557 = vadd.f32 0.0, %v2556
  %v2558 = vpop.f32.mrb[0].mxu0
  %2559 = vmatprep.mubr.bf16.mxu0 0
  %2560 = vmatmul.mubr.bf16.gmra.mrb[0].mxu0 %v1338
  %v2561 = vpop.f32.mrb[0].mxu0
  %v2562 = vadd.f32 0.0, %v2561
  %v2563 = vpop.f32.mrb[0].mxu0
  %v2564 = vpop.f32.mrb[0].mxu0
  %v2565 = vadd.f32 0.0, %v2564
  %v2566 = vpop.f32.mrb[0].mxu0
  %2567 = vmatprep.mubr.bf16.mxu0 0
  %2568 = vmatmul.mubr.bf16.gmra.mrb[0].mxu0 %v1339
  %v2569 = vpop.f32.mrb[0].mxu0
  %v2570 = vadd.f32 0.0, %v2569
  %v2571 = vpop.f32.mrb[0].mxu0
  %v2572 = vpop.f32.mrb[0].mxu0
  %v2573 = vadd.f32 0.0, %v2572
  %v2574 = vpop.f32.mrb[0].mxu0
  %2575 = vmatprep.mubr.bf16.mxu0 0
  %2576 = vmatmul.mubr.bf16.gmra.mrb[0].mxu0 %v1340
  %v2577 = vpop.f32.mrb[0].mxu0
  %v2578 = vadd.f32 0.0, %v2577
  %v2579 = vpop.f32.mrb[0].mxu0
  %v2580 = vpop.f32.mrb[0].mxu0
  %v2581 = vadd.f32 0.0, %v2580
  %v2582 = vpop.f32.mrb[0].mxu0
  %2583 = vmatprep.mubr.bf16.mxu0 0
  %2584 = vmatmul.mubr.bf16.gmra.mrb[0].mxu0 %v1341
  %v2585 = vpop.f32.mrb[0].mxu0
  %v2586 = vadd.f32 0.0, %v2585
  %v2587 = vpop.f32.mrb[0].mxu0
  %v2588 = vpop.f32.mrb[0].mxu0
  %v2589 = vadd.f32 0.0, %v2588
  %v2590 = vpop.f32.mrb[0].mxu0
  %2591 = vmatprep.mubr.bf16.mxu0 0
  %2592 = vmatmul.mubr.bf16.gmra.mrb[0].mxu0 %v1342
  %v2593 = vpop.f32.mrb[0].mxu0
  %v2594 = vadd.f32 0.0, %v2593
  %v2595 = vpop.f32.mrb[0].mxu0
  %v2596 = vpop.f32.mrb[0].mxu0
  %v2597 = vadd.f32 0.0, %v2596
  %v2598 = vpop.f32.mrb[0].mxu0
  %2599 = vmatprep.mubr.bf16.mxu0 0
  %2600 = vmatmul.mubr.bf16.gmra.mrb[0].mxu0 %v1343
  %v2601 = vpop.f32.mrb[0].mxu0
  %v2602 = vadd.f32 0.0, %v2601
  %v2603 = vpop.f32.mrb[0].mxu0
  %v2604 = vpop.f32.mrb[0].mxu0
  %v2605 = vadd.f32 0.0, %v2604
  %v2606 = vpop.f32.mrb[0].mxu0
  %2607 = vmatprep.mubr.bf16.mxu0 0
  %2608 = vmatmul.mubr.bf16.gmra.mrb[0].mxu0 %v1344
  %v2609 = vpop.f32.mrb[0].mxu0
  %v2610 = vadd.f32 0.0, %v2609
  %v2611 = vpop.f32.mrb[0].mxu0
  %v2612 = vpop.f32.mrb[0].mxu0
  %v2613 = vadd.f32 0.0, %v2612
  %v2614 = vpop.f32.mrb[0].mxu0
  %2615 = vmatprep.mubr.bf16.mxu0 0
  %2616 = vmatmul.mubr.bf16.gmra.mrb[0].mxu0 %v1345
  %v2617 = vpop.f32.mrb[0].mxu0
  %v2618 = vadd.f32 0.0, %v2617
  %v2619 = vpop.f32.mrb[0].mxu0
  %v2620 = vpop.f32.mrb[0].mxu0
  %v2621 = vadd.f32 0.0, %v2620
  %v2622 = vpop.f32.mrb[0].mxu0
  %2623 = vmatprep.mubr.bf16.mxu0 0
  %2624 = vmatmul.mubr.bf16.gmra.mrb[0].mxu0 %v1346
  %v2625 = vpop.f32.mrb[0].mxu0
  %v2626 = vadd.f32 0.0, %v2625
  %v2627 = vpop.f32.mrb[0].mxu0
  %v2628 = vpop.f32.mrb[0].mxu0
  %v2629 = vadd.f32 0.0, %v2628
  %v2630 = vpop.f32.mrb[0].mxu0
  %2631 = vmatprep.mubr.bf16.mxu0 0
  %2632 = vmatmul.mubr.bf16.gmra.mrb[0].mxu0 %v1347
  %v2633 = vpop.f32.mrb[0].mxu0
  %v2634 = vadd.f32 0.0, %v2633
  %v2635 = vpop.f32.mrb[0].mxu0
  %v2636 = vpop.f32.mrb[0].mxu0
  %v2637 = vadd.f32 0.0, %v2636
  %v2638 = vpop.f32.mrb[0].mxu0
  %2639 = vmatprep.mubr.bf16.mxu0 0
  %2640 = vmatmul.mubr.bf16.gmra.mrb[0].mxu0 %v1348
  %v2641 = vpop.f32.mrb[0].mxu0
  %v2642 = vadd.f32 0.0, %v2641
  %v2643 = vpop.f32.mrb[0].mxu0
  %v2644 = vpop.f32.mrb[0].mxu0
  %v2645 = vadd.f32 0.0, %v2644
  %v2646 = vpop.f32.mrb[0].mxu0
  %2647 = vmatprep.mubr.bf16.mxu0 0
  %2648 = vmatmul.mubr.bf16.gmra.mrb[0].mxu0 %v1349
  %v2649 = vpop.f32.mrb[0].mxu0
  %v2650 = vadd.f32 0.0, %v2649
  %v2651 = vpop.f32.mrb[0].mxu0
  %v2652 = vpop.f32.mrb[0].mxu0
  %v2653 = vadd.f32 0.0, %v2652
  %v2654 = vpop.f32.mrb[0].mxu0
  %2655 = vmatprep.mubr.bf16.mxu0 0
  %2656 = vmatmul.mubr.bf16.gmra.mrb[0].mxu0 %v1350
  %v2657 = vpop.f32.mrb[0].mxu0
  %v2658 = vadd.f32 0.0, %v2657
  %v2659 = vpop.f32.mrb[0].mxu0
  %v2660 = vpop.f32.mrb[0].mxu0
  %v2661 = vadd.f32 0.0, %v2660
  %v2662 = vpop.f32.mrb[0].mxu0
  %2663 = vmatprep.mubr.bf16.mxu0 0
  %2664 = vmatmul.mubr.bf16.gmra.mrb[0].mxu0 %v1351
  %v2665 = vpop.f32.mrb[0].mxu0
  %v2666 = vadd.f32 0.0, %v2665
  %v2667 = vpop.f32.mrb[0].mxu0
  %v2668 = vpop.f32.mrb[0].mxu0
  %v2669 = vadd.f32 0.0, %v2668
  %v2670 = vpop.f32.mrb[0].mxu0
  %2671 = vmatprep.mubr.bf16.mxu0 0
  %2672 = vmatmul.mubr.bf16.gmra.mrb[0].mxu0 %v1352
  %v2673 = vpop.f32.mrb[0].mxu0
  %v2674 = vadd.f32 0.0, %v2673
  %v2675 = vpop.f32.mrb[0].mxu0
  %v2676 = vpop.f32.mrb[0].mxu0
  %v2677 = vadd.f32 0.0, %v2676
  %v2678 = vpop.f32.mrb[0].mxu0
  %2679 = vmatprep.mubr.bf16.mxu0 0
  %2680 = vmatmul.mubr.bf16.gmra.mrb[0].mxu0 %v1353
  %v2681 = vpop.f32.mrb[0].mxu0
  %v2682 = vadd.f32 0.0, %v2681
  %v2683 = vpop.f32.mrb[0].mxu0
  %v2684 = vpop.f32.mrb[0].mxu0
  %v2685 = vadd.f32 0.0, %v2684
  %v2686 = vpop.f32.mrb[0].mxu0
  %2687 = vmatprep.mubr.bf16.mxu0 0
  %2688 = vmatmul.mubr.bf16.gmra.mrb[0].mxu0 %v1354
  %v2689 = vpop.f32.mrb[0].mxu0
  %v2690 = vadd.f32 0.0, %v2689
  %v2691 = vpop.f32.mrb[0].mxu0
  %v2692 = vpop.f32.mrb[0].mxu0
  %v2693 = vadd.f32 0.0, %v2692
  %v2694 = vpop.f32.mrb[0].mxu0
  %2695 = vmatprep.mubr.bf16.mxu0 0
  %2696 = vmatmul.mubr.bf16.gmra.mrb[0].mxu0 %v1355
  %v2697 = vpop.f32.mrb[0].mxu0
  %v2698 = vadd.f32 0.0, %v2697
  %v2699 = vpop.f32.mrb[0].mxu0
  %v2700 = vpop.f32.mrb[0].mxu0
  %v2701 = vadd.f32 0.0, %v2700
  %v2702 = vpop.f32.mrb[0].mxu0
  %2703 = vmatprep.mubr.bf16.mxu0 0
  %2704 = vmatmul.mubr.bf16.gmra.mrb[0].mxu0 %v1356
  %v2705 = vpop.f32.mrb[0].mxu0
  %v2706 = vadd.f32 0.0, %v2705
  %v2707 = vpop.f32.mrb[0].mxu0
  %v2708 = vpop.f32.mrb[0].mxu0
  %v2709 = vadd.f32 0.0, %v2708
  %v2710 = vpop.f32.mrb[0].mxu0
  %2711 = vmatprep.mubr.bf16.mxu0 0
  %2712 = vmatmul.mubr.bf16.gmra.mrb[0].mxu0 %v1357
  %v2713 = vpop.f32.mrb[0].mxu0
  %v2714 = vadd.f32 0.0, %v2713
  %v2715 = vpop.f32.mrb[0].mxu0
  %v2716 = vpop.f32.mrb[0].mxu0
  %v2717 = vadd.f32 0.0, %v2716
  %v2718 = vpop.f32.mrb[0].mxu0
  %2719 = vmatprep.mubr.bf16.mxu0 0
  %2720 = vmatmul.mubr.bf16.gmra.mrb[0].mxu0 %v1358
  %v2721 = vpop.f32.mrb[0].mxu0
  %v2722 = vadd.f32 0.0, %v2721
  %v2723 = vpop.f32.mrb[0].mxu0
  %v2724 = vpop.f32.mrb[0].mxu0
  %v2725 = vadd.f32 0.0, %v2724
  %v2726 = vpop.f32.mrb[0].mxu0
  %2727 = vmatprep.mubr.bf16.mxu0 0
  %2728 = vmatmul.mubr.bf16.gmra.mrb[0].mxu0 %v1359
  %v2729 = vpop.f32.mrb[0].mxu0
  %v2730 = vadd.f32 0.0, %v2729
  %v2731 = vpop.f32.mrb[0].mxu0
  %v2732 = vpop.f32.mrb[0].mxu0
  %v2733 = vadd.f32 0.0, %v2732
  %v2734 = vpop.f32.mrb[0].mxu0
  %2735 = vmatprep.mubr.bf16.mxu0 0
  %2736 = vmatmul.mubr.bf16.gmra.mrb[0].mxu0 %v1360
  %v2737 = vpop.f32.mrb[0].mxu0
  %v2738 = vadd.f32 0.0, %v2737
  %v2739 = vpop.f32.mrb[0].mxu0
  %v2740 = vpop.f32.mrb[0].mxu0
  %v2741 = vadd.f32 0.0, %v2740
  %v2742 = vpop.f32.mrb[0].mxu0
  %2743 = vmatprep.mubr.bf16.mxu0 0
  %2744 = vmatmul.mubr.bf16.gmra.mrb[0].mxu0 %v1361
  %v2745 = vpop.f32.mrb[0].mxu0
  %v2746 = vadd.f32 0.0, %v2745
  %v2747 = vpop.f32.mrb[0].mxu0
  %v2748 = vpop.f32.mrb[0].mxu0
  %v2749 = vadd.f32 0.0, %v2748
  %v2750 = vpop.f32.mrb[0].mxu0
  %2751 = vmatprep.mubr.bf16.mxu0 0
  %2752 = vmatmul.mubr.bf16.gmra.mrb[0].mxu0 %v1362
  %v2753 = vpop.f32.mrb[0].mxu0
  %v2754 = vadd.f32 0.0, %v2753
  %v2755 = vpop.f32.mrb[0].mxu0
  %v2756 = vpop.f32.mrb[0].mxu0
  %v2757 = vadd.f32 0.0, %v2756
  %v2758 = vpop.f32.mrb[0].mxu0
  %2759 = vmatprep.mubr.bf16.mxu0 0
  %2760 = vmatmul.mubr.bf16.gmra.mrb[0].mxu0 %v1363
  %v2761 = vpop.f32.mrb[0].mxu0
  %v2762 = vadd.f32 0.0, %v2761
  %v2763 = vpop.f32.mrb[0].mxu0
  %v2764 = vpop.f32.mrb[0].mxu0
  %v2765 = vadd.f32 0.0, %v2764
  %v2766 = vpop.f32.mrb[0].mxu0
  %2767 = vmatprep.mubr.bf16.mxu0 0
  %2768 = vmatmul.mubr.bf16.gmra.mrb[0].mxu0 %v1364
  %v2769 = vpop.f32.mrb[0].mxu0
  %v2770 = vadd.f32 0.0, %v2769
  %v2771 = vpop.f32.mrb[0].mxu0
  %v2772 = vpop.f32.mrb[0].mxu0
  %v2773 = vadd.f32 0.0, %v2772
  %v2774 = vpop.f32.mrb[0].mxu0
  %2775 = vmatprep.mubr.bf16.mxu0 0
  %2776 = vmatmul.mubr.bf16.gmra.mrb[0].mxu0 %v1365
  %v2777 = vpop.f32.mrb[0].mxu0
  %v2778 = vadd.f32 0.0, %v2777
  %v2779 = vpop.f32.mrb[0].mxu0
  %v2780 = vpop.f32.mrb[0].mxu0
  %v2781 = vadd.f32 0.0, %v2780
  %v2782 = vpop.f32.mrb[0].mxu0
  %2783 = vmatprep.mubr.bf16.mxu0 0
  %2784 = vmatmul.mubr.bf16.gmra.mrb[0].mxu0 %v1366
  %v2785 = vpop.f32.mrb[0].mxu0
  %v2786 = vadd.f32 0.0, %v2785
  %v2787 = vpop.f32.mrb[0].mxu0
  %v2788 = vpop.f32.mrb[0].mxu0
  %v2789 = vadd.f32 0.0, %v2788
  %v2790 = vpop.f32.mrb[0].mxu0
  %2791 = vmatprep.mubr.bf16.mxu0 0
  %2792 = vmatmul.mubr.bf16.gmra.mrb[0].mxu0 %v1367
  %v2793 = vpop.f32.mrb[0].mxu0
  %v2794 = vadd.f32 0.0, %v2793
  %v2795 = vpop.f32.mrb[0].mxu0
  %v2796 = vpop.f32.mrb[0].mxu0
  %v2797 = vadd.f32 0.0, %v2796
  %v2798 = vpop.f32.mrb[0].mxu0
  %2799 = vmatprep.mubr.bf16.mxu0 0
  %2800 = vmatmul.mubr.bf16.gmra.mrb[0].mxu0 %v1368
  %v2801 = vpop.f32.mrb[0].mxu0
  %v2802 = vadd.f32 0.0, %v2801
  %v2803 = vpop.f32.mrb[0].mxu0
  %v2804 = vpop.f32.mrb[0].mxu0
  %v2805 = vadd.f32 0.0, %v2804
  %v2806 = vpop.f32.mrb[0].mxu0
  %2807 = vmatprep.mubr.bf16.mxu0 0
  %2808 = vmatmul.mubr.bf16.gmra.mrb[0].mxu0 %v1369
  %v2809 = vpop.f32.mrb[0].mxu0
  %v2810 = vadd.f32 0.0, %v2809
  %v2811 = vpop.f32.mrb[0].mxu0
  %v2812 = vpop.f32.mrb[0].mxu0
  %v2813 = vadd.f32 0.0, %v2812
  %v2814 = vpop.f32.mrb[0].mxu0
  %2815 = vmatprep.mubr.bf16.mxu0 0
  %2816 = vmatmul.mubr.bf16.gmra.mrb[0].mxu0 %v1370
  %v2817 = vpop.f32.mrb[0].mxu0
  %v2818 = vadd.f32 0.0, %v2817
  %v2819 = vpop.f32.mrb[0].mxu0
  %v2820 = vpop.f32.mrb[0].mxu0
  %v2821 = vadd.f32 0.0, %v2820
  %v2822 = vpop.f32.mrb[0].mxu0
  %2823 = vmatprep.mubr.bf16.mxu0 0
  %2824 = vmatmul.mubr.bf16.gmra.mrb[0].mxu0 %v1371
  %v2825 = vpop.f32.mrb[0].mxu0
  %v2826 = vadd.f32 0.0, %v2825
  %v2827 = vpop.f32.mrb[0].mxu0
  %v2828 = vpop.f32.mrb[0].mxu0
  %v2829 = vadd.f32 0.0, %v2828
  %v2830 = vpop.f32.mrb[0].mxu0
  %2831 = vmatprep.mubr.bf16.mxu0 0
  %2832 = vmatmul.mubr.bf16.gmra.mrb[0].mxu0 %v1372
  %v2833 = vpop.f32.mrb[0].mxu0
  %v2834 = vadd.f32 0.0, %v2833
  %v2835 = vpop.f32.mrb[0].mxu0
  %v2836 = vpop.f32.mrb[0].mxu0
  %v2837 = vadd.f32 0.0, %v2836
  %v2838 = vpop.f32.mrb[0].mxu0
  %2839 = vmatprep.mubr.bf16.mxu0 0
  %2840 = vmatmul.mubr.bf16.gmra.mrb[0].mxu0 %v1373
  %v2841 = vpop.f32.mrb[0].mxu0
  %v2842 = vadd.f32 0.0, %v2841
  %v2843 = vpop.f32.mrb[0].mxu0
  %v2844 = vpop.f32.mrb[0].mxu0
  %v2845 = vadd.f32 0.0, %v2844
  %v2846 = vpop.f32.mrb[0].mxu0
  %2847 = vmatprep.mubr.bf16.mxu0 0
  %2848 = vmatmul.mubr.bf16.gmra.mrb[0].mxu0 %v1374
  %v2849 = vpop.f32.mrb[0].mxu0
  %v2850 = vadd.f32 0.0, %v2849
  %v2851 = vpop.f32.mrb[0].mxu0
  %v2852 = vpop.f32.mrb[0].mxu0
  %v2853 = vadd.f32 0.0, %v2852
  %v2854 = vpop.f32.mrb[0].mxu0
  %2855 = vmatprep.mubr.bf16.mxu0 0
  %2856 = vmatmul.mubr.bf16.gmra.mrb[0].mxu0 %v1375
  %v2857 = vpop.f32.mrb[0].mxu0
  %v2858 = vadd.f32 0.0, %v2857
  %v2859 = vpop.f32.mrb[0].mxu0
  %v2860 = vpop.f32.mrb[0].mxu0
  %v2861 = vadd.f32 0.0, %v2860
  %v2862 = vpop.f32.mrb[0].mxu0
  %2863 = vmatprep.mubr.bf16.mxu0 0
  %2864 = vmatmul.mubr.bf16.gmra.mrb[0].mxu0 %v1376
  %v2865 = vpop.f32.mrb[0].mxu0
  %v2866 = vadd.f32 0.0, %v2865
  %v2867 = vpop.f32.mrb[0].mxu0
  %v2868 = vpop.f32.mrb[0].mxu0
  %v2869 = vadd.f32 0.0, %v2868
  %v2870 = vpop.f32.mrb[0].mxu0
  %2871 = vmatprep.mubr.bf16.mxu0 0
  %2872 = vmatmul.mubr.bf16.gmra.mrb[0].mxu0 %v1377
  %v2873 = vpop.f32.mrb[0].mxu0
  %v2874 = vadd.f32 0.0, %v2873
  %v2875 = vpop.f32.mrb[0].mxu0
  %v2876 = vpop.f32.mrb[0].mxu0
  %v2877 = vadd.f32 0.0, %v2876
  %v2878 = vpop.f32.mrb[0].mxu0
  %2879 = vmatprep.mubr.bf16.mxu0 0
  %2880 = vmatmul.mubr.bf16.gmra.mrb[0].mxu0 %v1378
  %v2881 = vpop.f32.mrb[0].mxu0
  %v2882 = vadd.f32 0.0, %v2881
  %v2883 = vpop.f32.mrb[0].mxu0
  %v2884 = vpop.f32.mrb[0].mxu0
  %v2885 = vadd.f32 0.0, %v2884
  %v2886 = vpop.f32.mrb[0].mxu0
  %2887 = vmatprep.mubr.bf16.mxu0 0
  %2888 = vmatmul.mubr.bf16.gmra.mrb[0].mxu0 %v1379
  %v2889 = vpop.f32.mrb[0].mxu0
  %v2890 = vadd.f32 0.0, %v2889
  %v2891 = vpop.f32.mrb[0].mxu0
  %v2892 = vpop.f32.mrb[0].mxu0
  %v2893 = vadd.f32 0.0, %v2892
  %v2894 = vpop.f32.mrb[0].mxu0
  %2895 = vmatprep.mubr.bf16.mxu0 0
  %2896 = vmatmul.mubr.bf16.gmra.mrb[0].mxu0 %v1380
  %v2897 = vpop.f32.mrb[0].mxu0
  %v2898 = vadd.f32 0.0, %v2897
  %v2899 = vpop.f32.mrb[0].mxu0
  %v2900 = vpop.f32.mrb[0].mxu0
  %v2901 = vadd.f32 0.0, %v2900
  %v2902 = vpop.f32.mrb[0].mxu0
  %2903 = vmatprep.mubr.bf16.mxu0 0
  %2904 = vmatmul.mubr.bf16.gmra.mrb[0].mxu0 %v1381
  %v2905 = vpop.f32.mrb[0].mxu0
  %v2906 = vadd.f32 0.0, %v2905
  %v2907 = vpop.f32.mrb[0].mxu0
  %v2908 = vpop.f32.mrb[0].mxu0
  %v2909 = vadd.f32 0.0, %v2908
  %v2910 = vpop.f32.mrb[0].mxu0
  %2911 = vmatprep.mubr.bf16.mxu0 0
  %2912 = vmatmul.mubr.bf16.gmra.mrb[0].mxu0 %v1382
  %v2913 = vpop.f32.mrb[0].mxu0
  %v2914 = vadd.f32 0.0, %v2913
  %v2915 = vpop.f32.mrb[0].mxu0
  %v2916 = vpop.f32.mrb[0].mxu0
  %v2917 = vadd.f32 0.0, %v2916
  %v2918 = vpop.f32.mrb[0].mxu0
  %2919 = vmatprep.mubr.bf16.mxu0 0
  %2920 = vmatmul.mubr.bf16.gmra.mrb[0].mxu0 %v1383
  %v2921 = vpop.f32.mrb[0].mxu0
  %v2922 = vadd.f32 0.0, %v2921
  %v2923 = vpop.f32.mrb[0].mxu0
  %v2924 = vpop.f32.mrb[0].mxu0
  %v2925 = vadd.f32 0.0, %v2924
  %v2926 = vpop.f32.mrb[0].mxu0
  %2927 = vmatprep.mubr.bf16.mxu0 0
  %2928 = vmatmul.mubr.bf16.gmra.mrb[0].mxu0 %v1384
  %v2929 = vpop.f32.mrb[0].mxu0
  %v2930 = vadd.f32 0.0, %v2929
  %v2931 = vpop.f32.mrb[0].mxu0
  %v2932 = vpop.f32.mrb[0].mxu0
  %v2933 = vadd.f32 0.0, %v2932
  %v2934 = vpop.f32.mrb[0].mxu0
  %2935 = vmatprep.mubr.bf16.mxu0 0
  %2936 = vmatmul.mubr.bf16.gmra.mrb[0].mxu0 %v1385
  %v2937 = vpop.f32.mrb[0].mxu0
  %v2938 = vadd.f32 0.0, %v2937
  %v2939 = vpop.f32.mrb[0].mxu0
  %v2940 = vpop.f32.mrb[0].mxu0
  %v2941 = vadd.f32 0.0, %v2940
  %v2942 = vpop.f32.mrb[0].mxu0
  %2943 = vmatprep.mubr.bf16.mxu0 0
  %2944 = vmatmul.mubr.bf16.gmra.mrb[0].mxu0 %v1386
  %v2945 = vpop.f32.mrb[0].mxu0
  %v2946 = vadd.f32 0.0, %v2945
  %v2947 = vpop.f32.mrb[0].mxu0
  %v2948 = vpop.f32.mrb[0].mxu0
  %v2949 = vadd.f32 0.0, %v2948
  %v2950 = vpop.f32.mrb[0].mxu0
  %2951 = vmatprep.mubr.bf16.mxu0 0
  %2952 = vmatmul.mubr.bf16.gmra.mrb[0].mxu0 %v1387
  %v2953 = vpop.f32.mrb[0].mxu0
  %v2954 = vadd.f32 0.0, %v2953
  %v2955 = vpop.f32.mrb[0].mxu0
  %v2956 = vpop.f32.mrb[0].mxu0
  %v2957 = vadd.f32 0.0, %v2956
  %v2958 = vpop.f32.mrb[0].mxu0
  %2959 = vmatprep.mubr.bf16.mxu0 0
  %2960 = vmatmul.mubr.bf16.gmra.mrb[0].mxu0 %v1388
  %v2961 = vpop.f32.mrb[0].mxu0
  %v2962 = vadd.f32 0.0, %v2961
  %v2963 = vpop.f32.mrb[0].mxu0
  %v2964 = vpop.f32.mrb[0].mxu0
  %v2965 = vadd.f32 0.0, %v2964
  %v2966 = vpop.f32.mrb[0].mxu0
  %2967 = vmatprep.mubr.bf16.mxu0 0
  %2968 = vmatmul.mubr.bf16.gmra.mrb[0].mxu0 %v1389
  %v2969 = vpop.f32.mrb[0].mxu0
  %v2970 = vadd.f32 0.0, %v2969
  %v2971 = vpop.f32.mrb[0].mxu0
  %v2972 = vpop.f32.mrb[0].mxu0
  %v2973 = vadd.f32 0.0, %v2972
  %v2974 = vpop.f32.mrb[0].mxu0
  %2975 = vmatprep.mubr.bf16.mxu0 0
  %2976 = vmatmul.mubr.bf16.gmra.mrb[0].mxu0 %v1390
  %v2977 = vpop.f32.mrb[0].mxu0
  %v2978 = vadd.f32 0.0, %v2977
  %v2979 = vpop.f32.mrb[0].mxu0
  %v2980 = vpop.f32.mrb[0].mxu0
  %v2981 = vadd.f32 0.0, %v2980
  %v2982 = vpop.f32.mrb[0].mxu0
  %2983 = vmatprep.mubr.bf16.mxu0 0
  %2984 = vmatmul.mubr.bf16.gmra.mrb[0].mxu0 %v1391
  %v2985 = vpop.f32.mrb[0].mxu0
  %v2986 = vadd.f32 0.0, %v2985
  %v2987 = vpop.f32.mrb[0].mxu0
  %v2988 = vpop.f32.mrb[0].mxu0
  %v2989 = vadd.f32 0.0, %v2988
  %v2990 = vpop.f32.mrb[0].mxu0
  %2991 = vmatprep.mubr.bf16.mxu0 0
  %2992 = vmatmul.mubr.bf16.gmra.mrb[0].mxu0 %v1392
  %v2993 = vpop.f32.mrb[0].mxu0
  %v2994 = vadd.f32 0.0, %v2993
  %v2995 = vpop.f32.mrb[0].mxu0
  %v2996 = vpop.f32.mrb[0].mxu0
  %v2997 = vadd.f32 0.0, %v2996
  %v2998 = vpop.f32.mrb[0].mxu0
  %2999 = vmatprep.mubr.bf16.mxu0 0
  %3000 = vmatmul.mubr.bf16.gmra.mrb[0].mxu0 %v1393
  %v3001 = vpop.f32.mrb[0].mxu0
  %v3002 = vadd.f32 0.0, %v3001
  %v3003 = vpop.f32.mrb[0].mxu0
  %v3004 = vpop.f32.mrb[0].mxu0
  %v3005 = vadd.f32 0.0, %v3004
  %v3006 = vpop.f32.mrb[0].mxu0
  %3007 = vmatprep.mubr.bf16.mxu0 0
  %3008 = vmatmul.mubr.bf16.gmra.mrb[0].mxu0 %v1394
  %v3009 = vpop.f32.mrb[0].mxu0
  %v3010 = vadd.f32 0.0, %v3009
  %v3011 = vpop.f32.mrb[0].mxu0
  %v3012 = vpop.f32.mrb[0].mxu0
  %v3013 = vadd.f32 0.0, %v3012
  %v3014 = vpop.f32.mrb[0].mxu0
  %3015 = vmatprep.mubr.bf16.mxu0 0
  %3016 = vmatmul.mubr.bf16.gmra.mrb[0].mxu0 %v1395
  %v3017 = vpop.f32.mrb[0].mxu0
  %v3018 = vadd.f32 0.0, %v3017
  %v3019 = vpop.f32.mrb[0].mxu0
  %v3020 = vpop.f32.mrb[0].mxu0
  %v3021 = vadd.f32 0.0, %v3020
  %v3022 = vpop.f32.mrb[0].mxu0
  %3023 = vmatprep.mubr.bf16.mxu0 0
  %3024 = vmatmul.mubr.bf16.gmra.mrb[0].mxu0 %v1396
  %v3025 = vpop.f32.mrb[0].mxu0
  %v3026 = vadd.f32 0.0, %v3025
  %v3027 = vpop.f32.mrb[0].mxu0
  %v3028 = vpop.f32.mrb[0].mxu0
  %v3029 = vadd.f32 0.0, %v3028
  %v3030 = vpop.f32.mrb[0].mxu0
  %3031 = vmatprep.mubr.bf16.mxu0 0
  %3032 = vmatmul.mubr.bf16.gmra.mrb[0].mxu0 %v1397
  %v3033 = vpop.f32.mrb[0].mxu0
  %v3034 = vadd.f32 0.0, %v3033
  %v3035 = vpop.f32.mrb[0].mxu0
  %v3036 = vpop.f32.mrb[0].mxu0
  %v3037 = vadd.f32 0.0, %v3036
  %v3038 = vpop.f32.mrb[0].mxu0
  %3039 = vmatprep.mubr.bf16.mxu0 0
  %3040 = vmatmul.mubr.bf16.gmra.mrb[0].mxu0 %v1398
  %v3041 = vpop.f32.mrb[0].mxu0
  %v3042 = vadd.f32 0.0, %v3041
  %v3043 = vpop.f32.mrb[0].mxu0
  %v3044 = vpop.f32.mrb[0].mxu0
  %v3045 = vadd.f32 0.0, %v3044
  %v3046 = vpop.f32.mrb[0].mxu0
  %3047 = vmatprep.mubr.bf16.mxu0 0
  %3048 = vmatmul.mubr.bf16.gmra.mrb[0].mxu0 %v1399
  %v3049 = vpop.f32.mrb[0].mxu0
  %v3050 = vadd.f32 0.0, %v3049
  %v3051 = vpop.f32.mrb[0].mxu0
  %v3052 = vpop.f32.mrb[0].mxu0
  %v3053 = vadd.f32 0.0, %v3052
  %v3054 = vpop.f32.mrb[0].mxu0
  %3055 = vmatprep.mubr.bf16.mxu0 0
  %3056 = vmatmul.mubr.bf16.gmra.mrb[0].mxu0 %v1400
  %v3057 = vpop.f32.mrb[0].mxu0
  %v3058 = vadd.f32 0.0, %v3057
  %v3059 = vpop.f32.mrb[0].mxu0
  %v3060 = vpop.f32.mrb[0].mxu0
  %v3061 = vadd.f32 0.0, %v3060
  %v3062 = vpop.f32.mrb[0].mxu0
  %3063 = vmatprep.mubr.bf16.mxu0 0
  %3064 = vmatmul.mubr.bf16.gmra.mrb[0].mxu0 %v1401
  %v3065 = vpop.f32.mrb[0].mxu0
  %v3066 = vadd.f32 0.0, %v3065
  %v3067 = vpop.f32.mrb[0].mxu0
  %v3068 = vpop.f32.mrb[0].mxu0
  %v3069 = vadd.f32 0.0, %v3068
  %v3070 = vpop.f32.mrb[0].mxu0
  %3071 = vmatprep.mubr.bf16.mxu0 0
  %3072 = vmatmul.mubr.bf16.gmra.mrb[0].mxu0 %v1402
  %v3073 = vpop.f32.mrb[0].mxu0
  %v3074 = vadd.f32 0.0, %v3073
  %v3075 = vpop.f32.mrb[0].mxu0
  %v3076 = vpop.f32.mrb[0].mxu0
  %v3077 = vadd.f32 0.0, %v3076
  %v3078 = vpop.f32.mrb[0].mxu0
  %3079 = vmatprep.mubr.bf16.mxu0 0
  %3080 = vmatmul.mubr.bf16.gmra.mrb[0].mxu0 %v1403
  %v3081 = vpop.f32.mrb[0].mxu0
  %v3082 = vadd.f32 0.0, %v3081
  %v3083 = vpop.f32.mrb[0].mxu0
  %v3084 = vpop.f32.mrb[0].mxu0
  %v3085 = vadd.f32 0.0, %v3084
  %v3086 = vpop.f32.mrb[0].mxu0
  %3087 = vmatprep.mubr.bf16.mxu0 0
  %3088 = vmatmul.mubr.bf16.gmra.mrb[0].mxu0 %v1404
  %v3089 = vpop.f32.mrb[0].mxu0
  %v3090 = vadd.f32 0.0, %v3089
  %v3091 = vpop.f32.mrb[0].mxu0
  %v3092 = vpop.f32.mrb[0].mxu0
  %v3093 = vadd.f32 0.0, %v3092
  %v3094 = vpop.f32.mrb[0].mxu0
  %3095 = vmatprep.mubr.bf16.mxu0 0
  %3096 = vmatmul.mubr.bf16.gmra.mrb[0].mxu0 %v1405
  %v3097 = vpop.f32.mrb[0].mxu0
  %v3098 = vadd.f32 0.0, %v3097
  %v3099 = vpop.f32.mrb[0].mxu0
  %v3100 = vpop.f32.mrb[0].mxu0
  %v3101 = vadd.f32 0.0, %v3100
  %v3102 = vpop.f32.mrb[0].mxu0
  %3103 = vmatprep.mubr.bf16.mxu0 0
  %3104 = vmatmul.mubr.bf16.gmra.mrb[0].mxu0 %v1406
  %v3105 = vpop.f32.mrb[0].mxu0
  %v3106 = vadd.f32 0.0, %v3105
  %v3107 = vpop.f32.mrb[0].mxu0
  %v3108 = vpop.f32.mrb[0].mxu0
  %v3109 = vadd.f32 0.0, %v3108
  %v3110 = vpop.f32.mrb[0].mxu0
  %3111 = vmatprep.mubr.bf16.mxu0 0
  %3112 = vmatmul.mubr.bf16.gmra.mrb[0].mxu0 %v1407
  %v3113 = vpop.f32.mrb[0].mxu0
  %v3114 = vadd.f32 0.0, %v3113
  %v3115 = vpop.f32.mrb[0].mxu0
  %v3116 = vpop.f32.mrb[0].mxu0
  %v3117 = vadd.f32 0.0, %v3116
  %v3118 = vpop.f32.mrb[0].mxu0
  %3119 = vmatprep.mubr.bf16.mxu0 0
  %3120 = vmatmul.mubr.bf16.gmra.mrb[0].mxu0 %v1408
  %v3121 = vpop.f32.mrb[0].mxu0
  %v3122 = vadd.f32 0.0, %v3121
  %v3123 = vpop.f32.mrb[0].mxu0
  %v3124 = vpop.f32.mrb[0].mxu0
  %v3125 = vadd.f32 0.0, %v3124
  %v3126 = vpop.f32.mrb[0].mxu0
  %3127 = vmatprep.mubr.bf16.mxu0 0
  %3128 = vmatmul.mubr.bf16.gmra.mrb[0].mxu0 %v1409
  %v3129 = vpop.f32.mrb[0].mxu0
  %v3130 = vadd.f32 0.0, %v3129
  %v3131 = vpop.f32.mrb[0].mxu0
  %v3132 = vpop.f32.mrb[0].mxu0
  %v3133 = vadd.f32 0.0, %v3132
  %v3134 = vpop.f32.mrb[0].mxu0
  %3135 = vmatprep.mubr.bf16.mxu0 0
  %3136 = vmatmul.mubr.bf16.gmra.mrb[0].mxu0 %v1410
  %v3137 = vpop.f32.mrb[0].mxu0
  %v3138 = vadd.f32 0.0, %v3137
  %v3139 = vpop.f32.mrb[0].mxu0
  %v3140 = vpop.f32.mrb[0].mxu0
  %v3141 = vadd.f32 0.0, %v3140
  %v3142 = vpop.f32.mrb[0].mxu0
  %3143 = vmatprep.mubr.bf16.mxu0 0
  %3144 = vmatmul.mubr.bf16.gmra.mrb[0].mxu0 %v1411
  %v3145 = vpop.f32.mrb[0].mxu0
  %v3146 = vadd.f32 0.0, %v3145
  %v3147 = vpop.f32.mrb[0].mxu0
  %v3148 = vpop.f32.mrb[0].mxu0
  %v3149 = vadd.f32 0.0, %v3148
  %v3150 = vpop.f32.mrb[0].mxu0
  %3151 = vmatprep.mubr.bf16.mxu0 0
  %3152 = vmatmul.mubr.bf16.gmra.mrb[0].mxu0 %v1412
  %v3153 = vpop.f32.mrb[0].mxu0
  %v3154 = vadd.f32 0.0, %v3153
  %v3155 = vpop.f32.mrb[0].mxu0
  %v3156 = vpop.f32.mrb[0].mxu0
  %v3157 = vadd.f32 0.0, %v3156
  %v3158 = vpop.f32.mrb[0].mxu0
  %3159 = vmatprep.mubr.bf16.mxu0 0
  %3160 = vmatmul.mubr.bf16.gmra.mrb[0].mxu0 %v1413
  %v3161 = vpop.f32.mrb[0].mxu0
  %v3162 = vadd.f32 0.0, %v3161
  %v3163 = vpop.f32.mrb[0].mxu0
  %v3164 = vpop.f32.mrb[0].mxu0
  %v3165 = vadd.f32 0.0, %v3164
  %v3166 = vpop.f32.mrb[0].mxu0
  %3167 = vmatprep.mubr.bf16.mxu0 0
  %3168 = vmatmul.mubr.bf16.gmra.mrb[0].mxu0 %v1414
  %v3169 = vpop.f32.mrb[0].mxu0
  %v3170 = vadd.f32 0.0, %v3169
  %v3171 = vpop.f32.mrb[0].mxu0
  %v3172 = vpop.f32.mrb[0].mxu0
  %v3173 = vadd.f32 0.0, %v3172
  %v3174 = vpop.f32.mrb[0].mxu0
  %3175 = vmatprep.mubr.bf16.mxu0 0
  %3176 = vmatmul.mubr.bf16.gmra.mrb[0].mxu0 %v1415
  %v3177 = vpop.f32.mrb[0].mxu0
  %v3178 = vadd.f32 0.0, %v3177
  %v3179 = vpop.f32.mrb[0].mxu0
  %v3180 = vpop.f32.mrb[0].mxu0
  %v3181 = vadd.f32 0.0, %v3180
  %v3182 = vpop.f32.mrb[0].mxu0
  %3183 = vmatprep.mubr.bf16.mxu0 0
  %3184 = vmatmul.mubr.bf16.gmra.mrb[0].mxu0 %v1416
  %v3185 = vpop.f32.mrb[0].mxu0
  %v3186 = vadd.f32 0.0, %v3185
  %v3187 = vpop.f32.mrb[0].mxu0
  %v3188 = vpop.f32.mrb[0].mxu0
  %v3189 = vadd.f32 0.0, %v3188
  %v3190 = vpop.f32.mrb[0].mxu0
  %3191 = vmatprep.mubr.bf16.mxu0 0
  %3192 = vmatmul.mubr.bf16.gmra.mrb[0].mxu0 %v1417
  %v3193 = vpop.f32.mrb[0].mxu0
  %v3194 = vadd.f32 0.0, %v3193
  %v3195 = vpop.f32.mrb[0].mxu0
  %v3196 = vpop.f32.mrb[0].mxu0
  %v3197 = vadd.f32 0.0, %v3196
  %v3198 = vpop.f32.mrb[0].mxu0
  %3199 = vmatprep.mubr.bf16.mxu0 0
  %3200 = vmatmul.mubr.bf16.gmra.mrb[0].mxu0 %v1418
  %v3201 = vpop.f32.mrb[0].mxu0
  %v3202 = vadd.f32 0.0, %v3201
  %v3203 = vpop.f32.mrb[0].mxu0
  %v3204 = vpop.f32.mrb[0].mxu0
  %v3205 = vadd.f32 0.0, %v3204
  %v3206 = vpop.f32.mrb[0].mxu0
  %3207 = vmatprep.mubr.bf16.mxu0 0
  %3208 = vmatmul.mubr.bf16.gmra.mrb[0].mxu0 %v1419
  %v3209 = vpop.f32.mrb[0].mxu0
  %v3210 = vadd.f32 0.0, %v3209
  %v3211 = vpop.f32.mrb[0].mxu0
  %v3212 = vpop.f32.mrb[0].mxu0
  %v3213 = vadd.f32 0.0, %v3212
  %v3214 = vpop.f32.mrb[0].mxu0
  %3215 = vmatprep.mubr.bf16.mxu0 0
  %3216 = vmatmul.mubr.bf16.gmra.mrb[0].mxu0 %v1420
  %v3217 = vpop.f32.mrb[0].mxu0
  %v3218 = vadd.f32 0.0, %v3217
  %v3219 = vpop.f32.mrb[0].mxu0
  %v3220 = vpop.f32.mrb[0].mxu0
  %v3221 = vadd.f32 0.0, %v3220
  %v3222 = vpop.f32.mrb[0].mxu0
  %3223 = vmatprep.mubr.bf16.mxu0 0
  %3224 = vmatmul.mubr.bf16.gmra.mrb[0].mxu0 %v1421
  %v3225 = vpop.f32.mrb[0].mxu0
  %v3226 = vadd.f32 0.0, %v3225
  %v3227 = vpop.f32.mrb[0].mxu0
  %v3228 = vpop.f32.mrb[0].mxu0
  %v3229 = vadd.f32 0.0, %v3228
  %v3230 = vpop.f32.mrb[0].mxu0
  %3231 = vmatprep.mubr.bf16.mxu0 0
  %3232 = vmatmul.mubr.bf16.gmra.mrb[0].mxu0 %v1422
  %v3233 = vpop.f32.mrb[0].mxu0
  %v3234 = vadd.f32 0.0, %v3233
  %v3235 = vpop.f32.mrb[0].mxu0
  %v3236 = vpop.f32.mrb[0].mxu0
  %v3237 = vadd.f32 0.0, %v3236
  %v3238 = vpop.f32.mrb[0].mxu0
  %3239 = vmatprep.mubr.bf16.mxu0 0
  %3240 = vmatmul.mubr.bf16.gmra.mrb[0].mxu0 %v1423
  %v3241 = vpop.f32.mrb[0].mxu0
  %v3242 = vadd.f32 0.0, %v3241
  %v3243 = vpop.f32.mrb[0].mxu0
  %v3244 = vpop.f32.mrb[0].mxu0
  %v3245 = vadd.f32 0.0, %v3244
  %v3246 = vpop.f32.mrb[0].mxu0
  %3247 = vmatprep.mubr.bf16.mxu0 0
  %3248 = vmatmul.mubr.bf16.gmra.mrb[0].mxu0 %v1424
  %v3249 = vpop.f32.mrb[0].mxu0
  %v3250 = vadd.f32 0.0, %v3249
  %v3251 = vpop.f32.mrb[0].mxu0
  %v3252 = vpop.f32.mrb[0].mxu0
  %v3253 = vadd.f32 0.0, %v3252
  %v3254 = vpop.f32.mrb[0].mxu0
  %3255 = vmatprep.mubr.bf16.mxu0 0
  %3256 = vmatmul.mubr.bf16.gmra.mrb[0].mxu0 %v1425
  %v3257 = vpop.f32.mrb[0].mxu0
  %v3258 = vadd.f32 0.0, %v3257
  %v3259 = vpop.f32.mrb[0].mxu0
  %v3260 = vpop.f32.mrb[0].mxu0
  %v3261 = vadd.f32 0.0, %v3260
  %v3262 = vpop.f32.mrb[0].mxu0
  %3263 = vmatprep.mubr.bf16.mxu0 0
  %3264 = vmatmul.mubr.bf16.gmra.mrb[0].mxu0 %v1426
  %v3265 = vpop.f32.mrb[0].mxu0
  %v3266 = vadd.f32 0.0, %v3265
  %v3267 = vpop.f32.mrb[0].mxu0
  %v3268 = vpop.f32.mrb[0].mxu0
  %v3269 = vadd.f32 0.0, %v3268
  %v3270 = vpop.f32.mrb[0].mxu0
  %3271 = vdwg.mxu0
  %v3272 = vmax.f32 %v1706, %v2098
  %v3273 = vmax.f32 %v1709, %v2101
  %v3274 = vmax.f32 %v1714, %v2106
  %v3275 = vmax.f32 %v1717, %v2109
  %v3276 = vmax.f32 %v1722, %v2114
  %v3277 = vmax.f32 %v1725, %v2117
  %v3278 = vmax.f32 %v1730, %v2122
  %v3279 = vmax.f32 %v1733, %v2125
  %v3280 = vmax.f32 %v1738, %v2130
  %v3281 = vmax.f32 %v1741, %v2133
  %v3282 = vmax.f32 %v1746, %v2138
  %v3283 = vmax.f32 %v1749, %v2141
  %v3284 = vmax.f32 %v1754, %v2146
  %v3285 = vmax.f32 %v1757, %v2149
  %v3286 = vmax.f32 %v1762, %v2154
  %v3287 = vmax.f32 %v1765, %v2157
  %v3288 = vmax.f32 %v1770, %v2162
  %v3289 = vmax.f32 %v1773, %v2165
  %v3290 = vmax.f32 %v1778, %v2170
  %v3291 = vmax.f32 %v1781, %v2173
  %v3292 = vmax.f32 %v1786, %v2178
  %v3293 = vmax.f32 %v1789, %v2181
  %v3294 = vmax.f32 %v1794, %v2186
  %v3295 = vmax.f32 %v1797, %v2189
  %v3296 = vmax.f32 %v1802, %v2194
  %v3297 = vmax.f32 %v1805, %v2197
  %v3298 = vmax.f32 %v1810, %v2202
  %v3299 = vmax.f32 %v1813, %v2205
  %v3300 = vmax.f32 %v1818, %v2210
  %v3301 = vmax.f32 %v1821, %v2213
  %v3302 = vmax.f32 %v1826, %v2218
  %v3303 = vmax.f32 %v1829, %v2221
  %v3304 = vmax.f32 %v1834, %v2226
  %v3305 = vmax.f32 %v1837, %v2229
  %v3306 = vmax.f32 %v1842, %v2234
  %v3307 = vmax.f32 %v1845, %v2237
  %v3308 = vmax.f32 %v1850, %v2242
  %v3309 = vmax.f32 %v1853, %v2245
  %v3310 = vmax.f32 %v1858, %v2250
  %v3311 = vmax.f32 %v1861, %v2253
  %v3312 = vmax.f32 %v1866, %v2258
  %v3313 = vmax.f32 %v1869, %v2261
  %v3314 = vmax.f32 %v1874, %v2266
  %v3315 = vmax.f32 %v1877, %v2269
  %v3316 = vmax.f32 %v1882, %v2274
  %v3317 = vmax.f32 %v1885, %v2277
  %v3318 = vmax.f32 %v1890, %v2282
  %v3319 = vmax.f32 %v1893, %v2285
  %v3320 = vmax.f32 %v1898, %v2290
  %v3321 = vmax.f32 %v1901, %v2293
  %v3322 = vmax.f32 %v1906, %v2298
  %v3323 = vmax.f32 %v1909, %v2301
  %v3324 = vmax.f32 %v1914, %v2306
  %v3325 = vmax.f32 %v1917, %v2309
  %v3326 = vmax.f32 %v1922, %v2314
  %v3327 = vmax.f32 %v1925, %v2317
  %v3328 = vmax.f32 %v1930, %v2322
  %v3329 = vmax.f32 %v1933, %v2325
  %v3330 = vmax.f32 %v1938, %v2330
  %v3331 = vmax.f32 %v1941, %v2333
  %v3332 = vmax.f32 %v1946, %v2338
  %v3333 = vmax.f32 %v1949, %v2341
  %v3334 = vmax.f32 %v1954, %v2346
  %v3335 = vmax.f32 %v1957, %v2349
  %v3336 = vmax.f32 %v1962, %v2354
  %v3337 = vmax.f32 %v1965, %v2357
  %v3338 = vmax.f32 %v1970, %v2362
  %v3339 = vmax.f32 %v1973, %v2365
  %v3340 = vmax.f32 %v1978, %v2370
  %v3341 = vmax.f32 %v1981, %v2373
  %v3342 = vmax.f32 %v1986, %v2378
  %v3343 = vmax.f32 %v1989, %v2381
  %v3344 = vmax.f32 %v1994, %v2386
  %v3345 = vmax.f32 %v1997, %v2389
  %v3346 = vmax.f32 %v2002, %v2394
  %v3347 = vmax.f32 %v2005, %v2397
  %v3348 = vmax.f32 %v2010, %v2402
  %v3349 = vmax.f32 %v2013, %v2405
  %v3350 = vmax.f32 %v2018, %v2410
  %v3351 = vmax.f32 %v2021, %v2413
  %v3352 = vmax.f32 %v2026, %v2418
  %v3353 = vmax.f32 %v2029, %v2421
  %v3354 = vmax.f32 %v2034, %v2426
  %v3355 = vmax.f32 %v2037, %v2429
  %v3356 = vmax.f32 %v2042, %v2434
  %v3357 = vmax.f32 %v2045, %v2437
  %v3358 = vmax.f32 %v2050, %v2442
  %v3359 = vmax.f32 %v2053, %v2445
  %v3360 = vmax.f32 %v2058, %v2450
  %v3361 = vmax.f32 %v2061, %v2453
  %v3362 = vmax.f32 %v2066, %v2458
  %v3363 = vmax.f32 %v2069, %v2461
  %v3364 = vmax.f32 %v2074, %v2466
  %v3365 = vmax.f32 %v2077, %v2469
  %v3366 = vmax.f32 %v2082, %v2474
  %v3367 = vmax.f32 %v2085, %v2477
  %v3368 = vmax.f32 %v2090, %v2482
  %v3369 = vmax.f32 %v2093, %v2485
  %v3370 = vmax.f32 %v2490, %v2882
  %v3371 = vmax.f32 %v2493, %v2885
  %v3372 = vmax.f32 %v2498, %v2890
  %v3373 = vmax.f32 %v2501, %v2893
  %v3374 = vmax.f32 %v2506, %v2898
  %v3375 = vmax.f32 %v2509, %v2901
  %v3376 = vmax.f32 %v2514, %v2906
  %v3377 = vmax.f32 %v2517, %v2909
  %v3378 = vmax.f32 %v2522, %v2914
  %v3379 = vmax.f32 %v2525, %v2917
  %v3380 = vmax.f32 %v2530, %v2922
  %v3381 = vmax.f32 %v2533, %v2925
  %v3382 = vmax.f32 %v2538, %v2930
  %v3383 = vmax.f32 %v2541, %v2933
  %v3384 = vmax.f32 %v2546, %v2938
  %v3385 = vmax.f32 %v2549, %v2941
  %v3386 = vmax.f32 %v2554, %v2946
  %v3387 = vmax.f32 %v2557, %v2949
  %v3388 = vmax.f32 %v2562, %v2954
  %v3389 = vmax.f32 %v2565, %v2957
  %v3390 = vmax.f32 %v2570, %v2962
  %v3391 = vmax.f32 %v2573, %v2965
  %v3392 = vmax.f32 %v2578, %v2970
  %v3393 = vmax.f32 %v2581, %v2973
  %v3394 = vmax.f32 %v2586, %v2978
  %v3395 = vmax.f32 %v2589, %v2981
  %v3396 = vmax.f32 %v2594, %v2986
  %v3397 = vmax.f32 %v2597, %v2989
  %v3398 = vmax.f32 %v2602, %v2994
  %v3399 = vmax.f32 %v2605, %v2997
  %v3400 = vmax.f32 %v2610, %v3002
  %v3401 = vmax.f32 %v2613, %v3005
  %v3402 = vmax.f32 %v2618, %v3010
  %v3403 = vmax.f32 %v2621, %v3013
  %v3404 = vmax.f32 %v2626, %v3018
  %v3405 = vmax.f32 %v2629, %v3021
  %v3406 = vmax.f32 %v2634, %v3026
  %v3407 = vmax.f32 %v2637, %v3029
  %v3408 = vmax.f32 %v2642, %v3034
  %v3409 = vmax.f32 %v2645, %v3037
  %v3410 = vmax.f32 %v2650, %v3042
  %v3411 = vmax.f32 %v2653, %v3045
  %v3412 = vmax.f32 %v2658, %v3050
  %v3413 = vmax.f32 %v2661, %v3053
  %v3414 = vmax.f32 %v2666, %v3058
  %v3415 = vmax.f32 %v2669, %v3061
  %v3416 = vmax.f32 %v2674, %v3066
  %v3417 = vmax.f32 %v2677, %v3069
  %v3418 = vmax.f32 %v2682, %v3074
  %v3419 = vmax.f32 %v2685, %v3077
  %v3420 = vmax.f32 %v2690, %v3082
  %v3421 = vmax.f32 %v2693, %v3085
  %v3422 = vmax.f32 %v2698, %v3090
  %v3423 = vmax.f32 %v2701, %v3093
  %v3424 = vmax.f32 %v2706, %v3098
  %v3425 = vmax.f32 %v2709, %v3101
  %v3426 = vmax.f32 %v2714, %v3106
  %v3427 = vmax.f32 %v2717, %v3109
  %v3428 = vmax.f32 %v2722, %v3114
  %v3429 = vmax.f32 %v2725, %v3117
  %v3430 = vmax.f32 %v2730, %v3122
  %v3431 = vmax.f32 %v2733, %v3125
  %v3432 = vmax.f32 %v2738, %v3130
  %v3433 = vmax.f32 %v2741, %v3133
  %v3434 = vmax.f32 %v2746, %v3138
  %v3435 = vmax.f32 %v2749, %v3141
  %v3436 = vmax.f32 %v2754, %v3146
  %v3437 = vmax.f32 %v2757, %v3149
  %v3438 = vmax.f32 %v2762, %v3154
  %v3439 = vmax.f32 %v2765, %v3157
  %v3440 = vmax.f32 %v2770, %v3162
  %v3441 = vmax.f32 %v2773, %v3165
  %v3442 = vmax.f32 %v2778, %v3170
  %v3443 = vmax.f32 %v2781, %v3173
  %v3444 = vmax.f32 %v2786, %v3178
  %v3445 = vmax.f32 %v2789, %v3181
  %v3446 = vmax.f32 %v2794, %v3186
  %v3447 = vmax.f32 %v2797, %v3189
  %v3448 = vmax.f32 %v2802, %v3194
  %v3449 = vmax.f32 %v2805, %v3197
  %v3450 = vmax.f32 %v2810, %v3202
  %v3451 = vmax.f32 %v2813, %v3205
  %v3452 = vmax.f32 %v2818, %v3210
  %v3453 = vmax.f32 %v2821, %v3213
  %v3454 = vmax.f32 %v2826, %v3218
  %v3455 = vmax.f32 %v2829, %v3221
  %v3456 = vmax.f32 %v2834, %v3226
  %v3457 = vmax.f32 %v2837, %v3229
  %v3458 = vmax.f32 %v2842, %v3234
  %v3459 = vmax.f32 %v2845, %v3237
  %v3460 = vmax.f32 %v2850, %v3242
  %v3461 = vmax.f32 %v2853, %v3245
  %v3462 = vmax.f32 %v2858, %v3250
  %v3463 = vmax.f32 %v2861, %v3253
  %v3464 = vmax.f32 %v2866, %v3258
  %v3465 = vmax.f32 %v2869, %v3261
  %v3466 = vmax.f32 %v2874, %v3266
  %v3467 = vmax.f32 %v2877, %v3269
  %v3468 = vmax.f32 %v3272, %v3370
  %v3469 = vmax.f32 %v3273, %v3371
  %v3470 = vmax.f32 %v3274, %v3372
  %v3471 = vmax.f32 %v3275, %v3373
  %v3472 = vmax.f32 %v3276, %v3374
  %v3473 = vmax.f32 %v3277, %v3375
  %v3474 = vmax.f32 %v3278, %v3376
  %v3475 = vmax.f32 %v3279, %v3377
  %v3476 = vmax.f32 %v3280, %v3378
  %v3477 = vmax.f32 %v3281, %v3379
  %v3478 = vmax.f32 %v3282, %v3380
  %v3479 = vmax.f32 %v3283, %v3381
  %v3480 = vmax.f32 %v3284, %v3382
  %v3481 = vmax.f32 %v3285, %v3383
  %v3482 = vmax.f32 %v3286, %v3384
  %v3483 = vmax.f32 %v3287, %v3385
  %v3484 = vmax.f32 %v3288, %v3386
  %v3485 = vmax.f32 %v3289, %v3387
  %v3486 = vmax.f32 %v3290, %v3388
  %v3487 = vmax.f32 %v3291, %v3389
  %v3488 = vmax.f32 %v3292, %v3390
  %v3489 = vmax.f32 %v3293, %v3391
  %v3490 = vmax.f32 %v3294, %v3392
  %v3491 = vmax.f32 %v3295, %v3393
  %v3492 = vmax.f32 %v3296, %v3394
  %v3493 = vmax.f32 %v3297, %v3395
  %v3494 = vmax.f32 %v3298, %v3396
  %v3495 = vmax.f32 %v3299, %v3397
  %v3496 = vmax.f32 %v3300, %v3398
  %v3497 = vmax.f32 %v3301, %v3399
  %v3498 = vmax.f32 %v3302, %v3400
  %v3499 = vmax.f32 %v3303, %v3401
  %v3500 = vmax.f32 %v3304, %v3402
  %v3501 = vmax.f32 %v3305, %v3403
  %v3502 = vmax.f32 %v3306, %v3404
  %v3503 = vmax.f32 %v3307, %v3405
  %v3504 = vmax.f32 %v3308, %v3406
  %v3505 = vmax.f32 %v3309, %v3407
  %v3506 = vmax.f32 %v3310, %v3408
  %v3507 = vmax.f32 %v3311, %v3409
  %v3508 = vmax.f32 %v3312, %v3410
  %v3509 = vmax.f32 %v3313, %v3411
  %v3510 = vmax.f32 %v3314, %v3412
  %v3511 = vmax.f32 %v3315, %v3413
  %v3512 = vmax.f32 %v3316, %v3414
  %v3513 = vmax.f32 %v3317, %v3415
  %v3514 = vmax.f32 %v3318, %v3416
  %v3515 = vmax.f32 %v3319, %v3417
  %v3516 = vmax.f32 %v3320, %v3418
  %v3517 = vmax.f32 %v3321, %v3419
  %v3518 = vmax.f32 %v3322, %v3420
  %v3519 = vmax.f32 %v3323, %v3421
  %v3520 = vmax.f32 %v3324, %v3422
  %v3521 = vmax.f32 %v3325, %v3423
  %v3522 = vmax.f32 %v3326, %v3424
  %v3523 = vmax.f32 %v3327, %v3425
  %v3524 = vmax.f32 %v3328, %v3426
  %v3525 = vmax.f32 %v3329, %v3427
  %v3526 = vmax.f32 %v3330, %v3428
  %v3527 = vmax.f32 %v3331, %v3429
  %v3528 = vmax.f32 %v3332, %v3430
  %v3529 = vmax.f32 %v3333, %v3431
  %v3530 = vmax.f32 %v3334, %v3432
  %v3531 = vmax.f32 %v3335, %v3433
  %v3532 = vmax.f32 %v3336, %v3434
  %v3533 = vmax.f32 %v3337, %v3435
  %v3534 = vmax.f32 %v3338, %v3436
  %v3535 = vmax.f32 %v3339, %v3437
  %v3536 = vmax.f32 %v3340, %v3438
  %v3537 = vmax.f32 %v3341, %v3439
  %v3538 = vmax.f32 %v3342, %v3440
  %v3539 = vmax.f32 %v3343, %v3441
  %v3540 = vmax.f32 %v3344, %v3442
  %v3541 = vmax.f32 %v3345, %v3443
  %v3542 = vmax.f32 %v3346, %v3444
  %v3543 = vmax.f32 %v3347, %v3445
  %v3544 = vmax.f32 %v3348, %v3446
  %v3545 = vmax.f32 %v3349, %v3447
  %v3546 = vmax.f32 %v3350, %v3448
  %v3547 = vmax.f32 %v3351, %v3449
  %v3548 = vmax.f32 %v3352, %v3450
  %v3549 = vmax.f32 %v3353, %v3451
  %v3550 = vmax.f32 %v3354, %v3452
  %v3551 = vmax.f32 %v3355, %v3453
  %v3552 = vmax.f32 %v3356, %v3454
  %v3553 = vmax.f32 %v3357, %v3455
  %v3554 = vmax.f32 %v3358, %v3456
  %v3555 = vmax.f32 %v3359, %v3457
  %v3556 = vmax.f32 %v3360, %v3458
  %v3557 = vmax.f32 %v3361, %v3459
  %v3558 = vmax.f32 %v3362, %v3460
  %v3559 = vmax.f32 %v3363, %v3461
  %v3560 = vmax.f32 %v3364, %v3462
  %v3561 = vmax.f32 %v3365, %v3463
  %v3562 = vmax.f32 %v3366, %v3464
  %v3563 = vmax.f32 %v3367, %v3465
  %v3564 = vmax.f32 %v3368, %v3466
  %v3565 = vmax.f32 %v3369, %v3467
  %v3566 = vld [vmem:[%s2] sm:$0x1]
  %v3568 = vlaneseq
  %v3569 = vshrl.u32 %v3568, 7
  %v3570 = vsub.s32 0, %v3569
  %v3571 = vrot.slane %v3566, %v3570
  %v3573 = vadd.f32 %v3468, %v3571
  %v3574 = vadd.f32 %v3469, %v3571
  %v3575 = vadd.f32 %v3470, %v3571
  %v3576 = vadd.f32 %v3471, %v3571
  %v3577 = vadd.f32 %v3472, %v3571
  %v3578 = vadd.f32 %v3473, %v3571
  %v3579 = vadd.f32 %v3474, %v3571
  %v3580 = vadd.f32 %v3475, %v3571
  %v3581 = vadd.f32 %v3476, %v3571
  %v3582 = vadd.f32 %v3477, %v3571
  %v3583 = vadd.f32 %v3478, %v3571
  %v3584 = vadd.f32 %v3479, %v3571
  %v3585 = vadd.f32 %v3480, %v3571
  %v3586 = vadd.f32 %v3481, %v3571
  %v3587 = vadd.f32 %v3482, %v3571
  %v3588 = vadd.f32 %v3483, %v3571
  %v3589 = vadd.f32 %v3484, %v3571
  %v3590 = vadd.f32 %v3485, %v3571
  %v3591 = vadd.f32 %v3486, %v3571
  %v3592 = vadd.f32 %v3487, %v3571
  %v3593 = vadd.f32 %v3488, %v3571
  %v3594 = vadd.f32 %v3489, %v3571
  %v3595 = vadd.f32 %v3490, %v3571
  %v3596 = vadd.f32 %v3491, %v3571
  %v3597 = vadd.f32 %v3492, %v3571
  %v3598 = vadd.f32 %v3493, %v3571
  %v3599 = vadd.f32 %v3494, %v3571
  %v3600 = vadd.f32 %v3495, %v3571
  %v3601 = vadd.f32 %v3496, %v3571
  %v3602 = vadd.f32 %v3497, %v3571
  %v3603 = vadd.f32 %v3498, %v3571
  %v3604 = vadd.f32 %v3499, %v3571
  %v3605 = vadd.f32 %v3500, %v3571
  %v3606 = vadd.f32 %v3501, %v3571
  %v3607 = vadd.f32 %v3502, %v3571
  %v3608 = vadd.f32 %v3503, %v3571
  %v3609 = vadd.f32 %v3504, %v3571
  %v3610 = vadd.f32 %v3505, %v3571
  %v3611 = vadd.f32 %v3506, %v3571
  %v3612 = vadd.f32 %v3507, %v3571
  %v3613 = vadd.f32 %v3508, %v3571
  %v3614 = vadd.f32 %v3509, %v3571
  %v3615 = vadd.f32 %v3510, %v3571
  %v3616 = vadd.f32 %v3511, %v3571
  %v3617 = vadd.f32 %v3512, %v3571
  %v3618 = vadd.f32 %v3513, %v3571
  %v3619 = vadd.f32 %v3514, %v3571
  %v3620 = vadd.f32 %v3515, %v3571
  %v3621 = vadd.f32 %v3516, %v3571
  %v3622 = vadd.f32 %v3517, %v3571
  %v3623 = vadd.f32 %v3518, %v3571
  %v3624 = vadd.f32 %v3519, %v3571
  %v3625 = vadd.f32 %v3520, %v3571
  %v3626 = vadd.f32 %v3521, %v3571
  %v3627 = vadd.f32 %v3522, %v3571
  %v3628 = vadd.f32 %v3523, %v3571
  %v3629 = vadd.f32 %v3524, %v3571
  %v3630 = vadd.f32 %v3525, %v3571
  %v3631 = vadd.f32 %v3526, %v3571
  %v3632 = vadd.f32 %v3527, %v3571
  %v3633 = vadd.f32 %v3528, %v3571
  %v3634 = vadd.f32 %v3529, %v3571
  %v3635 = vadd.f32 %v3530, %v3571
  %v3636 = vadd.f32 %v3531, %v3571
  %v3637 = vadd.f32 %v3532, %v3571
  %v3638 = vadd.f32 %v3533, %v3571
  %v3639 = vadd.f32 %v3534, %v3571
  %v3640 = vadd.f32 %v3535, %v3571
  %v3641 = vadd.f32 %v3536, %v3571
  %v3642 = vadd.f32 %v3537, %v3571
  %v3643 = vadd.f32 %v3538, %v3571
  %v3644 = vadd.f32 %v3539, %v3571
  %v3645 = vadd.f32 %v3540, %v3571
  %v3646 = vadd.f32 %v3541, %v3571
  %v3647 = vadd.f32 %v3542, %v3571
  %v3648 = vadd.f32 %v3543, %v3571
  %v3649 = vadd.f32 %v3544, %v3571
  %v3650 = vadd.f32 %v3545, %v3571
  %v3651 = vadd.f32 %v3546, %v3571
  %v3652 = vadd.f32 %v3547, %v3571
  %v3653 = vadd.f32 %v3548, %v3571
  %v3654 = vadd.f32 %v3549, %v3571
  %v3655 = vadd.f32 %v3550, %v3571
  %v3656 = vadd.f32 %v3551, %v3571
  %v3657 = vadd.f32 %v3552, %v3571
  %v3658 = vadd.f32 %v3553, %v3571
  %v3659 = vadd.f32 %v3554, %v3571
  %v3660 = vadd.f32 %v3555, %v3571
  %v3661 = vadd.f32 %v3556, %v3571
  %v3662 = vadd.f32 %v3557, %v3571
  %v3663 = vadd.f32 %v3558, %v3571
  %v3664 = vadd.f32 %v3559, %v3571
  %v3665 = vadd.f32 %v3560, %v3571
  %v3666 = vadd.f32 %v3561, %v3571
  %v3667 = vadd.f32 %v3562, %v3571
  %v3668 = vadd.f32 %v3563, %v3571
  %v3669 = vadd.f32 %v3564, %v3571
  %v3670 = vadd.f32 %v3565, %v3571
  %v3671 = vmax.f32 %v3573, 0.0
  %v3672 = vmax.f32 %v3574, 0.0
  %v3673 = vmax.f32 %v3575, 0.0
  %v3674 = vmax.f32 %v3576, 0.0
  %v3675 = vmax.f32 %v3577, 0.0
  %v3676 = vmax.f32 %v3578, 0.0
  %v3677 = vmax.f32 %v3579, 0.0
  %v3678 = vmax.f32 %v3580, 0.0
  %v3679 = vmax.f32 %v3581, 0.0
  %v3680 = vmax.f32 %v3582, 0.0
  %v3681 = vmax.f32 %v3583, 0.0
  %v3682 = vmax.f32 %v3584, 0.0
  %v3683 = vmax.f32 %v3585, 0.0
  %v3684 = vmax.f32 %v3586, 0.0
  %v3685 = vmax.f32 %v3587, 0.0
  %v3686 = vmax.f32 %v3588, 0.0
  %v3687 = vmax.f32 %v3589, 0.0
  %v3688 = vmax.f32 %v3590, 0.0
  %v3689 = vmax.f32 %v3591, 0.0
  %v3690 = vmax.f32 %v3592, 0.0
  %v3691 = vmax.f32 %v3593, 0.0
  %v3692 = vmax.f32 %v3594, 0.0
  %v3693 = vmax.f32 %v3595, 0.0
  %v3694 = vmax.f32 %v3596, 0.0
  %v3695 = vmax.f32 %v3597, 0.0
  %v3696 = vmax.f32 %v3598, 0.0
  %v3697 = vmax.f32 %v3599, 0.0
  %v3698 = vmax.f32 %v3600, 0.0
  %v3699 = vmax.f32 %v3601, 0.0
  %v3700 = vmax.f32 %v3602, 0.0
  %v3701 = vmax.f32 %v3603, 0.0
  %v3702 = vmax.f32 %v3604, 0.0
  %v3703 = vmax.f32 %v3605, 0.0
  %v3704 = vmax.f32 %v3606, 0.0
  %v3705 = vmax.f32 %v3607, 0.0
  %v3706 = vmax.f32 %v3608, 0.0
  %v3707 = vmax.f32 %v3609, 0.0
  %v3708 = vmax.f32 %v3610, 0.0
  %v3709 = vmax.f32 %v3611, 0.0
  %v3710 = vmax.f32 %v3612, 0.0
  %v3711 = vmax.f32 %v3613, 0.0
  %v3712 = vmax.f32 %v3614, 0.0
  %v3713 = vmax.f32 %v3615, 0.0
  %v3714 = vmax.f32 %v3616, 0.0
  %v3715 = vmax.f32 %v3617, 0.0
  %v3716 = vmax.f32 %v3618, 0.0
  %v3717 = vmax.f32 %v3619, 0.0
  %v3718 = vmax.f32 %v3620, 0.0
  %v3719 = vmax.f32 %v3621, 0.0
  %v3720 = vmax.f32 %v3622, 0.0
  %v3721 = vmax.f32 %v3623, 0.0
  %v3722 = vmax.f32 %v3624, 0.0
  %v3723 = vmax.f32 %v3625, 0.0
  %v3724 = vmax.f32 %v3626, 0.0
  %v3725 = vmax.f32 %v3627, 0.0
  %v3726 = vmax.f32 %v3628, 0.0
  %v3727 = vmax.f32 %v3629, 0.0
  %v3728 = vmax.f32 %v3630, 0.0
  %v3729 = vmax.f32 %v3631, 0.0
  %v3730 = vmax.f32 %v3632, 0.0
  %v3731 = vmax.f32 %v3633, 0.0
  %v3732 = vmax.f32 %v3634, 0.0
  %v3733 = vmax.f32 %v3635, 0.0
  %v3734 = vmax.f32 %v3636, 0.0
  %v3735 = vmax.f32 %v3637, 0.0
  %v3736 = vmax.f32 %v3638, 0.0
  %v3737 = vmax.f32 %v3639, 0.0
  %v3738 = vmax.f32 %v3640, 0.0
  %v3739 = vmax.f32 %v3641, 0.0
  %v3740 = vmax.f32 %v3642, 0.0
  %v3741 = vmax.f32 %v3643, 0.0
  %v3742 = vmax.f32 %v3644, 0.0
  %v3743 = vmax.f32 %v3645, 0.0
  %v3744 = vmax.f32 %v3646, 0.0
  %v3745 = vmax.f32 %v3647, 0.0
  %v3746 = vmax.f32 %v3648, 0.0
  %v3747 = vmax.f32 %v3649, 0.0
  %v3748 = vmax.f32 %v3650, 0.0
  %v3749 = vmax.f32 %v3651, 0.0
  %v3750 = vmax.f32 %v3652, 0.0
  %v3751 = vmax.f32 %v3653, 0.0
  %v3752 = vmax.f32 %v3654, 0.0
  %v3753 = vmax.f32 %v3655, 0.0
  %v3754 = vmax.f32 %v3656, 0.0
  %v3755 = vmax.f32 %v3657, 0.0
  %v3756 = vmax.f32 %v3658, 0.0
  %v3757 = vmax.f32 %v3659, 0.0
  %v3758 = vmax.f32 %v3660, 0.0
  %v3759 = vmax.f32 %v3661, 0.0
  %v3760 = vmax.f32 %v3662, 0.0
  %v3761 = vmax.f32 %v3663, 0.0
  %v3762 = vmax.f32 %v3664, 0.0
  %v3763 = vmax.f32 %v3665, 0.0
  %v3764 = vmax.f32 %v3666, 0.0
  %v3765 = vmax.f32 %v3667, 0.0
  %v3766 = vmax.f32 %v3668, 0.0
  %v3767 = vmax.f32 %v3669, 0.0
  %v3768 = vmax.f32 %v3670, 0.0
  %v3769 = vpack.c.bf16 %v3672, %v3671
  %v3770 = vpack.c.bf16 %v3674, %v3673
  %v3771 = vpack.c.bf16 %v3676, %v3675
  %v3772 = vpack.c.bf16 %v3678, %v3677
  %v3773 = vpack.c.bf16 %v3680, %v3679
  %v3774 = vpack.c.bf16 %v3682, %v3681
  %v3775 = vpack.c.bf16 %v3684, %v3683
  %v3776 = vpack.c.bf16 %v3686, %v3685
  %v3777 = vpack.c.bf16 %v3688, %v3687
  %v3778 = vpack.c.bf16 %v3690, %v3689
  %v3779 = vpack.c.bf16 %v3692, %v3691
  %v3780 = vpack.c.bf16 %v3694, %v3693
  %v3781 = vpack.c.bf16 %v3696, %v3695
  %v3782 = vpack.c.bf16 %v3698, %v3697
  %v3783 = vpack.c.bf16 %v3700, %v3699
  %v3784 = vpack.c.bf16 %v3702, %v3701
  %v3785 = vpack.c.bf16 %v3704, %v3703
  %v3786 = vpack.c.bf16 %v3706, %v3705
  %v3787 = vpack.c.bf16 %v3708, %v3707
  %v3788 = vpack.c.bf16 %v3710, %v3709
  %v3789 = vpack.c.bf16 %v3712, %v3711
  %v3790 = vpack.c.bf16 %v3714, %v3713
  %v3791 = vpack.c.bf16 %v3716, %v3715
  %v3792 = vpack.c.bf16 %v3718, %v3717
  %v3793 = vpack.c.bf16 %v3720, %v3719
  %v3794 = vpack.c.bf16 %v3722, %v3721
  %v3795 = vpack.c.bf16 %v3724, %v3723
  %v3796 = vpack.c.bf16 %v3726, %v3725
  %v3797 = vpack.c.bf16 %v3728, %v3727
  %v3798 = vpack.c.bf16 %v3730, %v3729
  %v3799 = vpack.c.bf16 %v3732, %v3731
  %v3800 = vpack.c.bf16 %v3734, %v3733
  %v3801 = vpack.c.bf16 %v3736, %v3735
  %v3802 = vpack.c.bf16 %v3738, %v3737
  %v3803 = vpack.c.bf16 %v3740, %v3739
  %v3804 = vpack.c.bf16 %v3742, %v3741
  %v3805 = vpack.c.bf16 %v3744, %v3743
  %v3806 = vpack.c.bf16 %v3746, %v3745
  %v3807 = vpack.c.bf16 %v3748, %v3747
  %v3808 = vpack.c.bf16 %v3750, %v3749
  %v3809 = vpack.c.bf16 %v3752, %v3751
  %v3810 = vpack.c.bf16 %v3754, %v3753
  %v3811 = vpack.c.bf16 %v3756, %v3755
  %v3812 = vpack.c.bf16 %v3758, %v3757
  %v3813 = vpack.c.bf16 %v3760, %v3759
  %v3814 = vpack.c.bf16 %v3762, %v3761
  %v3815 = vpack.c.bf16 %v3764, %v3763
  %v3816 = vpack.c.bf16 %v3766, %v3765
  %v3817 = vpack.c.bf16 %v3768, %v3767
  %3818 = vst [vmem:[#allocation2] sm:$0xff] %v3769
  %3819 = vst [vmem:[#allocation2 + $0x8] sm:$0xff] %v3770
  %3820 = vst [vmem:[#allocation2 + $0x10] sm:$0xff] %v3771
  %3821 = vst [vmem:[#allocation2 + $0x18] sm:$0xff] %v3772
  %3822 = vst [vmem:[#allocation2 + $0x20] sm:$0xff] %v3773
  %3823 = vst [vmem:[#allocation2 + $0x28] sm:$0xff] %v3774
  %3824 = vst [vmem:[#allocation2 + $0x30] sm:$0xff] %v3775
  %3825 = vst [vmem:[#allocation2 + $0x38] sm:$0xff] %v3776
  %3826 = vst [vmem:[#allocation2 + $0x40] sm:$0xff] %v3777
  %3827 = vst [vmem:[#allocation2 + $0x48] sm:$0xff] %v3778
  %3828 = vst [vmem:[#allocation2 + $0x50] sm:$0xff] %v3779
  %3829 = vst [vmem:[#allocation2 + $0x58] sm:$0xff] %v3780
  %3830 = vst [vmem:[#allocation2 + $0x60] sm:$0xff] %v3781
  %3831 = vst [vmem:[#allocation2 + $0x68] sm:$0xff] %v3782
  %3832 = vst [vmem:[#allocation2 + $0x70] sm:$0xff] %v3783
  %3833 = vst [vmem:[#allocation2 + $0x78] sm:$0xff] %v3784
  %3834 = vst [vmem:[#allocation2 + $0x80] sm:$0xff] %v3785
  %3835 = vst [vmem:[#allocation2 + $0x88] sm:$0xff] %v3786
  %3836 = vst [vmem:[#allocation2 + $0x90] sm:$0xff] %v3787
  %3837 = vst [vmem:[#allocation2 + $0x98] sm:$0xff] %v3788
  %3838 = vst [vmem:[#allocation2 + $0xa0] sm:$0xff] %v3789
  %3839 = vst [vmem:[#allocation2 + $0xa8] sm:$0xff] %v3790
  %3840 = vst [vmem:[#allocation2 + $0xb0] sm:$0xff] %v3791
  %3841 = vst [vmem:[#allocation2 + $0xb8] sm:$0xff] %v3792
  %3842 = vst [vmem:[#allocation2 + $0xc0] sm:$0xff] %v3793
  %3843 = vst [vmem:[#allocation2 + $0xc8] sm:$0xff] %v3794
  %3844 = vst [vmem:[#allocation2 + $0xd0] sm:$0xff] %v3795
  %3845 = vst [vmem:[#allocation2 + $0xd8] sm:$0xff] %v3796
  %3846 = vst [vmem:[#allocation2 + $0xe0] sm:$0xff] %v3797
  %3847 = vst [vmem:[#allocation2 + $0xe8] sm:$0xff] %v3798
  %3848 = vst [vmem:[#allocation2 + $0xf0] sm:$0xff] %v3799
  %3849 = vst [vmem:[#allocation2 + $0xf8] sm:$0xff] %v3800
  %3850 = vst [vmem:[#allocation2 + $0x100] sm:$0xff] %v3801
  %3851 = vst [vmem:[#allocation2 + $0x108] sm:$0xff] %v3802
  %3852 = vst [vmem:[#allocation2 + $0x110] sm:$0xff] %v3803
  %3853 = vst [vmem:[#allocation2 + $0x118] sm:$0xff] %v3804
  %3854 = vst [vmem:[#allocation2 + $0x120] sm:$0xff] %v3805
  %3855 = vst [vmem:[#allocation2 + $0x128] sm:$0xff] %v3806
  %3856 = vst [vmem:[#allocation2 + $0x130] sm:$0xff] %v3807
  %3857 = vst [vmem:[#allocation2 + $0x138] sm:$0xff] %v3808
  %3858 = vst [vmem:[#allocation2 + $0x140] sm:$0xff] %v3809
  %3859 = vst [vmem:[#allocation2 + $0x148] sm:$0xff] %v3810
  %3860 = vst [vmem:[#allocation2 + $0x150] sm:$0xff] %v3811
  %3861 = vst [vmem:[#allocation2 + $0x158] sm:$0xff] %v3812
  %3862 = vst [vmem:[#allocation2 + $0x160] sm:$0xff] %v3813
  %3863 = vst [vmem:[#allocation2 + $0x168] sm:$0xff] %v3814
  %3864 = vst [vmem:[#allocation2 + $0x170] sm:$0xff] %v3815
  %3865 = vst [vmem:[#allocation2 + $0x178] sm:$0xff] %v3816
  %3866 = vst [vmem:[#allocation2 + $0x180] sm:$0xff] %v3817
  %v3867 = vld [vmem:[#allocation2] sm:$0xff]
  %v3868 = vld [vmem:[#allocation2 + $0x10] sm:$0xff]
  %v3869 = vld [vmem:[#allocation2 + $0x20] sm:$0xff]
  %v3870 = vld [vmem:[#allocation2 + $0x70] sm:$0xff]
  %v3871 = vld [vmem:[#allocation2 + $0x80] sm:$0xff]
  %v3872 = vld [vmem:[#allocation2 + $0x90] sm:$0xff]
  %v3873 = vld [vmem:[#allocation2 + $0xe0] sm:$0xff]
  %v3874 = vld [vmem:[#allocation2 + $0xf0] sm:$0xff]
  %v3875 = vld [vmem:[#allocation2 + $0x100] sm:$0xff]
  %v3876 = vld [vmem:[%s3] sm:$0xff]
  %v3877 = vld [vmem:[%s3 + $0x8] sm:$0xff]
  %v3878 = vld [vmem:[%s3 + $0x10] sm:$0xff]
  %v3879 = vld [vmem:[%s3 + $0x18] sm:$0xff]
  %v3880 = vld [vmem:[%s3 + $0x20] sm:$0xff]
  %v3881 = vld [vmem:[%s3 + $0x28] sm:$0xff]
  %v3882 = vld [vmem:[%s3 + $0x30] sm:$0xff]
  %v3883 = vld [vmem:[%s3 + $0x38] sm:$0xff]
  %v3884 = vld [vmem:[%s3 + $0x40] sm:$0xff]
  %v3885 = vld [vmem:[%s3 + $0x48] sm:$0xff]
  %v3886 = vld [vmem:[%s3 + $0x50] sm:$0xff]
  %v3887 = vld [vmem:[%s3 + $0x58] sm:$0xff]
  %v3888 = vld [vmem:[%s3 + $0x60] sm:$0xff]
  %v3889 = vld [vmem:[%s3 + $0x68] sm:$0xff]
  %v3890 = vld [vmem:[%s3 + $0x70] sm:$0xff]
  %v3891 = vld [vmem:[%s3 + $0x78] sm:$0xff]
  %v3892 = vld [vmem:[#allocation2 + $0x8] sm:$0xff]
  %v3893 = vld [vmem:[#allocation2 + $0x18] sm:$0xff]
  %v3894 = vld [vmem:[#allocation2 + $0x28] sm:$0xff]
  %v3895 = vld [vmem:[#allocation2 + $0x78] sm:$0xff]
  %v3896 = vld [vmem:[#allocation2 + $0x88] sm:$0xff]
  %v3897 = vld [vmem:[#allocation2 + $0x98] sm:$0xff]
  %v3898 = vld [vmem:[#allocation2 + $0xe8] sm:$0xff]
  %v3899 = vld [vmem:[#allocation2 + $0xf8] sm:$0xff]
  %v3900 = vld [vmem:[#allocation2 + $0x108] sm:$0xff]
  %s3901 = scalar_lea.vmem %s3, 128
  %v3902 = vld [vmem:[%s3901] sm:$0xff]
  %v3903 = vld [vmem:[%s3901 + $0x8] sm:$0xff]
  %v3904 = vld [vmem:[%s3901 + $0x10] sm:$0xff]
  %v3905 = vld [vmem:[%s3901 + $0x18] sm:$0xff]
  %v3906 = vld [vmem:[%s3901 + $0x20] sm:$0xff]
  %v3907 = vld [vmem:[%s3901 + $0x28] sm:$0xff]
  %v3908 = vld [vmem:[%s3901 + $0x30] sm:$0xff]
  %v3909 = vld [vmem:[%s3901 + $0x38] sm:$0xff]
  %v3910 = vld [vmem:[%s3901 + $0x40] sm:$0xff]
  %v3911 = vld [vmem:[%s3901 + $0x48] sm:$0xff]
  %v3912 = vld [vmem:[%s3901 + $0x50] sm:$0xff]
  %v3913 = vld [vmem:[%s3901 + $0x58] sm:$0xff]
  %v3914 = vld [vmem:[%s3901 + $0x60] sm:$0xff]
  %v3915 = vld [vmem:[%s3901 + $0x68] sm:$0xff]
  %v3916 = vld [vmem:[%s3901 + $0x70] sm:$0xff]
  %v3917 = vld [vmem:[%s3901 + $0x78] sm:$0xff]
  %v3934 = vunpack.c.l.b16 %v3902
  %v3935 = vunpack.c.h.b16 %v3902
  %v3936 = vunpack.c.l.b16 %v3903
  %v3937 = vunpack.c.h.b16 %v3903
  %v3938 = vunpack.c.l.b16 %v3904
  %v3939 = vunpack.c.h.b16 %v3904
  %v3940 = vunpack.c.l.b16 %v3905
  %v3941 = vunpack.c.h.b16 %v3905
  %v3942 = vunpack.c.l.b16 %v3906
  %v3943 = vunpack.c.h.b16 %v3906
  %v3944 = vunpack.c.l.b16 %v3907
  %v3945 = vunpack.c.h.b16 %v3907
  %v3946 = vunpack.c.l.b16 %v3908
  %v3947 = vunpack.c.h.b16 %v3908
  %v3948 = vunpack.c.l.b16 %v3909
  %v3949 = vunpack.c.h.b16 %v3909
  %v3950 = vunpack.c.l.b16 %v3910
  %v3951 = vunpack.c.h.b16 %v3910
  %v3952 = vunpack.c.l.b16 %v3911
  %v3953 = vunpack.c.h.b16 %v3911
  %v3954 = vunpack.c.l.b16 %v3912
  %v3955 = vunpack.c.h.b16 %v3912
  %v3956 = vunpack.c.l.b16 %v3913
  %v3957 = vunpack.c.h.b16 %v3913
  %v3958 = vunpack.c.l.b16 %v3914
  %v3959 = vunpack.c.h.b16 %v3914
  %v3960 = vunpack.c.l.b16 %v3915
  %v3961 = vunpack.c.h.b16 %v3915
  %v3962 = vunpack.c.l.b16 %v3916
  %v3963 = vunpack.c.h.b16 %v3916
  %v3964 = vunpack.c.l.b16 %v3917
  %v3965 = vunpack.c.h.b16 %v3917
  %v3966 = vpack.c.b16 %v3936, %v3934
  %v3967 = vpack.c.b16 %v3937, %v3935
  %v3968 = vpack.c.b16 %v3940, %v3938
  %v3969 = vpack.c.b16 %v3941, %v3939
  %v3970 = vpack.c.b16 %v3944, %v3942
  %v3971 = vpack.c.b16 %v3945, %v3943
  %v3972 = vpack.c.b16 %v3948, %v3946
  %v3973 = vpack.c.b16 %v3949, %v3947
  %v3974 = vpack.c.b16 %v3952, %v3950
  %v3975 = vpack.c.b16 %v3953, %v3951
  %v3976 = vpack.c.b16 %v3956, %v3954
  %v3977 = vpack.c.b16 %v3957, %v3955
  %v3978 = vpack.c.b16 %v3960, %v3958
  %v3979 = vpack.c.b16 %v3961, %v3959
  %v3980 = vpack.c.b16 %v3964, %v3962
  %v3981 = vpack.c.b16 %v3965, %v3963
  %3998 = vmatprep.subr.bf16.mxu0 %v3967
  %3999 = vmatpush1.bf16.msra.mxu0 %v3966
  %4000 = vmatprep.subr.bf16.mxu0 %v3969
  %4001 = vmatpush1.bf16.msra.mxu0 %v3968
  %4002 = vmatprep.subr.bf16.mxu0 %v3971
  %4003 = vmatpush1.bf16.msra.mxu0 %v3970
  %4004 = vmatprep.subr.bf16.mxu0 %v3973
  %4005 = vmatpush1.bf16.msra.mxu0 %v3972
  %4006 = vmatprep.subr.bf16.mxu0 %v3975
  %4007 = vmatpush1.bf16.msra.mxu0 %v3974
  %4008 = vmatprep.subr.bf16.mxu0 %v3977
  %4009 = vmatpush1.bf16.msra.mxu0 %v3976
  %4010 = vmatprep.subr.bf16.mxu0 %v3979
  %4011 = vmatpush1.bf16.msra.mxu0 %v3978
  %4012 = vmatprep.subr.bf16.mxu0 %v3981
  %4013 = vmatpush1.bf16.msra.mxu0 %v3980
  %4014 = vmatprep.subr.bf16.mxu0 0
  %4015 = vmatpush1.bf16.msra.mxu0 0
  %4016 = vmatprep.subr.bf16.mxu0 0
  %4017 = vmatpush1.bf16.msra.mxu0 0
  %4018 = vmatprep.subr.bf16.mxu0 0
  %4019 = vmatpush1.bf16.msra.mxu0 0
  %4020 = vmatprep.subr.bf16.mxu0 0
  %4021 = vmatpush1.bf16.msra.mxu0 0
  %4022 = vmatprep.subr.bf16.mxu0 0
  %4023 = vmatpush1.bf16.msra.mxu0 0
  %4024 = vmatprep.subr.bf16.mxu0 0
  %4025 = vmatpush1.bf16.msra.mxu0 0
  %4026 = vmatprep.subr.bf16.mxu0 0
  %4027 = vmatpush1.bf16.msra.mxu0 0
  %4028 = vmatprep.subr.bf16.mxu0 0
  %4029 = vmatpush1.bf16.msra.mxu0 0
  %4030 = vmatprep.mubr.bf16.mxu0 0
  %4031 = vmatmul.mubr.bf16.gmra.mrb[0].mxu0 %v3892
  %v4032 = vpop.f32.mrb[0].mxu0
  %v4033 = vadd.f32 0.0, %v4032
  %v4034 = vpop.f32.mrb[0].mxu0
  %v4035 = vadd.f32 0.0, %v4034
  %v4036 = vpop.f32.mrb[0].mxu0
  %v4037 = vadd.f32 0.0, %v4036
  %v4038 = vpop.f32.mrb[0].mxu0
  %v4039 = vadd.f32 0.0, %v4038
  %4040 = vmatprep.mubr.bf16.mxu0 0
  %4041 = vmatmul.mubr.bf16.gmra.mrb[0].mxu0 %v3893
  %v4042 = vpop.f32.mrb[0].mxu0
  %v4043 = vadd.f32 0.0, %v4042
  %v4044 = vpop.f32.mrb[0].mxu0
  %v4045 = vadd.f32 0.0, %v4044
  %v4046 = vpop.f32.mrb[0].mxu0
  %v4047 = vadd.f32 0.0, %v4046
  %v4048 = vpop.f32.mrb[0].mxu0
  %v4049 = vadd.f32 0.0, %v4048
  %4050 = vmatprep.mubr.bf16.mxu0 0
  %4051 = vmatmul.mubr.bf16.gmra.mrb[0].mxu0 %v3894
  %v4052 = vpop.f32.mrb[0].mxu0
  %v4053 = vadd.f32 0.0, %v4052
  %v4054 = vpop.f32.mrb[0].mxu0
  %v4055 = vadd.f32 0.0, %v4054
  %v4056 = vpop.f32.mrb[0].mxu0
  %v4057 = vadd.f32 0.0, %v4056
  %v4058 = vpop.f32.mrb[0].mxu0
  %v4059 = vadd.f32 0.0, %v4058
  %4060 = vmatprep.mubr.bf16.mxu0 0
  %4061 = vmatmul.mubr.bf16.gmra.mrb[0].mxu0 %v3895
  %v4062 = vpop.f32.mrb[0].mxu0
  %v4063 = vadd.f32 0.0, %v4062
  %v4064 = vpop.f32.mrb[0].mxu0
  %v4065 = vadd.f32 0.0, %v4064
  %v4066 = vpop.f32.mrb[0].mxu0
  %v4067 = vadd.f32 0.0, %v4066
  %v4068 = vpop.f32.mrb[0].mxu0
  %v4069 = vadd.f32 0.0, %v4068
  %4070 = vmatprep.mubr.bf16.mxu0 0
  %4071 = vmatmul.mubr.bf16.gmra.mrb[0].mxu0 %v3896
  %v4072 = vpop.f32.mrb[0].mxu0
  %v4073 = vadd.f32 0.0, %v4072
  %v4074 = vpop.f32.mrb[0].mxu0
  %v4075 = vadd.f32 0.0, %v4074
  %v4076 = vpop.f32.mrb[0].mxu0
  %v4077 = vadd.f32 0.0, %v4076
  %v4078 = vpop.f32.mrb[0].mxu0
  %v4079 = vadd.f32 0.0, %v4078
  %4080 = vmatprep.mubr.bf16.mxu0 0
  %4081 = vmatmul.mubr.bf16.gmra.mrb[0].mxu0 %v3897
  %v4082 = vpop.f32.mrb[0].mxu0
  %v4083 = vadd.f32 0.0, %v4082
  %v4084 = vpop.f32.mrb[0].mxu0
  %v4085 = vadd.f32 0.0, %v4084
  %v4086 = vpop.f32.mrb[0].mxu0
  %v4087 = vadd.f32 0.0, %v4086
  %v4088 = vpop.f32.mrb[0].mxu0
  %v4089 = vadd.f32 0.0, %v4088
  %4090 = vmatprep.mubr.bf16.mxu0 0
  %4091 = vmatmul.mubr.bf16.gmra.mrb[0].mxu0 %v3898
  %v4092 = vpop.f32.mrb[0].mxu0
  %v4093 = vadd.f32 0.0, %v4092
  %v4094 = vpop.f32.mrb[0].mxu0
  %v4095 = vadd.f32 0.0, %v4094
  %v4096 = vpop.f32.mrb[0].mxu0
  %v4097 = vadd.f32 0.0, %v4096
  %v4098 = vpop.f32.mrb[0].mxu0
  %v4099 = vadd.f32 0.0, %v4098
  %4100 = vmatprep.mubr.bf16.mxu0 0
  %4101 = vmatmul.mubr.bf16.gmra.mrb[0].mxu0 %v3899
  %v4102 = vpop.f32.mrb[0].mxu0
  %v4103 = vadd.f32 0.0, %v4102
  %v4104 = vpop.f32.mrb[0].mxu0
  %v4105 = vadd.f32 0.0, %v4104
  %v4106 = vpop.f32.mrb[0].mxu0
  %v4107 = vadd.f32 0.0, %v4106
  %v4108 = vpop.f32.mrb[0].mxu0
  %v4109 = vadd.f32 0.0, %v4108
  %4110 = vmatprep.mubr.bf16.mxu0 0
  %4111 = vmatmul.mubr.bf16.gmra.mrb[0].mxu0 %v3900
  %v4112 = vpop.f32.mrb[0].mxu0
  %v4113 = vadd.f32 0.0, %v4112
  %v4114 = vpop.f32.mrb[0].mxu0
  %v4115 = vadd.f32 0.0, %v4114
  %v4116 = vpop.f32.mrb[0].mxu0
  %v4117 = vadd.f32 0.0, %v4116
  %v4118 = vpop.f32.mrb[0].mxu0
  %v4119 = vadd.f32 0.0, %v4118
  %4120 = vdwg.mxu0
  %v4121 = vld [vmem:[#allocation2 + $0x30] sm:$0xff]
  %v4122 = vld [vmem:[#allocation2 + $0xa0] sm:$0xff]
  %v4123 = vld [vmem:[#allocation2 + $0x110] sm:$0xff]
  %s4124 = scalar_lea.vmem %s3, 256
  %v4125 = vld [vmem:[%s4124] sm:$0xff]
  %v4126 = vld [vmem:[%s4124 + $0x8] sm:$0xff]
  %v4127 = vld [vmem:[%s4124 + $0x10] sm:$0xff]
  %v4128 = vld [vmem:[%s4124 + $0x18] sm:$0xff]
  %v4129 = vld [vmem:[%s4124 + $0x20] sm:$0xff]
  %v4130 = vld [vmem:[%s4124 + $0x28] sm:$0xff]
  %v4131 = vld [vmem:[%s4124 + $0x30] sm:$0xff]
  %v4132 = vld [vmem:[%s4124 + $0x38] sm:$0xff]
  %v4133 = vld [vmem:[%s4124 + $0x40] sm:$0xff]
  %v4134 = vld [vmem:[%s4124 + $0x48] sm:$0xff]
  %v4135 = vld [vmem:[%s4124 + $0x50] sm:$0xff]
  %v4136 = vld [vmem:[%s4124 + $0x58] sm:$0xff]
  %v4137 = vld [vmem:[%s4124 + $0x60] sm:$0xff]
  %v4138 = vld [vmem:[%s4124 + $0x68] sm:$0xff]
  %v4139 = vld [vmem:[%s4124 + $0x70] sm:$0xff]
  %v4140 = vld [vmem:[%s4124 + $0x78] sm:$0xff]
  %v4141 = vld [vmem:[#allocation2 + $0x38] sm:$0xff]
  %v4142 = vld [vmem:[#allocation2 + $0x48] sm:$0xff]
  %v4143 = vld [vmem:[#allocation2 + $0x58] sm:$0xff]
  %v4144 = vld [vmem:[#allocation2 + $0xa8] sm:$0xff]
  %v4145 = vld [vmem:[#allocation2 + $0xb8] sm:$0xff]
  %v4146 = vld [vmem:[#allocation2 + $0xc8] sm:$0xff]
  %v4147 = vld [vmem:[#allocation2 + $0x118] sm:$0xff]
  %v4148 = vld [vmem:[#allocation2 + $0x128] sm:$0xff]
  %v4149 = vld [vmem:[#allocation2 + $0x138] sm:$0xff]
  %s4150 = scalar_lea.vmem %s3, 384
  %v4151 = vld [vmem:[%s4150] sm:$0xff]
  %v4152 = vld [vmem:[%s4150 + $0x8] sm:$0xff]
  %v4153 = vld [vmem:[%s4150 + $0x10] sm:$0xff]
  %v4154 = vld [vmem:[%s4150 + $0x18] sm:$0xff]
  %v4155 = vld [vmem:[%s4150 + $0x20] sm:$0xff]
  %v4156 = vld [vmem:[%s4150 + $0x28] sm:$0xff]
  %v4157 = vld [vmem:[%s4150 + $0x30] sm:$0xff]
  %v4158 = vld [vmem:[%s4150 + $0x38] sm:$0xff]
  %v4159 = vld [vmem:[%s4150 + $0x40] sm:$0xff]
  %v4160 = vld [vmem:[%s4150 + $0x48] sm:$0xff]
  %v4161 = vld [vmem:[%s4150 + $0x50] sm:$0xff]
  %v4162 = vld [vmem:[%s4150 + $0x58] sm:$0xff]
  %v4163 = vld [vmem:[%s4150 + $0x60] sm:$0xff]
  %v4164 = vld [vmem:[%s4150 + $0x68] sm:$0xff]
  %v4165 = vld [vmem:[%s4150 + $0x70] sm:$0xff]
  %v4166 = vld [vmem:[%s4150 + $0x78] sm:$0xff]
  %v4183 = vunpack.c.l.b16 %v4151
  %v4184 = vunpack.c.h.b16 %v4151
  %v4185 = vunpack.c.l.b16 %v4152
  %v4186 = vunpack.c.h.b16 %v4152
  %v4187 = vunpack.c.l.b16 %v4153
  %v4188 = vunpack.c.h.b16 %v4153
  %v4189 = vunpack.c.l.b16 %v4154
  %v4190 = vunpack.c.h.b16 %v4154
  %v4191 = vunpack.c.l.b16 %v4155
  %v4192 = vunpack.c.h.b16 %v4155
  %v4193 = vunpack.c.l.b16 %v4156
  %v4194 = vunpack.c.h.b16 %v4156
  %v4195 = vunpack.c.l.b16 %v4157
  %v4196 = vunpack.c.h.b16 %v4157
  %v4197 = vunpack.c.l.b16 %v4158
  %v4198 = vunpack.c.h.b16 %v4158
  %v4199 = vunpack.c.l.b16 %v4159
  %v4200 = vunpack.c.h.b16 %v4159
  %v4201 = vunpack.c.l.b16 %v4160
  %v4202 = vunpack.c.h.b16 %v4160
  %v4203 = vunpack.c.l.b16 %v4161
  %v4204 = vunpack.c.h.b16 %v4161
  %v4205 = vunpack.c.l.b16 %v4162
  %v4206 = vunpack.c.h.b16 %v4162
  %v4207 = vunpack.c.l.b16 %v4163
  %v4208 = vunpack.c.h.b16 %v4163
  %v4209 = vunpack.c.l.b16 %v4164
  %v4210 = vunpack.c.h.b16 %v4164
  %v4211 = vunpack.c.l.b16 %v4165
  %v4212 = vunpack.c.h.b16 %v4165
  %v4213 = vunpack.c.l.b16 %v4166
  %v4214 = vunpack.c.h.b16 %v4166
  %v4215 = vpack.c.b16 %v4185, %v4183
  %v4216 = vpack.c.b16 %v4186, %v4184
  %v4217 = vpack.c.b16 %v4189, %v4187
  %v4218 = vpack.c.b16 %v4190, %v4188
  %v4219 = vpack.c.b16 %v4193, %v4191
  %v4220 = vpack.c.b16 %v4194, %v4192
  %v4221 = vpack.c.b16 %v4197, %v4195
  %v4222 = vpack.c.b16 %v4198, %v4196
  %v4223 = vpack.c.b16 %v4201, %v4199
  %v4224 = vpack.c.b16 %v4202, %v4200
  %v4225 = vpack.c.b16 %v4205, %v4203
  %v4226 = vpack.c.b16 %v4206, %v4204
  %v4227 = vpack.c.b16 %v4209, %v4207
  %v4228 = vpack.c.b16 %v4210, %v4208
  %v4229 = vpack.c.b16 %v4213, %v4211
  %v4230 = vpack.c.b16 %v4214, %v4212
  %4247 = vmatprep.subr.bf16.mxu0 %v4216
  %4248 = vmatpush1.bf16.msra.mxu0 %v4215
  %4249 = vmatprep.subr.bf16.mxu0 %v4218
  %4250 = vmatpush1.bf16.msra.mxu0 %v4217
  %4251 = vmatprep.subr.bf16.mxu0 %v4220
  %4252 = vmatpush1.bf16.msra.mxu0 %v4219
  %4253 = vmatprep.subr.bf16.mxu0 %v4222
  %4254 = vmatpush1.bf16.msra.mxu0 %v4221
  %4255 = vmatprep.subr.bf16.mxu0 %v4224
  %4256 = vmatpush1.bf16.msra.mxu0 %v4223
  %4257 = vmatprep.subr.bf16.mxu0 %v4226
  %4258 = vmatpush1.bf16.msra.mxu0 %v4225
  %4259 = vmatprep.subr.bf16.mxu0 %v4228
  %4260 = vmatpush1.bf16.msra.mxu0 %v4227
  %4261 = vmatprep.subr.bf16.mxu0 %v4230
  %4262 = vmatpush1.bf16.msra.mxu0 %v4229
  %4263 = vmatprep.subr.bf16.mxu0 0
  %4264 = vmatpush1.bf16.msra.mxu0 0
  %4265 = vmatprep.subr.bf16.mxu0 0
  %4266 = vmatpush1.bf16.msra.mxu0 0
  %4267 = vmatprep.subr.bf16.mxu0 0
  %4268 = vmatpush1.bf16.msra.mxu0 0
  %4269 = vmatprep.subr.bf16.mxu0 0
  %4270 = vmatpush1.bf16.msra.mxu0 0
  %4271 = vmatprep.subr.bf16.mxu0 0
  %4272 = vmatpush1.bf16.msra.mxu0 0
  %4273 = vmatprep.subr.bf16.mxu0 0
  %4274 = vmatpush1.bf16.msra.mxu0 0
  %4275 = vmatprep.subr.bf16.mxu0 0
  %4276 = vmatpush1.bf16.msra.mxu0 0
  %4277 = vmatprep.subr.bf16.mxu0 0
  %4278 = vmatpush1.bf16.msra.mxu0 0
  %4279 = vmatprep.mubr.bf16.mxu0 0
  %4280 = vmatmul.mubr.bf16.gmra.mrb[0].mxu0 %v4141
  %v4281 = vpop.f32.mrb[0].mxu0
  %v4282 = vadd.f32 0.0, %v4281
  %v4283 = vpop.f32.mrb[0].mxu0
  %v4284 = vadd.f32 0.0, %v4283
  %v4285 = vpop.f32.mrb[0].mxu0
  %v4286 = vadd.f32 0.0, %v4285
  %v4287 = vpop.f32.mrb[0].mxu0
  %v4288 = vadd.f32 0.0, %v4287
  %4289 = vmatprep.mubr.bf16.mxu0 0
  %4290 = vmatmul.mubr.bf16.gmra.mrb[0].mxu0 %v4142
  %v4291 = vpop.f32.mrb[0].mxu0
  %v4292 = vadd.f32 0.0, %v4291
  %v4293 = vpop.f32.mrb[0].mxu0
  %v4294 = vadd.f32 0.0, %v4293
  %v4295 = vpop.f32.mrb[0].mxu0
  %v4296 = vadd.f32 0.0, %v4295
  %v4297 = vpop.f32.mrb[0].mxu0
  %v4298 = vadd.f32 0.0, %v4297
  %4299 = vmatprep.mubr.bf16.mxu0 0
  %4300 = vmatmul.mubr.bf16.gmra.mrb[0].mxu0 %v4143
  %v4301 = vpop.f32.mrb[0].mxu0
  %v4302 = vadd.f32 0.0, %v4301
  %v4303 = vpop.f32.mrb[0].mxu0
  %v4304 = vadd.f32 0.0, %v4303
  %v4305 = vpop.f32.mrb[0].mxu0
  %v4306 = vadd.f32 0.0, %v4305
  %v4307 = vpop.f32.mrb[0].mxu0
  %v4308 = vadd.f32 0.0, %v4307
  %4309 = vmatprep.mubr.bf16.mxu0 0
  %4310 = vmatmul.mubr.bf16.gmra.mrb[0].mxu0 %v4144
  %v4311 = vpop.f32.mrb[0].mxu0
  %v4312 = vadd.f32 0.0, %v4311
  %v4313 = vpop.f32.mrb[0].mxu0
  %v4314 = vadd.f32 0.0, %v4313
  %v4315 = vpop.f32.mrb[0].mxu0
  %v4316 = vadd.f32 0.0, %v4315
  %v4317 = vpop.f32.mrb[0].mxu0
  %v4318 = vadd.f32 0.0, %v4317
  %4319 = vmatprep.mubr.bf16.mxu0 0
  %4320 = vmatmul.mubr.bf16.gmra.mrb[0].mxu0 %v4145
  %v4321 = vpop.f32.mrb[0].mxu0
  %v4322 = vadd.f32 0.0, %v4321
  %v4323 = vpop.f32.mrb[0].mxu0
  %v4324 = vadd.f32 0.0, %v4323
  %v4325 = vpop.f32.mrb[0].mxu0
  %v4326 = vadd.f32 0.0, %v4325
  %v4327 = vpop.f32.mrb[0].mxu0
  %v4328 = vadd.f32 0.0, %v4327
  %4329 = vmatprep.mubr.bf16.mxu0 0
  %4330 = vmatmul.mubr.bf16.gmra.mrb[0].mxu0 %v4146
  %v4331 = vpop.f32.mrb[0].mxu0
  %v4332 = vadd.f32 0.0, %v4331
  %v4333 = vpop.f32.mrb[0].mxu0
  %v4334 = vadd.f32 0.0, %v4333
  %v4335 = vpop.f32.mrb[0].mxu0
  %v4336 = vadd.f32 0.0, %v4335
  %v4337 = vpop.f32.mrb[0].mxu0
  %v4338 = vadd.f32 0.0, %v4337
  %4339 = vmatprep.mubr.bf16.mxu0 0
  %4340 = vmatmul.mubr.bf16.gmra.mrb[0].mxu0 %v4147
  %v4341 = vpop.f32.mrb[0].mxu0
  %v4342 = vadd.f32 0.0, %v4341
  %v4343 = vpop.f32.mrb[0].mxu0
  %v4344 = vadd.f32 0.0, %v4343
  %v4345 = vpop.f32.mrb[0].mxu0
  %v4346 = vadd.f32 0.0, %v4345
  %v4347 = vpop.f32.mrb[0].mxu0
  %v4348 = vadd.f32 0.0, %v4347
  %4349 = vmatprep.mubr.bf16.mxu0 0
  %4350 = vmatmul.mubr.bf16.gmra.mrb[0].mxu0 %v4148
  %v4351 = vpop.f32.mrb[0].mxu0
  %v4352 = vadd.f32 0.0, %v4351
  %v4353 = vpop.f32.mrb[0].mxu0
  %v4354 = vadd.f32 0.0, %v4353
  %v4355 = vpop.f32.mrb[0].mxu0
  %v4356 = vadd.f32 0.0, %v4355
  %v4357 = vpop.f32.mrb[0].mxu0
  %v4358 = vadd.f32 0.0, %v4357
  %4359 = vmatprep.mubr.bf16.mxu0 0
  %4360 = vmatmul.mubr.bf16.gmra.mrb[0].mxu0 %v4149
  %v4361 = vpop.f32.mrb[0].mxu0
  %v4362 = vadd.f32 0.0, %v4361
  %v4363 = vpop.f32.mrb[0].mxu0
  %v4364 = vadd.f32 0.0, %v4363
  %v4365 = vpop.f32.mrb[0].mxu0
  %v4366 = vadd.f32 0.0, %v4365
  %v4367 = vpop.f32.mrb[0].mxu0
  %v4368 = vadd.f32 0.0, %v4367
  %4369 = vdwg.mxu0
  %v4370 = vld [vmem:[#allocation2 + $0x40] sm:$0xff]
  %v4371 = vld [vmem:[#allocation2 + $0x50] sm:$0xff]
  %v4372 = vld [vmem:[#allocation2 + $0x60] sm:$0xff]
  %v4373 = vld [vmem:[#allocation2 + $0xb0] sm:$0xff]
  %v4374 = vld [vmem:[#allocation2 + $0xc0] sm:$0xff]
  %v4375 = vld [vmem:[#allocation2 + $0xd0] sm:$0xff]
  %v4376 = vld [vmem:[#allocation2 + $0x120] sm:$0xff]
  %v4377 = vld [vmem:[#allocation2 + $0x130] sm:$0xff]
  %v4378 = vld [vmem:[#allocation2 + $0x140] sm:$0xff]
  %s4379 = scalar_lea.vmem %s3, 512
  %v4380 = vld [vmem:[%s4379] sm:$0xff]
  %v4381 = vld [vmem:[%s4379 + $0x8] sm:$0xff]
  %v4382 = vld [vmem:[%s4379 + $0x10] sm:$0xff]
  %v4383 = vld [vmem:[%s4379 + $0x18] sm:$0xff]
  %v4384 = vld [vmem:[%s4379 + $0x20] sm:$0xff]
  %v4385 = vld [vmem:[%s4379 + $0x28] sm:$0xff]
  %v4386 = vld [vmem:[%s4379 + $0x30] sm:$0xff]
  %v4387 = vld [vmem:[%s4379 + $0x38] sm:$0xff]
  %v4388 = vld [vmem:[%s4379 + $0x40] sm:$0xff]
  %v4389 = vld [vmem:[%s4379 + $0x48] sm:$0xff]
  %v4390 = vld [vmem:[%s4379 + $0x50] sm:$0xff]
  %v4391 = vld [vmem:[%s4379 + $0x58] sm:$0xff]
  %v4392 = vld [vmem:[%s4379 + $0x60] sm:$0xff]
  %v4393 = vld [vmem:[%s4379 + $0x68] sm:$0xff]
  %v4394 = vld [vmem:[%s4379 + $0x70] sm:$0xff]
  %v4395 = vld [vmem:[%s4379 + $0x78] sm:$0xff]
  %v4396 = vld [vmem:[#allocation2 + $0x68] sm:$0xff]
  %v4397 = vld [vmem:[#allocation2 + $0xd8] sm:$0xff]
  %v4398 = vld [vmem:[#allocation2 + $0x148] sm:$0xff]
  %s4399 = scalar_lea.vmem %s3, 640
  %v4400 = vld [vmem:[%s4399] sm:$0xff]
  %v4401 = vld [vmem:[%s4399 + $0x8] sm:$0xff]
  %v4402 = vld [vmem:[%s4399 + $0x10] sm:$0xff]
  %v4403 = vld [vmem:[%s4399 + $0x18] sm:$0xff]
  %v4404 = vld [vmem:[%s4399 + $0x20] sm:$0xff]
  %v4405 = vld [vmem:[%s4399 + $0x28] sm:$0xff]
  %v4406 = vld [vmem:[%s4399 + $0x30] sm:$0xff]
  %v4407 = vld [vmem:[%s4399 + $0x38] sm:$0xff]
  %v4408 = vld [vmem:[%s4399 + $0x40] sm:$0xff]
  %v4409 = vld [vmem:[%s4399 + $0x48] sm:$0xff]
  %v4410 = vld [vmem:[%s4399 + $0x50] sm:$0xff]
  %v4411 = vld [vmem:[%s4399 + $0x58] sm:$0xff]
  %v4412 = vld [vmem:[%s4399 + $0x60] sm:$0xff]
  %v4413 = vld [vmem:[%s4399 + $0x68] sm:$0xff]
  %v4414 = vld [vmem:[%s4399 + $0x70] sm:$0xff]
  %v4415 = vld [vmem:[%s4399 + $0x78] sm:$0xff]
  %v4432 = vunpack.c.l.b16 %v4400
  %v4433 = vunpack.c.h.b16 %v4400
  %v4434 = vunpack.c.l.b16 %v4401
  %v4435 = vunpack.c.h.b16 %v4401
  %v4436 = vunpack.c.l.b16 %v4402
  %v4437 = vunpack.c.h.b16 %v4402
  %v4438 = vunpack.c.l.b16 %v4403
  %v4439 = vunpack.c.h.b16 %v4403
  %v4440 = vunpack.c.l.b16 %v4404
  %v4441 = vunpack.c.h.b16 %v4404
  %v4442 = vunpack.c.l.b16 %v4405
  %v4443 = vunpack.c.h.b16 %v4405
  %v4444 = vunpack.c.l.b16 %v4406
  %v4445 = vunpack.c.h.b16 %v4406
  %v4446 = vunpack.c.l.b16 %v4407
  %v4447 = vunpack.c.h.b16 %v4407
  %v4448 = vunpack.c.l.b16 %v4408
  %v4449 = vunpack.c.h.b16 %v4408
  %v4450 = vunpack.c.l.b16 %v4409
  %v4451 = vunpack.c.h.b16 %v4409
  %v4452 = vunpack.c.l.b16 %v4410
  %v4453 = vunpack.c.h.b16 %v4410
  %v4454 = vunpack.c.l.b16 %v4411
  %v4455 = vunpack.c.h.b16 %v4411
  %v4456 = vunpack.c.l.b16 %v4412
  %v4457 = vunpack.c.h.b16 %v4412
  %v4458 = vunpack.c.l.b16 %v4413
  %v4459 = vunpack.c.h.b16 %v4413
  %v4460 = vunpack.c.l.b16 %v4414
  %v4461 = vunpack.c.h.b16 %v4414
  %v4462 = vunpack.c.l.b16 %v4415
  %v4463 = vunpack.c.h.b16 %v4415
  %v4464 = vpack.c.b16 %v4434, %v4432
  %v4465 = vpack.c.b16 %v4435, %v4433
  %v4466 = vpack.c.b16 %v4438, %v4436
  %v4467 = vpack.c.b16 %v4439, %v4437
  %v4468 = vpack.c.b16 %v4442, %v4440
  %v4469 = vpack.c.b16 %v4443, %v4441
  %v4470 = vpack.c.b16 %v4446, %v4444
  %v4471 = vpack.c.b16 %v4447, %v4445
  %v4472 = vpack.c.b16 %v4450, %v4448
  %v4473 = vpack.c.b16 %v4451, %v4449
  %v4474 = vpack.c.b16 %v4454, %v4452
  %v4475 = vpack.c.b16 %v4455, %v4453
  %v4476 = vpack.c.b16 %v4458, %v4456
  %v4477 = vpack.c.b16 %v4459, %v4457
  %v4478 = vpack.c.b16 %v4462, %v4460
  %v4479 = vpack.c.b16 %v4463, %v4461
  %4496 = vmatprep.subr.bf16.mxu0 %v4465
  %4497 = vmatpush1.bf16.msra.mxu0 %v4464
  %4498 = vmatprep.subr.bf16.mxu0 %v4467
  %4499 = vmatpush1.bf16.msra.mxu0 %v4466
  %4500 = vmatprep.subr.bf16.mxu0 %v4469
  %4501 = vmatpush1.bf16.msra.mxu0 %v4468
  %4502 = vmatprep.subr.bf16.mxu0 %v4471
  %4503 = vmatpush1.bf16.msra.mxu0 %v4470
  %4504 = vmatprep.subr.bf16.mxu0 %v4473
  %4505 = vmatpush1.bf16.msra.mxu0 %v4472
  %4506 = vmatprep.subr.bf16.mxu0 %v4475
  %4507 = vmatpush1.bf16.msra.mxu0 %v4474
  %4508 = vmatprep.subr.bf16.mxu0 %v4477
  %4509 = vmatpush1.bf16.msra.mxu0 %v4476
  %4510 = vmatprep.subr.bf16.mxu0 %v4479
  %4511 = vmatpush1.bf16.msra.mxu0 %v4478
  %4512 = vmatprep.subr.bf16.mxu0 0
  %4513 = vmatpush1.bf16.msra.mxu0 0
  %4514 = vmatprep.subr.bf16.mxu0 0
  %4515 = vmatpush1.bf16.msra.mxu0 0
  %4516 = vmatprep.subr.bf16.mxu0 0
  %4517 = vmatpush1.bf16.msra.mxu0 0
  %4518 = vmatprep.subr.bf16.mxu0 0
  %4519 = vmatpush1.bf16.msra.mxu0 0
  %4520 = vmatprep.subr.bf16.mxu0 0
  %4521 = vmatpush1.bf16.msra.mxu0 0
  %4522 = vmatprep.subr.bf16.mxu0 0
  %4523 = vmatpush1.bf16.msra.mxu0 0
  %4524 = vmatprep.subr.bf16.mxu0 0
  %4525 = vmatpush1.bf16.msra.mxu0 0
  %4526 = vmatprep.subr.bf16.mxu0 0
  %4527 = vmatpush1.bf16.msra.mxu0 0
  %4528 = vmatprep.mubr.bf16.mxu0 0
  %4529 = vmatmul.mubr.bf16.gmra.mrb[0].mxu0 %v4142
  %v4530 = vpop.f32.mrb[0].mxu0
  %v4531 = vadd.f32 0.0, %v4530
  %v4532 = vpop.f32.mrb[0].mxu0
  %v4533 = vadd.f32 0.0, %v4532
  %v4534 = vpop.f32.mrb[0].mxu0
  %v4535 = vadd.f32 0.0, %v4534
  %v4536 = vpop.f32.mrb[0].mxu0
  %v4537 = vadd.f32 0.0, %v4536
  %4538 = vmatprep.mubr.bf16.mxu0 0
  %4539 = vmatmul.mubr.bf16.gmra.mrb[0].mxu0 %v4143
  %v4540 = vpop.f32.mrb[0].mxu0
  %v4541 = vadd.f32 0.0, %v4540
  %v4542 = vpop.f32.mrb[0].mxu0
  %v4543 = vadd.f32 0.0, %v4542
  %v4544 = vpop.f32.mrb[0].mxu0
  %v4545 = vadd.f32 0.0, %v4544
  %v4546 = vpop.f32.mrb[0].mxu0
  %v4547 = vadd.f32 0.0, %v4546
  %4548 = vmatprep.mubr.bf16.mxu0 0
  %4549 = vmatmul.mubr.bf16.gmra.mrb[0].mxu0 %v4396
  %v4550 = vpop.f32.mrb[0].mxu0
  %v4551 = vadd.f32 0.0, %v4550
  %v4552 = vpop.f32.mrb[0].mxu0
  %v4553 = vadd.f32 0.0, %v4552
  %v4554 = vpop.f32.mrb[0].mxu0
  %v4555 = vadd.f32 0.0, %v4554
  %v4556 = vpop.f32.mrb[0].mxu0
  %v4557 = vadd.f32 0.0, %v4556
  %4558 = vmatprep.mubr.bf16.mxu0 0
  %4559 = vmatmul.mubr.bf16.gmra.mrb[0].mxu0 %v4145
  %v4560 = vpop.f32.mrb[0].mxu0
  %v4561 = vadd.f32 0.0, %v4560
  %v4562 = vpop.f32.mrb[0].mxu0
  %v4563 = vadd.f32 0.0, %v4562
  %v4564 = vpop.f32.mrb[0].mxu0
  %v4565 = vadd.f32 0.0, %v4564
  %v4566 = vpop.f32.mrb[0].mxu0
  %v4567 = vadd.f32 0.0, %v4566
  %4568 = vmatprep.mubr.bf16.mxu0 0
  %4569 = vmatmul.mubr.bf16.gmra.mrb[0].mxu0 %v4146
  %v4570 = vpop.f32.mrb[0].mxu0
  %v4571 = vadd.f32 0.0, %v4570
  %v4572 = vpop.f32.mrb[0].mxu0
  %v4573 = vadd.f32 0.0, %v4572
  %v4574 = vpop.f32.mrb[0].mxu0
  %v4575 = vadd.f32 0.0, %v4574
  %v4576 = vpop.f32.mrb[0].mxu0
  %v4577 = vadd.f32 0.0, %v4576
  %4578 = vmatprep.mubr.bf16.mxu0 0
  %4579 = vmatmul.mubr.bf16.gmra.mrb[0].mxu0 %v4397
  %v4580 = vpop.f32.mrb[0].mxu0
  %v4581 = vadd.f32 0.0, %v4580
  %v4582 = vpop.f32.mrb[0].mxu0
  %v4583 = vadd.f32 0.0, %v4582
  %v4584 = vpop.f32.mrb[0].mxu0
  %v4585 = vadd.f32 0.0, %v4584
  %v4586 = vpop.f32.mrb[0].mxu0
  %v4587 = vadd.f32 0.0, %v4586
  %4588 = vmatprep.mubr.bf16.mxu0 0
  %4589 = vmatmul.mubr.bf16.gmra.mrb[0].mxu0 %v4148
  %v4590 = vpop.f32.mrb[0].mxu0
  %v4591 = vadd.f32 0.0, %v4590
  %v4592 = vpop.f32.mrb[0].mxu0
  %v4593 = vadd.f32 0.0, %v4592
  %v4594 = vpop.f32.mrb[0].mxu0
  %v4595 = vadd.f32 0.0, %v4594
  %v4596 = vpop.f32.mrb[0].mxu0
  %v4597 = vadd.f32 0.0, %v4596
  %4598 = vmatprep.mubr.bf16.mxu0 0
  %4599 = vmatmul.mubr.bf16.gmra.mrb[0].mxu0 %v4149
  %v4600 = vpop.f32.mrb[0].mxu0
  %v4601 = vadd.f32 0.0, %v4600
  %v4602 = vpop.f32.mrb[0].mxu0
  %v4603 = vadd.f32 0.0, %v4602
  %v4604 = vpop.f32.mrb[0].mxu0
  %v4605 = vadd.f32 0.0, %v4604
  %v4606 = vpop.f32.mrb[0].mxu0
  %v4607 = vadd.f32 0.0, %v4606
  %4608 = vmatprep.mubr.bf16.mxu0 0
  %4609 = vmatmul.mubr.bf16.gmra.mrb[0].mxu0 %v4398
  %v4610 = vpop.f32.mrb[0].mxu0
  %v4611 = vadd.f32 0.0, %v4610
  %v4612 = vpop.f32.mrb[0].mxu0
  %v4613 = vadd.f32 0.0, %v4612
  %v4614 = vpop.f32.mrb[0].mxu0
  %v4615 = vadd.f32 0.0, %v4614
  %v4616 = vpop.f32.mrb[0].mxu0
  %v4617 = vadd.f32 0.0, %v4616
  %4618 = vdwg.mxu0
  %v4619 = vld [vmem:[#allocation2 + $0x150] sm:$0xff]
  %v4620 = vld [vmem:[#allocation2 + $0x160] sm:$0xff]
  %v4621 = vld [vmem:[#allocation2 + $0x170] sm:$0xff]
  %s4622 = scalar_lea.vmem %s3, 768
  %v4623 = vld [vmem:[%s4622] sm:$0xff]
  %v4624 = vld [vmem:[%s4622 + $0x8] sm:$0xff]
  %v4625 = vld [vmem:[%s4622 + $0x10] sm:$0xff]
  %v4626 = vld [vmem:[%s4622 + $0x18] sm:$0xff]
  %v4627 = vld [vmem:[%s4622 + $0x20] sm:$0xff]
  %v4628 = vld [vmem:[%s4622 + $0x28] sm:$0xff]
  %v4629 = vld [vmem:[%s4622 + $0x30] sm:$0xff]
  %v4630 = vld [vmem:[%s4622 + $0x38] sm:$0xff]
  %v4631 = vld [vmem:[%s4622 + $0x40] sm:$0xff]
  %v4632 = vld [vmem:[%s4622 + $0x48] sm:$0xff]
  %v4633 = vld [vmem:[%s4622 + $0x50] sm:$0xff]
  %v4634 = vld [vmem:[%s4622 + $0x58] sm:$0xff]
  %v4635 = vld [vmem:[%s4622 + $0x60] sm:$0xff]
  %v4636 = vld [vmem:[%s4622 + $0x68] sm:$0xff]
  %v4637 = vld [vmem:[%s4622 + $0x70] sm:$0xff]
  %v4638 = vld [vmem:[%s4622 + $0x78] sm:$0xff]
  %v4639 = vld [vmem:[#allocation2 + $0x158] sm:$0xff]
  %v4640 = vld [vmem:[#allocation2 + $0x168] sm:$0xff]
  %v4641 = vld [vmem:[#allocation2 + $0x178] sm:$0xff]
  %s4642 = scalar_lea.vmem %s3, 896
  %v4643 = vld [vmem:[%s4642] sm:$0xff]
  %v4644 = vld [vmem:[%s4642 + $0x8] sm:$0xff]
  %v4645 = vld [vmem:[%s4642 + $0x10] sm:$0xff]
  %v4646 = vld [vmem:[%s4642 + $0x18] sm:$0xff]
  %v4647 = vld [vmem:[%s4642 + $0x20] sm:$0xff]
  %v4648 = vld [vmem:[%s4642 + $0x28] sm:$0xff]
  %v4649 = vld [vmem:[%s4642 + $0x30] sm:$0xff]
  %v4650 = vld [vmem:[%s4642 + $0x38] sm:$0xff]
  %v4651 = vld [vmem:[%s4642 + $0x40] sm:$0xff]
  %v4652 = vld [vmem:[%s4642 + $0x48] sm:$0xff]
  %v4653 = vld [vmem:[%s4642 + $0x50] sm:$0xff]
  %v4654 = vld [vmem:[%s4642 + $0x58] sm:$0xff]
  %v4655 = vld [vmem:[%s4642 + $0x60] sm:$0xff]
  %v4656 = vld [vmem:[%s4642 + $0x68] sm:$0xff]
  %v4657 = vld [vmem:[%s4642 + $0x70] sm:$0xff]
  %v4658 = vld [vmem:[%s4642 + $0x78] sm:$0xff]
  %v4675 = vunpack.c.l.b16 %v4643
  %v4676 = vunpack.c.h.b16 %v4643
  %v4677 = vunpack.c.l.b16 %v4644
  %v4678 = vunpack.c.h.b16 %v4644
  %v4679 = vunpack.c.l.b16 %v4645
  %v4680 = vunpack.c.h.b16 %v4645
  %v4681 = vunpack.c.l.b16 %v4646
  %v4682 = vunpack.c.h.b16 %v4646
  %v4683 = vunpack.c.l.b16 %v4647
  %v4684 = vunpack.c.h.b16 %v4647
  %v4685 = vunpack.c.l.b16 %v4648
  %v4686 = vunpack.c.h.b16 %v4648
  %v4687 = vunpack.c.l.b16 %v4649
  %v4688 = vunpack.c.h.b16 %v4649
  %v4689 = vunpack.c.l.b16 %v4650
  %v4690 = vunpack.c.h.b16 %v4650
  %v4691 = vunpack.c.l.b16 %v4651
  %v4692 = vunpack.c.h.b16 %v4651
  %v4693 = vunpack.c.l.b16 %v4652
  %v4694 = vunpack.c.h.b16 %v4652
  %v4695 = vunpack.c.l.b16 %v4653
  %v4696 = vunpack.c.h.b16 %v4653
  %v4697 = vunpack.c.l.b16 %v4654
  %v4698 = vunpack.c.h.b16 %v4654
  %v4699 = vunpack.c.l.b16 %v4655
  %v4700 = vunpack.c.h.b16 %v4655
  %v4701 = vunpack.c.l.b16 %v4656
  %v4702 = vunpack.c.h.b16 %v4656
  %v4703 = vunpack.c.l.b16 %v4657
  %v4704 = vunpack.c.h.b16 %v4657
  %v4705 = vunpack.c.l.b16 %v4658
  %v4706 = vunpack.c.h.b16 %v4658
  %v4707 = vpack.c.b16 %v4677, %v4675
  %v4708 = vpack.c.b16 %v4678, %v4676
  %v4709 = vpack.c.b16 %v4681, %v4679
  %v4710 = vpack.c.b16 %v4682, %v4680
  %v4711 = vpack.c.b16 %v4685, %v4683
  %v4712 = vpack.c.b16 %v4686, %v4684
  %v4713 = vpack.c.b16 %v4689, %v4687
  %v4714 = vpack.c.b16 %v4690, %v4688
  %v4715 = vpack.c.b16 %v4693, %v4691
  %v4716 = vpack.c.b16 %v4694, %v4692
  %v4717 = vpack.c.b16 %v4697, %v4695
  %v4718 = vpack.c.b16 %v4698, %v4696
  %v4719 = vpack.c.b16 %v4701, %v4699
  %v4720 = vpack.c.b16 %v4702, %v4700
  %v4721 = vpack.c.b16 %v4705, %v4703
  %v4722 = vpack.c.b16 %v4706, %v4704
  %4739 = vmatprep.subr.bf16.mxu0 %v4708
  %4740 = vmatpush1.bf16.msra.mxu0 %v4707
  %4741 = vmatprep.subr.bf16.mxu0 %v4710
  %4742 = vmatpush1.bf16.msra.mxu0 %v4709
  %4743 = vmatprep.subr.bf16.mxu0 %v4712
  %4744 = vmatpush1.bf16.msra.mxu0 %v4711
  %4745 = vmatprep.subr.bf16.mxu0 %v4714
  %4746 = vmatpush1.bf16.msra.mxu0 %v4713
  %4747 = vmatprep.subr.bf16.mxu0 %v4716
  %4748 = vmatpush1.bf16.msra.mxu0 %v4715
  %4749 = vmatprep.subr.bf16.mxu0 %v4718
  %4750 = vmatpush1.bf16.msra.mxu0 %v4717
  %4751 = vmatprep.subr.bf16.mxu0 %v4720
  %4752 = vmatpush1.bf16.msra.mxu0 %v4719
  %4753 = vmatprep.subr.bf16.mxu0 %v4722
  %4754 = vmatpush1.bf16.msra.mxu0 %v4721
  %4755 = vmatprep.subr.bf16.mxu0 0
  %4756 = vmatpush1.bf16.msra.mxu0 0
  %4757 = vmatprep.subr.bf16.mxu0 0
  %4758 = vmatpush1.bf16.msra.mxu0 0
  %4759 = vmatprep.subr.bf16.mxu0 0
  %4760 = vmatpush1.bf16.msra.mxu0 0
  %4761 = vmatprep.subr.bf16.mxu0 0
  %4762 = vmatpush1.bf16.msra.mxu0 0
  %4763 = vmatprep.subr.bf16.mxu0 0
  %4764 = vmatpush1.bf16.msra.mxu0 0
  %4765 = vmatprep.subr.bf16.mxu0 0
  %4766 = vmatpush1.bf16.msra.mxu0 0
  %4767 = vmatprep.subr.bf16.mxu0 0
  %4768 = vmatpush1.bf16.msra.mxu0 0
  %4769 = vmatprep.subr.bf16.mxu0 0
  %4770 = vmatpush1.bf16.msra.mxu0 0
  %4771 = vmatprep.mubr.bf16.mxu0 0
  %4772 = vmatmul.mubr.bf16.gmra.mrb[0].mxu0 %v3895
  %v4773 = vpop.f32.mrb[0].mxu0
  %v4774 = vadd.f32 0.0, %v4773
  %v4775 = vpop.f32.mrb[0].mxu0
  %v4776 = vadd.f32 0.0, %v4775
  %v4777 = vpop.f32.mrb[0].mxu0
  %v4778 = vadd.f32 0.0, %v4777
  %v4779 = vpop.f32.mrb[0].mxu0
  %v4780 = vadd.f32 0.0, %v4779
  %4781 = vmatprep.mubr.bf16.mxu0 0
  %4782 = vmatmul.mubr.bf16.gmra.mrb[0].mxu0 %v3896
  %v4783 = vpop.f32.mrb[0].mxu0
  %v4784 = vadd.f32 0.0, %v4783
  %v4785 = vpop.f32.mrb[0].mxu0
  %v4786 = vadd.f32 0.0, %v4785
  %v4787 = vpop.f32.mrb[0].mxu0
  %v4788 = vadd.f32 0.0, %v4787
  %v4789 = vpop.f32.mrb[0].mxu0
  %v4790 = vadd.f32 0.0, %v4789
  %4791 = vmatprep.mubr.bf16.mxu0 0
  %4792 = vmatmul.mubr.bf16.gmra.mrb[0].mxu0 %v3897
  %v4793 = vpop.f32.mrb[0].mxu0
  %v4794 = vadd.f32 0.0, %v4793
  %v4795 = vpop.f32.mrb[0].mxu0
  %v4796 = vadd.f32 0.0, %v4795
  %v4797 = vpop.f32.mrb[0].mxu0
  %v4798 = vadd.f32 0.0, %v4797
  %v4799 = vpop.f32.mrb[0].mxu0
  %v4800 = vadd.f32 0.0, %v4799
  %4801 = vmatprep.mubr.bf16.mxu0 0
  %4802 = vmatmul.mubr.bf16.gmra.mrb[0].mxu0 %v3898
  %v4803 = vpop.f32.mrb[0].mxu0
  %v4804 = vadd.f32 0.0, %v4803
  %v4805 = vpop.f32.mrb[0].mxu0
  %v4806 = vadd.f32 0.0, %v4805
  %v4807 = vpop.f32.mrb[0].mxu0
  %v4808 = vadd.f32 0.0, %v4807
  %v4809 = vpop.f32.mrb[0].mxu0
  %v4810 = vadd.f32 0.0, %v4809
  %4811 = vmatprep.mubr.bf16.mxu0 0
  %4812 = vmatmul.mubr.bf16.gmra.mrb[0].mxu0 %v3899
  %v4813 = vpop.f32.mrb[0].mxu0
  %v4814 = vadd.f32 0.0, %v4813
  %v4815 = vpop.f32.mrb[0].mxu0
  %v4816 = vadd.f32 0.0, %v4815
  %v4817 = vpop.f32.mrb[0].mxu0
  %v4818 = vadd.f32 0.0, %v4817
  %v4819 = vpop.f32.mrb[0].mxu0
  %v4820 = vadd.f32 0.0, %v4819
  %4821 = vmatprep.mubr.bf16.mxu0 0
  %4822 = vmatmul.mubr.bf16.gmra.mrb[0].mxu0 %v3900
  %v4823 = vpop.f32.mrb[0].mxu0
  %v4824 = vadd.f32 0.0, %v4823
  %v4825 = vpop.f32.mrb[0].mxu0
  %v4826 = vadd.f32 0.0, %v4825
  %v4827 = vpop.f32.mrb[0].mxu0
  %v4828 = vadd.f32 0.0, %v4827
  %v4829 = vpop.f32.mrb[0].mxu0
  %v4830 = vadd.f32 0.0, %v4829
  %4831 = vmatprep.mubr.bf16.mxu0 0
  %4832 = vmatmul.mubr.bf16.gmra.mrb[0].mxu0 %v4639
  %v4833 = vpop.f32.mrb[0].mxu0
  %v4834 = vadd.f32 0.0, %v4833
  %v4835 = vpop.f32.mrb[0].mxu0
  %v4836 = vadd.f32 0.0, %v4835
  %v4837 = vpop.f32.mrb[0].mxu0
  %v4838 = vadd.f32 0.0, %v4837
  %v4839 = vpop.f32.mrb[0].mxu0
  %v4840 = vadd.f32 0.0, %v4839
  %4841 = vmatprep.mubr.bf16.mxu0 0
  %4842 = vmatmul.mubr.bf16.gmra.mrb[0].mxu0 %v4640
  %v4843 = vpop.f32.mrb[0].mxu0
  %v4844 = vadd.f32 0.0, %v4843
  %v4845 = vpop.f32.mrb[0].mxu0
  %v4846 = vadd.f32 0.0, %v4845
  %v4847 = vpop.f32.mrb[0].mxu0
  %v4848 = vadd.f32 0.0, %v4847
  %v4849 = vpop.f32.mrb[0].mxu0
  %v4850 = vadd.f32 0.0, %v4849
  %4851 = vmatprep.mubr.bf16.mxu0 0
  %4852 = vmatmul.mubr.bf16.gmra.mrb[0].mxu0 %v4641
  %v4853 = vpop.f32.mrb[0].mxu0
  %v4854 = vadd.f32 0.0, %v4853
  %v4855 = vpop.f32.mrb[0].mxu0
  %v4856 = vadd.f32 0.0, %v4855
  %v4857 = vpop.f32.mrb[0].mxu0
  %v4858 = vadd.f32 0.0, %v4857
  %v4859 = vpop.f32.mrb[0].mxu0
  %v4860 = vadd.f32 0.0, %v4859
  %4861 = vdwg.mxu0
  %v4862 = vld [vmem:[#allocation2 + $0x180] sm:$0xff]
  %s4863 = scalar_lea.vmem %s3, 1024
  %v4864 = vld [vmem:[%s4863] sm:$0xff]
  %v4865 = vld [vmem:[%s4863 + $0x8] sm:$0xff]
  %v4866 = vld [vmem:[%s4863 + $0x10] sm:$0xff]
  %v4867 = vld [vmem:[%s4863 + $0x18] sm:$0xff]
  %v4868 = vld [vmem:[%s4863 + $0x20] sm:$0xff]
  %v4869 = vld [vmem:[%s4863 + $0x28] sm:$0xff]
  %v4870 = vld [vmem:[%s4863 + $0x30] sm:$0xff]
  %v4871 = vld [vmem:[%s4863 + $0x38] sm:$0xff]
  %v4872 = vld [vmem:[%s4863 + $0x40] sm:$0xff]
  %v4873 = vld [vmem:[%s4863 + $0x48] sm:$0xff]
  %v4874 = vld [vmem:[%s4863 + $0x50] sm:$0xff]
  %v4875 = vld [vmem:[%s4863 + $0x58] sm:$0xff]
  %v4876 = vld [vmem:[%s4863 + $0x60] sm:$0xff]
  %v4877 = vld [vmem:[%s4863 + $0x68] sm:$0xff]
  %v4878 = vld [vmem:[%s4863 + $0x70] sm:$0xff]
  %v4879 = vld [vmem:[%s4863 + $0x78] sm:$0xff]
  %v4896 = vunpack.c.l.b16 %v4864
  %v4897 = vunpack.c.h.b16 %v4864
  %v4898 = vunpack.c.l.b16 %v4865
  %v4899 = vunpack.c.h.b16 %v4865
  %v4900 = vunpack.c.l.b16 %v4866
  %v4901 = vunpack.c.h.b16 %v4866
  %v4902 = vunpack.c.l.b16 %v4867
  %v4903 = vunpack.c.h.b16 %v4867
  %v4904 = vunpack.c.l.b16 %v4868
  %v4905 = vunpack.c.h.b16 %v4868
  %v4906 = vunpack.c.l.b16 %v4869
  %v4907 = vunpack.c.h.b16 %v4869
  %v4908 = vunpack.c.l.b16 %v4870
  %v4909 = vunpack.c.h.b16 %v4870
  %v4910 = vunpack.c.l.b16 %v4871
  %v4911 = vunpack.c.h.b16 %v4871
  %v4912 = vunpack.c.l.b16 %v4872
  %v4913 = vunpack.c.h.b16 %v4872
  %v4914 = vunpack.c.l.b16 %v4873
  %v4915 = vunpack.c.h.b16 %v4873
  %v4916 = vunpack.c.l.b16 %v4874
  %v4917 = vunpack.c.h.b16 %v4874
  %v4918 = vunpack.c.l.b16 %v4875
  %v4919 = vunpack.c.h.b16 %v4875
  %v4920 = vunpack.c.l.b16 %v4876
  %v4921 = vunpack.c.h.b16 %v4876
  %v4922 = vunpack.c.l.b16 %v4877
  %v4923 = vunpack.c.h.b16 %v4877
  %v4924 = vunpack.c.l.b16 %v4878
  %v4925 = vunpack.c.h.b16 %v4878
  %v4926 = vunpack.c.l.b16 %v4879
  %v4927 = vunpack.c.h.b16 %v4879
  %v4928 = vpack.c.b16 %v4898, %v4896
  %v4929 = vpack.c.b16 %v4899, %v4897
  %v4930 = vpack.c.b16 %v4902, %v4900
  %v4931 = vpack.c.b16 %v4903, %v4901
  %v4932 = vpack.c.b16 %v4906, %v4904
  %v4933 = vpack.c.b16 %v4907, %v4905
  %v4934 = vpack.c.b16 %v4910, %v4908
  %v4935 = vpack.c.b16 %v4911, %v4909
  %v4936 = vpack.c.b16 %v4914, %v4912
  %v4937 = vpack.c.b16 %v4915, %v4913
  %v4938 = vpack.c.b16 %v4918, %v4916
  %v4939 = vpack.c.b16 %v4919, %v4917
  %v4940 = vpack.c.b16 %v4922, %v4920
  %v4941 = vpack.c.b16 %v4923, %v4921
  %v4942 = vpack.c.b16 %v4926, %v4924
  %v4943 = vpack.c.b16 %v4927, %v4925
  %4960 = vmatprep.subr.bf16.mxu0 %v4929
  %4961 = vmatpush1.bf16.msra.mxu0 %v4928
  %4962 = vmatprep.subr.bf16.mxu0 %v4931
  %4963 = vmatpush1.bf16.msra.mxu0 %v4930
  %4964 = vmatprep.subr.bf16.mxu0 %v4933
  %4965 = vmatpush1.bf16.msra.mxu0 %v4932
  %4966 = vmatprep.subr.bf16.mxu0 %v4935
  %4967 = vmatpush1.bf16.msra.mxu0 %v4934
  %4968 = vmatprep.subr.bf16.mxu0 %v4937
  %4969 = vmatpush1.bf16.msra.mxu0 %v4936
  %4970 = vmatprep.subr.bf16.mxu0 %v4939
  %4971 = vmatpush1.bf16.msra.mxu0 %v4938
  %4972 = vmatprep.subr.bf16.mxu0 %v4941
  %4973 = vmatpush1.bf16.msra.mxu0 %v4940
  %4974 = vmatprep.subr.bf16.mxu0 %v4943
  %4975 = vmatpush1.bf16.msra.mxu0 %v4942
  %4976 = vmatprep.subr.bf16.mxu0 0
  %4977 = vmatpush1.bf16.msra.mxu0 0
  %4978 = vmatprep.subr.bf16.mxu0 0
  %4979 = vmatpush1.bf16.msra.mxu0 0
  %4980 = vmatprep.subr.bf16.mxu0 0
  %4981 = vmatpush1.bf16.msra.mxu0 0
  %4982 = vmatprep.subr.bf16.mxu0 0
  %4983 = vmatpush1.bf16.msra.mxu0 0
  %4984 = vmatprep.subr.bf16.mxu0 0
  %4985 = vmatpush1.bf16.msra.mxu0 0
  %4986 = vmatprep.subr.bf16.mxu0 0
  %4987 = vmatpush1.bf16.msra.mxu0 0
  %4988 = vmatprep.subr.bf16.mxu0 0
  %4989 = vmatpush1.bf16.msra.mxu0 0
  %4990 = vmatprep.subr.bf16.mxu0 0
  %4991 = vmatpush1.bf16.msra.mxu0 0
  %4992 = vmatprep.mubr.bf16.mxu0 0
  %4993 = vmatmul.mubr.bf16.gmra.mrb[0].mxu0 %v3871
  %v4994 = vpop.f32.mrb[0].mxu0
  %v4995 = vadd.f32 0.0, %v4994
  %v4996 = vpop.f32.mrb[0].mxu0
  %v4997 = vadd.f32 0.0, %v4996
  %v4998 = vpop.f32.mrb[0].mxu0
  %v4999 = vadd.f32 0.0, %v4998
  %v5000 = vpop.f32.mrb[0].mxu0
  %v5001 = vadd.f32 0.0, %v5000
  %5002 = vmatprep.mubr.bf16.mxu0 0
  %5003 = vmatmul.mubr.bf16.gmra.mrb[0].mxu0 %v3872
  %v5004 = vpop.f32.mrb[0].mxu0
  %v5005 = vadd.f32 0.0, %v5004
  %v5006 = vpop.f32.mrb[0].mxu0
  %v5007 = vadd.f32 0.0, %v5006
  %v5008 = vpop.f32.mrb[0].mxu0
  %v5009 = vadd.f32 0.0, %v5008
  %v5010 = vpop.f32.mrb[0].mxu0
  %v5011 = vadd.f32 0.0, %v5010
  %5012 = vmatprep.mubr.bf16.mxu0 0
  %5013 = vmatmul.mubr.bf16.gmra.mrb[0].mxu0 %v4122
  %v5014 = vpop.f32.mrb[0].mxu0
  %v5015 = vadd.f32 0.0, %v5014
  %v5016 = vpop.f32.mrb[0].mxu0
  %v5017 = vadd.f32 0.0, %v5016
  %v5018 = vpop.f32.mrb[0].mxu0
  %v5019 = vadd.f32 0.0, %v5018
  %v5020 = vpop.f32.mrb[0].mxu0
  %v5021 = vadd.f32 0.0, %v5020
  %5022 = vmatprep.mubr.bf16.mxu0 0
  %5023 = vmatmul.mubr.bf16.gmra.mrb[0].mxu0 %v3874
  %v5024 = vpop.f32.mrb[0].mxu0
  %v5025 = vadd.f32 0.0, %v5024
  %v5026 = vpop.f32.mrb[0].mxu0
  %v5027 = vadd.f32 0.0, %v5026
  %v5028 = vpop.f32.mrb[0].mxu0
  %v5029 = vadd.f32 0.0, %v5028
  %v5030 = vpop.f32.mrb[0].mxu0
  %v5031 = vadd.f32 0.0, %v5030
  %5032 = vmatprep.mubr.bf16.mxu0 0
  %5033 = vmatmul.mubr.bf16.gmra.mrb[0].mxu0 %v3875
  %v5034 = vpop.f32.mrb[0].mxu0
  %v5035 = vadd.f32 0.0, %v5034
  %v5036 = vpop.f32.mrb[0].mxu0
  %v5037 = vadd.f32 0.0, %v5036
  %v5038 = vpop.f32.mrb[0].mxu0
  %v5039 = vadd.f32 0.0, %v5038
  %v5040 = vpop.f32.mrb[0].mxu0
  %v5041 = vadd.f32 0.0, %v5040
  %5042 = vmatprep.mubr.bf16.mxu0 0
  %5043 = vmatmul.mubr.bf16.gmra.mrb[0].mxu0 %v4123
  %v5044 = vpop.f32.mrb[0].mxu0
  %v5045 = vadd.f32 0.0, %v5044
  %v5046 = vpop.f32.mrb[0].mxu0
  %v5047 = vadd.f32 0.0, %v5046
  %v5048 = vpop.f32.mrb[0].mxu0
  %v5049 = vadd.f32 0.0, %v5048
  %v5050 = vpop.f32.mrb[0].mxu0
  %v5051 = vadd.f32 0.0, %v5050
  %5052 = vmatprep.mubr.bf16.mxu0 0
  %5053 = vmatmul.mubr.bf16.gmra.mrb[0].mxu0 %v4620
  %v5054 = vpop.f32.mrb[0].mxu0
  %v5055 = vadd.f32 0.0, %v5054
  %v5056 = vpop.f32.mrb[0].mxu0
  %v5057 = vadd.f32 0.0, %v5056
  %v5058 = vpop.f32.mrb[0].mxu0
  %v5059 = vadd.f32 0.0, %v5058
  %v5060 = vpop.f32.mrb[0].mxu0
  %v5061 = vadd.f32 0.0, %v5060
  %5062 = vmatprep.mubr.bf16.mxu0 0
  %5063 = vmatmul.mubr.bf16.gmra.mrb[0].mxu0 %v4621
  %v5064 = vpop.f32.mrb[0].mxu0
  %v5065 = vadd.f32 0.0, %v5064
  %v5066 = vpop.f32.mrb[0].mxu0
  %v5067 = vadd.f32 0.0, %v5066
  %v5068 = vpop.f32.mrb[0].mxu0
  %v5069 = vadd.f32 0.0, %v5068
  %v5070 = vpop.f32.mrb[0].mxu0
  %v5071 = vadd.f32 0.0, %v5070
  %5072 = vmatprep.mubr.bf16.mxu0 0
  %5073 = vmatmul.mubr.bf16.gmra.mrb[0].mxu0 %v4862
  %v5074 = vpop.f32.mrb[0].mxu0
  %v5075 = vadd.f32 0.0, %v5074
  %v5076 = vpop.f32.mrb[0].mxu0
  %v5077 = vadd.f32 0.0, %v5076
  %v5078 = vpop.f32.mrb[0].mxu0
  %v5079 = vadd.f32 0.0, %v5078
  %v5080 = vpop.f32.mrb[0].mxu0
  %v5081 = vadd.f32 0.0, %v5080
  %5082 = vdwg.mxu0
  %v5099 = vunpack.c.l.b16 %v3876
  %v5100 = vunpack.c.h.b16 %v3876
  %v5101 = vunpack.c.l.b16 %v3877
  %v5102 = vunpack.c.h.b16 %v3877
  %v5103 = vunpack.c.l.b16 %v3878
  %v5104 = vunpack.c.h.b16 %v3878
  %v5105 = vunpack.c.l.b16 %v3879
  %v5106 = vunpack.c.h.b16 %v3879
  %v5107 = vunpack.c.l.b16 %v3880
  %v5108 = vunpack.c.h.b16 %v3880
  %v5109 = vunpack.c.l.b16 %v3881
  %v5110 = vunpack.c.h.b16 %v3881
  %v5111 = vunpack.c.l.b16 %v3882
  %v5112 = vunpack.c.h.b16 %v3882
  %v5113 = vunpack.c.l.b16 %v3883
  %v5114 = vunpack.c.h.b16 %v3883
  %v5115 = vunpack.c.l.b16 %v3884
  %v5116 = vunpack.c.h.b16 %v3884
  %v5117 = vunpack.c.l.b16 %v3885
  %v5118 = vunpack.c.h.b16 %v3885
  %v5119 = vunpack.c.l.b16 %v3886
  %v5120 = vunpack.c.h.b16 %v3886
  %v5121 = vunpack.c.l.b16 %v3887
  %v5122 = vunpack.c.h.b16 %v3887
  %v5123 = vunpack.c.l.b16 %v3888
  %v5124 = vunpack.c.h.b16 %v3888
  %v5125 = vunpack.c.l.b16 %v3889
  %v5126 = vunpack.c.h.b16 %v3889
  %v5127 = vunpack.c.l.b16 %v3890
  %v5128 = vunpack.c.h.b16 %v3890
  %v5129 = vunpack.c.l.b16 %v3891
  %v5130 = vunpack.c.h.b16 %v3891
  %v5131 = vpack.c.b16 %v5101, %v5099
  %v5132 = vpack.c.b16 %v5102, %v5100
  %v5133 = vpack.c.b16 %v5105, %v5103
  %v5134 = vpack.c.b16 %v5106, %v5104
  %v5135 = vpack.c.b16 %v5109, %v5107
  %v5136 = vpack.c.b16 %v5110, %v5108
  %v5137 = vpack.c.b16 %v5113, %v5111
  %v5138 = vpack.c.b16 %v5114, %v5112
  %v5139 = vpack.c.b16 %v5117, %v5115
  %v5140 = vpack.c.b16 %v5118, %v5116
  %v5141 = vpack.c.b16 %v5121, %v5119
  %v5142 = vpack.c.b16 %v5122, %v5120
  %v5143 = vpack.c.b16 %v5125, %v5123
  %v5144 = vpack.c.b16 %v5126, %v5124
  %v5145 = vpack.c.b16 %v5129, %v5127
  %v5146 = vpack.c.b16 %v5130, %v5128
  %5163 = vmatprep.subr.bf16.mxu0 %v5132
  %5164 = vmatpush1.bf16.msra.mxu0 %v5131
  %5165 = vmatprep.subr.bf16.mxu0 %v5134
  %5166 = vmatpush1.bf16.msra.mxu0 %v5133
  %5167 = vmatprep.subr.bf16.mxu0 %v5136
  %5168 = vmatpush1.bf16.msra.mxu0 %v5135
  %5169 = vmatprep.subr.bf16.mxu0 %v5138
  %5170 = vmatpush1.bf16.msra.mxu0 %v5137
  %5171 = vmatprep.subr.bf16.mxu0 %v5140
  %5172 = vmatpush1.bf16.msra.mxu0 %v5139
  %5173 = vmatprep.subr.bf16.mxu0 %v5142
  %5174 = vmatpush1.bf16.msra.mxu0 %v5141
  %5175 = vmatprep.subr.bf16.mxu0 %v5144
  %5176 = vmatpush1.bf16.msra.mxu0 %v5143
  %5177 = vmatprep.subr.bf16.mxu0 %v5146
  %5178 = vmatpush1.bf16.msra.mxu0 %v5145
  %5179 = vmatprep.subr.bf16.mxu0 0
  %5180 = vmatpush1.bf16.msra.mxu0 0
  %5181 = vmatprep.subr.bf16.mxu0 0
  %5182 = vmatpush1.bf16.msra.mxu0 0
  %5183 = vmatprep.subr.bf16.mxu0 0
  %5184 = vmatpush1.bf16.msra.mxu0 0
  %5185 = vmatprep.subr.bf16.mxu0 0
  %5186 = vmatpush1.bf16.msra.mxu0 0
  %5187 = vmatprep.subr.bf16.mxu0 0
  %5188 = vmatpush1.bf16.msra.mxu0 0
  %5189 = vmatprep.subr.bf16.mxu0 0
  %5190 = vmatpush1.bf16.msra.mxu0 0
  %5191 = vmatprep.subr.bf16.mxu0 0
  %5192 = vmatpush1.bf16.msra.mxu0 0
  %5193 = vmatprep.subr.bf16.mxu0 0
  %5194 = vmatpush1.bf16.msra.mxu0 0
  %5195 = vmatprep.mubr.bf16.mxu0 0
  %5196 = vmatmul.mubr.bf16.gmra.mrb[0].mxu0 %v3867
  %v5197 = vpop.f32.mrb[0].mxu0
  %v5198 = vadd.f32 %v4033, %v5197
  %v5199 = vpop.f32.mrb[0].mxu0
  %v5200 = vadd.f32 %v4035, %v5199
  %v5201 = vpop.f32.mrb[0].mxu0
  %v5202 = vadd.f32 %v4037, %v5201
  %v5203 = vpop.f32.mrb[0].mxu0
  %v5204 = vadd.f32 %v4039, %v5203
  %5205 = vmatprep.mubr.bf16.mxu0 0
  %5206 = vmatmul.mubr.bf16.gmra.mrb[0].mxu0 %v3868
  %v5207 = vpop.f32.mrb[0].mxu0
  %v5208 = vadd.f32 %v4043, %v5207
  %v5209 = vpop.f32.mrb[0].mxu0
  %v5210 = vadd.f32 %v4045, %v5209
  %v5211 = vpop.f32.mrb[0].mxu0
  %v5212 = vadd.f32 %v4047, %v5211
  %v5213 = vpop.f32.mrb[0].mxu0
  %v5214 = vadd.f32 %v4049, %v5213
  %5215 = vmatprep.mubr.bf16.mxu0 0
  %5216 = vmatmul.mubr.bf16.gmra.mrb[0].mxu0 %v3869
  %v5217 = vpop.f32.mrb[0].mxu0
  %v5218 = vadd.f32 %v4053, %v5217
  %v5219 = vpop.f32.mrb[0].mxu0
  %v5220 = vadd.f32 %v4055, %v5219
  %v5221 = vpop.f32.mrb[0].mxu0
  %v5222 = vadd.f32 %v4057, %v5221
  %v5223 = vpop.f32.mrb[0].mxu0
  %v5224 = vadd.f32 %v4059, %v5223
  %5225 = vmatprep.mubr.bf16.mxu0 0
  %5226 = vmatmul.mubr.bf16.gmra.mrb[0].mxu0 %v3870
  %v5227 = vpop.f32.mrb[0].mxu0
  %v5228 = vadd.f32 %v4063, %v5227
  %v5229 = vpop.f32.mrb[0].mxu0
  %v5230 = vadd.f32 %v4065, %v5229
  %v5231 = vpop.f32.mrb[0].mxu0
  %v5232 = vadd.f32 %v4067, %v5231
  %v5233 = vpop.f32.mrb[0].mxu0
  %v5234 = vadd.f32 %v4069, %v5233
  %5235 = vmatprep.mubr.bf16.mxu0 0
  %5236 = vmatmul.mubr.bf16.gmra.mrb[0].mxu0 %v3871
  %v5237 = vpop.f32.mrb[0].mxu0
  %v5238 = vadd.f32 %v4073, %v5237
  %v5239 = vpop.f32.mrb[0].mxu0
  %v5240 = vadd.f32 %v4075, %v5239
  %v5241 = vpop.f32.mrb[0].mxu0
  %v5242 = vadd.f32 %v4077, %v5241
  %v5243 = vpop.f32.mrb[0].mxu0
  %v5244 = vadd.f32 %v4079, %v5243
  %5245 = vmatprep.mubr.bf16.mxu0 0
  %5246 = vmatmul.mubr.bf16.gmra.mrb[0].mxu0 %v3872
  %v5247 = vpop.f32.mrb[0].mxu0
  %v5248 = vadd.f32 %v4083, %v5247
  %v5249 = vpop.f32.mrb[0].mxu0
  %v5250 = vadd.f32 %v4085, %v5249
  %v5251 = vpop.f32.mrb[0].mxu0
  %v5252 = vadd.f32 %v4087, %v5251
  %v5253 = vpop.f32.mrb[0].mxu0
  %v5254 = vadd.f32 %v4089, %v5253
  %5255 = vmatprep.mubr.bf16.mxu0 0
  %5256 = vmatmul.mubr.bf16.gmra.mrb[0].mxu0 %v3873
  %v5257 = vpop.f32.mrb[0].mxu0
  %v5258 = vadd.f32 %v4093, %v5257
  %v5259 = vpop.f32.mrb[0].mxu0
  %v5260 = vadd.f32 %v4095, %v5259
  %v5261 = vpop.f32.mrb[0].mxu0
  %v5262 = vadd.f32 %v4097, %v5261
  %v5263 = vpop.f32.mrb[0].mxu0
  %v5264 = vadd.f32 %v4099, %v5263
  %5265 = vmatprep.mubr.bf16.mxu0 0
  %5266 = vmatmul.mubr.bf16.gmra.mrb[0].mxu0 %v3874
  %v5267 = vpop.f32.mrb[0].mxu0
  %v5268 = vadd.f32 %v4103, %v5267
  %v5269 = vpop.f32.mrb[0].mxu0
  %v5270 = vadd.f32 %v4105, %v5269
  %v5271 = vpop.f32.mrb[0].mxu0
  %v5272 = vadd.f32 %v4107, %v5271
  %v5273 = vpop.f32.mrb[0].mxu0
  %v5274 = vadd.f32 %v4109, %v5273
  %5275 = vmatprep.mubr.bf16.mxu0 0
  %5276 = vmatmul.mubr.bf16.gmra.mrb[0].mxu0 %v3875
  %v5277 = vpop.f32.mrb[0].mxu0
  %v5278 = vadd.f32 %v4113, %v5277
  %v5279 = vpop.f32.mrb[0].mxu0
  %v5280 = vadd.f32 %v4115, %v5279
  %v5281 = vpop.f32.mrb[0].mxu0
  %v5282 = vadd.f32 %v4117, %v5281
  %v5283 = vpop.f32.mrb[0].mxu0
  %v5284 = vadd.f32 %v4119, %v5283
  %5285 = vdwg.mxu0
  %v5302 = vunpack.c.l.b16 %v4125
  %v5303 = vunpack.c.h.b16 %v4125
  %v5304 = vunpack.c.l.b16 %v4126
  %v5305 = vunpack.c.h.b16 %v4126
  %v5306 = vunpack.c.l.b16 %v4127
  %v5307 = vunpack.c.h.b16 %v4127
  %v5308 = vunpack.c.l.b16 %v4128
  %v5309 = vunpack.c.h.b16 %v4128
  %v5310 = vunpack.c.l.b16 %v4129
  %v5311 = vunpack.c.h.b16 %v4129
  %v5312 = vunpack.c.l.b16 %v4130
  %v5313 = vunpack.c.h.b16 %v4130
  %v5314 = vunpack.c.l.b16 %v4131
  %v5315 = vunpack.c.h.b16 %v4131
  %v5316 = vunpack.c.l.b16 %v4132
  %v5317 = vunpack.c.h.b16 %v4132
  %v5318 = vunpack.c.l.b16 %v4133
  %v5319 = vunpack.c.h.b16 %v4133
  %v5320 = vunpack.c.l.b16 %v4134
  %v5321 = vunpack.c.h.b16 %v4134
  %v5322 = vunpack.c.l.b16 %v4135
  %v5323 = vunpack.c.h.b16 %v4135
  %v5324 = vunpack.c.l.b16 %v4136
  %v5325 = vunpack.c.h.b16 %v4136
  %v5326 = vunpack.c.l.b16 %v4137
  %v5327 = vunpack.c.h.b16 %v4137
  %v5328 = vunpack.c.l.b16 %v4138
  %v5329 = vunpack.c.h.b16 %v4138
  %v5330 = vunpack.c.l.b16 %v4139
  %v5331 = vunpack.c.h.b16 %v4139
  %v5332 = vunpack.c.l.b16 %v4140
  %v5333 = vunpack.c.h.b16 %v4140
  %v5334 = vpack.c.b16 %v5304, %v5302
  %v5335 = vpack.c.b16 %v5305, %v5303
  %v5336 = vpack.c.b16 %v5308, %v5306
  %v5337 = vpack.c.b16 %v5309, %v5307
  %v5338 = vpack.c.b16 %v5312, %v5310
  %v5339 = vpack.c.b16 %v5313, %v5311
  %v5340 = vpack.c.b16 %v5316, %v5314
  %v5341 = vpack.c.b16 %v5317, %v5315
  %v5342 = vpack.c.b16 %v5320, %v5318
  %v5343 = vpack.c.b16 %v5321, %v5319
  %v5344 = vpack.c.b16 %v5324, %v5322
  %v5345 = vpack.c.b16 %v5325, %v5323
  %v5346 = vpack.c.b16 %v5328, %v5326
  %v5347 = vpack.c.b16 %v5329, %v5327
  %v5348 = vpack.c.b16 %v5332, %v5330
  %v5349 = vpack.c.b16 %v5333, %v5331
  %5366 = vmatprep.subr.bf16.mxu0 %v5335
  %5367 = vmatpush1.bf16.msra.mxu0 %v5334
  %5368 = vmatprep.subr.bf16.mxu0 %v5337
  %5369 = vmatpush1.bf16.msra.mxu0 %v5336
  %5370 = vmatprep.subr.bf16.mxu0 %v5339
  %5371 = vmatpush1.bf16.msra.mxu0 %v5338
  %5372 = vmatprep.subr.bf16.mxu0 %v5341
  %5373 = vmatpush1.bf16.msra.mxu0 %v5340
  %5374 = vmatprep.subr.bf16.mxu0 %v5343
  %5375 = vmatpush1.bf16.msra.mxu0 %v5342
  %5376 = vmatprep.subr.bf16.mxu0 %v5345
  %5377 = vmatpush1.bf16.msra.mxu0 %v5344
  %5378 = vmatprep.subr.bf16.mxu0 %v5347
  %5379 = vmatpush1.bf16.msra.mxu0 %v5346
  %5380 = vmatprep.subr.bf16.mxu0 %v5349
  %5381 = vmatpush1.bf16.msra.mxu0 %v5348
  %5382 = vmatprep.subr.bf16.mxu0 0
  %5383 = vmatpush1.bf16.msra.mxu0 0
  %5384 = vmatprep.subr.bf16.mxu0 0
  %5385 = vmatpush1.bf16.msra.mxu0 0
  %5386 = vmatprep.subr.bf16.mxu0 0
  %5387 = vmatpush1.bf16.msra.mxu0 0
  %5388 = vmatprep.subr.bf16.mxu0 0
  %5389 = vmatpush1.bf16.msra.mxu0 0
  %5390 = vmatprep.subr.bf16.mxu0 0
  %5391 = vmatpush1.bf16.msra.mxu0 0
  %5392 = vmatprep.subr.bf16.mxu0 0
  %5393 = vmatpush1.bf16.msra.mxu0 0
  %5394 = vmatprep.subr.bf16.mxu0 0
  %5395 = vmatpush1.bf16.msra.mxu0 0
  %5396 = vmatprep.subr.bf16.mxu0 0
  %5397 = vmatpush1.bf16.msra.mxu0 0
  %5398 = vmatprep.mubr.bf16.mxu0 0
  %5399 = vmatmul.mubr.bf16.gmra.mrb[0].mxu0 %v3868
  %v5400 = vpop.f32.mrb[0].mxu0
  %v5401 = vadd.f32 %v4282, %v5400
  %v5402 = vpop.f32.mrb[0].mxu0
  %v5403 = vadd.f32 %v4284, %v5402
  %v5404 = vpop.f32.mrb[0].mxu0
  %v5405 = vadd.f32 %v4286, %v5404
  %v5406 = vpop.f32.mrb[0].mxu0
  %v5407 = vadd.f32 %v4288, %v5406
  %5408 = vmatprep.mubr.bf16.mxu0 0
  %5409 = vmatmul.mubr.bf16.gmra.mrb[0].mxu0 %v3869
  %v5410 = vpop.f32.mrb[0].mxu0
  %v5411 = vadd.f32 %v4292, %v5410
  %v5412 = vpop.f32.mrb[0].mxu0
  %v5413 = vadd.f32 %v4294, %v5412
  %v5414 = vpop.f32.mrb[0].mxu0
  %v5415 = vadd.f32 %v4296, %v5414
  %v5416 = vpop.f32.mrb[0].mxu0
  %v5417 = vadd.f32 %v4298, %v5416
  %5418 = vmatprep.mubr.bf16.mxu0 0
  %5419 = vmatmul.mubr.bf16.gmra.mrb[0].mxu0 %v4121
  %v5420 = vpop.f32.mrb[0].mxu0
  %v5421 = vadd.f32 %v4302, %v5420
  %v5422 = vpop.f32.mrb[0].mxu0
  %v5423 = vadd.f32 %v4304, %v5422
  %v5424 = vpop.f32.mrb[0].mxu0
  %v5425 = vadd.f32 %v4306, %v5424
  %v5426 = vpop.f32.mrb[0].mxu0
  %v5427 = vadd.f32 %v4308, %v5426
  %5428 = vmatprep.mubr.bf16.mxu0 0
  %5429 = vmatmul.mubr.bf16.gmra.mrb[0].mxu0 %v3871
  %v5430 = vpop.f32.mrb[0].mxu0
  %v5431 = vadd.f32 %v4312, %v5430
  %v5432 = vpop.f32.mrb[0].mxu0
  %v5433 = vadd.f32 %v4314, %v5432
  %v5434 = vpop.f32.mrb[0].mxu0
  %v5435 = vadd.f32 %v4316, %v5434
  %v5436 = vpop.f32.mrb[0].mxu0
  %v5437 = vadd.f32 %v4318, %v5436
  %5438 = vmatprep.mubr.bf16.mxu0 0
  %5439 = vmatmul.mubr.bf16.gmra.mrb[0].mxu0 %v3872
  %v5440 = vpop.f32.mrb[0].mxu0
  %v5441 = vadd.f32 %v4322, %v5440
  %v5442 = vpop.f32.mrb[0].mxu0
  %v5443 = vadd.f32 %v4324, %v5442
  %v5444 = vpop.f32.mrb[0].mxu0
  %v5445 = vadd.f32 %v4326, %v5444
  %v5446 = vpop.f32.mrb[0].mxu0
  %v5447 = vadd.f32 %v4328, %v5446
  %5448 = vmatprep.mubr.bf16.mxu0 0
  %5449 = vmatmul.mubr.bf16.gmra.mrb[0].mxu0 %v4122
  %v5450 = vpop.f32.mrb[0].mxu0
  %v5451 = vadd.f32 %v4332, %v5450
  %v5452 = vpop.f32.mrb[0].mxu0
  %v5453 = vadd.f32 %v4334, %v5452
  %v5454 = vpop.f32.mrb[0].mxu0
  %v5455 = vadd.f32 %v4336, %v5454
  %v5456 = vpop.f32.mrb[0].mxu0
  %v5457 = vadd.f32 %v4338, %v5456
  %5458 = vmatprep.mubr.bf16.mxu0 0
  %5459 = vmatmul.mubr.bf16.gmra.mrb[0].mxu0 %v3874
  %v5460 = vpop.f32.mrb[0].mxu0
  %v5461 = vadd.f32 %v4342, %v5460
  %v5462 = vpop.f32.mrb[0].mxu0
  %v5463 = vadd.f32 %v4344, %v5462
  %v5464 = vpop.f32.mrb[0].mxu0
  %v5465 = vadd.f32 %v4346, %v5464
  %v5466 = vpop.f32.mrb[0].mxu0
  %v5467 = vadd.f32 %v4348, %v5466
  %5468 = vmatprep.mubr.bf16.mxu0 0
  %5469 = vmatmul.mubr.bf16.gmra.mrb[0].mxu0 %v3875
  %v5470 = vpop.f32.mrb[0].mxu0
  %v5471 = vadd.f32 %v4352, %v5470
  %v5472 = vpop.f32.mrb[0].mxu0
  %v5473 = vadd.f32 %v4354, %v5472
  %v5474 = vpop.f32.mrb[0].mxu0
  %v5475 = vadd.f32 %v4356, %v5474
  %v5476 = vpop.f32.mrb[0].mxu0
  %v5477 = vadd.f32 %v4358, %v5476
  %5478 = vmatprep.mubr.bf16.mxu0 0
  %5479 = vmatmul.mubr.bf16.gmra.mrb[0].mxu0 %v4123
  %v5480 = vpop.f32.mrb[0].mxu0
  %v5481 = vadd.f32 %v4362, %v5480
  %v5482 = vpop.f32.mrb[0].mxu0
  %v5483 = vadd.f32 %v4364, %v5482
  %v5484 = vpop.f32.mrb[0].mxu0
  %v5485 = vadd.f32 %v4366, %v5484
  %v5486 = vpop.f32.mrb[0].mxu0
  %v5487 = vadd.f32 %v4368, %v5486
  %5488 = vdwg.mxu0
  %v5505 = vunpack.c.l.b16 %v4380
  %v5506 = vunpack.c.h.b16 %v4380
  %v5507 = vunpack.c.l.b16 %v4381
  %v5508 = vunpack.c.h.b16 %v4381
  %v5509 = vunpack.c.l.b16 %v4382
  %v5510 = vunpack.c.h.b16 %v4382
  %v5511 = vunpack.c.l.b16 %v4383
  %v5512 = vunpack.c.h.b16 %v4383
  %v5513 = vunpack.c.l.b16 %v4384
  %v5514 = vunpack.c.h.b16 %v4384
  %v5515 = vunpack.c.l.b16 %v4385
  %v5516 = vunpack.c.h.b16 %v4385
  %v5517 = vunpack.c.l.b16 %v4386
  %v5518 = vunpack.c.h.b16 %v4386
  %v5519 = vunpack.c.l.b16 %v4387
  %v5520 = vunpack.c.h.b16 %v4387
  %v5521 = vunpack.c.l.b16 %v4388
  %v5522 = vunpack.c.h.b16 %v4388
  %v5523 = vunpack.c.l.b16 %v4389
  %v5524 = vunpack.c.h.b16 %v4389
  %v5525 = vunpack.c.l.b16 %v4390
  %v5526 = vunpack.c.h.b16 %v4390
  %v5527 = vunpack.c.l.b16 %v4391
  %v5528 = vunpack.c.h.b16 %v4391
  %v5529 = vunpack.c.l.b16 %v4392
  %v5530 = vunpack.c.h.b16 %v4392
  %v5531 = vunpack.c.l.b16 %v4393
  %v5532 = vunpack.c.h.b16 %v4393
  %v5533 = vunpack.c.l.b16 %v4394
  %v5534 = vunpack.c.h.b16 %v4394
  %v5535 = vunpack.c.l.b16 %v4395
  %v5536 = vunpack.c.h.b16 %v4395
  %v5537 = vpack.c.b16 %v5507, %v5505
  %v5538 = vpack.c.b16 %v5508, %v5506
  %v5539 = vpack.c.b16 %v5511, %v5509
  %v5540 = vpack.c.b16 %v5512, %v5510
  %v5541 = vpack.c.b16 %v5515, %v5513
  %v5542 = vpack.c.b16 %v5516, %v5514
  %v5543 = vpack.c.b16 %v5519, %v5517
  %v5544 = vpack.c.b16 %v5520, %v5518
  %v5545 = vpack.c.b16 %v5523, %v5521
  %v5546 = vpack.c.b16 %v5524, %v5522
  %v5547 = vpack.c.b16 %v5527, %v5525
  %v5548 = vpack.c.b16 %v5528, %v5526
  %v5549 = vpack.c.b16 %v5531, %v5529
  %v5550 = vpack.c.b16 %v5532, %v5530
  %v5551 = vpack.c.b16 %v5535, %v5533
  %v5552 = vpack.c.b16 %v5536, %v5534
  %5569 = vmatprep.subr.bf16.mxu0 %v5538
  %5570 = vmatpush1.bf16.msra.mxu0 %v5537
  %5571 = vmatprep.subr.bf16.mxu0 %v5540
  %5572 = vmatpush1.bf16.msra.mxu0 %v5539
  %5573 = vmatprep.subr.bf16.mxu0 %v5542
  %5574 = vmatpush1.bf16.msra.mxu0 %v5541
  %5575 = vmatprep.subr.bf16.mxu0 %v5544
  %5576 = vmatpush1.bf16.msra.mxu0 %v5543
  %5577 = vmatprep.subr.bf16.mxu0 %v5546
  %5578 = vmatpush1.bf16.msra.mxu0 %v5545
  %5579 = vmatprep.subr.bf16.mxu0 %v5548
  %5580 = vmatpush1.bf16.msra.mxu0 %v5547
  %5581 = vmatprep.subr.bf16.mxu0 %v5550
  %5582 = vmatpush1.bf16.msra.mxu0 %v5549
  %5583 = vmatprep.subr.bf16.mxu0 %v5552
  %5584 = vmatpush1.bf16.msra.mxu0 %v5551
  %5585 = vmatprep.subr.bf16.mxu0 0
  %5586 = vmatpush1.bf16.msra.mxu0 0
  %5587 = vmatprep.subr.bf16.mxu0 0
  %5588 = vmatpush1.bf16.msra.mxu0 0
  %5589 = vmatprep.subr.bf16.mxu0 0
  %5590 = vmatpush1.bf16.msra.mxu0 0
  %5591 = vmatprep.subr.bf16.mxu0 0
  %5592 = vmatpush1.bf16.msra.mxu0 0
  %5593 = vmatprep.subr.bf16.mxu0 0
  %5594 = vmatpush1.bf16.msra.mxu0 0
  %5595 = vmatprep.subr.bf16.mxu0 0
  %5596 = vmatpush1.bf16.msra.mxu0 0
  %5597 = vmatprep.subr.bf16.mxu0 0
  %5598 = vmatpush1.bf16.msra.mxu0 0
  %5599 = vmatprep.subr.bf16.mxu0 0
  %5600 = vmatpush1.bf16.msra.mxu0 0
  %5601 = vmatprep.mubr.bf16.mxu0 0
  %5602 = vmatmul.mubr.bf16.gmra.mrb[0].mxu0 %v4370
  %v5603 = vpop.f32.mrb[0].mxu0
  %v5604 = vadd.f32 %v4531, %v5603
  %v5605 = vpop.f32.mrb[0].mxu0
  %v5606 = vadd.f32 %v4533, %v5605
  %v5607 = vpop.f32.mrb[0].mxu0
  %v5608 = vadd.f32 %v4535, %v5607
  %v5609 = vpop.f32.mrb[0].mxu0
  %v5610 = vadd.f32 %v4537, %v5609
  %5611 = vmatprep.mubr.bf16.mxu0 0
  %5612 = vmatmul.mubr.bf16.gmra.mrb[0].mxu0 %v4371
  %v5613 = vpop.f32.mrb[0].mxu0
  %v5614 = vadd.f32 %v4541, %v5613
  %v5615 = vpop.f32.mrb[0].mxu0
  %v5616 = vadd.f32 %v4543, %v5615
  %v5617 = vpop.f32.mrb[0].mxu0
  %v5618 = vadd.f32 %v4545, %v5617
  %v5619 = vpop.f32.mrb[0].mxu0
  %v5620 = vadd.f32 %v4547, %v5619
  %5621 = vmatprep.mubr.bf16.mxu0 0
  %5622 = vmatmul.mubr.bf16.gmra.mrb[0].mxu0 %v4372
  %v5623 = vpop.f32.mrb[0].mxu0
  %v5624 = vadd.f32 %v4551, %v5623
  %v5625 = vpop.f32.mrb[0].mxu0
  %v5626 = vadd.f32 %v4553, %v5625
  %v5627 = vpop.f32.mrb[0].mxu0
  %v5628 = vadd.f32 %v4555, %v5627
  %v5629 = vpop.f32.mrb[0].mxu0
  %v5630 = vadd.f32 %v4557, %v5629
  %5631 = vmatprep.mubr.bf16.mxu0 0
  %5632 = vmatmul.mubr.bf16.gmra.mrb[0].mxu0 %v4373
  %v5633 = vpop.f32.mrb[0].mxu0
  %v5634 = vadd.f32 %v4561, %v5633
  %v5635 = vpop.f32.mrb[0].mxu0
  %v5636 = vadd.f32 %v4563, %v5635
  %v5637 = vpop.f32.mrb[0].mxu0
  %v5638 = vadd.f32 %v4565, %v5637
  %v5639 = vpop.f32.mrb[0].mxu0
  %v5640 = vadd.f32 %v4567, %v5639
  %5641 = vmatprep.mubr.bf16.mxu0 0
  %5642 = vmatmul.mubr.bf16.gmra.mrb[0].mxu0 %v4374
  %v5643 = vpop.f32.mrb[0].mxu0
  %v5644 = vadd.f32 %v4571, %v5643
  %v5645 = vpop.f32.mrb[0].mxu0
  %v5646 = vadd.f32 %v4573, %v5645
  %v5647 = vpop.f32.mrb[0].mxu0
  %v5648 = vadd.f32 %v4575, %v5647
  %v5649 = vpop.f32.mrb[0].mxu0
  %v5650 = vadd.f32 %v4577, %v5649
  %5651 = vmatprep.mubr.bf16.mxu0 0
  %5652 = vmatmul.mubr.bf16.gmra.mrb[0].mxu0 %v4375
  %v5653 = vpop.f32.mrb[0].mxu0
  %v5654 = vadd.f32 %v4581, %v5653
  %v5655 = vpop.f32.mrb[0].mxu0
  %v5656 = vadd.f32 %v4583, %v5655
  %v5657 = vpop.f32.mrb[0].mxu0
  %v5658 = vadd.f32 %v4585, %v5657
  %v5659 = vpop.f32.mrb[0].mxu0
  %v5660 = vadd.f32 %v4587, %v5659
  %5661 = vmatprep.mubr.bf16.mxu0 0
  %5662 = vmatmul.mubr.bf16.gmra.mrb[0].mxu0 %v4376
  %v5663 = vpop.f32.mrb[0].mxu0
  %v5664 = vadd.f32 %v4591, %v5663
  %v5665 = vpop.f32.mrb[0].mxu0
  %v5666 = vadd.f32 %v4593, %v5665
  %v5667 = vpop.f32.mrb[0].mxu0
  %v5668 = vadd.f32 %v4595, %v5667
  %v5669 = vpop.f32.mrb[0].mxu0
  %v5670 = vadd.f32 %v4597, %v5669
  %5671 = vmatprep.mubr.bf16.mxu0 0
  %5672 = vmatmul.mubr.bf16.gmra.mrb[0].mxu0 %v4377
  %v5673 = vpop.f32.mrb[0].mxu0
  %v5674 = vadd.f32 %v4601, %v5673
  %v5675 = vpop.f32.mrb[0].mxu0
  %v5676 = vadd.f32 %v4603, %v5675
  %v5677 = vpop.f32.mrb[0].mxu0
  %v5678 = vadd.f32 %v4605, %v5677
  %v5679 = vpop.f32.mrb[0].mxu0
  %v5680 = vadd.f32 %v4607, %v5679
  %5681 = vmatprep.mubr.bf16.mxu0 0
  %5682 = vmatmul.mubr.bf16.gmra.mrb[0].mxu0 %v4378
  %v5683 = vpop.f32.mrb[0].mxu0
  %v5684 = vadd.f32 %v4611, %v5683
  %v5685 = vpop.f32.mrb[0].mxu0
  %v5686 = vadd.f32 %v4613, %v5685
  %v5687 = vpop.f32.mrb[0].mxu0
  %v5688 = vadd.f32 %v4615, %v5687
  %v5689 = vpop.f32.mrb[0].mxu0
  %v5690 = vadd.f32 %v4617, %v5689
  %5691 = vdwg.mxu0
  %v5708 = vunpack.c.l.b16 %v4623
  %v5709 = vunpack.c.h.b16 %v4623
  %v5710 = vunpack.c.l.b16 %v4624
  %v5711 = vunpack.c.h.b16 %v4624
  %v5712 = vunpack.c.l.b16 %v4625
  %v5713 = vunpack.c.h.b16 %v4625
  %v5714 = vunpack.c.l.b16 %v4626
  %v5715 = vunpack.c.h.b16 %v4626
  %v5716 = vunpack.c.l.b16 %v4627
  %v5717 = vunpack.c.h.b16 %v4627
  %v5718 = vunpack.c.l.b16 %v4628
  %v5719 = vunpack.c.h.b16 %v4628
  %v5720 = vunpack.c.l.b16 %v4629
  %v5721 = vunpack.c.h.b16 %v4629
  %v5722 = vunpack.c.l.b16 %v4630
  %v5723 = vunpack.c.h.b16 %v4630
  %v5724 = vunpack.c.l.b16 %v4631
  %v5725 = vunpack.c.h.b16 %v4631
  %v5726 = vunpack.c.l.b16 %v4632
  %v5727 = vunpack.c.h.b16 %v4632
  %v5728 = vunpack.c.l.b16 %v4633
  %v5729 = vunpack.c.h.b16 %v4633
  %v5730 = vunpack.c.l.b16 %v4634
  %v5731 = vunpack.c.h.b16 %v4634
  %v5732 = vunpack.c.l.b16 %v4635
  %v5733 = vunpack.c.h.b16 %v4635
  %v5734 = vunpack.c.l.b16 %v4636
  %v5735 = vunpack.c.h.b16 %v4636
  %v5736 = vunpack.c.l.b16 %v4637
  %v5737 = vunpack.c.h.b16 %v4637
  %v5738 = vunpack.c.l.b16 %v4638
  %v5739 = vunpack.c.h.b16 %v4638
  %v5740 = vpack.c.b16 %v5710, %v5708
  %v5741 = vpack.c.b16 %v5711, %v5709
  %v5742 = vpack.c.b16 %v5714, %v5712
  %v5743 = vpack.c.b16 %v5715, %v5713
  %v5744 = vpack.c.b16 %v5718, %v5716
  %v5745 = vpack.c.b16 %v5719, %v5717
  %v5746 = vpack.c.b16 %v5722, %v5720
  %v5747 = vpack.c.b16 %v5723, %v5721
  %v5748 = vpack.c.b16 %v5726, %v5724
  %v5749 = vpack.c.b16 %v5727, %v5725
  %v5750 = vpack.c.b16 %v5730, %v5728
  %v5751 = vpack.c.b16 %v5731, %v5729
  %v5752 = vpack.c.b16 %v5734, %v5732
  %v5753 = vpack.c.b16 %v5735, %v5733
  %v5754 = vpack.c.b16 %v5738, %v5736
  %v5755 = vpack.c.b16 %v5739, %v5737
  %5772 = vmatprep.subr.bf16.mxu0 %v5741
  %5773 = vmatpush1.bf16.msra.mxu0 %v5740
  %5774 = vmatprep.subr.bf16.mxu0 %v5743
  %5775 = vmatpush1.bf16.msra.mxu0 %v5742
  %5776 = vmatprep.subr.bf16.mxu0 %v5745
  %5777 = vmatpush1.bf16.msra.mxu0 %v5744
  %5778 = vmatprep.subr.bf16.mxu0 %v5747
  %5779 = vmatpush1.bf16.msra.mxu0 %v5746
  %5780 = vmatprep.subr.bf16.mxu0 %v5749
  %5781 = vmatpush1.bf16.msra.mxu0 %v5748
  %5782 = vmatprep.subr.bf16.mxu0 %v5751
  %5783 = vmatpush1.bf16.msra.mxu0 %v5750
  %5784 = vmatprep.subr.bf16.mxu0 %v5753
  %5785 = vmatpush1.bf16.msra.mxu0 %v5752
  %5786 = vmatprep.subr.bf16.mxu0 %v5755
  %5787 = vmatpush1.bf16.msra.mxu0 %v5754
  %5788 = vmatprep.subr.bf16.mxu0 0
  %5789 = vmatpush1.bf16.msra.mxu0 0
  %5790 = vmatprep.subr.bf16.mxu0 0
  %5791 = vmatpush1.bf16.msra.mxu0 0
  %5792 = vmatprep.subr.bf16.mxu0 0
  %5793 = vmatpush1.bf16.msra.mxu0 0
  %5794 = vmatprep.subr.bf16.mxu0 0
  %5795 = vmatpush1.bf16.msra.mxu0 0
  %5796 = vmatprep.subr.bf16.mxu0 0
  %5797 = vmatpush1.bf16.msra.mxu0 0
  %5798 = vmatprep.subr.bf16.mxu0 0
  %5799 = vmatpush1.bf16.msra.mxu0 0
  %5800 = vmatprep.subr.bf16.mxu0 0
  %5801 = vmatpush1.bf16.msra.mxu0 0
  %5802 = vmatprep.subr.bf16.mxu0 0
  %5803 = vmatpush1.bf16.msra.mxu0 0
  %5804 = vmatprep.mubr.bf16.mxu0 0
  %5805 = vmatmul.mubr.bf16.gmra.mrb[0].mxu0 %v3870
  %v5806 = vpop.f32.mrb[0].mxu0
  %v5807 = vadd.f32 %v4774, %v5806
  %v5808 = vpop.f32.mrb[0].mxu0
  %v5809 = vadd.f32 %v4776, %v5808
  %v5810 = vpop.f32.mrb[0].mxu0
  %v5811 = vadd.f32 %v4778, %v5810
  %v5812 = vpop.f32.mrb[0].mxu0
  %v5813 = vadd.f32 %v4780, %v5812
  %5814 = vmatprep.mubr.bf16.mxu0 0
  %5815 = vmatmul.mubr.bf16.gmra.mrb[0].mxu0 %v3871
  %v5816 = vpop.f32.mrb[0].mxu0
  %v5817 = vadd.f32 %v4784, %v5816
  %v5818 = vpop.f32.mrb[0].mxu0
  %v5819 = vadd.f32 %v4786, %v5818
  %v5820 = vpop.f32.mrb[0].mxu0
  %v5821 = vadd.f32 %v4788, %v5820
  %v5822 = vpop.f32.mrb[0].mxu0
  %v5823 = vadd.f32 %v4790, %v5822
  %5824 = vmatprep.mubr.bf16.mxu0 0
  %5825 = vmatmul.mubr.bf16.gmra.mrb[0].mxu0 %v3872
  %v5826 = vpop.f32.mrb[0].mxu0
  %v5827 = vadd.f32 %v4794, %v5826
  %v5828 = vpop.f32.mrb[0].mxu0
  %v5829 = vadd.f32 %v4796, %v5828
  %v5830 = vpop.f32.mrb[0].mxu0
  %v5831 = vadd.f32 %v4798, %v5830
  %v5832 = vpop.f32.mrb[0].mxu0
  %v5833 = vadd.f32 %v4800, %v5832
  %5834 = vmatprep.mubr.bf16.mxu0 0
  %5835 = vmatmul.mubr.bf16.gmra.mrb[0].mxu0 %v3873
  %v5836 = vpop.f32.mrb[0].mxu0
  %v5837 = vadd.f32 %v4804, %v5836
  %v5838 = vpop.f32.mrb[0].mxu0
  %v5839 = vadd.f32 %v4806, %v5838
  %v5840 = vpop.f32.mrb[0].mxu0
  %v5841 = vadd.f32 %v4808, %v5840
  %v5842 = vpop.f32.mrb[0].mxu0
  %v5843 = vadd.f32 %v4810, %v5842
  %5844 = vmatprep.mubr.bf16.mxu0 0
  %5845 = vmatmul.mubr.bf16.gmra.mrb[0].mxu0 %v3874
  %v5846 = vpop.f32.mrb[0].mxu0
  %v5847 = vadd.f32 %v4814, %v5846
  %v5848 = vpop.f32.mrb[0].mxu0
  %v5849 = vadd.f32 %v4816, %v5848
  %v5850 = vpop.f32.mrb[0].mxu0
  %v5851 = vadd.f32 %v4818, %v5850
  %v5852 = vpop.f32.mrb[0].mxu0
  %v5853 = vadd.f32 %v4820, %v5852
  %5854 = vmatprep.mubr.bf16.mxu0 0
  %5855 = vmatmul.mubr.bf16.gmra.mrb[0].mxu0 %v3875
  %v5856 = vpop.f32.mrb[0].mxu0
  %v5857 = vadd.f32 %v4824, %v5856
  %v5858 = vpop.f32.mrb[0].mxu0
  %v5859 = vadd.f32 %v4826, %v5858
  %v5860 = vpop.f32.mrb[0].mxu0
  %v5861 = vadd.f32 %v4828, %v5860
  %v5862 = vpop.f32.mrb[0].mxu0
  %v5863 = vadd.f32 %v4830, %v5862
  %5864 = vmatprep.mubr.bf16.mxu0 0
  %5865 = vmatmul.mubr.bf16.gmra.mrb[0].mxu0 %v4619
  %v5866 = vpop.f32.mrb[0].mxu0
  %v5867 = vadd.f32 %v4834, %v5866
  %v5868 = vpop.f32.mrb[0].mxu0
  %v5869 = vadd.f32 %v4836, %v5868
  %v5870 = vpop.f32.mrb[0].mxu0
  %v5871 = vadd.f32 %v4838, %v5870
  %v5872 = vpop.f32.mrb[0].mxu0
  %v5873 = vadd.f32 %v4840, %v5872
  %5874 = vmatprep.mubr.bf16.mxu0 0
  %5875 = vmatmul.mubr.bf16.gmra.mrb[0].mxu0 %v4620
  %v5876 = vpop.f32.mrb[0].mxu0
  %v5877 = vadd.f32 %v4844, %v5876
  %v5878 = vpop.f32.mrb[0].mxu0
  %v5879 = vadd.f32 %v4846, %v5878
  %v5880 = vpop.f32.mrb[0].mxu0
  %v5881 = vadd.f32 %v4848, %v5880
  %v5882 = vpop.f32.mrb[0].mxu0
  %v5883 = vadd.f32 %v4850, %v5882
  %5884 = vmatprep.mubr.bf16.mxu0 0
  %5885 = vmatmul.mubr.bf16.gmra.mrb[0].mxu0 %v4621
  %v5886 = vpop.f32.mrb[0].mxu0
  %v5887 = vadd.f32 %v4854, %v5886
  %v5888 = vpop.f32.mrb[0].mxu0
  %v5889 = vadd.f32 %v4856, %v5888
  %v5890 = vpop.f32.mrb[0].mxu0
  %v5891 = vadd.f32 %v4858, %v5890
  %v5892 = vpop.f32.mrb[0].mxu0
  %v5893 = vadd.f32 %v4860, %v5892
  %5894 = vdwg.mxu0
  %v5895 = vadd.f32 %v5198, %v5401
  %v5896 = vadd.f32 %v5200, %v5403
  %v5897 = vadd.f32 %v5202, %v5405
  %v5898 = vadd.f32 %v5204, %v5407
  %v5899 = vadd.f32 %v5208, %v5411
  %v5900 = vadd.f32 %v5210, %v5413
  %v5901 = vadd.f32 %v5212, %v5415
  %v5902 = vadd.f32 %v5214, %v5417
  %v5903 = vadd.f32 %v5218, %v5421
  %v5904 = vadd.f32 %v5220, %v5423
  %v5905 = vadd.f32 %v5222, %v5425
  %v5906 = vadd.f32 %v5224, %v5427
  %v5907 = vadd.f32 %v5228, %v5431
  %v5908 = vadd.f32 %v5230, %v5433
  %v5909 = vadd.f32 %v5232, %v5435
  %v5910 = vadd.f32 %v5234, %v5437
  %v5911 = vadd.f32 %v5238, %v5441
  %v5912 = vadd.f32 %v5240, %v5443
  %v5913 = vadd.f32 %v5242, %v5445
  %v5914 = vadd.f32 %v5244, %v5447
  %v5915 = vadd.f32 %v5248, %v5451
  %v5916 = vadd.f32 %v5250, %v5453
  %v5917 = vadd.f32 %v5252, %v5455
  %v5918 = vadd.f32 %v5254, %v5457
  %v5919 = vadd.f32 %v5258, %v5461
  %v5920 = vadd.f32 %v5260, %v5463
  %v5921 = vadd.f32 %v5262, %v5465
  %v5922 = vadd.f32 %v5264, %v5467
  %v5923 = vadd.f32 %v5268, %v5471
  %v5924 = vadd.f32 %v5270, %v5473
  %v5925 = vadd.f32 %v5272, %v5475
  %v5926 = vadd.f32 %v5274, %v5477
  %v5927 = vadd.f32 %v5278, %v5481
  %v5928 = vadd.f32 %v5280, %v5483
  %v5929 = vadd.f32 %v5282, %v5485
  %v5930 = vadd.f32 %v5284, %v5487
  %v5931 = vadd.f32 %v5604, %v5807
  %v5932 = vadd.f32 %v5606, %v5809
  %v5933 = vadd.f32 %v5608, %v5811
  %v5934 = vadd.f32 %v5610, %v5813
  %v5935 = vadd.f32 %v5614, %v5817
  %v5936 = vadd.f32 %v5616, %v5819
  %v5937 = vadd.f32 %v5618, %v5821
  %v5938 = vadd.f32 %v5620, %v5823
  %v5939 = vadd.f32 %v5624, %v5827
  %v5940 = vadd.f32 %v5626, %v5829
  %v5941 = vadd.f32 %v5628, %v5831
  %v5942 = vadd.f32 %v5630, %v5833
  %v5943 = vadd.f32 %v5634, %v5837
  %v5944 = vadd.f32 %v5636, %v5839
  %v5945 = vadd.f32 %v5638, %v5841
  %v5946 = vadd.f32 %v5640, %v5843
  %v5947 = vadd.f32 %v5644, %v5847
  %v5948 = vadd.f32 %v5646, %v5849
  %v5949 = vadd.f32 %v5648, %v5851
  %v5950 = vadd.f32 %v5650, %v5853
  %v5951 = vadd.f32 %v5654, %v5857
  %v5952 = vadd.f32 %v5656, %v5859
  %v5953 = vadd.f32 %v5658, %v5861
  %v5954 = vadd.f32 %v5660, %v5863
  %v5955 = vadd.f32 %v5664, %v5867
  %v5956 = vadd.f32 %v5666, %v5869
  %v5957 = vadd.f32 %v5668, %v5871
  %v5958 = vadd.f32 %v5670, %v5873
  %v5959 = vadd.f32 %v5674, %v5877
  %v5960 = vadd.f32 %v5676, %v5879
  %v5961 = vadd.f32 %v5678, %v5881
  %v5962 = vadd.f32 %v5680, %v5883
  %v5963 = vadd.f32 %v5684, %v5887
  %v5964 = vadd.f32 %v5686, %v5889
  %v5965 = vadd.f32 %v5688, %v5891
  %v5966 = vadd.f32 %v5690, %v5893
  %v5967 = vadd.f32 %v5895, %v5931
  %v5968 = vadd.f32 %v5896, %v5932
  %v5969 = vadd.f32 %v5897, %v5933
  %v5970 = vadd.f32 %v5898, %v5934
  %v5971 = vadd.f32 %v5899, %v5935
  %v5972 = vadd.f32 %v5900, %v5936
  %v5973 = vadd.f32 %v5901, %v5937
  %v5974 = vadd.f32 %v5902, %v5938
  %v5975 = vadd.f32 %v5903, %v5939
  %v5976 = vadd.f32 %v5904, %v5940
  %v5977 = vadd.f32 %v5905, %v5941
  %v5978 = vadd.f32 %v5906, %v5942
  %v5979 = vadd.f32 %v5907, %v5943
  %v5980 = vadd.f32 %v5908, %v5944
  %v5981 = vadd.f32 %v5909, %v5945
  %v5982 = vadd.f32 %v5910, %v5946
  %v5983 = vadd.f32 %v5911, %v5947
  %v5984 = vadd.f32 %v5912, %v5948
  %v5985 = vadd.f32 %v5913, %v5949
  %v5986 = vadd.f32 %v5914, %v5950
  %v5987 = vadd.f32 %v5915, %v5951
  %v5988 = vadd.f32 %v5916, %v5952
  %v5989 = vadd.f32 %v5917, %v5953
  %v5990 = vadd.f32 %v5918, %v5954
  %v5991 = vadd.f32 %v5919, %v5955
  %v5992 = vadd.f32 %v5920, %v5956
  %v5993 = vadd.f32 %v5921, %v5957
  %v5994 = vadd.f32 %v5922, %v5958
  %v5995 = vadd.f32 %v5923, %v5959
  %v5996 = vadd.f32 %v5924, %v5960
  %v5997 = vadd.f32 %v5925, %v5961
  %v5998 = vadd.f32 %v5926, %v5962
  %v5999 = vadd.f32 %v5927, %v5963
  %v6000 = vadd.f32 %v5928, %v5964
  %v6001 = vadd.f32 %v5929, %v5965
  %v6002 = vadd.f32 %v5930, %v5966
  %v6003 = vadd.f32 %v5967, %v4995
  %v6004 = vadd.f32 %v5968, %v4997
  %v6005 = vadd.f32 %v5969, %v4999
  %v6006 = vadd.f32 %v5970, %v5001
  %v6007 = vadd.f32 %v5971, %v5005
  %v6008 = vadd.f32 %v5972, %v5007
  %v6009 = vadd.f32 %v5973, %v5009
  %v6010 = vadd.f32 %v5974, %v5011
  %v6011 = vadd.f32 %v5975, %v5015
  %v6012 = vadd.f32 %v5976, %v5017
  %v6013 = vadd.f32 %v5977, %v5019
  %v6014 = vadd.f32 %v5978, %v5021
  %v6015 = vadd.f32 %v5979, %v5025
  %v6016 = vadd.f32 %v5980, %v5027
  %v6017 = vadd.f32 %v5981, %v5029
  %v6018 = vadd.f32 %v5982, %v5031
  %v6019 = vadd.f32 %v5983, %v5035
  %v6020 = vadd.f32 %v5984, %v5037
  %v6021 = vadd.f32 %v5985, %v5039
  %v6022 = vadd.f32 %v5986, %v5041
  %v6023 = vadd.f32 %v5987, %v5045
  %v6024 = vadd.f32 %v5988, %v5047
  %v6025 = vadd.f32 %v5989, %v5049
  %v6026 = vadd.f32 %v5990, %v5051
  %v6027 = vadd.f32 %v5991, %v5055
  %v6028 = vadd.f32 %v5992, %v5057
  %v6029 = vadd.f32 %v5993, %v5059
  %v6030 = vadd.f32 %v5994, %v5061
  %v6031 = vadd.f32 %v5995, %v5065
  %v6032 = vadd.f32 %v5996, %v5067
  %v6033 = vadd.f32 %v5997, %v5069
  %v6034 = vadd.f32 %v5998, %v5071
  %v6035 = vadd.f32 %v5999, %v5075
  %v6036 = vadd.f32 %v6000, %v5077
  %v6037 = vadd.f32 %v6001, %v5079
  %v6038 = vadd.f32 %v6002, %v5081
  %v6039 = vld [vmem:[%s4] sm:$0x3]
  %v6041 = vlaneseq
  %v6042 = vshrl.u32 %v6041, 7
  %v6043 = vsub.s32 0, %v6042
  %v6044 = vrot.slane %v6039, %v6043
  %v6045 = vlaneseq
  %v6046 = vshrl.u32 %v6045, 7
  %v6047 = vsub.s32 1, %v6046
  %v6048 = vrot.slane %v6039, %v6047
  %v6051 = vadd.f32 %v6003, %v6044
  %v6052 = vadd.f32 %v6004, %v6048
  %v6053 = vadd.f32 %v6005, %v6044
  %v6054 = vadd.f32 %v6006, %v6048
  %v6055 = vadd.f32 %v6007, %v6044
  %v6056 = vadd.f32 %v6008, %v6048
  %v6057 = vadd.f32 %v6009, %v6044
  %v6058 = vadd.f32 %v6010, %v6048
  %v6059 = vadd.f32 %v6011, %v6044
  %v6060 = vadd.f32 %v6012, %v6048
  %v6061 = vadd.f32 %v6013, %v6044
  %v6062 = vadd.f32 %v6014, %v6048
  %v6063 = vadd.f32 %v6015, %v6044
  %v6064 = vadd.f32 %v6016, %v6048
  %v6065 = vadd.f32 %v6017, %v6044
  %v6066 = vadd.f32 %v6018, %v6048
  %v6067 = vadd.f32 %v6019, %v6044
  %v6068 = vadd.f32 %v6020, %v6048
  %v6069 = vadd.f32 %v6021, %v6044
  %v6070 = vadd.f32 %v6022, %v6048
  %v6071 = vadd.f32 %v6023, %v6044
  %v6072 = vadd.f32 %v6024, %v6048
  %v6073 = vadd.f32 %v6025, %v6044
  %v6074 = vadd.f32 %v6026, %v6048
  %v6075 = vadd.f32 %v6027, %v6044
  %v6076 = vadd.f32 %v6028, %v6048
  %v6077 = vadd.f32 %v6029, %v6044
  %v6078 = vadd.f32 %v6030, %v6048
  %v6079 = vadd.f32 %v6031, %v6044
  %v6080 = vadd.f32 %v6032, %v6048
  %v6081 = vadd.f32 %v6033, %v6044
  %v6082 = vadd.f32 %v6034, %v6048
  %v6083 = vadd.f32 %v6035, %v6044
  %v6084 = vadd.f32 %v6036, %v6048
  %v6085 = vadd.f32 %v6037, %v6044
  %v6086 = vadd.f32 %v6038, %v6048
  %v6087 = vmax.f32 %v6051, 0.0
  %v6088 = vmax.f32 %v6052, 0.0
  %v6089 = vmax.f32 %v6053, 0.0
  %v6090 = vmax.f32 %v6054, 0.0
  %v6091 = vmax.f32 %v6055, 0.0
  %v6092 = vmax.f32 %v6056, 0.0
  %v6093 = vmax.f32 %v6057, 0.0
  %v6094 = vmax.f32 %v6058, 0.0
  %v6095 = vmax.f32 %v6059, 0.0
  %v6096 = vmax.f32 %v6060, 0.0
  %v6097 = vmax.f32 %v6061, 0.0
  %v6098 = vmax.f32 %v6062, 0.0
  %v6099 = vmax.f32 %v6063, 0.0
  %v6100 = vmax.f32 %v6064, 0.0
  %v6101 = vmax.f32 %v6065, 0.0
  %v6102 = vmax.f32 %v6066, 0.0
  %v6103 = vmax.f32 %v6067, 0.0
  %v6104 = vmax.f32 %v6068, 0.0
  %v6105 = vmax.f32 %v6069, 0.0
  %v6106 = vmax.f32 %v6070, 0.0
  %v6107 = vmax.f32 %v6071, 0.0
  %v6108 = vmax.f32 %v6072, 0.0
  %v6109 = vmax.f32 %v6073, 0.0
  %v6110 = vmax.f32 %v6074, 0.0
  %v6111 = vmax.f32 %v6075, 0.0
  %v6112 = vmax.f32 %v6076, 0.0
  %v6113 = vmax.f32 %v6077, 0.0
  %v6114 = vmax.f32 %v6078, 0.0
  %v6115 = vmax.f32 %v6079, 0.0
  %v6116 = vmax.f32 %v6080, 0.0
  %v6117 = vmax.f32 %v6081, 0.0
  %v6118 = vmax.f32 %v6082, 0.0
  %v6119 = vmax.f32 %v6083, 0.0
  %v6120 = vmax.f32 %v6084, 0.0
  %v6121 = vmax.f32 %v6085, 0.0
  %v6122 = vmax.f32 %v6086, 0.0
  %v6123 = vpack.c.bf16 %v6089, %v6087
  %v6124 = vpack.c.bf16 %v6090, %v6088
  %v6125 = vpack.c.bf16 %v6093, %v6091
  %v6126 = vpack.c.bf16 %v6094, %v6092
  %v6127 = vpack.c.bf16 %v6097, %v6095
  %v6128 = vpack.c.bf16 %v6098, %v6096
  %v6129 = vpack.c.bf16 %v6101, %v6099
  %v6130 = vpack.c.bf16 %v6102, %v6100
  %v6131 = vpack.c.bf16 %v6105, %v6103
  %v6132 = vpack.c.bf16 %v6106, %v6104
  %v6133 = vpack.c.bf16 %v6109, %v6107
  %v6134 = vpack.c.bf16 %v6110, %v6108
  %v6135 = vpack.c.bf16 %v6113, %v6111
  %v6136 = vpack.c.bf16 %v6114, %v6112
  %v6137 = vpack.c.bf16 %v6117, %v6115
  %v6138 = vpack.c.bf16 %v6118, %v6116
  %v6139 = vpack.c.bf16 %v6121, %v6119
  %v6140 = vpack.c.bf16 %v6122, %v6120
  %v6141 = vld [vmem:[%s5] sm:$0xff]
  %v6142 = vld [vmem:[%s5 + $0x8] sm:$0xff]
  %v6143 = vld [vmem:[%s5 + $0x10] sm:$0xff]
  %v6144 = vld [vmem:[%s5 + $0x18] sm:$0xff]
  %v6145 = vld [vmem:[%s5 + $0x20] sm:$0xff]
  %v6146 = vld [vmem:[%s5 + $0x28] sm:$0xff]
  %v6147 = vld [vmem:[%s5 + $0x30] sm:$0xff]
  %v6148 = vld [vmem:[%s5 + $0x38] sm:$0xff]
  %v6149 = vld [vmem:[%s5 + $0x40] sm:$0xff]
  %v6150 = vld [vmem:[%s5 + $0x48] sm:$0xff]
  %v6151 = vld [vmem:[%s5 + $0x50] sm:$0xff]
  %v6152 = vld [vmem:[%s5 + $0x58] sm:$0xff]
  %v6153 = vld [vmem:[%s5 + $0x60] sm:$0xff]
  %v6154 = vld [vmem:[%s5 + $0x68] sm:$0xff]
  %v6155 = vld [vmem:[%s5 + $0x70] sm:$0xff]
  %v6156 = vld [vmem:[%s5 + $0x78] sm:$0xff]
  %v6157 = vld [vmem:[%s5 + $0x80] sm:$0xff]
  %v6158 = vld [vmem:[%s5 + $0x88] sm:$0xff]
  %v6159 = vld [vmem:[%s5 + $0x90] sm:$0xff]
  %v6160 = vld [vmem:[%s5 + $0x98] sm:$0xff]
  %v6161 = vld [vmem:[%s5 + $0xa0] sm:$0xff]
  %v6162 = vld [vmem:[%s5 + $0xa8] sm:$0xff]
  %v6163 = vld [vmem:[%s5 + $0xb0] sm:$0xff]
  %v6164 = vld [vmem:[%s5 + $0xb8] sm:$0xff]
  %v6165 = vld [vmem:[%s5 + $0xc0] sm:$0xff]
  %v6166 = vld [vmem:[%s5 + $0xc8] sm:$0xff]
  %v6167 = vld [vmem:[%s5 + $0xd0] sm:$0xff]
  %v6168 = vld [vmem:[%s5 + $0xd8] sm:$0xff]
  %v6169 = vld [vmem:[%s5 + $0xe0] sm:$0xff]
  %v6170 = vld [vmem:[%s5 + $0xe8] sm:$0xff]
  %v6171 = vld [vmem:[%s5 + $0xf0] sm:$0xff]
  %v6172 = vld [vmem:[%s5 + $0xf8] sm:$0xff]
  %v6173 = vld [vmem:[%s5 + $0x100] sm:$0xff]
  %v6174 = vld [vmem:[%s5 + $0x108] sm:$0xff]
  %v6175 = vld [vmem:[%s5 + $0x110] sm:$0xff]
  %v6176 = vld [vmem:[%s5 + $0x118] sm:$0xff]
  %v6177 = vld [vmem:[%s5 + $0x120] sm:$0xff]
  %v6178 = vld [vmem:[%s5 + $0x128] sm:$0xff]
  %v6179 = vld [vmem:[%s5 + $0x130] sm:$0xff]
  %v6180 = vld [vmem:[%s5 + $0x138] sm:$0xff]
  %v6181 = vld [vmem:[%s5 + $0x140] sm:$0xff]
  %v6182 = vld [vmem:[%s5 + $0x148] sm:$0xff]
  %v6183 = vld [vmem:[%s5 + $0x150] sm:$0xff]
  %v6184 = vld [vmem:[%s5 + $0x158] sm:$0xff]
  %v6185 = vld [vmem:[%s5 + $0x160] sm:$0xff]
  %v6186 = vld [vmem:[%s5 + $0x168] sm:$0xff]
  %v6187 = vld [vmem:[%s5 + $0x170] sm:$0xff]
  %v6188 = vld [vmem:[%s5 + $0x178] sm:$0xff]
  %v6189 = vld [vmem:[%s5 + $0x180] sm:$0xff]
  %v6190 = vld [vmem:[%s5 + $0x188] sm:$0xff]
  %v6191 = vld [vmem:[%s5 + $0x190] sm:$0xff]
  %v6192 = vld [vmem:[%s5 + $0x198] sm:$0xff]
  %v6193 = vld [vmem:[%s5 + $0x1a0] sm:$0xff]
  %v6194 = vld [vmem:[%s5 + $0x1a8] sm:$0xff]
  %v6195 = vld [vmem:[%s5 + $0x1b0] sm:$0xff]
  %v6196 = vld [vmem:[%s5 + $0x1b8] sm:$0xff]
  %v6197 = vld [vmem:[%s5 + $0x1c0] sm:$0xff]
  %v6198 = vld [vmem:[%s5 + $0x1c8] sm:$0xff]
  %v6199 = vld [vmem:[%s5 + $0x1d0] sm:$0xff]
  %v6200 = vld [vmem:[%s5 + $0x1d8] sm:$0xff]
  %v6201 = vld [vmem:[%s5 + $0x1e0] sm:$0xff]
  %v6202 = vld [vmem:[%s5 + $0x1e8] sm:$0xff]
  %v6203 = vld [vmem:[%s5 + $0x1f0] sm:$0xff]
  %v6204 = vld [vmem:[%s5 + $0x1f8] sm:$0xff]
  %s6205 = scalar_lea.vmem %s5, 512
  %v6206 = vld [vmem:[%s6205] sm:$0xff]
  %v6207 = vld [vmem:[%s6205 + $0x8] sm:$0xff]
  %v6208 = vld [vmem:[%s6205 + $0x10] sm:$0xff]
  %v6209 = vld [vmem:[%s6205 + $0x18] sm:$0xff]
  %v6210 = vld [vmem:[%s6205 + $0x20] sm:$0xff]
  %v6211 = vld [vmem:[%s6205 + $0x28] sm:$0xff]
  %v6212 = vld [vmem:[%s6205 + $0x30] sm:$0xff]
  %v6213 = vld [vmem:[%s6205 + $0x38] sm:$0xff]
  %v6214 = vld [vmem:[%s6205 + $0x40] sm:$0xff]
  %v6215 = vld [vmem:[%s6205 + $0x48] sm:$0xff]
  %v6216 = vld [vmem:[%s6205 + $0x50] sm:$0xff]
  %v6217 = vld [vmem:[%s6205 + $0x58] sm:$0xff]
  %v6218 = vld [vmem:[%s6205 + $0x60] sm:$0xff]
  %v6219 = vld [vmem:[%s6205 + $0x68] sm:$0xff]
  %v6220 = vld [vmem:[%s6205 + $0x70] sm:$0xff]
  %v6221 = vld [vmem:[%s6205 + $0x78] sm:$0xff]
  %v6222 = vld [vmem:[%s6205 + $0x80] sm:$0xff]
  %v6223 = vld [vmem:[%s6205 + $0x88] sm:$0xff]
  %v6224 = vld [vmem:[%s6205 + $0x90] sm:$0xff]
  %v6225 = vld [vmem:[%s6205 + $0x98] sm:$0xff]
  %v6226 = vld [vmem:[%s6205 + $0xa0] sm:$0xff]
  %v6227 = vld [vmem:[%s6205 + $0xa8] sm:$0xff]
  %v6228 = vld [vmem:[%s6205 + $0xb0] sm:$0xff]
  %v6229 = vld [vmem:[%s6205 + $0xb8] sm:$0xff]
  %v6230 = vld [vmem:[%s6205 + $0xc0] sm:$0xff]
  %v6231 = vld [vmem:[%s6205 + $0xc8] sm:$0xff]
  %v6232 = vld [vmem:[%s6205 + $0xd0] sm:$0xff]
  %v6233 = vld [vmem:[%s6205 + $0xd8] sm:$0xff]
  %v6234 = vld [vmem:[%s6205 + $0xe0] sm:$0xff]
  %v6235 = vld [vmem:[%s6205 + $0xe8] sm:$0xff]
  %v6236 = vld [vmem:[%s6205 + $0xf0] sm:$0xff]
  %v6237 = vld [vmem:[%s6205 + $0xf8] sm:$0xff]
  %v6238 = vld [vmem:[%s6205 + $0x100] sm:$0xff]
  %v6239 = vld [vmem:[%s6205 + $0x108] sm:$0xff]
  %v6240 = vld [vmem:[%s6205 + $0x110] sm:$0xff]
  %v6241 = vld [vmem:[%s6205 + $0x118] sm:$0xff]
  %v6242 = vld [vmem:[%s6205 + $0x120] sm:$0xff]
  %v6243 = vld [vmem:[%s6205 + $0x128] sm:$0xff]
  %v6244 = vld [vmem:[%s6205 + $0x130] sm:$0xff]
  %v6245 = vld [vmem:[%s6205 + $0x138] sm:$0xff]
  %v6246 = vld [vmem:[%s6205 + $0x140] sm:$0xff]
  %v6247 = vld [vmem:[%s6205 + $0x148] sm:$0xff]
  %v6248 = vld [vmem:[%s6205 + $0x150] sm:$0xff]
  %v6249 = vld [vmem:[%s6205 + $0x158] sm:$0xff]
  %v6250 = vld [vmem:[%s6205 + $0x160] sm:$0xff]
  %v6251 = vld [vmem:[%s6205 + $0x168] sm:$0xff]
  %v6252 = vld [vmem:[%s6205 + $0x170] sm:$0xff]
  %v6253 = vld [vmem:[%s6205 + $0x178] sm:$0xff]
  %v6254 = vld [vmem:[%s6205 + $0x180] sm:$0xff]
  %v6255 = vld [vmem:[%s6205 + $0x188] sm:$0xff]
  %v6256 = vld [vmem:[%s6205 + $0x190] sm:$0xff]
  %v6257 = vld [vmem:[%s6205 + $0x198] sm:$0xff]
  %v6258 = vld [vmem:[%s6205 + $0x1a0] sm:$0xff]
  %v6259 = vld [vmem:[%s6205 + $0x1a8] sm:$0xff]
  %v6260 = vld [vmem:[%s6205 + $0x1b0] sm:$0xff]
  %v6261 = vld [vmem:[%s6205 + $0x1b8] sm:$0xff]
  %v6262 = vld [vmem:[%s6205 + $0x1c0] sm:$0xff]
  %v6263 = vld [vmem:[%s6205 + $0x1c8] sm:$0xff]
  %v6264 = vld [vmem:[%s6205 + $0x1d0] sm:$0xff]
  %v6265 = vld [vmem:[%s6205 + $0x1d8] sm:$0xff]
  %v6266 = vld [vmem:[%s6205 + $0x1e0] sm:$0xff]
  %v6267 = vld [vmem:[%s6205 + $0x1e8] sm:$0xff]
  %v6268 = vld [vmem:[%s6205 + $0x1f0] sm:$0xff]
  %v6269 = vld [vmem:[%s6205 + $0x1f8] sm:$0xff]
  %v6334 = vunpack.c.l.b16 %v6206
  %v6335 = vunpack.c.h.b16 %v6206
  %v6336 = vunpack.c.l.b16 %v6207
  %v6337 = vunpack.c.h.b16 %v6207
  %v6338 = vunpack.c.l.b16 %v6208
  %v6339 = vunpack.c.h.b16 %v6208
  %v6340 = vunpack.c.l.b16 %v6209
  %v6341 = vunpack.c.h.b16 %v6209
  %v6342 = vunpack.c.l.b16 %v6210
  %v6343 = vunpack.c.h.b16 %v6210
  %v6344 = vunpack.c.l.b16 %v6211
  %v6345 = vunpack.c.h.b16 %v6211
  %v6346 = vunpack.c.l.b16 %v6212
  %v6347 = vunpack.c.h.b16 %v6212
  %v6348 = vunpack.c.l.b16 %v6213
  %v6349 = vunpack.c.h.b16 %v6213
  %v6350 = vunpack.c.l.b16 %v6214
  %v6351 = vunpack.c.h.b16 %v6214
  %v6352 = vunpack.c.l.b16 %v6215
  %v6353 = vunpack.c.h.b16 %v6215
  %v6354 = vunpack.c.l.b16 %v6216
  %v6355 = vunpack.c.h.b16 %v6216
  %v6356 = vunpack.c.l.b16 %v6217
  %v6357 = vunpack.c.h.b16 %v6217
  %v6358 = vunpack.c.l.b16 %v6218
  %v6359 = vunpack.c.h.b16 %v6218
  %v6360 = vunpack.c.l.b16 %v6219
  %v6361 = vunpack.c.h.b16 %v6219
  %v6362 = vunpack.c.l.b16 %v6220
  %v6363 = vunpack.c.h.b16 %v6220
  %v6364 = vunpack.c.l.b16 %v6221
  %v6365 = vunpack.c.h.b16 %v6221
  %v6366 = vunpack.c.l.b16 %v6222
  %v6367 = vunpack.c.h.b16 %v6222
  %v6368 = vunpack.c.l.b16 %v6223
  %v6369 = vunpack.c.h.b16 %v6223
  %v6370 = vunpack.c.l.b16 %v6224
  %v6371 = vunpack.c.h.b16 %v6224
  %v6372 = vunpack.c.l.b16 %v6225
  %v6373 = vunpack.c.h.b16 %v6225
  %v6374 = vunpack.c.l.b16 %v6226
  %v6375 = vunpack.c.h.b16 %v6226
  %v6376 = vunpack.c.l.b16 %v6227
  %v6377 = vunpack.c.h.b16 %v6227
  %v6378 = vunpack.c.l.b16 %v6228
  %v6379 = vunpack.c.h.b16 %v6228
  %v6380 = vunpack.c.l.b16 %v6229
  %v6381 = vunpack.c.h.b16 %v6229
  %v6382 = vunpack.c.l.b16 %v6230
  %v6383 = vunpack.c.h.b16 %v6230
  %v6384 = vunpack.c.l.b16 %v6231
  %v6385 = vunpack.c.h.b16 %v6231
  %v6386 = vunpack.c.l.b16 %v6232
  %v6387 = vunpack.c.h.b16 %v6232
  %v6388 = vunpack.c.l.b16 %v6233
  %v6389 = vunpack.c.h.b16 %v6233
  %v6390 = vunpack.c.l.b16 %v6234
  %v6391 = vunpack.c.h.b16 %v6234
  %v6392 = vunpack.c.l.b16 %v6235
  %v6393 = vunpack.c.h.b16 %v6235
  %v6394 = vunpack.c.l.b16 %v6236
  %v6395 = vunpack.c.h.b16 %v6236
  %v6396 = vunpack.c.l.b16 %v6237
  %v6397 = vunpack.c.h.b16 %v6237
  %v6398 = vunpack.c.l.b16 %v6238
  %v6399 = vunpack.c.h.b16 %v6238
  %v6400 = vunpack.c.l.b16 %v6239
  %v6401 = vunpack.c.h.b16 %v6239
  %v6402 = vunpack.c.l.b16 %v6240
  %v6403 = vunpack.c.h.b16 %v6240
  %v6404 = vunpack.c.l.b16 %v6241
  %v6405 = vunpack.c.h.b16 %v6241
  %v6406 = vunpack.c.l.b16 %v6242
  %v6407 = vunpack.c.h.b16 %v6242
  %v6408 = vunpack.c.l.b16 %v6243
  %v6409 = vunpack.c.h.b16 %v6243
  %v6410 = vunpack.c.l.b16 %v6244
  %v6411 = vunpack.c.h.b16 %v6244
  %v6412 = vunpack.c.l.b16 %v6245
  %v6413 = vunpack.c.h.b16 %v6245
  %v6414 = vunpack.c.l.b16 %v6246
  %v6415 = vunpack.c.h.b16 %v6246
  %v6416 = vunpack.c.l.b16 %v6247
  %v6417 = vunpack.c.h.b16 %v6247
  %v6418 = vunpack.c.l.b16 %v6248
  %v6419 = vunpack.c.h.b16 %v6248
  %v6420 = vunpack.c.l.b16 %v6249
  %v6421 = vunpack.c.h.b16 %v6249
  %v6422 = vunpack.c.l.b16 %v6250
  %v6423 = vunpack.c.h.b16 %v6250
  %v6424 = vunpack.c.l.b16 %v6251
  %v6425 = vunpack.c.h.b16 %v6251
  %v6426 = vunpack.c.l.b16 %v6252
  %v6427 = vunpack.c.h.b16 %v6252
  %v6428 = vunpack.c.l.b16 %v6253
  %v6429 = vunpack.c.h.b16 %v6253
  %v6430 = vunpack.c.l.b16 %v6254
  %v6431 = vunpack.c.h.b16 %v6254
  %v6432 = vunpack.c.l.b16 %v6255
  %v6433 = vunpack.c.h.b16 %v6255
  %v6434 = vunpack.c.l.b16 %v6256
  %v6435 = vunpack.c.h.b16 %v6256
  %v6436 = vunpack.c.l.b16 %v6257
  %v6437 = vunpack.c.h.b16 %v6257
  %v6438 = vunpack.c.l.b16 %v6258
  %v6439 = vunpack.c.h.b16 %v6258
  %v6440 = vunpack.c.l.b16 %v6259
  %v6441 = vunpack.c.h.b16 %v6259
  %v6442 = vunpack.c.l.b16 %v6260
  %v6443 = vunpack.c.h.b16 %v6260
  %v6444 = vunpack.c.l.b16 %v6261
  %v6445 = vunpack.c.h.b16 %v6261
  %v6446 = vunpack.c.l.b16 %v6262
  %v6447 = vunpack.c.h.b16 %v6262
  %v6448 = vunpack.c.l.b16 %v6263
  %v6449 = vunpack.c.h.b16 %v6263
  %v6450 = vunpack.c.l.b16 %v6264
  %v6451 = vunpack.c.h.b16 %v6264
  %v6452 = vunpack.c.l.b16 %v6265
  %v6453 = vunpack.c.h.b16 %v6265
  %v6454 = vunpack.c.l.b16 %v6266
  %v6455 = vunpack.c.h.b16 %v6266
  %v6456 = vunpack.c.l.b16 %v6267
  %v6457 = vunpack.c.h.b16 %v6267
  %v6458 = vunpack.c.l.b16 %v6268
  %v6459 = vunpack.c.h.b16 %v6268
  %v6460 = vunpack.c.l.b16 %v6269
  %v6461 = vunpack.c.h.b16 %v6269
  %v6462 = vpack.c.b16 %v6338, %v6334
  %v6463 = vpack.c.b16 %v6339, %v6335
  %v6464 = vpack.c.b16 %v6340, %v6336
  %v6465 = vpack.c.b16 %v6341, %v6337
  %v6466 = vpack.c.b16 %v6346, %v6342
  %v6467 = vpack.c.b16 %v6347, %v6343
  %v6468 = vpack.c.b16 %v6348, %v6344
  %v6469 = vpack.c.b16 %v6349, %v6345
  %v6470 = vpack.c.b16 %v6354, %v6350
  %v6471 = vpack.c.b16 %v6355, %v6351
  %v6472 = vpack.c.b16 %v6356, %v6352
  %v6473 = vpack.c.b16 %v6357, %v6353
  %v6474 = vpack.c.b16 %v6362, %v6358
  %v6475 = vpack.c.b16 %v6363, %v6359
  %v6476 = vpack.c.b16 %v6364, %v6360
  %v6477 = vpack.c.b16 %v6365, %v6361
  %v6478 = vpack.c.b16 %v6370, %v6366
  %v6479 = vpack.c.b16 %v6371, %v6367
  %v6480 = vpack.c.b16 %v6372, %v6368
  %v6481 = vpack.c.b16 %v6373, %v6369
  %v6482 = vpack.c.b16 %v6378, %v6374
  %v6483 = vpack.c.b16 %v6379, %v6375
  %v6484 = vpack.c.b16 %v6380, %v6376
  %v6485 = vpack.c.b16 %v6381, %v6377
  %v6486 = vpack.c.b16 %v6386, %v6382
  %v6487 = vpack.c.b16 %v6387, %v6383
  %v6488 = vpack.c.b16 %v6388, %v6384
  %v6489 = vpack.c.b16 %v6389, %v6385
  %v6490 = vpack.c.b16 %v6394, %v6390
  %v6491 = vpack.c.b16 %v6395, %v6391
  %v6492 = vpack.c.b16 %v6396, %v6392
  %v6493 = vpack.c.b16 %v6397, %v6393
  %v6494 = vpack.c.b16 %v6402, %v6398
  %v6495 = vpack.c.b16 %v6403, %v6399
  %v6496 = vpack.c.b16 %v6404, %v6400
  %v6497 = vpack.c.b16 %v6405, %v6401
  %v6498 = vpack.c.b16 %v6410, %v6406
  %v6499 = vpack.c.b16 %v6411, %v6407
  %v6500 = vpack.c.b16 %v6412, %v6408
  %v6501 = vpack.c.b16 %v6413, %v6409
  %v6502 = vpack.c.b16 %v6418, %v6414
  %v6503 = vpack.c.b16 %v6419, %v6415
  %v6504 = vpack.c.b16 %v6420, %v6416
  %v6505 = vpack.c.b16 %v6421, %v6417
  %v6506 = vpack.c.b16 %v6426, %v6422
  %v6507 = vpack.c.b16 %v6427, %v6423
  %v6508 = vpack.c.b16 %v6428, %v6424
  %v6509 = vpack.c.b16 %v6429, %v6425
  %v6510 = vpack.c.b16 %v6434, %v6430
  %v6511 = vpack.c.b16 %v6435, %v6431
  %v6512 = vpack.c.b16 %v6436, %v6432
  %v6513 = vpack.c.b16 %v6437, %v6433
  %v6514 = vpack.c.b16 %v6442, %v6438
  %v6515 = vpack.c.b16 %v6443, %v6439
  %v6516 = vpack.c.b16 %v6444, %v6440
  %v6517 = vpack.c.b16 %v6445, %v6441
  %v6518 = vpack.c.b16 %v6450, %v6446
  %v6519 = vpack.c.b16 %v6451, %v6447
  %v6520 = vpack.c.b16 %v6452, %v6448
  %v6521 = vpack.c.b16 %v6453, %v6449
  %v6522 = vpack.c.b16 %v6458, %v6454
  %v6523 = vpack.c.b16 %v6459, %v6455
  %v6524 = vpack.c.b16 %v6460, %v6456
  %v6525 = vpack.c.b16 %v6461, %v6457
  %6590 = vmatprep.subr.bf16.mxu0 %v6463
  %6591 = vmatpush1.bf16.msra.mxu0 %v6462
  %6592 = vmatprep.subr.bf16.mxu0 %v6467
  %6593 = vmatpush1.bf16.msra.mxu0 %v6466
  %6594 = vmatprep.subr.bf16.mxu0 %v6471
  %6595 = vmatpush1.bf16.msra.mxu0 %v6470
  %6596 = vmatprep.subr.bf16.mxu0 %v6475
  %6597 = vmatpush1.bf16.msra.mxu0 %v6474
  %6598 = vmatprep.subr.bf16.mxu0 %v6479
  %6599 = vmatpush1.bf16.msra.mxu0 %v6478
  %6600 = vmatprep.subr.bf16.mxu0 %v6483
  %6601 = vmatpush1.bf16.msra.mxu0 %v6482
  %6602 = vmatprep.subr.bf16.mxu0 %v6487
  %6603 = vmatpush1.bf16.msra.mxu0 %v6486
  %6604 = vmatprep.subr.bf16.mxu0 %v6491
  %6605 = vmatpush1.bf16.msra.mxu0 %v6490
  %6606 = vmatprep.subr.bf16.mxu0 %v6495
  %6607 = vmatpush1.bf16.msra.mxu0 %v6494
  %6608 = vmatprep.subr.bf16.mxu0 %v6499
  %6609 = vmatpush1.bf16.msra.mxu0 %v6498
  %6610 = vmatprep.subr.bf16.mxu0 %v6503
  %6611 = vmatpush1.bf16.msra.mxu0 %v6502
  %6612 = vmatprep.subr.bf16.mxu0 %v6507
  %6613 = vmatpush1.bf16.msra.mxu0 %v6506
  %6614 = vmatprep.subr.bf16.mxu0 %v6511
  %6615 = vmatpush1.bf16.msra.mxu0 %v6510
  %6616 = vmatprep.subr.bf16.mxu0 %v6515
  %6617 = vmatpush1.bf16.msra.mxu0 %v6514
  %6618 = vmatprep.subr.bf16.mxu0 %v6519
  %6619 = vmatpush1.bf16.msra.mxu0 %v6518
  %6620 = vmatprep.subr.bf16.mxu0 %v6523
  %6621 = vmatpush1.bf16.msra.mxu0 %v6522
  %6622 = vmatprep.mubr.bf16.mxu0 %v6126
  %6623 = vmatmul.mubr.bf16.gmra.mrb[0].mxu0 %v6125
  %v6624 = vpop.f32.mrb[0].mxu0
  %v6625 = vadd.f32 0.0, %v6624
  %v6626 = vpop.f32.mrb[0].mxu0
  %v6627 = vadd.f32 0.0, %v6626
  %v6628 = vpop.f32.mrb[0].mxu0
  %v6629 = vadd.f32 0.0, %v6628
  %v6630 = vpop.f32.mrb[0].mxu0
  %v6631 = vadd.f32 0.0, %v6630
  %6632 = vdwg.mxu0
  %6633 = vmatprep.subr.bf16.mxu0 %v6465
  %6634 = vmatpush1.bf16.msra.mxu0 %v6464
  %6635 = vmatprep.subr.bf16.mxu0 %v6469
  %6636 = vmatpush1.bf16.msra.mxu0 %v6468
  %6637 = vmatprep.subr.bf16.mxu0 %v6473
  %6638 = vmatpush1.bf16.msra.mxu0 %v6472
  %6639 = vmatprep.subr.bf16.mxu0 %v6477
  %6640 = vmatpush1.bf16.msra.mxu0 %v6476
  %6641 = vmatprep.subr.bf16.mxu0 %v6481
  %6642 = vmatpush1.bf16.msra.mxu0 %v6480
  %6643 = vmatprep.subr.bf16.mxu0 %v6485
  %6644 = vmatpush1.bf16.msra.mxu0 %v6484
  %6645 = vmatprep.subr.bf16.mxu0 %v6489
  %6646 = vmatpush1.bf16.msra.mxu0 %v6488
  %6647 = vmatprep.subr.bf16.mxu0 %v6493
  %6648 = vmatpush1.bf16.msra.mxu0 %v6492
  %6649 = vmatprep.subr.bf16.mxu0 %v6497
  %6650 = vmatpush1.bf16.msra.mxu0 %v6496
  %6651 = vmatprep.subr.bf16.mxu0 %v6501
  %6652 = vmatpush1.bf16.msra.mxu0 %v6500
  %6653 = vmatprep.subr.bf16.mxu0 %v6505
  %6654 = vmatpush1.bf16.msra.mxu0 %v6504
  %6655 = vmatprep.subr.bf16.mxu0 %v6509
  %6656 = vmatpush1.bf16.msra.mxu0 %v6508
  %6657 = vmatprep.subr.bf16.mxu0 %v6513
  %6658 = vmatpush1.bf16.msra.mxu0 %v6512
  %6659 = vmatprep.subr.bf16.mxu0 %v6517
  %6660 = vmatpush1.bf16.msra.mxu0 %v6516
  %6661 = vmatprep.subr.bf16.mxu0 %v6521
  %6662 = vmatpush1.bf16.msra.mxu0 %v6520
  %6663 = vmatprep.subr.bf16.mxu0 %v6525
  %6664 = vmatpush1.bf16.msra.mxu0 %v6524
  %6665 = vmatprep.mubr.bf16.mxu0 %v6126
  %6666 = vmatmul.mubr.bf16.gmra.mrb[0].mxu0 %v6125
  %v6667 = vpop.f32.mrb[0].mxu0
  %v6668 = vadd.f32 0.0, %v6667
  %v6669 = vpop.f32.mrb[0].mxu0
  %v6670 = vadd.f32 0.0, %v6669
  %v6671 = vpop.f32.mrb[0].mxu0
  %v6672 = vadd.f32 0.0, %v6671
  %v6673 = vpop.f32.mrb[0].mxu0
  %v6674 = vadd.f32 0.0, %v6673
  %6675 = vdwg.mxu0
  %s6676 = scalar_lea.vmem %s5, 1024
  %v6677 = vld [vmem:[%s6676] sm:$0xff]
  %v6678 = vld [vmem:[%s6676 + $0x8] sm:$0xff]
  %v6679 = vld [vmem:[%s6676 + $0x10] sm:$0xff]
  %v6680 = vld [vmem:[%s6676 + $0x18] sm:$0xff]
  %v6681 = vld [vmem:[%s6676 + $0x20] sm:$0xff]
  %v6682 = vld [vmem:[%s6676 + $0x28] sm:$0xff]
  %v6683 = vld [vmem:[%s6676 + $0x30] sm:$0xff]
  %v6684 = vld [vmem:[%s6676 + $0x38] sm:$0xff]
  %v6685 = vld [vmem:[%s6676 + $0x40] sm:$0xff]
  %v6686 = vld [vmem:[%s6676 + $0x48] sm:$0xff]
  %v6687 = vld [vmem:[%s6676 + $0x50] sm:$0xff]
  %v6688 = vld [vmem:[%s6676 + $0x58] sm:$0xff]
  %v6689 = vld [vmem:[%s6676 + $0x60] sm:$0xff]
  %v6690 = vld [vmem:[%s6676 + $0x68] sm:$0xff]
  %v6691 = vld [vmem:[%s6676 + $0x70] sm:$0xff]
  %v6692 = vld [vmem:[%s6676 + $0x78] sm:$0xff]
  %v6693 = vld [vmem:[%s6676 + $0x80] sm:$0xff]
  %v6694 = vld [vmem:[%s6676 + $0x88] sm:$0xff]
  %v6695 = vld [vmem:[%s6676 + $0x90] sm:$0xff]
  %v6696 = vld [vmem:[%s6676 + $0x98] sm:$0xff]
  %v6697 = vld [vmem:[%s6676 + $0xa0] sm:$0xff]
  %v6698 = vld [vmem:[%s6676 + $0xa8] sm:$0xff]
  %v6699 = vld [vmem:[%s6676 + $0xb0] sm:$0xff]
  %v6700 = vld [vmem:[%s6676 + $0xb8] sm:$0xff]
  %v6701 = vld [vmem:[%s6676 + $0xc0] sm:$0xff]
  %v6702 = vld [vmem:[%s6676 + $0xc8] sm:$0xff]
  %v6703 = vld [vmem:[%s6676 + $0xd0] sm:$0xff]
  %v6704 = vld [vmem:[%s6676 + $0xd8] sm:$0xff]
  %v6705 = vld [vmem:[%s6676 + $0xe0] sm:$0xff]
  %v6706 = vld [vmem:[%s6676 + $0xe8] sm:$0xff]
  %v6707 = vld [vmem:[%s6676 + $0xf0] sm:$0xff]
  %v6708 = vld [vmem:[%s6676 + $0xf8] sm:$0xff]
  %v6709 = vld [vmem:[%s6676 + $0x100] sm:$0xff]
  %v6710 = vld [vmem:[%s6676 + $0x108] sm:$0xff]
  %v6711 = vld [vmem:[%s6676 + $0x110] sm:$0xff]
  %v6712 = vld [vmem:[%s6676 + $0x118] sm:$0xff]
  %v6713 = vld [vmem:[%s6676 + $0x120] sm:$0xff]
  %v6714 = vld [vmem:[%s6676 + $0x128] sm:$0xff]
  %v6715 = vld [vmem:[%s6676 + $0x130] sm:$0xff]
  %v6716 = vld [vmem:[%s6676 + $0x138] sm:$0xff]
  %v6717 = vld [vmem:[%s6676 + $0x140] sm:$0xff]
  %v6718 = vld [vmem:[%s6676 + $0x148] sm:$0xff]
  %v6719 = vld [vmem:[%s6676 + $0x150] sm:$0xff]
  %v6720 = vld [vmem:[%s6676 + $0x158] sm:$0xff]
  %v6721 = vld [vmem:[%s6676 + $0x160] sm:$0xff]
  %v6722 = vld [vmem:[%s6676 + $0x168] sm:$0xff]
  %v6723 = vld [vmem:[%s6676 + $0x170] sm:$0xff]
  %v6724 = vld [vmem:[%s6676 + $0x178] sm:$0xff]
  %v6725 = vld [vmem:[%s6676 + $0x180] sm:$0xff]
  %v6726 = vld [vmem:[%s6676 + $0x188] sm:$0xff]
  %v6727 = vld [vmem:[%s6676 + $0x190] sm:$0xff]
  %v6728 = vld [vmem:[%s6676 + $0x198] sm:$0xff]
  %v6729 = vld [vmem:[%s6676 + $0x1a0] sm:$0xff]
  %v6730 = vld [vmem:[%s6676 + $0x1a8] sm:$0xff]
  %v6731 = vld [vmem:[%s6676 + $0x1b0] sm:$0xff]
  %v6732 = vld [vmem:[%s6676 + $0x1b8] sm:$0xff]
  %v6733 = vld [vmem:[%s6676 + $0x1c0] sm:$0xff]
  %v6734 = vld [vmem:[%s6676 + $0x1c8] sm:$0xff]
  %v6735 = vld [vmem:[%s6676 + $0x1d0] sm:$0xff]
  %v6736 = vld [vmem:[%s6676 + $0x1d8] sm:$0xff]
  %v6737 = vld [vmem:[%s6676 + $0x1e0] sm:$0xff]
  %v6738 = vld [vmem:[%s6676 + $0x1e8] sm:$0xff]
  %v6739 = vld [vmem:[%s6676 + $0x1f0] sm:$0xff]
  %v6740 = vld [vmem:[%s6676 + $0x1f8] sm:$0xff]
  %s6741 = scalar_lea.vmem %s5, 1536
  %v6742 = vld [vmem:[%s6741] sm:$0xff]
  %v6743 = vld [vmem:[%s6741 + $0x8] sm:$0xff]
  %v6744 = vld [vmem:[%s6741 + $0x10] sm:$0xff]
  %v6745 = vld [vmem:[%s6741 + $0x18] sm:$0xff]
  %v6746 = vld [vmem:[%s6741 + $0x20] sm:$0xff]
  %v6747 = vld [vmem:[%s6741 + $0x28] sm:$0xff]
  %v6748 = vld [vmem:[%s6741 + $0x30] sm:$0xff]
  %v6749 = vld [vmem:[%s6741 + $0x38] sm:$0xff]
  %v6750 = vld [vmem:[%s6741 + $0x40] sm:$0xff]
  %v6751 = vld [vmem:[%s6741 + $0x48] sm:$0xff]
  %v6752 = vld [vmem:[%s6741 + $0x50] sm:$0xff]
  %v6753 = vld [vmem:[%s6741 + $0x58] sm:$0xff]
  %v6754 = vld [vmem:[%s6741 + $0x60] sm:$0xff]
  %v6755 = vld [vmem:[%s6741 + $0x68] sm:$0xff]
  %v6756 = vld [vmem:[%s6741 + $0x70] sm:$0xff]
  %v6757 = vld [vmem:[%s6741 + $0x78] sm:$0xff]
  %v6758 = vld [vmem:[%s6741 + $0x80] sm:$0xff]
  %v6759 = vld [vmem:[%s6741 + $0x88] sm:$0xff]
  %v6760 = vld [vmem:[%s6741 + $0x90] sm:$0xff]
  %v6761 = vld [vmem:[%s6741 + $0x98] sm:$0xff]
  %v6762 = vld [vmem:[%s6741 + $0xa0] sm:$0xff]
  %v6763 = vld [vmem:[%s6741 + $0xa8] sm:$0xff]
  %v6764 = vld [vmem:[%s6741 + $0xb0] sm:$0xff]
  %v6765 = vld [vmem:[%s6741 + $0xb8] sm:$0xff]
  %v6766 = vld [vmem:[%s6741 + $0xc0] sm:$0xff]
  %v6767 = vld [vmem:[%s6741 + $0xc8] sm:$0xff]
  %v6768 = vld [vmem:[%s6741 + $0xd0] sm:$0xff]
  %v6769 = vld [vmem:[%s6741 + $0xd8] sm:$0xff]
  %v6770 = vld [vmem:[%s6741 + $0xe0] sm:$0xff]
  %v6771 = vld [vmem:[%s6741 + $0xe8] sm:$0xff]
  %v6772 = vld [vmem:[%s6741 + $0xf0] sm:$0xff]
  %v6773 = vld [vmem:[%s6741 + $0xf8] sm:$0xff]
  %v6774 = vld [vmem:[%s6741 + $0x100] sm:$0xff]
  %v6775 = vld [vmem:[%s6741 + $0x108] sm:$0xff]
  %v6776 = vld [vmem:[%s6741 + $0x110] sm:$0xff]
  %v6777 = vld [vmem:[%s6741 + $0x118] sm:$0xff]
  %v6778 = vld [vmem:[%s6741 + $0x120] sm:$0xff]
  %v6779 = vld [vmem:[%s6741 + $0x128] sm:$0xff]
  %v6780 = vld [vmem:[%s6741 + $0x130] sm:$0xff]
  %v6781 = vld [vmem:[%s6741 + $0x138] sm:$0xff]
  %v6782 = vld [vmem:[%s6741 + $0x140] sm:$0xff]
  %v6783 = vld [vmem:[%s6741 + $0x148] sm:$0xff]
  %v6784 = vld [vmem:[%s6741 + $0x150] sm:$0xff]
  %v6785 = vld [vmem:[%s6741 + $0x158] sm:$0xff]
  %v6786 = vld [vmem:[%s6741 + $0x160] sm:$0xff]
  %v6787 = vld [vmem:[%s6741 + $0x168] sm:$0xff]
  %v6788 = vld [vmem:[%s6741 + $0x170] sm:$0xff]
  %v6789 = vld [vmem:[%s6741 + $0x178] sm:$0xff]
  %v6790 = vld [vmem:[%s6741 + $0x180] sm:$0xff]
  %v6791 = vld [vmem:[%s6741 + $0x188] sm:$0xff]
  %v6792 = vld [vmem:[%s6741 + $0x190] sm:$0xff]
  %v6793 = vld [vmem:[%s6741 + $0x198] sm:$0xff]
  %v6794 = vld [vmem:[%s6741 + $0x1a0] sm:$0xff]
  %v6795 = vld [vmem:[%s6741 + $0x1a8] sm:$0xff]
  %v6796 = vld [vmem:[%s6741 + $0x1b0] sm:$0xff]
  %v6797 = vld [vmem:[%s6741 + $0x1b8] sm:$0xff]
  %v6798 = vld [vmem:[%s6741 + $0x1c0] sm:$0xff]
  %v6799 = vld [vmem:[%s6741 + $0x1c8] sm:$0xff]
  %v6800 = vld [vmem:[%s6741 + $0x1d0] sm:$0xff]
  %v6801 = vld [vmem:[%s6741 + $0x1d8] sm:$0xff]
  %v6802 = vld [vmem:[%s6741 + $0x1e0] sm:$0xff]
  %v6803 = vld [vmem:[%s6741 + $0x1e8] sm:$0xff]
  %v6804 = vld [vmem:[%s6741 + $0x1f0] sm:$0xff]
  %v6805 = vld [vmem:[%s6741 + $0x1f8] sm:$0xff]
  %v6870 = vunpack.c.l.b16 %v6742
  %v6871 = vunpack.c.h.b16 %v6742
  %v6872 = vunpack.c.l.b16 %v6743
  %v6873 = vunpack.c.h.b16 %v6743
  %v6874 = vunpack.c.l.b16 %v6744
  %v6875 = vunpack.c.h.b16 %v6744
  %v6876 = vunpack.c.l.b16 %v6745
  %v6877 = vunpack.c.h.b16 %v6745
  %v6878 = vunpack.c.l.b16 %v6746
  %v6879 = vunpack.c.h.b16 %v6746
  %v6880 = vunpack.c.l.b16 %v6747
  %v6881 = vunpack.c.h.b16 %v6747
  %v6882 = vunpack.c.l.b16 %v6748
  %v6883 = vunpack.c.h.b16 %v6748
  %v6884 = vunpack.c.l.b16 %v6749
  %v6885 = vunpack.c.h.b16 %v6749
  %v6886 = vunpack.c.l.b16 %v6750
  %v6887 = vunpack.c.h.b16 %v6750
  %v6888 = vunpack.c.l.b16 %v6751
  %v6889 = vunpack.c.h.b16 %v6751
  %v6890 = vunpack.c.l.b16 %v6752
  %v6891 = vunpack.c.h.b16 %v6752
  %v6892 = vunpack.c.l.b16 %v6753
  %v6893 = vunpack.c.h.b16 %v6753
  %v6894 = vunpack.c.l.b16 %v6754
  %v6895 = vunpack.c.h.b16 %v6754
  %v6896 = vunpack.c.l.b16 %v6755
  %v6897 = vunpack.c.h.b16 %v6755
  %v6898 = vunpack.c.l.b16 %v6756
  %v6899 = vunpack.c.h.b16 %v6756
  %v6900 = vunpack.c.l.b16 %v6757
  %v6901 = vunpack.c.h.b16 %v6757
  %v6902 = vunpack.c.l.b16 %v6758
  %v6903 = vunpack.c.h.b16 %v6758
  %v6904 = vunpack.c.l.b16 %v6759
  %v6905 = vunpack.c.h.b16 %v6759
  %v6906 = vunpack.c.l.b16 %v6760
  %v6907 = vunpack.c.h.b16 %v6760
  %v6908 = vunpack.c.l.b16 %v6761
  %v6909 = vunpack.c.h.b16 %v6761
  %v6910 = vunpack.c.l.b16 %v6762
  %v6911 = vunpack.c.h.b16 %v6762
  %v6912 = vunpack.c.l.b16 %v6763
  %v6913 = vunpack.c.h.b16 %v6763
  %v6914 = vunpack.c.l.b16 %v6764
  %v6915 = vunpack.c.h.b16 %v6764
  %v6916 = vunpack.c.l.b16 %v6765
  %v6917 = vunpack.c.h.b16 %v6765
  %v6918 = vunpack.c.l.b16 %v6766
  %v6919 = vunpack.c.h.b16 %v6766
  %v6920 = vunpack.c.l.b16 %v6767
  %v6921 = vunpack.c.h.b16 %v6767
  %v6922 = vunpack.c.l.b16 %v6768
  %v6923 = vunpack.c.h.b16 %v6768
  %v6924 = vunpack.c.l.b16 %v6769
  %v6925 = vunpack.c.h.b16 %v6769
  %v6926 = vunpack.c.l.b16 %v6770
  %v6927 = vunpack.c.h.b16 %v6770
  %v6928 = vunpack.c.l.b16 %v6771
  %v6929 = vunpack.c.h.b16 %v6771
  %v6930 = vunpack.c.l.b16 %v6772
  %v6931 = vunpack.c.h.b16 %v6772
  %v6932 = vunpack.c.l.b16 %v6773
  %v6933 = vunpack.c.h.b16 %v6773
  %v6934 = vunpack.c.l.b16 %v6774
  %v6935 = vunpack.c.h.b16 %v6774
  %v6936 = vunpack.c.l.b16 %v6775
  %v6937 = vunpack.c.h.b16 %v6775
  %v6938 = vunpack.c.l.b16 %v6776
  %v6939 = vunpack.c.h.b16 %v6776
  %v6940 = vunpack.c.l.b16 %v6777
  %v6941 = vunpack.c.h.b16 %v6777
  %v6942 = vunpack.c.l.b16 %v6778
  %v6943 = vunpack.c.h.b16 %v6778
  %v6944 = vunpack.c.l.b16 %v6779
  %v6945 = vunpack.c.h.b16 %v6779
  %v6946 = vunpack.c.l.b16 %v6780
  %v6947 = vunpack.c.h.b16 %v6780
  %v6948 = vunpack.c.l.b16 %v6781
  %v6949 = vunpack.c.h.b16 %v6781
  %v6950 = vunpack.c.l.b16 %v6782
  %v6951 = vunpack.c.h.b16 %v6782
  %v6952 = vunpack.c.l.b16 %v6783
  %v6953 = vunpack.c.h.b16 %v6783
  %v6954 = vunpack.c.l.b16 %v6784
  %v6955 = vunpack.c.h.b16 %v6784
  %v6956 = vunpack.c.l.b16 %v6785
  %v6957 = vunpack.c.h.b16 %v6785
  %v6958 = vunpack.c.l.b16 %v6786
  %v6959 = vunpack.c.h.b16 %v6786
  %v6960 = vunpack.c.l.b16 %v6787
  %v6961 = vunpack.c.h.b16 %v6787
  %v6962 = vunpack.c.l.b16 %v6788
  %v6963 = vunpack.c.h.b16 %v6788
  %v6964 = vunpack.c.l.b16 %v6789
  %v6965 = vunpack.c.h.b16 %v6789
  %v6966 = vunpack.c.l.b16 %v6790
  %v6967 = vunpack.c.h.b16 %v6790
  %v6968 = vunpack.c.l.b16 %v6791
  %v6969 = vunpack.c.h.b16 %v6791
  %v6970 = vunpack.c.l.b16 %v6792
  %v6971 = vunpack.c.h.b16 %v6792
  %v6972 = vunpack.c.l.b16 %v6793
  %v6973 = vunpack.c.h.b16 %v6793
  %v6974 = vunpack.c.l.b16 %v6794
  %v6975 = vunpack.c.h.b16 %v6794
  %v6976 = vunpack.c.l.b16 %v6795
  %v6977 = vunpack.c.h.b16 %v6795
  %v6978 = vunpack.c.l.b16 %v6796
  %v6979 = vunpack.c.h.b16 %v6796
  %v6980 = vunpack.c.l.b16 %v6797
  %v6981 = vunpack.c.h.b16 %v6797
  %v6982 = vunpack.c.l.b16 %v6798
  %v6983 = vunpack.c.h.b16 %v6798
  %v6984 = vunpack.c.l.b16 %v6799
  %v6985 = vunpack.c.h.b16 %v6799
  %v6986 = vunpack.c.l.b16 %v6800
  %v6987 = vunpack.c.h.b16 %v6800
  %v6988 = vunpack.c.l.b16 %v6801
  %v6989 = vunpack.c.h.b16 %v6801
  %v6990 = vunpack.c.l.b16 %v6802
  %v6991 = vunpack.c.h.b16 %v6802
  %v6992 = vunpack.c.l.b16 %v6803
  %v6993 = vunpack.c.h.b16 %v6803
  %v6994 = vunpack.c.l.b16 %v6804
  %v6995 = vunpack.c.h.b16 %v6804
  %v6996 = vunpack.c.l.b16 %v6805
  %v6997 = vunpack.c.h.b16 %v6805
  %v6998 = vpack.c.b16 %v6874, %v6870
  %v6999 = vpack.c.b16 %v6875, %v6871
  %v7000 = vpack.c.b16 %v6876, %v6872
  %v7001 = vpack.c.b16 %v6877, %v6873
  %v7002 = vpack.c.b16 %v6882, %v6878
  %v7003 = vpack.c.b16 %v6883, %v6879
  %v7004 = vpack.c.b16 %v6884, %v6880
  %v7005 = vpack.c.b16 %v6885, %v6881
  %v7006 = vpack.c.b16 %v6890, %v6886
  %v7007 = vpack.c.b16 %v6891, %v6887
  %v7008 = vpack.c.b16 %v6892, %v6888
  %v7009 = vpack.c.b16 %v6893, %v6889
  %v7010 = vpack.c.b16 %v6898, %v6894
  %v7011 = vpack.c.b16 %v6899, %v6895
  %v7012 = vpack.c.b16 %v6900, %v6896
  %v7013 = vpack.c.b16 %v6901, %v6897
  %v7014 = vpack.c.b16 %v6906, %v6902
  %v7015 = vpack.c.b16 %v6907, %v6903
  %v7016 = vpack.c.b16 %v6908, %v6904
  %v7017 = vpack.c.b16 %v6909, %v6905
  %v7018 = vpack.c.b16 %v6914, %v6910
  %v7019 = vpack.c.b16 %v6915, %v6911
  %v7020 = vpack.c.b16 %v6916, %v6912
  %v7021 = vpack.c.b16 %v6917, %v6913
  %v7022 = vpack.c.b16 %v6922, %v6918
  %v7023 = vpack.c.b16 %v6923, %v6919
  %v7024 = vpack.c.b16 %v6924, %v6920
  %v7025 = vpack.c.b16 %v6925, %v6921
  %v7026 = vpack.c.b16 %v6930, %v6926
  %v7027 = vpack.c.b16 %v6931, %v6927
  %v7028 = vpack.c.b16 %v6932, %v6928
  %v7029 = vpack.c.b16 %v6933, %v6929
  %v7030 = vpack.c.b16 %v6938, %v6934
  %v7031 = vpack.c.b16 %v6939, %v6935
  %v7032 = vpack.c.b16 %v6940, %v6936
  %v7033 = vpack.c.b16 %v6941, %v6937
  %v7034 = vpack.c.b16 %v6946, %v6942
  %v7035 = vpack.c.b16 %v6947, %v6943
  %v7036 = vpack.c.b16 %v6948, %v6944
  %v7037 = vpack.c.b16 %v6949, %v6945
  %v7038 = vpack.c.b16 %v6954, %v6950
  %v7039 = vpack.c.b16 %v6955, %v6951
  %v7040 = vpack.c.b16 %v6956, %v6952
  %v7041 = vpack.c.b16 %v6957, %v6953
  %v7042 = vpack.c.b16 %v6962, %v6958
  %v7043 = vpack.c.b16 %v6963, %v6959
  %v7044 = vpack.c.b16 %v6964, %v6960
  %v7045 = vpack.c.b16 %v6965, %v6961
  %v7046 = vpack.c.b16 %v6970, %v6966
  %v7047 = vpack.c.b16 %v6971, %v6967
  %v7048 = vpack.c.b16 %v6972, %v6968
  %v7049 = vpack.c.b16 %v6973, %v6969
  %v7050 = vpack.c.b16 %v6978, %v6974
  %v7051 = vpack.c.b16 %v6979, %v6975
  %v7052 = vpack.c.b16 %v6980, %v6976
  %v7053 = vpack.c.b16 %v6981, %v6977
  %v7054 = vpack.c.b16 %v6986, %v6982
  %v7055 = vpack.c.b16 %v6987, %v6983
  %v7056 = vpack.c.b16 %v6988, %v6984
  %v7057 = vpack.c.b16 %v6989, %v6985
  %v7058 = vpack.c.b16 %v6994, %v6990
  %v7059 = vpack.c.b16 %v6995, %v6991
  %v7060 = vpack.c.b16 %v6996, %v6992
  %v7061 = vpack.c.b16 %v6997, %v6993
  %7126 = vmatprep.subr.bf16.mxu0 %v6999
  %7127 = vmatpush1.bf16.msra.mxu0 %v6998
  %7128 = vmatprep.subr.bf16.mxu0 %v7003
  %7129 = vmatpush1.bf16.msra.mxu0 %v7002
  %7130 = vmatprep.subr.bf16.mxu0 %v7007
  %7131 = vmatpush1.bf16.msra.mxu0 %v7006
  %7132 = vmatprep.subr.bf16.mxu0 %v7011
  %7133 = vmatpush1.bf16.msra.mxu0 %v7010
  %7134 = vmatprep.subr.bf16.mxu0 %v7015
  %7135 = vmatpush1.bf16.msra.mxu0 %v7014
  %7136 = vmatprep.subr.bf16.mxu0 %v7019
  %7137 = vmatpush1.bf16.msra.mxu0 %v7018
  %7138 = vmatprep.subr.bf16.mxu0 %v7023
  %7139 = vmatpush1.bf16.msra.mxu0 %v7022
  %7140 = vmatprep.subr.bf16.mxu0 %v7027
  %7141 = vmatpush1.bf16.msra.mxu0 %v7026
  %7142 = vmatprep.subr.bf16.mxu0 %v7031
  %7143 = vmatpush1.bf16.msra.mxu0 %v7030
  %7144 = vmatprep.subr.bf16.mxu0 %v7035
  %7145 = vmatpush1.bf16.msra.mxu0 %v7034
  %7146 = vmatprep.subr.bf16.mxu0 %v7039
  %7147 = vmatpush1.bf16.msra.mxu0 %v7038
  %7148 = vmatprep.subr.bf16.mxu0 %v7043
  %7149 = vmatpush1.bf16.msra.mxu0 %v7042
  %7150 = vmatprep.subr.bf16.mxu0 %v7047
  %7151 = vmatpush1.bf16.msra.mxu0 %v7046
  %7152 = vmatprep.subr.bf16.mxu0 %v7051
  %7153 = vmatpush1.bf16.msra.mxu0 %v7050
  %7154 = vmatprep.subr.bf16.mxu0 %v7055
  %7155 = vmatpush1.bf16.msra.mxu0 %v7054
  %7156 = vmatprep.subr.bf16.mxu0 %v7059
  %7157 = vmatpush1.bf16.msra.mxu0 %v7058
  %7158 = vmatprep.mubr.bf16.mxu0 %v6130
  %7159 = vmatmul.mubr.bf16.gmra.mrb[0].mxu0 %v6129
  %v7160 = vpop.f32.mrb[0].mxu0
  %v7161 = vadd.f32 0.0, %v7160
  %v7162 = vpop.f32.mrb[0].mxu0
  %v7163 = vadd.f32 0.0, %v7162
  %v7164 = vpop.f32.mrb[0].mxu0
  %v7165 = vadd.f32 0.0, %v7164
  %v7166 = vpop.f32.mrb[0].mxu0
  %v7167 = vadd.f32 0.0, %v7166
  %7168 = vdwg.mxu0
  %7169 = vmatprep.subr.bf16.mxu0 %v7001
  %7170 = vmatpush1.bf16.msra.mxu0 %v7000
  %7171 = vmatprep.subr.bf16.mxu0 %v7005
  %7172 = vmatpush1.bf16.msra.mxu0 %v7004
  %7173 = vmatprep.subr.bf16.mxu0 %v7009
  %7174 = vmatpush1.bf16.msra.mxu0 %v7008
  %7175 = vmatprep.subr.bf16.mxu0 %v7013
  %7176 = vmatpush1.bf16.msra.mxu0 %v7012
  %7177 = vmatprep.subr.bf16.mxu0 %v7017
  %7178 = vmatpush1.bf16.msra.mxu0 %v7016
  %7179 = vmatprep.subr.bf16.mxu0 %v7021
  %7180 = vmatpush1.bf16.msra.mxu0 %v7020
  %7181 = vmatprep.subr.bf16.mxu0 %v7025
  %7182 = vmatpush1.bf16.msra.mxu0 %v7024
  %7183 = vmatprep.subr.bf16.mxu0 %v7029
  %7184 = vmatpush1.bf16.msra.mxu0 %v7028
  %7185 = vmatprep.subr.bf16.mxu0 %v7033
  %7186 = vmatpush1.bf16.msra.mxu0 %v7032
  %7187 = vmatprep.subr.bf16.mxu0 %v7037
  %7188 = vmatpush1.bf16.msra.mxu0 %v7036
  %7189 = vmatprep.subr.bf16.mxu0 %v7041
  %7190 = vmatpush1.bf16.msra.mxu0 %v7040
  %7191 = vmatprep.subr.bf16.mxu0 %v7045
  %7192 = vmatpush1.bf16.msra.mxu0 %v7044
  %7193 = vmatprep.subr.bf16.mxu0 %v7049
  %7194 = vmatpush1.bf16.msra.mxu0 %v7048
  %7195 = vmatprep.subr.bf16.mxu0 %v7053
  %7196 = vmatpush1.bf16.msra.mxu0 %v7052
  %7197 = vmatprep.subr.bf16.mxu0 %v7057
  %7198 = vmatpush1.bf16.msra.mxu0 %v7056
  %7199 = vmatprep.subr.bf16.mxu0 %v7061
  %7200 = vmatpush1.bf16.msra.mxu0 %v7060
  %7201 = vmatprep.mubr.bf16.mxu0 %v6130
  %7202 = vmatmul.mubr.bf16.gmra.mrb[0].mxu0 %v6129
  %v7203 = vpop.f32.mrb[0].mxu0
  %v7204 = vadd.f32 0.0, %v7203
  %v7205 = vpop.f32.mrb[0].mxu0
  %v7206 = vadd.f32 0.0, %v7205
  %v7207 = vpop.f32.mrb[0].mxu0
  %v7208 = vadd.f32 0.0, %v7207
  %v7209 = vpop.f32.mrb[0].mxu0
  %v7210 = vadd.f32 0.0, %v7209
  %7211 = vdwg.mxu0
  %s7212 = scalar_lea.vmem %s5, 2048
  %v7213 = vld [vmem:[%s7212] sm:$0xff]
  %v7214 = vld [vmem:[%s7212 + $0x8] sm:$0xff]
  %v7215 = vld [vmem:[%s7212 + $0x10] sm:$0xff]
  %v7216 = vld [vmem:[%s7212 + $0x18] sm:$0xff]
  %v7217 = vld [vmem:[%s7212 + $0x20] sm:$0xff]
  %v7218 = vld [vmem:[%s7212 + $0x28] sm:$0xff]
  %v7219 = vld [vmem:[%s7212 + $0x30] sm:$0xff]
  %v7220 = vld [vmem:[%s7212 + $0x38] sm:$0xff]
  %v7221 = vld [vmem:[%s7212 + $0x40] sm:$0xff]
  %v7222 = vld [vmem:[%s7212 + $0x48] sm:$0xff]
  %v7223 = vld [vmem:[%s7212 + $0x50] sm:$0xff]
  %v7224 = vld [vmem:[%s7212 + $0x58] sm:$0xff]
  %v7225 = vld [vmem:[%s7212 + $0x60] sm:$0xff]
  %v7226 = vld [vmem:[%s7212 + $0x68] sm:$0xff]
  %v7227 = vld [vmem:[%s7212 + $0x70] sm:$0xff]
  %v7228 = vld [vmem:[%s7212 + $0x78] sm:$0xff]
  %v7229 = vld [vmem:[%s7212 + $0x80] sm:$0xff]
  %v7230 = vld [vmem:[%s7212 + $0x88] sm:$0xff]
  %v7231 = vld [vmem:[%s7212 + $0x90] sm:$0xff]
  %v7232 = vld [vmem:[%s7212 + $0x98] sm:$0xff]
  %v7233 = vld [vmem:[%s7212 + $0xa0] sm:$0xff]
  %v7234 = vld [vmem:[%s7212 + $0xa8] sm:$0xff]
  %v7235 = vld [vmem:[%s7212 + $0xb0] sm:$0xff]
  %v7236 = vld [vmem:[%s7212 + $0xb8] sm:$0xff]
  %v7237 = vld [vmem:[%s7212 + $0xc0] sm:$0xff]
  %v7238 = vld [vmem:[%s7212 + $0xc8] sm:$0xff]
  %v7239 = vld [vmem:[%s7212 + $0xd0] sm:$0xff]
  %v7240 = vld [vmem:[%s7212 + $0xd8] sm:$0xff]
  %v7241 = vld [vmem:[%s7212 + $0xe0] sm:$0xff]
  %v7242 = vld [vmem:[%s7212 + $0xe8] sm:$0xff]
  %v7243 = vld [vmem:[%s7212 + $0xf0] sm:$0xff]
  %v7244 = vld [vmem:[%s7212 + $0xf8] sm:$0xff]
  %v7245 = vld [vmem:[%s7212 + $0x100] sm:$0xff]
  %v7246 = vld [vmem:[%s7212 + $0x108] sm:$0xff]
  %v7247 = vld [vmem:[%s7212 + $0x110] sm:$0xff]
  %v7248 = vld [vmem:[%s7212 + $0x118] sm:$0xff]
  %v7249 = vld [vmem:[%s7212 + $0x120] sm:$0xff]
  %v7250 = vld [vmem:[%s7212 + $0x128] sm:$0xff]
  %v7251 = vld [vmem:[%s7212 + $0x130] sm:$0xff]
  %v7252 = vld [vmem:[%s7212 + $0x138] sm:$0xff]
  %v7253 = vld [vmem:[%s7212 + $0x140] sm:$0xff]
  %v7254 = vld [vmem:[%s7212 + $0x148] sm:$0xff]
  %v7255 = vld [vmem:[%s7212 + $0x150] sm:$0xff]
  %v7256 = vld [vmem:[%s7212 + $0x158] sm:$0xff]
  %v7257 = vld [vmem:[%s7212 + $0x160] sm:$0xff]
  %v7258 = vld [vmem:[%s7212 + $0x168] sm:$0xff]
  %v7259 = vld [vmem:[%s7212 + $0x170] sm:$0xff]
  %v7260 = vld [vmem:[%s7212 + $0x178] sm:$0xff]
  %v7261 = vld [vmem:[%s7212 + $0x180] sm:$0xff]
  %v7262 = vld [vmem:[%s7212 + $0x188] sm:$0xff]
  %v7263 = vld [vmem:[%s7212 + $0x190] sm:$0xff]
  %v7264 = vld [vmem:[%s7212 + $0x198] sm:$0xff]
  %v7265 = vld [vmem:[%s7212 + $0x1a0] sm:$0xff]
  %v7266 = vld [vmem:[%s7212 + $0x1a8] sm:$0xff]
  %v7267 = vld [vmem:[%s7212 + $0x1b0] sm:$0xff]
  %v7268 = vld [vmem:[%s7212 + $0x1b8] sm:$0xff]
  %v7269 = vld [vmem:[%s7212 + $0x1c0] sm:$0xff]
  %v7270 = vld [vmem:[%s7212 + $0x1c8] sm:$0xff]
  %v7271 = vld [vmem:[%s7212 + $0x1d0] sm:$0xff]
  %v7272 = vld [vmem:[%s7212 + $0x1d8] sm:$0xff]
  %v7273 = vld [vmem:[%s7212 + $0x1e0] sm:$0xff]
  %v7274 = vld [vmem:[%s7212 + $0x1e8] sm:$0xff]
  %v7275 = vld [vmem:[%s7212 + $0x1f0] sm:$0xff]
  %v7276 = vld [vmem:[%s7212 + $0x1f8] sm:$0xff]
  %s7277 = scalar_lea.vmem %s5, 2560
  %v7278 = vld [vmem:[%s7277] sm:$0xff]
  %v7279 = vld [vmem:[%s7277 + $0x8] sm:$0xff]
  %v7280 = vld [vmem:[%s7277 + $0x10] sm:$0xff]
  %v7281 = vld [vmem:[%s7277 + $0x18] sm:$0xff]
  %v7282 = vld [vmem:[%s7277 + $0x20] sm:$0xff]
  %v7283 = vld [vmem:[%s7277 + $0x28] sm:$0xff]
  %v7284 = vld [vmem:[%s7277 + $0x30] sm:$0xff]
  %v7285 = vld [vmem:[%s7277 + $0x38] sm:$0xff]
  %v7286 = vld [vmem:[%s7277 + $0x40] sm:$0xff]
  %v7287 = vld [vmem:[%s7277 + $0x48] sm:$0xff]
  %v7288 = vld [vmem:[%s7277 + $0x50] sm:$0xff]
  %v7289 = vld [vmem:[%s7277 + $0x58] sm:$0xff]
  %v7290 = vld [vmem:[%s7277 + $0x60] sm:$0xff]
  %v7291 = vld [vmem:[%s7277 + $0x68] sm:$0xff]
  %v7292 = vld [vmem:[%s7277 + $0x70] sm:$0xff]
  %v7293 = vld [vmem:[%s7277 + $0x78] sm:$0xff]
  %v7294 = vld [vmem:[%s7277 + $0x80] sm:$0xff]
  %v7295 = vld [vmem:[%s7277 + $0x88] sm:$0xff]
  %v7296 = vld [vmem:[%s7277 + $0x90] sm:$0xff]
  %v7297 = vld [vmem:[%s7277 + $0x98] sm:$0xff]
  %v7298 = vld [vmem:[%s7277 + $0xa0] sm:$0xff]
  %v7299 = vld [vmem:[%s7277 + $0xa8] sm:$0xff]
  %v7300 = vld [vmem:[%s7277 + $0xb0] sm:$0xff]
  %v7301 = vld [vmem:[%s7277 + $0xb8] sm:$0xff]
  %v7302 = vld [vmem:[%s7277 + $0xc0] sm:$0xff]
  %v7303 = vld [vmem:[%s7277 + $0xc8] sm:$0xff]
  %v7304 = vld [vmem:[%s7277 + $0xd0] sm:$0xff]
  %v7305 = vld [vmem:[%s7277 + $0xd8] sm:$0xff]
  %v7306 = vld [vmem:[%s7277 + $0xe0] sm:$0xff]
  %v7307 = vld [vmem:[%s7277 + $0xe8] sm:$0xff]
  %v7308 = vld [vmem:[%s7277 + $0xf0] sm:$0xff]
  %v7309 = vld [vmem:[%s7277 + $0xf8] sm:$0xff]
  %v7310 = vld [vmem:[%s7277 + $0x100] sm:$0xff]
  %v7311 = vld [vmem:[%s7277 + $0x108] sm:$0xff]
  %v7312 = vld [vmem:[%s7277 + $0x110] sm:$0xff]
  %v7313 = vld [vmem:[%s7277 + $0x118] sm:$0xff]
  %v7314 = vld [vmem:[%s7277 + $0x120] sm:$0xff]
  %v7315 = vld [vmem:[%s7277 + $0x128] sm:$0xff]
  %v7316 = vld [vmem:[%s7277 + $0x130] sm:$0xff]
  %v7317 = vld [vmem:[%s7277 + $0x138] sm:$0xff]
  %v7318 = vld [vmem:[%s7277 + $0x140] sm:$0xff]
  %v7319 = vld [vmem:[%s7277 + $0x148] sm:$0xff]
  %v7320 = vld [vmem:[%s7277 + $0x150] sm:$0xff]
  %v7321 = vld [vmem:[%s7277 + $0x158] sm:$0xff]
  %v7322 = vld [vmem:[%s7277 + $0x160] sm:$0xff]
  %v7323 = vld [vmem:[%s7277 + $0x168] sm:$0xff]
  %v7324 = vld [vmem:[%s7277 + $0x170] sm:$0xff]
  %v7325 = vld [vmem:[%s7277 + $0x178] sm:$0xff]
  %v7326 = vld [vmem:[%s7277 + $0x180] sm:$0xff]
  %v7327 = vld [vmem:[%s7277 + $0x188] sm:$0xff]
  %v7328 = vld [vmem:[%s7277 + $0x190] sm:$0xff]
  %v7329 = vld [vmem:[%s7277 + $0x198] sm:$0xff]
  %v7330 = vld [vmem:[%s7277 + $0x1a0] sm:$0xff]
  %v7331 = vld [vmem:[%s7277 + $0x1a8] sm:$0xff]
  %v7332 = vld [vmem:[%s7277 + $0x1b0] sm:$0xff]
  %v7333 = vld [vmem:[%s7277 + $0x1b8] sm:$0xff]
  %v7334 = vld [vmem:[%s7277 + $0x1c0] sm:$0xff]
  %v7335 = vld [vmem:[%s7277 + $0x1c8] sm:$0xff]
  %v7336 = vld [vmem:[%s7277 + $0x1d0] sm:$0xff]
  %v7337 = vld [vmem:[%s7277 + $0x1d8] sm:$0xff]
  %v7338 = vld [vmem:[%s7277 + $0x1e0] sm:$0xff]
  %v7339 = vld [vmem:[%s7277 + $0x1e8] sm:$0xff]
  %v7340 = vld [vmem:[%s7277 + $0x1f0] sm:$0xff]
  %v7341 = vld [vmem:[%s7277 + $0x1f8] sm:$0xff]
  %v7406 = vunpack.c.l.b16 %v7278
  %v7407 = vunpack.c.h.b16 %v7278
  %v7408 = vunpack.c.l.b16 %v7279
  %v7409 = vunpack.c.h.b16 %v7279
  %v7410 = vunpack.c.l.b16 %v7280
  %v7411 = vunpack.c.h.b16 %v7280
  %v7412 = vunpack.c.l.b16 %v7281
  %v7413 = vunpack.c.h.b16 %v7281
  %v7414 = vunpack.c.l.b16 %v7282
  %v7415 = vunpack.c.h.b16 %v7282
  %v7416 = vunpack.c.l.b16 %v7283
  %v7417 = vunpack.c.h.b16 %v7283
  %v7418 = vunpack.c.l.b16 %v7284
  %v7419 = vunpack.c.h.b16 %v7284
  %v7420 = vunpack.c.l.b16 %v7285
  %v7421 = vunpack.c.h.b16 %v7285
  %v7422 = vunpack.c.l.b16 %v7286
  %v7423 = vunpack.c.h.b16 %v7286
  %v7424 = vunpack.c.l.b16 %v7287
  %v7425 = vunpack.c.h.b16 %v7287
  %v7426 = vunpack.c.l.b16 %v7288
  %v7427 = vunpack.c.h.b16 %v7288
  %v7428 = vunpack.c.l.b16 %v7289
  %v7429 = vunpack.c.h.b16 %v7289
  %v7430 = vunpack.c.l.b16 %v7290
  %v7431 = vunpack.c.h.b16 %v7290
  %v7432 = vunpack.c.l.b16 %v7291
  %v7433 = vunpack.c.h.b16 %v7291
  %v7434 = vunpack.c.l.b16 %v7292
  %v7435 = vunpack.c.h.b16 %v7292
  %v7436 = vunpack.c.l.b16 %v7293
  %v7437 = vunpack.c.h.b16 %v7293
  %v7438 = vunpack.c.l.b16 %v7294
  %v7439 = vunpack.c.h.b16 %v7294
  %v7440 = vunpack.c.l.b16 %v7295
  %v7441 = vunpack.c.h.b16 %v7295
  %v7442 = vunpack.c.l.b16 %v7296
  %v7443 = vunpack.c.h.b16 %v7296
  %v7444 = vunpack.c.l.b16 %v7297
  %v7445 = vunpack.c.h.b16 %v7297
  %v7446 = vunpack.c.l.b16 %v7298
  %v7447 = vunpack.c.h.b16 %v7298
  %v7448 = vunpack.c.l.b16 %v7299
  %v7449 = vunpack.c.h.b16 %v7299
  %v7450 = vunpack.c.l.b16 %v7300
  %v7451 = vunpack.c.h.b16 %v7300
  %v7452 = vunpack.c.l.b16 %v7301
  %v7453 = vunpack.c.h.b16 %v7301
  %v7454 = vunpack.c.l.b16 %v7302
  %v7455 = vunpack.c.h.b16 %v7302
  %v7456 = vunpack.c.l.b16 %v7303
  %v7457 = vunpack.c.h.b16 %v7303
  %v7458 = vunpack.c.l.b16 %v7304
  %v7459 = vunpack.c.h.b16 %v7304
  %v7460 = vunpack.c.l.b16 %v7305
  %v7461 = vunpack.c.h.b16 %v7305
  %v7462 = vunpack.c.l.b16 %v7306
  %v7463 = vunpack.c.h.b16 %v7306
  %v7464 = vunpack.c.l.b16 %v7307
  %v7465 = vunpack.c.h.b16 %v7307
  %v7466 = vunpack.c.l.b16 %v7308
  %v7467 = vunpack.c.h.b16 %v7308
  %v7468 = vunpack.c.l.b16 %v7309
  %v7469 = vunpack.c.h.b16 %v7309
  %v7470 = vunpack.c.l.b16 %v7310
  %v7471 = vunpack.c.h.b16 %v7310
  %v7472 = vunpack.c.l.b16 %v7311
  %v7473 = vunpack.c.h.b16 %v7311
  %v7474 = vunpack.c.l.b16 %v7312
  %v7475 = vunpack.c.h.b16 %v7312
  %v7476 = vunpack.c.l.b16 %v7313
  %v7477 = vunpack.c.h.b16 %v7313
  %v7478 = vunpack.c.l.b16 %v7314
  %v7479 = vunpack.c.h.b16 %v7314
  %v7480 = vunpack.c.l.b16 %v7315
  %v7481 = vunpack.c.h.b16 %v7315
  %v7482 = vunpack.c.l.b16 %v7316
  %v7483 = vunpack.c.h.b16 %v7316
  %v7484 = vunpack.c.l.b16 %v7317
  %v7485 = vunpack.c.h.b16 %v7317
  %v7486 = vunpack.c.l.b16 %v7318
  %v7487 = vunpack.c.h.b16 %v7318
  %v7488 = vunpack.c.l.b16 %v7319
  %v7489 = vunpack.c.h.b16 %v7319
  %v7490 = vunpack.c.l.b16 %v7320
  %v7491 = vunpack.c.h.b16 %v7320
  %v7492 = vunpack.c.l.b16 %v7321
  %v7493 = vunpack.c.h.b16 %v7321
  %v7494 = vunpack.c.l.b16 %v7322
  %v7495 = vunpack.c.h.b16 %v7322
  %v7496 = vunpack.c.l.b16 %v7323
  %v7497 = vunpack.c.h.b16 %v7323
  %v7498 = vunpack.c.l.b16 %v7324
  %v7499 = vunpack.c.h.b16 %v7324
  %v7500 = vunpack.c.l.b16 %v7325
  %v7501 = vunpack.c.h.b16 %v7325
  %v7502 = vunpack.c.l.b16 %v7326
  %v7503 = vunpack.c.h.b16 %v7326
  %v7504 = vunpack.c.l.b16 %v7327
  %v7505 = vunpack.c.h.b16 %v7327
  %v7506 = vunpack.c.l.b16 %v7328
  %v7507 = vunpack.c.h.b16 %v7328
  %v7508 = vunpack.c.l.b16 %v7329
  %v7509 = vunpack.c.h.b16 %v7329
  %v7510 = vunpack.c.l.b16 %v7330
  %v7511 = vunpack.c.h.b16 %v7330
  %v7512 = vunpack.c.l.b16 %v7331
  %v7513 = vunpack.c.h.b16 %v7331
  %v7514 = vunpack.c.l.b16 %v7332
  %v7515 = vunpack.c.h.b16 %v7332
  %v7516 = vunpack.c.l.b16 %v7333
  %v7517 = vunpack.c.h.b16 %v7333
  %v7518 = vunpack.c.l.b16 %v7334
  %v7519 = vunpack.c.h.b16 %v7334
  %v7520 = vunpack.c.l.b16 %v7335
  %v7521 = vunpack.c.h.b16 %v7335
  %v7522 = vunpack.c.l.b16 %v7336
  %v7523 = vunpack.c.h.b16 %v7336
  %v7524 = vunpack.c.l.b16 %v7337
  %v7525 = vunpack.c.h.b16 %v7337
  %v7526 = vunpack.c.l.b16 %v7338
  %v7527 = vunpack.c.h.b16 %v7338
  %v7528 = vunpack.c.l.b16 %v7339
  %v7529 = vunpack.c.h.b16 %v7339
  %v7530 = vunpack.c.l.b16 %v7340
  %v7531 = vunpack.c.h.b16 %v7340
  %v7532 = vunpack.c.l.b16 %v7341
  %v7533 = vunpack.c.h.b16 %v7341
  %v7534 = vpack.c.b16 %v7410, %v7406
  %v7535 = vpack.c.b16 %v7411, %v7407
  %v7536 = vpack.c.b16 %v7412, %v7408
  %v7537 = vpack.c.b16 %v7413, %v7409
  %v7538 = vpack.c.b16 %v7418, %v7414
  %v7539 = vpack.c.b16 %v7419, %v7415
  %v7540 = vpack.c.b16 %v7420, %v7416
  %v7541 = vpack.c.b16 %v7421, %v7417
  %v7542 = vpack.c.b16 %v7426, %v7422
  %v7543 = vpack.c.b16 %v7427, %v7423
  %v7544 = vpack.c.b16 %v7428, %v7424
  %v7545 = vpack.c.b16 %v7429, %v7425
  %v7546 = vpack.c.b16 %v7434, %v7430
  %v7547 = vpack.c.b16 %v7435, %v7431
  %v7548 = vpack.c.b16 %v7436, %v7432
  %v7549 = vpack.c.b16 %v7437, %v7433
  %v7550 = vpack.c.b16 %v7442, %v7438
  %v7551 = vpack.c.b16 %v7443, %v7439
  %v7552 = vpack.c.b16 %v7444, %v7440
  %v7553 = vpack.c.b16 %v7445, %v7441
  %v7554 = vpack.c.b16 %v7450, %v7446
  %v7555 = vpack.c.b16 %v7451, %v7447
  %v7556 = vpack.c.b16 %v7452, %v7448
  %v7557 = vpack.c.b16 %v7453, %v7449
  %v7558 = vpack.c.b16 %v7458, %v7454
  %v7559 = vpack.c.b16 %v7459, %v7455
  %v7560 = vpack.c.b16 %v7460, %v7456
  %v7561 = vpack.c.b16 %v7461, %v7457
  %v7562 = vpack.c.b16 %v7466, %v7462
  %v7563 = vpack.c.b16 %v7467, %v7463
  %v7564 = vpack.c.b16 %v7468, %v7464
  %v7565 = vpack.c.b16 %v7469, %v7465
  %v7566 = vpack.c.b16 %v7474, %v7470
  %v7567 = vpack.c.b16 %v7475, %v7471
  %v7568 = vpack.c.b16 %v7476, %v7472
  %v7569 = vpack.c.b16 %v7477, %v7473
  %v7570 = vpack.c.b16 %v7482, %v7478
  %v7571 = vpack.c.b16 %v7483, %v7479
  %v7572 = vpack.c.b16 %v7484, %v7480
  %v7573 = vpack.c.b16 %v7485, %v7481
  %v7574 = vpack.c.b16 %v7490, %v7486
  %v7575 = vpack.c.b16 %v7491, %v7487
  %v7576 = vpack.c.b16 %v7492, %v7488
  %v7577 = vpack.c.b16 %v7493, %v7489
  %v7578 = vpack.c.b16 %v7498, %v7494
  %v7579 = vpack.c.b16 %v7499, %v7495
  %v7580 = vpack.c.b16 %v7500, %v7496
  %v7581 = vpack.c.b16 %v7501, %v7497
  %v7582 = vpack.c.b16 %v7506, %v7502
  %v7583 = vpack.c.b16 %v7507, %v7503
  %v7584 = vpack.c.b16 %v7508, %v7504
  %v7585 = vpack.c.b16 %v7509, %v7505
  %v7586 = vpack.c.b16 %v7514, %v7510
  %v7587 = vpack.c.b16 %v7515, %v7511
  %v7588 = vpack.c.b16 %v7516, %v7512
  %v7589 = vpack.c.b16 %v7517, %v7513
  %v7590 = vpack.c.b16 %v7522, %v7518
  %v7591 = vpack.c.b16 %v7523, %v7519
  %v7592 = vpack.c.b16 %v7524, %v7520
  %v7593 = vpack.c.b16 %v7525, %v7521
  %v7594 = vpack.c.b16 %v7530, %v7526
  %v7595 = vpack.c.b16 %v7531, %v7527
  %v7596 = vpack.c.b16 %v7532, %v7528
  %v7597 = vpack.c.b16 %v7533, %v7529
  %7662 = vmatprep.subr.bf16.mxu0 %v7535
  %7663 = vmatpush1.bf16.msra.mxu0 %v7534
  %7664 = vmatprep.subr.bf16.mxu0 %v7539
  %7665 = vmatpush1.bf16.msra.mxu0 %v7538
  %7666 = vmatprep.subr.bf16.mxu0 %v7543
  %7667 = vmatpush1.bf16.msra.mxu0 %v7542
  %7668 = vmatprep.subr.bf16.mxu0 %v7547
  %7669 = vmatpush1.bf16.msra.mxu0 %v7546
  %7670 = vmatprep.subr.bf16.mxu0 %v7551
  %7671 = vmatpush1.bf16.msra.mxu0 %v7550
  %7672 = vmatprep.subr.bf16.mxu0 %v7555
  %7673 = vmatpush1.bf16.msra.mxu0 %v7554
  %7674 = vmatprep.subr.bf16.mxu0 %v7559
  %7675 = vmatpush1.bf16.msra.mxu0 %v7558
  %7676 = vmatprep.subr.bf16.mxu0 %v7563
  %7677 = vmatpush1.bf16.msra.mxu0 %v7562
  %7678 = vmatprep.subr.bf16.mxu0 %v7567
  %7679 = vmatpush1.bf16.msra.mxu0 %v7566
  %7680 = vmatprep.subr.bf16.mxu0 %v7571
  %7681 = vmatpush1.bf16.msra.mxu0 %v7570
  %7682 = vmatprep.subr.bf16.mxu0 %v7575
  %7683 = vmatpush1.bf16.msra.mxu0 %v7574
  %7684 = vmatprep.subr.bf16.mxu0 %v7579
  %7685 = vmatpush1.bf16.msra.mxu0 %v7578
  %7686 = vmatprep.subr.bf16.mxu0 %v7583
  %7687 = vmatpush1.bf16.msra.mxu0 %v7582
  %7688 = vmatprep.subr.bf16.mxu0 %v7587
  %7689 = vmatpush1.bf16.msra.mxu0 %v7586
  %7690 = vmatprep.subr.bf16.mxu0 %v7591
  %7691 = vmatpush1.bf16.msra.mxu0 %v7590
  %7692 = vmatprep.subr.bf16.mxu0 %v7595
  %7693 = vmatpush1.bf16.msra.mxu0 %v7594
  %7694 = vmatprep.mubr.bf16.mxu0 %v6134
  %7695 = vmatmul.mubr.bf16.gmra.mrb[0].mxu0 %v6133
  %v7696 = vpop.f32.mrb[0].mxu0
  %v7697 = vadd.f32 0.0, %v7696
  %v7698 = vpop.f32.mrb[0].mxu0
  %v7699 = vadd.f32 0.0, %v7698
  %v7700 = vpop.f32.mrb[0].mxu0
  %v7701 = vadd.f32 0.0, %v7700
  %v7702 = vpop.f32.mrb[0].mxu0
  %v7703 = vadd.f32 0.0, %v7702
  %7704 = vdwg.mxu0
  %7705 = vmatprep.subr.bf16.mxu0 %v7537
  %7706 = vmatpush1.bf16.msra.mxu0 %v7536
  %7707 = vmatprep.subr.bf16.mxu0 %v7541
  %7708 = vmatpush1.bf16.msra.mxu0 %v7540
  %7709 = vmatprep.subr.bf16.mxu0 %v7545
  %7710 = vmatpush1.bf16.msra.mxu0 %v7544
  %7711 = vmatprep.subr.bf16.mxu0 %v7549
  %7712 = vmatpush1.bf16.msra.mxu0 %v7548
  %7713 = vmatprep.subr.bf16.mxu0 %v7553
  %7714 = vmatpush1.bf16.msra.mxu0 %v7552
  %7715 = vmatprep.subr.bf16.mxu0 %v7557
  %7716 = vmatpush1.bf16.msra.mxu0 %v7556
  %7717 = vmatprep.subr.bf16.mxu0 %v7561
  %7718 = vmatpush1.bf16.msra.mxu0 %v7560
  %7719 = vmatprep.subr.bf16.mxu0 %v7565
  %7720 = vmatpush1.bf16.msra.mxu0 %v7564
  %7721 = vmatprep.subr.bf16.mxu0 %v7569
  %7722 = vmatpush1.bf16.msra.mxu0 %v7568
  %7723 = vmatprep.subr.bf16.mxu0 %v7573
  %7724 = vmatpush1.bf16.msra.mxu0 %v7572
  %7725 = vmatprep.subr.bf16.mxu0 %v7577
  %7726 = vmatpush1.bf16.msra.mxu0 %v7576
  %7727 = vmatprep.subr.bf16.mxu0 %v7581
  %7728 = vmatpush1.bf16.msra.mxu0 %v7580
  %7729 = vmatprep.subr.bf16.mxu0 %v7585
  %7730 = vmatpush1.bf16.msra.mxu0 %v7584
  %7731 = vmatprep.subr.bf16.mxu0 %v7589
  %7732 = vmatpush1.bf16.msra.mxu0 %v7588
  %7733 = vmatprep.subr.bf16.mxu0 %v7593
  %7734 = vmatpush1.bf16.msra.mxu0 %v7592
  %7735 = vmatprep.subr.bf16.mxu0 %v7597
  %7736 = vmatpush1.bf16.msra.mxu0 %v7596
  %7737 = vmatprep.mubr.bf16.mxu0 %v6134
  %7738 = vmatmul.mubr.bf16.gmra.mrb[0].mxu0 %v6133
  %v7739 = vpop.f32.mrb[0].mxu0
  %v7740 = vadd.f32 0.0, %v7739
  %v7741 = vpop.f32.mrb[0].mxu0
  %v7742 = vadd.f32 0.0, %v7741
  %v7743 = vpop.f32.mrb[0].mxu0
  %v7744 = vadd.f32 0.0, %v7743
  %v7745 = vpop.f32.mrb[0].mxu0
  %v7746 = vadd.f32 0.0, %v7745
  %7747 = vdwg.mxu0
  %s7748 = scalar_lea.vmem %s5, 3072
  %v7749 = vld [vmem:[%s7748] sm:$0xff]
  %v7750 = vld [vmem:[%s7748 + $0x8] sm:$0xff]
  %v7751 = vld [vmem:[%s7748 + $0x10] sm:$0xff]
  %v7752 = vld [vmem:[%s7748 + $0x18] sm:$0xff]
  %v7753 = vld [vmem:[%s7748 + $0x20] sm:$0xff]
  %v7754 = vld [vmem:[%s7748 + $0x28] sm:$0xff]
  %v7755 = vld [vmem:[%s7748 + $0x30] sm:$0xff]
  %v7756 = vld [vmem:[%s7748 + $0x38] sm:$0xff]
  %v7757 = vld [vmem:[%s7748 + $0x40] sm:$0xff]
  %v7758 = vld [vmem:[%s7748 + $0x48] sm:$0xff]
  %v7759 = vld [vmem:[%s7748 + $0x50] sm:$0xff]
  %v7760 = vld [vmem:[%s7748 + $0x58] sm:$0xff]
  %v7761 = vld [vmem:[%s7748 + $0x60] sm:$0xff]
  %v7762 = vld [vmem:[%s7748 + $0x68] sm:$0xff]
  %v7763 = vld [vmem:[%s7748 + $0x70] sm:$0xff]
  %v7764 = vld [vmem:[%s7748 + $0x78] sm:$0xff]
  %v7765 = vld [vmem:[%s7748 + $0x80] sm:$0xff]
  %v7766 = vld [vmem:[%s7748 + $0x88] sm:$0xff]
  %v7767 = vld [vmem:[%s7748 + $0x90] sm:$0xff]
  %v7768 = vld [vmem:[%s7748 + $0x98] sm:$0xff]
  %v7769 = vld [vmem:[%s7748 + $0xa0] sm:$0xff]
  %v7770 = vld [vmem:[%s7748 + $0xa8] sm:$0xff]
  %v7771 = vld [vmem:[%s7748 + $0xb0] sm:$0xff]
  %v7772 = vld [vmem:[%s7748 + $0xb8] sm:$0xff]
  %v7773 = vld [vmem:[%s7748 + $0xc0] sm:$0xff]
  %v7774 = vld [vmem:[%s7748 + $0xc8] sm:$0xff]
  %v7775 = vld [vmem:[%s7748 + $0xd0] sm:$0xff]
  %v7776 = vld [vmem:[%s7748 + $0xd8] sm:$0xff]
  %v7777 = vld [vmem:[%s7748 + $0xe0] sm:$0xff]
  %v7778 = vld [vmem:[%s7748 + $0xe8] sm:$0xff]
  %v7779 = vld [vmem:[%s7748 + $0xf0] sm:$0xff]
  %v7780 = vld [vmem:[%s7748 + $0xf8] sm:$0xff]
  %v7781 = vld [vmem:[%s7748 + $0x100] sm:$0xff]
  %v7782 = vld [vmem:[%s7748 + $0x108] sm:$0xff]
  %v7783 = vld [vmem:[%s7748 + $0x110] sm:$0xff]
  %v7784 = vld [vmem:[%s7748 + $0x118] sm:$0xff]
  %v7785 = vld [vmem:[%s7748 + $0x120] sm:$0xff]
  %v7786 = vld [vmem:[%s7748 + $0x128] sm:$0xff]
  %v7787 = vld [vmem:[%s7748 + $0x130] sm:$0xff]
  %v7788 = vld [vmem:[%s7748 + $0x138] sm:$0xff]
  %v7789 = vld [vmem:[%s7748 + $0x140] sm:$0xff]
  %v7790 = vld [vmem:[%s7748 + $0x148] sm:$0xff]
  %v7791 = vld [vmem:[%s7748 + $0x150] sm:$0xff]
  %v7792 = vld [vmem:[%s7748 + $0x158] sm:$0xff]
  %v7793 = vld [vmem:[%s7748 + $0x160] sm:$0xff]
  %v7794 = vld [vmem:[%s7748 + $0x168] sm:$0xff]
  %v7795 = vld [vmem:[%s7748 + $0x170] sm:$0xff]
  %v7796 = vld [vmem:[%s7748 + $0x178] sm:$0xff]
  %v7797 = vld [vmem:[%s7748 + $0x180] sm:$0xff]
  %v7798 = vld [vmem:[%s7748 + $0x188] sm:$0xff]
  %v7799 = vld [vmem:[%s7748 + $0x190] sm:$0xff]
  %v7800 = vld [vmem:[%s7748 + $0x198] sm:$0xff]
  %v7801 = vld [vmem:[%s7748 + $0x1a0] sm:$0xff]
  %v7802 = vld [vmem:[%s7748 + $0x1a8] sm:$0xff]
  %v7803 = vld [vmem:[%s7748 + $0x1b0] sm:$0xff]
  %v7804 = vld [vmem:[%s7748 + $0x1b8] sm:$0xff]
  %v7805 = vld [vmem:[%s7748 + $0x1c0] sm:$0xff]
  %v7806 = vld [vmem:[%s7748 + $0x1c8] sm:$0xff]
  %v7807 = vld [vmem:[%s7748 + $0x1d0] sm:$0xff]
  %v7808 = vld [vmem:[%s7748 + $0x1d8] sm:$0xff]
  %v7809 = vld [vmem:[%s7748 + $0x1e0] sm:$0xff]
  %v7810 = vld [vmem:[%s7748 + $0x1e8] sm:$0xff]
  %v7811 = vld [vmem:[%s7748 + $0x1f0] sm:$0xff]
  %v7812 = vld [vmem:[%s7748 + $0x1f8] sm:$0xff]
  %s7813 = scalar_lea.vmem %s5, 3584
  %v7814 = vld [vmem:[%s7813] sm:$0xff]
  %v7815 = vld [vmem:[%s7813 + $0x8] sm:$0xff]
  %v7816 = vld [vmem:[%s7813 + $0x10] sm:$0xff]
  %v7817 = vld [vmem:[%s7813 + $0x18] sm:$0xff]
  %v7818 = vld [vmem:[%s7813 + $0x20] sm:$0xff]
  %v7819 = vld [vmem:[%s7813 + $0x28] sm:$0xff]
  %v7820 = vld [vmem:[%s7813 + $0x30] sm:$0xff]
  %v7821 = vld [vmem:[%s7813 + $0x38] sm:$0xff]
  %v7822 = vld [vmem:[%s7813 + $0x40] sm:$0xff]
  %v7823 = vld [vmem:[%s7813 + $0x48] sm:$0xff]
  %v7824 = vld [vmem:[%s7813 + $0x50] sm:$0xff]
  %v7825 = vld [vmem:[%s7813 + $0x58] sm:$0xff]
  %v7826 = vld [vmem:[%s7813 + $0x60] sm:$0xff]
  %v7827 = vld [vmem:[%s7813 + $0x68] sm:$0xff]
  %v7828 = vld [vmem:[%s7813 + $0x70] sm:$0xff]
  %v7829 = vld [vmem:[%s7813 + $0x78] sm:$0xff]
  %v7830 = vld [vmem:[%s7813 + $0x80] sm:$0xff]
  %v7831 = vld [vmem:[%s7813 + $0x88] sm:$0xff]
  %v7832 = vld [vmem:[%s7813 + $0x90] sm:$0xff]
  %v7833 = vld [vmem:[%s7813 + $0x98] sm:$0xff]
  %v7834 = vld [vmem:[%s7813 + $0xa0] sm:$0xff]
  %v7835 = vld [vmem:[%s7813 + $0xa8] sm:$0xff]
  %v7836 = vld [vmem:[%s7813 + $0xb0] sm:$0xff]
  %v7837 = vld [vmem:[%s7813 + $0xb8] sm:$0xff]
  %v7838 = vld [vmem:[%s7813 + $0xc0] sm:$0xff]
  %v7839 = vld [vmem:[%s7813 + $0xc8] sm:$0xff]
  %v7840 = vld [vmem:[%s7813 + $0xd0] sm:$0xff]
  %v7841 = vld [vmem:[%s7813 + $0xd8] sm:$0xff]
  %v7842 = vld [vmem:[%s7813 + $0xe0] sm:$0xff]
  %v7843 = vld [vmem:[%s7813 + $0xe8] sm:$0xff]
  %v7844 = vld [vmem:[%s7813 + $0xf0] sm:$0xff]
  %v7845 = vld [vmem:[%s7813 + $0xf8] sm:$0xff]
  %v7846 = vld [vmem:[%s7813 + $0x100] sm:$0xff]
  %v7847 = vld [vmem:[%s7813 + $0x108] sm:$0xff]
  %v7848 = vld [vmem:[%s7813 + $0x110] sm:$0xff]
  %v7849 = vld [vmem:[%s7813 + $0x118] sm:$0xff]
  %v7850 = vld [vmem:[%s7813 + $0x120] sm:$0xff]
  %v7851 = vld [vmem:[%s7813 + $0x128] sm:$0xff]
  %v7852 = vld [vmem:[%s7813 + $0x130] sm:$0xff]
  %v7853 = vld [vmem:[%s7813 + $0x138] sm:$0xff]
  %v7854 = vld [vmem:[%s7813 + $0x140] sm:$0xff]
  %v7855 = vld [vmem:[%s7813 + $0x148] sm:$0xff]
  %v7856 = vld [vmem:[%s7813 + $0x150] sm:$0xff]
  %v7857 = vld [vmem:[%s7813 + $0x158] sm:$0xff]
  %v7858 = vld [vmem:[%s7813 + $0x160] sm:$0xff]
  %v7859 = vld [vmem:[%s7813 + $0x168] sm:$0xff]
  %v7860 = vld [vmem:[%s7813 + $0x170] sm:$0xff]
  %v7861 = vld [vmem:[%s7813 + $0x178] sm:$0xff]
  %v7862 = vld [vmem:[%s7813 + $0x180] sm:$0xff]
  %v7863 = vld [vmem:[%s7813 + $0x188] sm:$0xff]
  %v7864 = vld [vmem:[%s7813 + $0x190] sm:$0xff]
  %v7865 = vld [vmem:[%s7813 + $0x198] sm:$0xff]
  %v7866 = vld [vmem:[%s7813 + $0x1a0] sm:$0xff]
  %v7867 = vld [vmem:[%s7813 + $0x1a8] sm:$0xff]
  %v7868 = vld [vmem:[%s7813 + $0x1b0] sm:$0xff]
  %v7869 = vld [vmem:[%s7813 + $0x1b8] sm:$0xff]
  %v7870 = vld [vmem:[%s7813 + $0x1c0] sm:$0xff]
  %v7871 = vld [vmem:[%s7813 + $0x1c8] sm:$0xff]
  %v7872 = vld [vmem:[%s7813 + $0x1d0] sm:$0xff]
  %v7873 = vld [vmem:[%s7813 + $0x1d8] sm:$0xff]
  %v7874 = vld [vmem:[%s7813 + $0x1e0] sm:$0xff]
  %v7875 = vld [vmem:[%s7813 + $0x1e8] sm:$0xff]
  %v7876 = vld [vmem:[%s7813 + $0x1f0] sm:$0xff]
  %v7877 = vld [vmem:[%s7813 + $0x1f8] sm:$0xff]
  %v7942 = vunpack.c.l.b16 %v7814
  %v7943 = vunpack.c.h.b16 %v7814
  %v7944 = vunpack.c.l.b16 %v7815
  %v7945 = vunpack.c.h.b16 %v7815
  %v7946 = vunpack.c.l.b16 %v7816
  %v7947 = vunpack.c.h.b16 %v7816
  %v7948 = vunpack.c.l.b16 %v7817
  %v7949 = vunpack.c.h.b16 %v7817
  %v7950 = vunpack.c.l.b16 %v7818
  %v7951 = vunpack.c.h.b16 %v7818
  %v7952 = vunpack.c.l.b16 %v7819
  %v7953 = vunpack.c.h.b16 %v7819
  %v7954 = vunpack.c.l.b16 %v7820
  %v7955 = vunpack.c.h.b16 %v7820
  %v7956 = vunpack.c.l.b16 %v7821
  %v7957 = vunpack.c.h.b16 %v7821
  %v7958 = vunpack.c.l.b16 %v7822
  %v7959 = vunpack.c.h.b16 %v7822
  %v7960 = vunpack.c.l.b16 %v7823
  %v7961 = vunpack.c.h.b16 %v7823
  %v7962 = vunpack.c.l.b16 %v7824
  %v7963 = vunpack.c.h.b16 %v7824
  %v7964 = vunpack.c.l.b16 %v7825
  %v7965 = vunpack.c.h.b16 %v7825
  %v7966 = vunpack.c.l.b16 %v7826
  %v7967 = vunpack.c.h.b16 %v7826
  %v7968 = vunpack.c.l.b16 %v7827
  %v7969 = vunpack.c.h.b16 %v7827
  %v7970 = vunpack.c.l.b16 %v7828
  %v7971 = vunpack.c.h.b16 %v7828
  %v7972 = vunpack.c.l.b16 %v7829
  %v7973 = vunpack.c.h.b16 %v7829
  %v7974 = vunpack.c.l.b16 %v7830
  %v7975 = vunpack.c.h.b16 %v7830
  %v7976 = vunpack.c.l.b16 %v7831
  %v7977 = vunpack.c.h.b16 %v7831
  %v7978 = vunpack.c.l.b16 %v7832
  %v7979 = vunpack.c.h.b16 %v7832
  %v7980 = vunpack.c.l.b16 %v7833
  %v7981 = vunpack.c.h.b16 %v7833
  %v7982 = vunpack.c.l.b16 %v7834
  %v7983 = vunpack.c.h.b16 %v7834
  %v7984 = vunpack.c.l.b16 %v7835
  %v7985 = vunpack.c.h.b16 %v7835
  %v7986 = vunpack.c.l.b16 %v7836
  %v7987 = vunpack.c.h.b16 %v7836
  %v7988 = vunpack.c.l.b16 %v7837
  %v7989 = vunpack.c.h.b16 %v7837
  %v7990 = vunpack.c.l.b16 %v7838
  %v7991 = vunpack.c.h.b16 %v7838
  %v7992 = vunpack.c.l.b16 %v7839
  %v7993 = vunpack.c.h.b16 %v7839
  %v7994 = vunpack.c.l.b16 %v7840
  %v7995 = vunpack.c.h.b16 %v7840
  %v7996 = vunpack.c.l.b16 %v7841
  %v7997 = vunpack.c.h.b16 %v7841
  %v7998 = vunpack.c.l.b16 %v7842
  %v7999 = vunpack.c.h.b16 %v7842
  %v8000 = vunpack.c.l.b16 %v7843
  %v8001 = vunpack.c.h.b16 %v7843
  %v8002 = vunpack.c.l.b16 %v7844
  %v8003 = vunpack.c.h.b16 %v7844
  %v8004 = vunpack.c.l.b16 %v7845
  %v8005 = vunpack.c.h.b16 %v7845
  %v8006 = vunpack.c.l.b16 %v7846
  %v8007 = vunpack.c.h.b16 %v7846
  %v8008 = vunpack.c.l.b16 %v7847
  %v8009 = vunpack.c.h.b16 %v7847
  %v8010 = vunpack.c.l.b16 %v7848
  %v8011 = vunpack.c.h.b16 %v7848
  %v8012 = vunpack.c.l.b16 %v7849
  %v8013 = vunpack.c.h.b16 %v7849
  %v8014 = vunpack.c.l.b16 %v7850
  %v8015 = vunpack.c.h.b16 %v7850
  %v8016 = vunpack.c.l.b16 %v7851
  %v8017 = vunpack.c.h.b16 %v7851
  %v8018 = vunpack.c.l.b16 %v7852
  %v8019 = vunpack.c.h.b16 %v7852
  %v8020 = vunpack.c.l.b16 %v7853
  %v8021 = vunpack.c.h.b16 %v7853
  %v8022 = vunpack.c.l.b16 %v7854
  %v8023 = vunpack.c.h.b16 %v7854
  %v8024 = vunpack.c.l.b16 %v7855
  %v8025 = vunpack.c.h.b16 %v7855
  %v8026 = vunpack.c.l.b16 %v7856
  %v8027 = vunpack.c.h.b16 %v7856
  %v8028 = vunpack.c.l.b16 %v7857
  %v8029 = vunpack.c.h.b16 %v7857
  %v8030 = vunpack.c.l.b16 %v7858
  %v8031 = vunpack.c.h.b16 %v7858
  %v8032 = vunpack.c.l.b16 %v7859
  %v8033 = vunpack.c.h.b16 %v7859
  %v8034 = vunpack.c.l.b16 %v7860
  %v8035 = vunpack.c.h.b16 %v7860
  %v8036 = vunpack.c.l.b16 %v7861
  %v8037 = vunpack.c.h.b16 %v7861
  %v8038 = vunpack.c.l.b16 %v7862
  %v8039 = vunpack.c.h.b16 %v7862
  %v8040 = vunpack.c.l.b16 %v7863
  %v8041 = vunpack.c.h.b16 %v7863
  %v8042 = vunpack.c.l.b16 %v7864
  %v8043 = vunpack.c.h.b16 %v7864
  %v8044 = vunpack.c.l.b16 %v7865
  %v8045 = vunpack.c.h.b16 %v7865
  %v8046 = vunpack.c.l.b16 %v7866
  %v8047 = vunpack.c.h.b16 %v7866
  %v8048 = vunpack.c.l.b16 %v7867
  %v8049 = vunpack.c.h.b16 %v7867
  %v8050 = vunpack.c.l.b16 %v7868
  %v8051 = vunpack.c.h.b16 %v7868
  %v8052 = vunpack.c.l.b16 %v7869
  %v8053 = vunpack.c.h.b16 %v7869
  %v8054 = vunpack.c.l.b16 %v7870
  %v8055 = vunpack.c.h.b16 %v7870
  %v8056 = vunpack.c.l.b16 %v7871
  %v8057 = vunpack.c.h.b16 %v7871
  %v8058 = vunpack.c.l.b16 %v7872
  %v8059 = vunpack.c.h.b16 %v7872
  %v8060 = vunpack.c.l.b16 %v7873
  %v8061 = vunpack.c.h.b16 %v7873
  %v8062 = vunpack.c.l.b16 %v7874
  %v8063 = vunpack.c.h.b16 %v7874
  %v8064 = vunpack.c.l.b16 %v7875
  %v8065 = vunpack.c.h.b16 %v7875
  %v8066 = vunpack.c.l.b16 %v7876
  %v8067 = vunpack.c.h.b16 %v7876
  %v8068 = vunpack.c.l.b16 %v7877
  %v8069 = vunpack.c.h.b16 %v7877
  %v8070 = vpack.c.b16 %v7946, %v7942
  %v8071 = vpack.c.b16 %v7947, %v7943
  %v8072 = vpack.c.b16 %v7948, %v7944
  %v8073 = vpack.c.b16 %v7949, %v7945
  %v8074 = vpack.c.b16 %v7954, %v7950
  %v8075 = vpack.c.b16 %v7955, %v7951
  %v8076 = vpack.c.b16 %v7956, %v7952
  %v8077 = vpack.c.b16 %v7957, %v7953
  %v8078 = vpack.c.b16 %v7962, %v7958
  %v8079 = vpack.c.b16 %v7963, %v7959
  %v8080 = vpack.c.b16 %v7964, %v7960
  %v8081 = vpack.c.b16 %v7965, %v7961
  %v8082 = vpack.c.b16 %v7970, %v7966
  %v8083 = vpack.c.b16 %v7971, %v7967
  %v8084 = vpack.c.b16 %v7972, %v7968
  %v8085 = vpack.c.b16 %v7973, %v7969
  %v8086 = vpack.c.b16 %v7978, %v7974
  %v8087 = vpack.c.b16 %v7979, %v7975
  %v8088 = vpack.c.b16 %v7980, %v7976
  %v8089 = vpack.c.b16 %v7981, %v7977
  %v8090 = vpack.c.b16 %v7986, %v7982
  %v8091 = vpack.c.b16 %v7987, %v7983
  %v8092 = vpack.c.b16 %v7988, %v7984
  %v8093 = vpack.c.b16 %v7989, %v7985
  %v8094 = vpack.c.b16 %v7994, %v7990
  %v8095 = vpack.c.b16 %v7995, %v7991
  %v8096 = vpack.c.b16 %v7996, %v7992
  %v8097 = vpack.c.b16 %v7997, %v7993
  %v8098 = vpack.c.b16 %v8002, %v7998
  %v8099 = vpack.c.b16 %v8003, %v7999
  %v8100 = vpack.c.b16 %v8004, %v8000
  %v8101 = vpack.c.b16 %v8005, %v8001
  %v8102 = vpack.c.b16 %v8010, %v8006
  %v8103 = vpack.c.b16 %v8011, %v8007
  %v8104 = vpack.c.b16 %v8012, %v8008
  %v8105 = vpack.c.b16 %v8013, %v8009
  %v8106 = vpack.c.b16 %v8018, %v8014
  %v8107 = vpack.c.b16 %v8019, %v8015
  %v8108 = vpack.c.b16 %v8020, %v8016
  %v8109 = vpack.c.b16 %v8021, %v8017
  %v8110 = vpack.c.b16 %v8026, %v8022
  %v8111 = vpack.c.b16 %v8027, %v8023
  %v8112 = vpack.c.b16 %v8028, %v8024
  %v8113 = vpack.c.b16 %v8029, %v8025
  %v8114 = vpack.c.b16 %v8034, %v8030
  %v8115 = vpack.c.b16 %v8035, %v8031
  %v8116 = vpack.c.b16 %v8036, %v8032
  %v8117 = vpack.c.b16 %v8037, %v8033
  %v8118 = vpack.c.b16 %v8042, %v8038
  %v8119 = vpack.c.b16 %v8043, %v8039
  %v8120 = vpack.c.b16 %v8044, %v8040
  %v8121 = vpack.c.b16 %v8045, %v8041
  %v8122 = vpack.c.b16 %v8050, %v8046
  %v8123 = vpack.c.b16 %v8051, %v8047
  %v8124 = vpack.c.b16 %v8052, %v8048
  %v8125 = vpack.c.b16 %v8053, %v8049
  %v8126 = vpack.c.b16 %v8058, %v8054
  %v8127 = vpack.c.b16 %v8059, %v8055
  %v8128 = vpack.c.b16 %v8060, %v8056
  %v8129 = vpack.c.b16 %v8061, %v8057
  %v8130 = vpack.c.b16 %v8066, %v8062
  %v8131 = vpack.c.b16 %v8067, %v8063
  %v8132 = vpack.c.b16 %v8068, %v8064
  %v8133 = vpack.c.b16 %v8069, %v8065
  %8198 = vmatprep.subr.bf16.mxu0 %v8071
  %8199 = vmatpush1.bf16.msra.mxu0 %v8070
  %8200 = vmatprep.subr.bf16.mxu0 %v8075
  %8201 = vmatpush1.bf16.msra.mxu0 %v8074
  %8202 = vmatprep.subr.bf16.mxu0 %v8079
  %8203 = vmatpush1.bf16.msra.mxu0 %v8078
  %8204 = vmatprep.subr.bf16.mxu0 %v8083
  %8205 = vmatpush1.bf16.msra.mxu0 %v8082
  %8206 = vmatprep.subr.bf16.mxu0 %v8087
  %8207 = vmatpush1.bf16.msra.mxu0 %v8086
  %8208 = vmatprep.subr.bf16.mxu0 %v8091
  %8209 = vmatpush1.bf16.msra.mxu0 %v8090
  %8210 = vmatprep.subr.bf16.mxu0 %v8095
  %8211 = vmatpush1.bf16.msra.mxu0 %v8094
  %8212 = vmatprep.subr.bf16.mxu0 %v8099
  %8213 = vmatpush1.bf16.msra.mxu0 %v8098
  %8214 = vmatprep.subr.bf16.mxu0 %v8103
  %8215 = vmatpush1.bf16.msra.mxu0 %v8102
  %8216 = vmatprep.subr.bf16.mxu0 %v8107
  %8217 = vmatpush1.bf16.msra.mxu0 %v8106
  %8218 = vmatprep.subr.bf16.mxu0 %v8111
  %8219 = vmatpush1.bf16.msra.mxu0 %v8110
  %8220 = vmatprep.subr.bf16.mxu0 %v8115
  %8221 = vmatpush1.bf16.msra.mxu0 %v8114
  %8222 = vmatprep.subr.bf16.mxu0 %v8119
  %8223 = vmatpush1.bf16.msra.mxu0 %v8118
  %8224 = vmatprep.subr.bf16.mxu0 %v8123
  %8225 = vmatpush1.bf16.msra.mxu0 %v8122
  %8226 = vmatprep.subr.bf16.mxu0 %v8127
  %8227 = vmatpush1.bf16.msra.mxu0 %v8126
  %8228 = vmatprep.subr.bf16.mxu0 %v8131
  %8229 = vmatpush1.bf16.msra.mxu0 %v8130
  %8230 = vmatprep.mubr.bf16.mxu0 %v6138
  %8231 = vmatmul.mubr.bf16.gmra.mrb[0].mxu0 %v6137
  %v8232 = vpop.f32.mrb[0].mxu0
  %v8233 = vadd.f32 0.0, %v8232
  %v8234 = vpop.f32.mrb[0].mxu0
  %v8235 = vadd.f32 0.0, %v8234
  %v8236 = vpop.f32.mrb[0].mxu0
  %v8237 = vadd.f32 0.0, %v8236
  %v8238 = vpop.f32.mrb[0].mxu0
  %v8239 = vadd.f32 0.0, %v8238
  %8240 = vdwg.mxu0
  %8241 = vmatprep.subr.bf16.mxu0 %v8073
  %8242 = vmatpush1.bf16.msra.mxu0 %v8072
  %8243 = vmatprep.subr.bf16.mxu0 %v8077
  %8244 = vmatpush1.bf16.msra.mxu0 %v8076
  %8245 = vmatprep.subr.bf16.mxu0 %v8081
  %8246 = vmatpush1.bf16.msra.mxu0 %v8080
  %8247 = vmatprep.subr.bf16.mxu0 %v8085
  %8248 = vmatpush1.bf16.msra.mxu0 %v8084
  %8249 = vmatprep.subr.bf16.mxu0 %v8089
  %8250 = vmatpush1.bf16.msra.mxu0 %v8088
  %8251 = vmatprep.subr.bf16.mxu0 %v8093
  %8252 = vmatpush1.bf16.msra.mxu0 %v8092
  %8253 = vmatprep.subr.bf16.mxu0 %v8097
  %8254 = vmatpush1.bf16.msra.mxu0 %v8096
  %8255 = vmatprep.subr.bf16.mxu0 %v8101
  %8256 = vmatpush1.bf16.msra.mxu0 %v8100
  %8257 = vmatprep.subr.bf16.mxu0 %v8105
  %8258 = vmatpush1.bf16.msra.mxu0 %v8104
  %8259 = vmatprep.subr.bf16.mxu0 %v8109
  %8260 = vmatpush1.bf16.msra.mxu0 %v8108
  %8261 = vmatprep.subr.bf16.mxu0 %v8113
  %8262 = vmatpush1.bf16.msra.mxu0 %v8112
  %8263 = vmatprep.subr.bf16.mxu0 %v8117
  %8264 = vmatpush1.bf16.msra.mxu0 %v8116
  %8265 = vmatprep.subr.bf16.mxu0 %v8121
  %8266 = vmatpush1.bf16.msra.mxu0 %v8120
  %8267 = vmatprep.subr.bf16.mxu0 %v8125
  %8268 = vmatpush1.bf16.msra.mxu0 %v8124
  %8269 = vmatprep.subr.bf16.mxu0 %v8129
  %8270 = vmatpush1.bf16.msra.mxu0 %v8128
  %8271 = vmatprep.subr.bf16.mxu0 %v8133
  %8272 = vmatpush1.bf16.msra.mxu0 %v8132
  %8273 = vmatprep.mubr.bf16.mxu0 %v6138
  %8274 = vmatmul.mubr.bf16.gmra.mrb[0].mxu0 %v6137
  %v8275 = vpop.f32.mrb[0].mxu0
  %v8276 = vadd.f32 0.0, %v8275
  %v8277 = vpop.f32.mrb[0].mxu0
  %v8278 = vadd.f32 0.0, %v8277
  %v8279 = vpop.f32.mrb[0].mxu0
  %v8280 = vadd.f32 0.0, %v8279
  %v8281 = vpop.f32.mrb[0].mxu0
  %v8282 = vadd.f32 0.0, %v8281
  %8283 = vdwg.mxu0
  %s8284 = scalar_lea.vmem %s5, 4096
  %v8285 = vld [vmem:[%s8284] sm:$0xff]
  %v8286 = vld [vmem:[%s8284 + $0x8] sm:$0xff]
  %v8287 = vld [vmem:[%s8284 + $0x10] sm:$0xff]
  %v8288 = vld [vmem:[%s8284 + $0x18] sm:$0xff]
  %v8289 = vld [vmem:[%s8284 + $0x20] sm:$0xff]
  %v8290 = vld [vmem:[%s8284 + $0x28] sm:$0xff]
  %v8291 = vld [vmem:[%s8284 + $0x30] sm:$0xff]
  %v8292 = vld [vmem:[%s8284 + $0x38] sm:$0xff]
  %v8293 = vld [vmem:[%s8284 + $0x40] sm:$0xff]
  %v8294 = vld [vmem:[%s8284 + $0x48] sm:$0xff]
  %v8295 = vld [vmem:[%s8284 + $0x50] sm:$0xff]
  %v8296 = vld [vmem:[%s8284 + $0x58] sm:$0xff]
  %v8297 = vld [vmem:[%s8284 + $0x60] sm:$0xff]
  %v8298 = vld [vmem:[%s8284 + $0x68] sm:$0xff]
  %v8299 = vld [vmem:[%s8284 + $0x70] sm:$0xff]
  %v8300 = vld [vmem:[%s8284 + $0x78] sm:$0xff]
  %v8301 = vld [vmem:[%s8284 + $0x80] sm:$0xff]
  %v8302 = vld [vmem:[%s8284 + $0x88] sm:$0xff]
  %v8303 = vld [vmem:[%s8284 + $0x90] sm:$0xff]
  %v8304 = vld [vmem:[%s8284 + $0x98] sm:$0xff]
  %v8305 = vld [vmem:[%s8284 + $0xa0] sm:$0xff]
  %v8306 = vld [vmem:[%s8284 + $0xa8] sm:$0xff]
  %v8307 = vld [vmem:[%s8284 + $0xb0] sm:$0xff]
  %v8308 = vld [vmem:[%s8284 + $0xb8] sm:$0xff]
  %v8309 = vld [vmem:[%s8284 + $0xc0] sm:$0xff]
  %v8310 = vld [vmem:[%s8284 + $0xc8] sm:$0xff]
  %v8311 = vld [vmem:[%s8284 + $0xd0] sm:$0xff]
  %v8312 = vld [vmem:[%s8284 + $0xd8] sm:$0xff]
  %v8313 = vld [vmem:[%s8284 + $0xe0] sm:$0xff]
  %v8314 = vld [vmem:[%s8284 + $0xe8] sm:$0xff]
  %v8315 = vld [vmem:[%s8284 + $0xf0] sm:$0xff]
  %v8316 = vld [vmem:[%s8284 + $0xf8] sm:$0xff]
  %v8317 = vld [vmem:[%s8284 + $0x100] sm:$0xff]
  %v8318 = vld [vmem:[%s8284 + $0x108] sm:$0xff]
  %v8319 = vld [vmem:[%s8284 + $0x110] sm:$0xff]
  %v8320 = vld [vmem:[%s8284 + $0x118] sm:$0xff]
  %v8321 = vld [vmem:[%s8284 + $0x120] sm:$0xff]
  %v8322 = vld [vmem:[%s8284 + $0x128] sm:$0xff]
  %v8323 = vld [vmem:[%s8284 + $0x130] sm:$0xff]
  %v8324 = vld [vmem:[%s8284 + $0x138] sm:$0xff]
  %v8325 = vld [vmem:[%s8284 + $0x140] sm:$0xff]
  %v8326 = vld [vmem:[%s8284 + $0x148] sm:$0xff]
  %v8327 = vld [vmem:[%s8284 + $0x150] sm:$0xff]
  %v8328 = vld [vmem:[%s8284 + $0x158] sm:$0xff]
  %v8329 = vld [vmem:[%s8284 + $0x160] sm:$0xff]
  %v8330 = vld [vmem:[%s8284 + $0x168] sm:$0xff]
  %v8331 = vld [vmem:[%s8284 + $0x170] sm:$0xff]
  %v8332 = vld [vmem:[%s8284 + $0x178] sm:$0xff]
  %v8333 = vld [vmem:[%s8284 + $0x180] sm:$0xff]
  %v8334 = vld [vmem:[%s8284 + $0x188] sm:$0xff]
  %v8335 = vld [vmem:[%s8284 + $0x190] sm:$0xff]
  %v8336 = vld [vmem:[%s8284 + $0x198] sm:$0xff]
  %v8337 = vld [vmem:[%s8284 + $0x1a0] sm:$0xff]
  %v8338 = vld [vmem:[%s8284 + $0x1a8] sm:$0xff]
  %v8339 = vld [vmem:[%s8284 + $0x1b0] sm:$0xff]
  %v8340 = vld [vmem:[%s8284 + $0x1b8] sm:$0xff]
  %v8341 = vld [vmem:[%s8284 + $0x1c0] sm:$0xff]
  %v8342 = vld [vmem:[%s8284 + $0x1c8] sm:$0xff]
  %v8343 = vld [vmem:[%s8284 + $0x1d0] sm:$0xff]
  %v8344 = vld [vmem:[%s8284 + $0x1d8] sm:$0xff]
  %v8345 = vld [vmem:[%s8284 + $0x1e0] sm:$0xff]
  %v8346 = vld [vmem:[%s8284 + $0x1e8] sm:$0xff]
  %v8347 = vld [vmem:[%s8284 + $0x1f0] sm:$0xff]
  %v8348 = vld [vmem:[%s8284 + $0x1f8] sm:$0xff]
  %v8413 = vunpack.c.l.b16 %v8285
  %v8414 = vunpack.c.h.b16 %v8285
  %v8415 = vunpack.c.l.b16 %v8286
  %v8416 = vunpack.c.h.b16 %v8286
  %v8417 = vunpack.c.l.b16 %v8287
  %v8418 = vunpack.c.h.b16 %v8287
  %v8419 = vunpack.c.l.b16 %v8288
  %v8420 = vunpack.c.h.b16 %v8288
  %v8421 = vunpack.c.l.b16 %v8289
  %v8422 = vunpack.c.h.b16 %v8289
  %v8423 = vunpack.c.l.b16 %v8290
  %v8424 = vunpack.c.h.b16 %v8290
  %v8425 = vunpack.c.l.b16 %v8291
  %v8426 = vunpack.c.h.b16 %v8291
  %v8427 = vunpack.c.l.b16 %v8292
  %v8428 = vunpack.c.h.b16 %v8292
  %v8429 = vunpack.c.l.b16 %v8293
  %v8430 = vunpack.c.h.b16 %v8293
  %v8431 = vunpack.c.l.b16 %v8294
  %v8432 = vunpack.c.h.b16 %v8294
  %v8433 = vunpack.c.l.b16 %v8295
  %v8434 = vunpack.c.h.b16 %v8295
  %v8435 = vunpack.c.l.b16 %v8296
  %v8436 = vunpack.c.h.b16 %v8296
  %v8437 = vunpack.c.l.b16 %v8297
  %v8438 = vunpack.c.h.b16 %v8297
  %v8439 = vunpack.c.l.b16 %v8298
  %v8440 = vunpack.c.h.b16 %v8298
  %v8441 = vunpack.c.l.b16 %v8299
  %v8442 = vunpack.c.h.b16 %v8299
  %v8443 = vunpack.c.l.b16 %v8300
  %v8444 = vunpack.c.h.b16 %v8300
  %v8445 = vunpack.c.l.b16 %v8301
  %v8446 = vunpack.c.h.b16 %v8301
  %v8447 = vunpack.c.l.b16 %v8302
  %v8448 = vunpack.c.h.b16 %v8302
  %v8449 = vunpack.c.l.b16 %v8303
  %v8450 = vunpack.c.h.b16 %v8303
  %v8451 = vunpack.c.l.b16 %v8304
  %v8452 = vunpack.c.h.b16 %v8304
  %v8453 = vunpack.c.l.b16 %v8305
  %v8454 = vunpack.c.h.b16 %v8305
  %v8455 = vunpack.c.l.b16 %v8306
  %v8456 = vunpack.c.h.b16 %v8306
  %v8457 = vunpack.c.l.b16 %v8307
  %v8458 = vunpack.c.h.b16 %v8307
  %v8459 = vunpack.c.l.b16 %v8308
  %v8460 = vunpack.c.h.b16 %v8308
  %v8461 = vunpack.c.l.b16 %v8309
  %v8462 = vunpack.c.h.b16 %v8309
  %v8463 = vunpack.c.l.b16 %v8310
  %v8464 = vunpack.c.h.b16 %v8310
  %v8465 = vunpack.c.l.b16 %v8311
  %v8466 = vunpack.c.h.b16 %v8311
  %v8467 = vunpack.c.l.b16 %v8312
  %v8468 = vunpack.c.h.b16 %v8312
  %v8469 = vunpack.c.l.b16 %v8313
  %v8470 = vunpack.c.h.b16 %v8313
  %v8471 = vunpack.c.l.b16 %v8314
  %v8472 = vunpack.c.h.b16 %v8314
  %v8473 = vunpack.c.l.b16 %v8315
  %v8474 = vunpack.c.h.b16 %v8315
  %v8475 = vunpack.c.l.b16 %v8316
  %v8476 = vunpack.c.h.b16 %v8316
  %v8477 = vunpack.c.l.b16 %v8317
  %v8478 = vunpack.c.h.b16 %v8317
  %v8479 = vunpack.c.l.b16 %v8318
  %v8480 = vunpack.c.h.b16 %v8318
  %v8481 = vunpack.c.l.b16 %v8319
  %v8482 = vunpack.c.h.b16 %v8319
  %v8483 = vunpack.c.l.b16 %v8320
  %v8484 = vunpack.c.h.b16 %v8320
  %v8485 = vunpack.c.l.b16 %v8321
  %v8486 = vunpack.c.h.b16 %v8321
  %v8487 = vunpack.c.l.b16 %v8322
  %v8488 = vunpack.c.h.b16 %v8322
  %v8489 = vunpack.c.l.b16 %v8323
  %v8490 = vunpack.c.h.b16 %v8323
  %v8491 = vunpack.c.l.b16 %v8324
  %v8492 = vunpack.c.h.b16 %v8324
  %v8493 = vunpack.c.l.b16 %v8325
  %v8494 = vunpack.c.h.b16 %v8325
  %v8495 = vunpack.c.l.b16 %v8326
  %v8496 = vunpack.c.h.b16 %v8326
  %v8497 = vunpack.c.l.b16 %v8327
  %v8498 = vunpack.c.h.b16 %v8327
  %v8499 = vunpack.c.l.b16 %v8328
  %v8500 = vunpack.c.h.b16 %v8328
  %v8501 = vunpack.c.l.b16 %v8329
  %v8502 = vunpack.c.h.b16 %v8329
  %v8503 = vunpack.c.l.b16 %v8330
  %v8504 = vunpack.c.h.b16 %v8330
  %v8505 = vunpack.c.l.b16 %v8331
  %v8506 = vunpack.c.h.b16 %v8331
  %v8507 = vunpack.c.l.b16 %v8332
  %v8508 = vunpack.c.h.b16 %v8332
  %v8509 = vunpack.c.l.b16 %v8333
  %v8510 = vunpack.c.h.b16 %v8333
  %v8511 = vunpack.c.l.b16 %v8334
  %v8512 = vunpack.c.h.b16 %v8334
  %v8513 = vunpack.c.l.b16 %v8335
  %v8514 = vunpack.c.h.b16 %v8335
  %v8515 = vunpack.c.l.b16 %v8336
  %v8516 = vunpack.c.h.b16 %v8336
  %v8517 = vunpack.c.l.b16 %v8337
  %v8518 = vunpack.c.h.b16 %v8337
  %v8519 = vunpack.c.l.b16 %v8338
  %v8520 = vunpack.c.h.b16 %v8338
  %v8521 = vunpack.c.l.b16 %v8339
  %v8522 = vunpack.c.h.b16 %v8339
  %v8523 = vunpack.c.l.b16 %v8340
  %v8524 = vunpack.c.h.b16 %v8340
  %v8525 = vunpack.c.l.b16 %v8341
  %v8526 = vunpack.c.h.b16 %v8341
  %v8527 = vunpack.c.l.b16 %v8342
  %v8528 = vunpack.c.h.b16 %v8342
  %v8529 = vunpack.c.l.b16 %v8343
  %v8530 = vunpack.c.h.b16 %v8343
  %v8531 = vunpack.c.l.b16 %v8344
  %v8532 = vunpack.c.h.b16 %v8344
  %v8533 = vunpack.c.l.b16 %v8345
  %v8534 = vunpack.c.h.b16 %v8345
  %v8535 = vunpack.c.l.b16 %v8346
  %v8536 = vunpack.c.h.b16 %v8346
  %v8537 = vunpack.c.l.b16 %v8347
  %v8538 = vunpack.c.h.b16 %v8347
  %v8539 = vunpack.c.l.b16 %v8348
  %v8540 = vunpack.c.h.b16 %v8348
  %v8541 = vpack.c.b16 %v8417, %v8413
  %v8542 = vpack.c.b16 %v8418, %v8414
  %v8543 = vpack.c.b16 %v8419, %v8415
  %v8544 = vpack.c.b16 %v8420, %v8416
  %v8545 = vpack.c.b16 %v8425, %v8421
  %v8546 = vpack.c.b16 %v8426, %v8422
  %v8547 = vpack.c.b16 %v8427, %v8423
  %v8548 = vpack.c.b16 %v8428, %v8424
  %v8549 = vpack.c.b16 %v8433, %v8429
  %v8550 = vpack.c.b16 %v8434, %v8430
  %v8551 = vpack.c.b16 %v8435, %v8431
  %v8552 = vpack.c.b16 %v8436, %v8432
  %v8553 = vpack.c.b16 %v8441, %v8437
  %v8554 = vpack.c.b16 %v8442, %v8438
  %v8555 = vpack.c.b16 %v8443, %v8439
  %v8556 = vpack.c.b16 %v8444, %v8440
  %v8557 = vpack.c.b16 %v8449, %v8445
  %v8558 = vpack.c.b16 %v8450, %v8446
  %v8559 = vpack.c.b16 %v8451, %v8447
  %v8560 = vpack.c.b16 %v8452, %v8448
  %v8561 = vpack.c.b16 %v8457, %v8453
  %v8562 = vpack.c.b16 %v8458, %v8454
  %v8563 = vpack.c.b16 %v8459, %v8455
  %v8564 = vpack.c.b16 %v8460, %v8456
  %v8565 = vpack.c.b16 %v8465, %v8461
  %v8566 = vpack.c.b16 %v8466, %v8462
  %v8567 = vpack.c.b16 %v8467, %v8463
  %v8568 = vpack.c.b16 %v8468, %v8464
  %v8569 = vpack.c.b16 %v8473, %v8469
  %v8570 = vpack.c.b16 %v8474, %v8470
  %v8571 = vpack.c.b16 %v8475, %v8471
  %v8572 = vpack.c.b16 %v8476, %v8472
  %v8573 = vpack.c.b16 %v8481, %v8477
  %v8574 = vpack.c.b16 %v8482, %v8478
  %v8575 = vpack.c.b16 %v8483, %v8479
  %v8576 = vpack.c.b16 %v8484, %v8480
  %v8577 = vpack.c.b16 %v8489, %v8485
  %v8578 = vpack.c.b16 %v8490, %v8486
  %v8579 = vpack.c.b16 %v8491, %v8487
  %v8580 = vpack.c.b16 %v8492, %v8488
  %v8581 = vpack.c.b16 %v8497, %v8493
  %v8582 = vpack.c.b16 %v8498, %v8494
  %v8583 = vpack.c.b16 %v8499, %v8495
  %v8584 = vpack.c.b16 %v8500, %v8496
  %v8585 = vpack.c.b16 %v8505, %v8501
  %v8586 = vpack.c.b16 %v8506, %v8502
  %v8587 = vpack.c.b16 %v8507, %v8503
  %v8588 = vpack.c.b16 %v8508, %v8504
  %v8589 = vpack.c.b16 %v8513, %v8509
  %v8590 = vpack.c.b16 %v8514, %v8510
  %v8591 = vpack.c.b16 %v8515, %v8511
  %v8592 = vpack.c.b16 %v8516, %v8512
  %v8593 = vpack.c.b16 %v8521, %v8517
  %v8594 = vpack.c.b16 %v8522, %v8518
  %v8595 = vpack.c.b16 %v8523, %v8519
  %v8596 = vpack.c.b16 %v8524, %v8520
  %v8597 = vpack.c.b16 %v8529, %v8525
  %v8598 = vpack.c.b16 %v8530, %v8526
  %v8599 = vpack.c.b16 %v8531, %v8527
  %v8600 = vpack.c.b16 %v8532, %v8528
  %v8601 = vpack.c.b16 %v8537, %v8533
  %v8602 = vpack.c.b16 %v8538, %v8534
  %v8603 = vpack.c.b16 %v8539, %v8535
  %v8604 = vpack.c.b16 %v8540, %v8536
  %8669 = vmatprep.subr.bf16.mxu0 %v8542
  %8670 = vmatpush1.bf16.msra.mxu0 %v8541
  %8671 = vmatprep.subr.bf16.mxu0 %v8546
  %8672 = vmatpush1.bf16.msra.mxu0 %v8545
  %8673 = vmatprep.subr.bf16.mxu0 %v8550
  %8674 = vmatpush1.bf16.msra.mxu0 %v8549
  %8675 = vmatprep.subr.bf16.mxu0 %v8554
  %8676 = vmatpush1.bf16.msra.mxu0 %v8553
  %8677 = vmatprep.subr.bf16.mxu0 %v8558
  %8678 = vmatpush1.bf16.msra.mxu0 %v8557
  %8679 = vmatprep.subr.bf16.mxu0 %v8562
  %8680 = vmatpush1.bf16.msra.mxu0 %v8561
  %8681 = vmatprep.subr.bf16.mxu0 %v8566
  %8682 = vmatpush1.bf16.msra.mxu0 %v8565
  %8683 = vmatprep.subr.bf16.mxu0 %v8570
  %8684 = vmatpush1.bf16.msra.mxu0 %v8569
  %8685 = vmatprep.subr.bf16.mxu0 %v8574
  %8686 = vmatpush1.bf16.msra.mxu0 %v8573
  %8687 = vmatprep.subr.bf16.mxu0 %v8578
  %8688 = vmatpush1.bf16.msra.mxu0 %v8577
  %8689 = vmatprep.subr.bf16.mxu0 %v8582
  %8690 = vmatpush1.bf16.msra.mxu0 %v8581
  %8691 = vmatprep.subr.bf16.mxu0 %v8586
  %8692 = vmatpush1.bf16.msra.mxu0 %v8585
  %8693 = vmatprep.subr.bf16.mxu0 %v8590
  %8694 = vmatpush1.bf16.msra.mxu0 %v8589
  %8695 = vmatprep.subr.bf16.mxu0 %v8594
  %8696 = vmatpush1.bf16.msra.mxu0 %v8593
  %8697 = vmatprep.subr.bf16.mxu0 %v8598
  %8698 = vmatpush1.bf16.msra.mxu0 %v8597
  %8699 = vmatprep.subr.bf16.mxu0 %v8602
  %8700 = vmatpush1.bf16.msra.mxu0 %v8601
  %8701 = vmatprep.mubr.bf16.mxu0 %v6140
  %8702 = vmatmul.mubr.bf16.gmra.mrb[0].mxu0 %v6139
  %v8703 = vpop.f32.mrb[0].mxu0
  %v8704 = vadd.f32 0.0, %v8703
  %v8705 = vpop.f32.mrb[0].mxu0
  %v8706 = vadd.f32 0.0, %v8705
  %v8707 = vpop.f32.mrb[0].mxu0
  %v8708 = vadd.f32 0.0, %v8707
  %v8709 = vpop.f32.mrb[0].mxu0
  %v8710 = vadd.f32 0.0, %v8709
  %8711 = vdwg.mxu0
  %8712 = vmatprep.subr.bf16.mxu0 %v8544
  %8713 = vmatpush1.bf16.msra.mxu0 %v8543
  %8714 = vmatprep.subr.bf16.mxu0 %v8548
  %8715 = vmatpush1.bf16.msra.mxu0 %v8547
  %8716 = vmatprep.subr.bf16.mxu0 %v8552
  %8717 = vmatpush1.bf16.msra.mxu0 %v8551
  %8718 = vmatprep.subr.bf16.mxu0 %v8556
  %8719 = vmatpush1.bf16.msra.mxu0 %v8555
  %8720 = vmatprep.subr.bf16.mxu0 %v8560
  %8721 = vmatpush1.bf16.msra.mxu0 %v8559
  %8722 = vmatprep.subr.bf16.mxu0 %v8564
  %8723 = vmatpush1.bf16.msra.mxu0 %v8563
  %8724 = vmatprep.subr.bf16.mxu0 %v8568
  %8725 = vmatpush1.bf16.msra.mxu0 %v8567
  %8726 = vmatprep.subr.bf16.mxu0 %v8572
  %8727 = vmatpush1.bf16.msra.mxu0 %v8571
  %8728 = vmatprep.subr.bf16.mxu0 %v8576
  %8729 = vmatpush1.bf16.msra.mxu0 %v8575
  %8730 = vmatprep.subr.bf16.mxu0 %v8580
  %8731 = vmatpush1.bf16.msra.mxu0 %v8579
  %8732 = vmatprep.subr.bf16.mxu0 %v8584
  %8733 = vmatpush1.bf16.msra.mxu0 %v8583
  %8734 = vmatprep.subr.bf16.mxu0 %v8588
  %8735 = vmatpush1.bf16.msra.mxu0 %v8587
  %8736 = vmatprep.subr.bf16.mxu0 %v8592
  %8737 = vmatpush1.bf16.msra.mxu0 %v8591
  %8738 = vmatprep.subr.bf16.mxu0 %v8596
  %8739 = vmatpush1.bf16.msra.mxu0 %v8595
  %8740 = vmatprep.subr.bf16.mxu0 %v8600
  %8741 = vmatpush1.bf16.msra.mxu0 %v8599
  %8742 = vmatprep.subr.bf16.mxu0 %v8604
  %8743 = vmatpush1.bf16.msra.mxu0 %v8603
  %8744 = vmatprep.mubr.bf16.mxu0 %v6140
  %8745 = vmatmul.mubr.bf16.gmra.mrb[0].mxu0 %v6139
  %v8746 = vpop.f32.mrb[0].mxu0
  %v8747 = vadd.f32 0.0, %v8746
  %v8748 = vpop.f32.mrb[0].mxu0
  %v8749 = vadd.f32 0.0, %v8748
  %v8750 = vpop.f32.mrb[0].mxu0
  %v8751 = vadd.f32 0.0, %v8750
  %v8752 = vpop.f32.mrb[0].mxu0
  %v8753 = vadd.f32 0.0, %v8752
  %8754 = vdwg.mxu0
  %v8819 = vunpack.c.l.b16 %v6141
  %v8820 = vunpack.c.h.b16 %v6141
  %v8821 = vunpack.c.l.b16 %v6142
  %v8822 = vunpack.c.h.b16 %v6142
  %v8823 = vunpack.c.l.b16 %v6143
  %v8824 = vunpack.c.h.b16 %v6143
  %v8825 = vunpack.c.l.b16 %v6144
  %v8826 = vunpack.c.h.b16 %v6144
  %v8827 = vunpack.c.l.b16 %v6145
  %v8828 = vunpack.c.h.b16 %v6145
  %v8829 = vunpack.c.l.b16 %v6146
  %v8830 = vunpack.c.h.b16 %v6146
  %v8831 = vunpack.c.l.b16 %v6147
  %v8832 = vunpack.c.h.b16 %v6147
  %v8833 = vunpack.c.l.b16 %v6148
  %v8834 = vunpack.c.h.b16 %v6148
  %v8835 = vunpack.c.l.b16 %v6149
  %v8836 = vunpack.c.h.b16 %v6149
  %v8837 = vunpack.c.l.b16 %v6150
  %v8838 = vunpack.c.h.b16 %v6150
  %v8839 = vunpack.c.l.b16 %v6151
  %v8840 = vunpack.c.h.b16 %v6151
  %v8841 = vunpack.c.l.b16 %v6152
  %v8842 = vunpack.c.h.b16 %v6152
  %v8843 = vunpack.c.l.b16 %v6153
  %v8844 = vunpack.c.h.b16 %v6153
  %v8845 = vunpack.c.l.b16 %v6154
  %v8846 = vunpack.c.h.b16 %v6154
  %v8847 = vunpack.c.l.b16 %v6155
  %v8848 = vunpack.c.h.b16 %v6155
  %v8849 = vunpack.c.l.b16 %v6156
  %v8850 = vunpack.c.h.b16 %v6156
  %v8851 = vunpack.c.l.b16 %v6157
  %v8852 = vunpack.c.h.b16 %v6157
  %v8853 = vunpack.c.l.b16 %v6158
  %v8854 = vunpack.c.h.b16 %v6158
  %v8855 = vunpack.c.l.b16 %v6159
  %v8856 = vunpack.c.h.b16 %v6159
  %v8857 = vunpack.c.l.b16 %v6160
  %v8858 = vunpack.c.h.b16 %v6160
  %v8859 = vunpack.c.l.b16 %v6161
  %v8860 = vunpack.c.h.b16 %v6161
  %v8861 = vunpack.c.l.b16 %v6162
  %v8862 = vunpack.c.h.b16 %v6162
  %v8863 = vunpack.c.l.b16 %v6163
  %v8864 = vunpack.c.h.b16 %v6163
  %v8865 = vunpack.c.l.b16 %v6164
  %v8866 = vunpack.c.h.b16 %v6164
  %v8867 = vunpack.c.l.b16 %v6165
  %v8868 = vunpack.c.h.b16 %v6165
  %v8869 = vunpack.c.l.b16 %v6166
  %v8870 = vunpack.c.h.b16 %v6166
  %v8871 = vunpack.c.l.b16 %v6167
  %v8872 = vunpack.c.h.b16 %v6167
  %v8873 = vunpack.c.l.b16 %v6168
  %v8874 = vunpack.c.h.b16 %v6168
  %v8875 = vunpack.c.l.b16 %v6169
  %v8876 = vunpack.c.h.b16 %v6169
  %v8877 = vunpack.c.l.b16 %v6170
  %v8878 = vunpack.c.h.b16 %v6170
  %v8879 = vunpack.c.l.b16 %v6171
  %v8880 = vunpack.c.h.b16 %v6171
  %v8881 = vunpack.c.l.b16 %v6172
  %v8882 = vunpack.c.h.b16 %v6172
  %v8883 = vunpack.c.l.b16 %v6173
  %v8884 = vunpack.c.h.b16 %v6173
  %v8885 = vunpack.c.l.b16 %v6174
  %v8886 = vunpack.c.h.b16 %v6174
  %v8887 = vunpack.c.l.b16 %v6175
  %v8888 = vunpack.c.h.b16 %v6175
  %v8889 = vunpack.c.l.b16 %v6176
  %v8890 = vunpack.c.h.b16 %v6176
  %v8891 = vunpack.c.l.b16 %v6177
  %v8892 = vunpack.c.h.b16 %v6177
  %v8893 = vunpack.c.l.b16 %v6178
  %v8894 = vunpack.c.h.b16 %v6178
  %v8895 = vunpack.c.l.b16 %v6179
  %v8896 = vunpack.c.h.b16 %v6179
  %v8897 = vunpack.c.l.b16 %v6180
  %v8898 = vunpack.c.h.b16 %v6180
  %v8899 = vunpack.c.l.b16 %v6181
  %v8900 = vunpack.c.h.b16 %v6181
  %v8901 = vunpack.c.l.b16 %v6182
  %v8902 = vunpack.c.h.b16 %v6182
  %v8903 = vunpack.c.l.b16 %v6183
  %v8904 = vunpack.c.h.b16 %v6183
  %v8905 = vunpack.c.l.b16 %v6184
  %v8906 = vunpack.c.h.b16 %v6184
  %v8907 = vunpack.c.l.b16 %v6185
  %v8908 = vunpack.c.h.b16 %v6185
  %v8909 = vunpack.c.l.b16 %v6186
  %v8910 = vunpack.c.h.b16 %v6186
  %v8911 = vunpack.c.l.b16 %v6187
  %v8912 = vunpack.c.h.b16 %v6187
  %v8913 = vunpack.c.l.b16 %v6188
  %v8914 = vunpack.c.h.b16 %v6188
  %v8915 = vunpack.c.l.b16 %v6189
  %v8916 = vunpack.c.h.b16 %v6189
  %v8917 = vunpack.c.l.b16 %v6190
  %v8918 = vunpack.c.h.b16 %v6190
  %v8919 = vunpack.c.l.b16 %v6191
  %v8920 = vunpack.c.h.b16 %v6191
  %v8921 = vunpack.c.l.b16 %v6192
  %v8922 = vunpack.c.h.b16 %v6192
  %v8923 = vunpack.c.l.b16 %v6193
  %v8924 = vunpack.c.h.b16 %v6193
  %v8925 = vunpack.c.l.b16 %v6194
  %v8926 = vunpack.c.h.b16 %v6194
  %v8927 = vunpack.c.l.b16 %v6195
  %v8928 = vunpack.c.h.b16 %v6195
  %v8929 = vunpack.c.l.b16 %v6196
  %v8930 = vunpack.c.h.b16 %v6196
  %v8931 = vunpack.c.l.b16 %v6197
  %v8932 = vunpack.c.h.b16 %v6197
  %v8933 = vunpack.c.l.b16 %v6198
  %v8934 = vunpack.c.h.b16 %v6198
  %v8935 = vunpack.c.l.b16 %v6199
  %v8936 = vunpack.c.h.b16 %v6199
  %v8937 = vunpack.c.l.b16 %v6200
  %v8938 = vunpack.c.h.b16 %v6200
  %v8939 = vunpack.c.l.b16 %v6201
  %v8940 = vunpack.c.h.b16 %v6201
  %v8941 = vunpack.c.l.b16 %v6202
  %v8942 = vunpack.c.h.b16 %v6202
  %v8943 = vunpack.c.l.b16 %v6203
  %v8944 = vunpack.c.h.b16 %v6203
  %v8945 = vunpack.c.l.b16 %v6204
  %v8946 = vunpack.c.h.b16 %v6204
  %v8947 = vpack.c.b16 %v8823, %v8819
  %v8948 = vpack.c.b16 %v8824, %v8820
  %v8949 = vpack.c.b16 %v8825, %v8821
  %v8950 = vpack.c.b16 %v8826, %v8822
  %v8951 = vpack.c.b16 %v8831, %v8827
  %v8952 = vpack.c.b16 %v8832, %v8828
  %v8953 = vpack.c.b16 %v8833, %v8829
  %v8954 = vpack.c.b16 %v8834, %v8830
  %v8955 = vpack.c.b16 %v8839, %v8835
  %v8956 = vpack.c.b16 %v8840, %v8836
  %v8957 = vpack.c.b16 %v8841, %v8837
  %v8958 = vpack.c.b16 %v8842, %v8838
  %v8959 = vpack.c.b16 %v8847, %v8843
  %v8960 = vpack.c.b16 %v8848, %v8844
  %v8961 = vpack.c.b16 %v8849, %v8845
  %v8962 = vpack.c.b16 %v8850, %v8846
  %v8963 = vpack.c.b16 %v8855, %v8851
  %v8964 = vpack.c.b16 %v8856, %v8852
  %v8965 = vpack.c.b16 %v8857, %v8853
  %v8966 = vpack.c.b16 %v8858, %v8854
  %v8967 = vpack.c.b16 %v8863, %v8859
  %v8968 = vpack.c.b16 %v8864, %v8860
  %v8969 = vpack.c.b16 %v8865, %v8861
  %v8970 = vpack.c.b16 %v8866, %v8862
  %v8971 = vpack.c.b16 %v8871, %v8867
  %v8972 = vpack.c.b16 %v8872, %v8868
  %v8973 = vpack.c.b16 %v8873, %v8869
  %v8974 = vpack.c.b16 %v8874, %v8870
  %v8975 = vpack.c.b16 %v8879, %v8875
  %v8976 = vpack.c.b16 %v8880, %v8876
  %v8977 = vpack.c.b16 %v8881, %v8877
  %v8978 = vpack.c.b16 %v8882, %v8878
  %v8979 = vpack.c.b16 %v8887, %v8883
  %v8980 = vpack.c.b16 %v8888, %v8884
  %v8981 = vpack.c.b16 %v8889, %v8885
  %v8982 = vpack.c.b16 %v8890, %v8886
  %v8983 = vpack.c.b16 %v8895, %v8891
  %v8984 = vpack.c.b16 %v8896, %v8892
  %v8985 = vpack.c.b16 %v8897, %v8893
  %v8986 = vpack.c.b16 %v8898, %v8894
  %v8987 = vpack.c.b16 %v8903, %v8899
  %v8988 = vpack.c.b16 %v8904, %v8900
  %v8989 = vpack.c.b16 %v8905, %v8901
  %v8990 = vpack.c.b16 %v8906, %v8902
  %v8991 = vpack.c.b16 %v8911, %v8907
  %v8992 = vpack.c.b16 %v8912, %v8908
  %v8993 = vpack.c.b16 %v8913, %v8909
  %v8994 = vpack.c.b16 %v8914, %v8910
  %v8995 = vpack.c.b16 %v8919, %v8915
  %v8996 = vpack.c.b16 %v8920, %v8916
  %v8997 = vpack.c.b16 %v8921, %v8917
  %v8998 = vpack.c.b16 %v8922, %v8918
  %v8999 = vpack.c.b16 %v8927, %v8923
  %v9000 = vpack.c.b16 %v8928, %v8924
  %v9001 = vpack.c.b16 %v8929, %v8925
  %v9002 = vpack.c.b16 %v8930, %v8926
  %v9003 = vpack.c.b16 %v8935, %v8931
  %v9004 = vpack.c.b16 %v8936, %v8932
  %v9005 = vpack.c.b16 %v8937, %v8933
  %v9006 = vpack.c.b16 %v8938, %v8934
  %v9007 = vpack.c.b16 %v8943, %v8939
  %v9008 = vpack.c.b16 %v8944, %v8940
  %v9009 = vpack.c.b16 %v8945, %v8941
  %v9010 = vpack.c.b16 %v8946, %v8942
  %9075 = vmatprep.subr.bf16.mxu0 %v8948
  %9076 = vmatpush1.bf16.msra.mxu0 %v8947
  %9077 = vmatprep.subr.bf16.mxu0 %v8952
  %9078 = vmatpush1.bf16.msra.mxu0 %v8951
  %9079 = vmatprep.subr.bf16.mxu0 %v8956
  %9080 = vmatpush1.bf16.msra.mxu0 %v8955
  %9081 = vmatprep.subr.bf16.mxu0 %v8960
  %9082 = vmatpush1.bf16.msra.mxu0 %v8959
  %9083 = vmatprep.subr.bf16.mxu0 %v8964
  %9084 = vmatpush1.bf16.msra.mxu0 %v8963
  %9085 = vmatprep.subr.bf16.mxu0 %v8968
  %9086 = vmatpush1.bf16.msra.mxu0 %v8967
  %9087 = vmatprep.subr.bf16.mxu0 %v8972
  %9088 = vmatpush1.bf16.msra.mxu0 %v8971
  %9089 = vmatprep.subr.bf16.mxu0 %v8976
  %9090 = vmatpush1.bf16.msra.mxu0 %v8975
  %9091 = vmatprep.subr.bf16.mxu0 %v8980
  %9092 = vmatpush1.bf16.msra.mxu0 %v8979
  %9093 = vmatprep.subr.bf16.mxu0 %v8984
  %9094 = vmatpush1.bf16.msra.mxu0 %v8983
  %9095 = vmatprep.subr.bf16.mxu0 %v8988
  %9096 = vmatpush1.bf16.msra.mxu0 %v8987
  %9097 = vmatprep.subr.bf16.mxu0 %v8992
  %9098 = vmatpush1.bf16.msra.mxu0 %v8991
  %9099 = vmatprep.subr.bf16.mxu0 %v8996
  %9100 = vmatpush1.bf16.msra.mxu0 %v8995
  %9101 = vmatprep.subr.bf16.mxu0 %v9000
  %9102 = vmatpush1.bf16.msra.mxu0 %v8999
  %9103 = vmatprep.subr.bf16.mxu0 %v9004
  %9104 = vmatpush1.bf16.msra.mxu0 %v9003
  %9105 = vmatprep.subr.bf16.mxu0 %v9008
  %9106 = vmatpush1.bf16.msra.mxu0 %v9007
  %9107 = vmatprep.mubr.bf16.mxu0 %v6124
  %9108 = vmatmul.mubr.bf16.gmra.mrb[0].mxu0 %v6123
  %v9109 = vpop.f32.mrb[0].mxu0
  %v9110 = vadd.f32 %v6625, %v9109
  %v9111 = vpop.f32.mrb[0].mxu0
  %v9112 = vadd.f32 %v6627, %v9111
  %v9113 = vpop.f32.mrb[0].mxu0
  %v9114 = vadd.f32 %v6629, %v9113
  %v9115 = vpop.f32.mrb[0].mxu0
  %v9116 = vadd.f32 %v6631, %v9115
  %9117 = vdwg.mxu0
  %9118 = vmatprep.subr.bf16.mxu0 %v8950
  %9119 = vmatpush1.bf16.msra.mxu0 %v8949
  %9120 = vmatprep.subr.bf16.mxu0 %v8954
  %9121 = vmatpush1.bf16.msra.mxu0 %v8953
  %9122 = vmatprep.subr.bf16.mxu0 %v8958
  %9123 = vmatpush1.bf16.msra.mxu0 %v8957
  %9124 = vmatprep.subr.bf16.mxu0 %v8962
  %9125 = vmatpush1.bf16.msra.mxu0 %v8961
  %9126 = vmatprep.subr.bf16.mxu0 %v8966
  %9127 = vmatpush1.bf16.msra.mxu0 %v8965
  %9128 = vmatprep.subr.bf16.mxu0 %v8970
  %9129 = vmatpush1.bf16.msra.mxu0 %v8969
  %9130 = vmatprep.subr.bf16.mxu0 %v8974
  %9131 = vmatpush1.bf16.msra.mxu0 %v8973
  %9132 = vmatprep.subr.bf16.mxu0 %v8978
  %9133 = vmatpush1.bf16.msra.mxu0 %v8977
  %9134 = vmatprep.subr.bf16.mxu0 %v8982
  %9135 = vmatpush1.bf16.msra.mxu0 %v8981
  %9136 = vmatprep.subr.bf16.mxu0 %v8986
  %9137 = vmatpush1.bf16.msra.mxu0 %v8985
  %9138 = vmatprep.subr.bf16.mxu0 %v8990
  %9139 = vmatpush1.bf16.msra.mxu0 %v8989
  %9140 = vmatprep.subr.bf16.mxu0 %v8994
  %9141 = vmatpush1.bf16.msra.mxu0 %v8993
  %9142 = vmatprep.subr.bf16.mxu0 %v8998
  %9143 = vmatpush1.bf16.msra.mxu0 %v8997
  %9144 = vmatprep.subr.bf16.mxu0 %v9002
  %9145 = vmatpush1.bf16.msra.mxu0 %v9001
  %9146 = vmatprep.subr.bf16.mxu0 %v9006
  %9147 = vmatpush1.bf16.msra.mxu0 %v9005
  %9148 = vmatprep.subr.bf16.mxu0 %v9010
  %9149 = vmatpush1.bf16.msra.mxu0 %v9009
  %9150 = vmatprep.mubr.bf16.mxu0 %v6124
  %9151 = vmatmul.mubr.bf16.gmra.mrb[0].mxu0 %v6123
  %v9152 = vpop.f32.mrb[0].mxu0
  %v9153 = vadd.f32 %v6668, %v9152
  %v9154 = vpop.f32.mrb[0].mxu0
  %v9155 = vadd.f32 %v6670, %v9154
  %v9156 = vpop.f32.mrb[0].mxu0
  %v9157 = vadd.f32 %v6672, %v9156
  %v9158 = vpop.f32.mrb[0].mxu0
  %v9159 = vadd.f32 %v6674, %v9158
  %9160 = vdwg.mxu0
  %v9225 = vunpack.c.l.b16 %v6677
  %v9226 = vunpack.c.h.b16 %v6677
  %v9227 = vunpack.c.l.b16 %v6678
  %v9228 = vunpack.c.h.b16 %v6678
  %v9229 = vunpack.c.l.b16 %v6679
  %v9230 = vunpack.c.h.b16 %v6679
  %v9231 = vunpack.c.l.b16 %v6680
  %v9232 = vunpack.c.h.b16 %v6680
  %v9233 = vunpack.c.l.b16 %v6681
  %v9234 = vunpack.c.h.b16 %v6681
  %v9235 = vunpack.c.l.b16 %v6682
  %v9236 = vunpack.c.h.b16 %v6682
  %v9237 = vunpack.c.l.b16 %v6683
  %v9238 = vunpack.c.h.b16 %v6683
  %v9239 = vunpack.c.l.b16 %v6684
  %v9240 = vunpack.c.h.b16 %v6684
  %v9241 = vunpack.c.l.b16 %v6685
  %v9242 = vunpack.c.h.b16 %v6685
  %v9243 = vunpack.c.l.b16 %v6686
  %v9244 = vunpack.c.h.b16 %v6686
  %v9245 = vunpack.c.l.b16 %v6687
  %v9246 = vunpack.c.h.b16 %v6687
  %v9247 = vunpack.c.l.b16 %v6688
  %v9248 = vunpack.c.h.b16 %v6688
  %v9249 = vunpack.c.l.b16 %v6689
  %v9250 = vunpack.c.h.b16 %v6689
  %v9251 = vunpack.c.l.b16 %v6690
  %v9252 = vunpack.c.h.b16 %v6690
  %v9253 = vunpack.c.l.b16 %v6691
  %v9254 = vunpack.c.h.b16 %v6691
  %v9255 = vunpack.c.l.b16 %v6692
  %v9256 = vunpack.c.h.b16 %v6692
  %v9257 = vunpack.c.l.b16 %v6693
  %v9258 = vunpack.c.h.b16 %v6693
  %v9259 = vunpack.c.l.b16 %v6694
  %v9260 = vunpack.c.h.b16 %v6694
  %v9261 = vunpack.c.l.b16 %v6695
  %v9262 = vunpack.c.h.b16 %v6695
  %v9263 = vunpack.c.l.b16 %v6696
  %v9264 = vunpack.c.h.b16 %v6696
  %v9265 = vunpack.c.l.b16 %v6697
  %v9266 = vunpack.c.h.b16 %v6697
  %v9267 = vunpack.c.l.b16 %v6698
  %v9268 = vunpack.c.h.b16 %v6698
  %v9269 = vunpack.c.l.b16 %v6699
  %v9270 = vunpack.c.h.b16 %v6699
  %v9271 = vunpack.c.l.b16 %v6700
  %v9272 = vunpack.c.h.b16 %v6700
  %v9273 = vunpack.c.l.b16 %v6701
  %v9274 = vunpack.c.h.b16 %v6701
  %v9275 = vunpack.c.l.b16 %v6702
  %v9276 = vunpack.c.h.b16 %v6702
  %v9277 = vunpack.c.l.b16 %v6703
  %v9278 = vunpack.c.h.b16 %v6703
  %v9279 = vunpack.c.l.b16 %v6704
  %v9280 = vunpack.c.h.b16 %v6704
  %v9281 = vunpack.c.l.b16 %v6705
  %v9282 = vunpack.c.h.b16 %v6705
  %v9283 = vunpack.c.l.b16 %v6706
  %v9284 = vunpack.c.h.b16 %v6706
  %v9285 = vunpack.c.l.b16 %v6707
  %v9286 = vunpack.c.h.b16 %v6707
  %v9287 = vunpack.c.l.b16 %v6708
  %v9288 = vunpack.c.h.b16 %v6708
  %v9289 = vunpack.c.l.b16 %v6709
  %v9290 = vunpack.c.h.b16 %v6709
  %v9291 = vunpack.c.l.b16 %v6710
  %v9292 = vunpack.c.h.b16 %v6710
  %v9293 = vunpack.c.l.b16 %v6711
  %v9294 = vunpack.c.h.b16 %v6711
  %v9295 = vunpack.c.l.b16 %v6712
  %v9296 = vunpack.c.h.b16 %v6712
  %v9297 = vunpack.c.l.b16 %v6713
  %v9298 = vunpack.c.h.b16 %v6713
  %v9299 = vunpack.c.l.b16 %v6714
  %v9300 = vunpack.c.h.b16 %v6714
  %v9301 = vunpack.c.l.b16 %v6715
  %v9302 = vunpack.c.h.b16 %v6715
  %v9303 = vunpack.c.l.b16 %v6716
  %v9304 = vunpack.c.h.b16 %v6716
  %v9305 = vunpack.c.l.b16 %v6717
  %v9306 = vunpack.c.h.b16 %v6717
  %v9307 = vunpack.c.l.b16 %v6718
  %v9308 = vunpack.c.h.b16 %v6718
  %v9309 = vunpack.c.l.b16 %v6719
  %v9310 = vunpack.c.h.b16 %v6719
  %v9311 = vunpack.c.l.b16 %v6720
  %v9312 = vunpack.c.h.b16 %v6720
  %v9313 = vunpack.c.l.b16 %v6721
  %v9314 = vunpack.c.h.b16 %v6721
  %v9315 = vunpack.c.l.b16 %v6722
  %v9316 = vunpack.c.h.b16 %v6722
  %v9317 = vunpack.c.l.b16 %v6723
  %v9318 = vunpack.c.h.b16 %v6723
  %v9319 = vunpack.c.l.b16 %v6724
  %v9320 = vunpack.c.h.b16 %v6724
  %v9321 = vunpack.c.l.b16 %v6725
  %v9322 = vunpack.c.h.b16 %v6725
  %v9323 = vunpack.c.l.b16 %v6726
  %v9324 = vunpack.c.h.b16 %v6726
  %v9325 = vunpack.c.l.b16 %v6727
  %v9326 = vunpack.c.h.b16 %v6727
  %v9327 = vunpack.c.l.b16 %v6728
  %v9328 = vunpack.c.h.b16 %v6728
  %v9329 = vunpack.c.l.b16 %v6729
  %v9330 = vunpack.c.h.b16 %v6729
  %v9331 = vunpack.c.l.b16 %v6730
  %v9332 = vunpack.c.h.b16 %v6730
  %v9333 = vunpack.c.l.b16 %v6731
  %v9334 = vunpack.c.h.b16 %v6731
  %v9335 = vunpack.c.l.b16 %v6732
  %v9336 = vunpack.c.h.b16 %v6732
  %v9337 = vunpack.c.l.b16 %v6733
  %v9338 = vunpack.c.h.b16 %v6733
  %v9339 = vunpack.c.l.b16 %v6734
  %v9340 = vunpack.c.h.b16 %v6734
  %v9341 = vunpack.c.l.b16 %v6735
  %v9342 = vunpack.c.h.b16 %v6735
  %v9343 = vunpack.c.l.b16 %v6736
  %v9344 = vunpack.c.h.b16 %v6736
  %v9345 = vunpack.c.l.b16 %v6737
  %v9346 = vunpack.c.h.b16 %v6737
  %v9347 = vunpack.c.l.b16 %v6738
  %v9348 = vunpack.c.h.b16 %v6738
  %v9349 = vunpack.c.l.b16 %v6739
  %v9350 = vunpack.c.h.b16 %v6739
  %v9351 = vunpack.c.l.b16 %v6740
  %v9352 = vunpack.c.h.b16 %v6740
  %v9353 = vpack.c.b16 %v9229, %v9225
  %v9354 = vpack.c.b16 %v9230, %v9226
  %v9355 = vpack.c.b16 %v9231, %v9227
  %v9356 = vpack.c.b16 %v9232, %v9228
  %v9357 = vpack.c.b16 %v9237, %v9233
  %v9358 = vpack.c.b16 %v9238, %v9234
  %v9359 = vpack.c.b16 %v9239, %v9235
  %v9360 = vpack.c.b16 %v9240, %v9236
  %v9361 = vpack.c.b16 %v9245, %v9241
  %v9362 = vpack.c.b16 %v9246, %v9242
  %v9363 = vpack.c.b16 %v9247, %v9243
  %v9364 = vpack.c.b16 %v9248, %v9244
  %v9365 = vpack.c.b16 %v9253, %v9249
  %v9366 = vpack.c.b16 %v9254, %v9250
  %v9367 = vpack.c.b16 %v9255, %v9251
  %v9368 = vpack.c.b16 %v9256, %v9252
  %v9369 = vpack.c.b16 %v9261, %v9257
  %v9370 = vpack.c.b16 %v9262, %v9258
  %v9371 = vpack.c.b16 %v9263, %v9259
  %v9372 = vpack.c.b16 %v9264, %v9260
  %v9373 = vpack.c.b16 %v9269, %v9265
  %v9374 = vpack.c.b16 %v9270, %v9266
  %v9375 = vpack.c.b16 %v9271, %v9267
  %v9376 = vpack.c.b16 %v9272, %v9268
  %v9377 = vpack.c.b16 %v9277, %v9273
  %v9378 = vpack.c.b16 %v9278, %v9274
  %v9379 = vpack.c.b16 %v9279, %v9275
  %v9380 = vpack.c.b16 %v9280, %v9276
  %v9381 = vpack.c.b16 %v9285, %v9281
  %v9382 = vpack.c.b16 %v9286, %v9282
  %v9383 = vpack.c.b16 %v9287, %v9283
  %v9384 = vpack.c.b16 %v9288, %v9284
  %v9385 = vpack.c.b16 %v9293, %v9289
  %v9386 = vpack.c.b16 %v9294, %v9290
  %v9387 = vpack.c.b16 %v9295, %v9291
  %v9388 = vpack.c.b16 %v9296, %v9292
  %v9389 = vpack.c.b16 %v9301, %v9297
  %v9390 = vpack.c.b16 %v9302, %v9298
  %v9391 = vpack.c.b16 %v9303, %v9299
  %v9392 = vpack.c.b16 %v9304, %v9300
  %v9393 = vpack.c.b16 %v9309, %v9305
  %v9394 = vpack.c.b16 %v9310, %v9306
  %v9395 = vpack.c.b16 %v9311, %v9307
  %v9396 = vpack.c.b16 %v9312, %v9308
  %v9397 = vpack.c.b16 %v9317, %v9313
  %v9398 = vpack.c.b16 %v9318, %v9314
  %v9399 = vpack.c.b16 %v9319, %v9315
  %v9400 = vpack.c.b16 %v9320, %v9316
  %v9401 = vpack.c.b16 %v9325, %v9321
  %v9402 = vpack.c.b16 %v9326, %v9322
  %v9403 = vpack.c.b16 %v9327, %v9323
  %v9404 = vpack.c.b16 %v9328, %v9324
  %v9405 = vpack.c.b16 %v9333, %v9329
  %v9406 = vpack.c.b16 %v9334, %v9330
  %v9407 = vpack.c.b16 %v9335, %v9331
  %v9408 = vpack.c.b16 %v9336, %v9332
  %v9409 = vpack.c.b16 %v9341, %v9337
  %v9410 = vpack.c.b16 %v9342, %v9338
  %v9411 = vpack.c.b16 %v9343, %v9339
  %v9412 = vpack.c.b16 %v9344, %v9340
  %v9413 = vpack.c.b16 %v9349, %v9345
  %v9414 = vpack.c.b16 %v9350, %v9346
  %v9415 = vpack.c.b16 %v9351, %v9347
  %v9416 = vpack.c.b16 %v9352, %v9348
  %9481 = vmatprep.subr.bf16.mxu0 %v9354
  %9482 = vmatpush1.bf16.msra.mxu0 %v9353
  %9483 = vmatprep.subr.bf16.mxu0 %v9358
  %9484 = vmatpush1.bf16.msra.mxu0 %v9357
  %9485 = vmatprep.subr.bf16.mxu0 %v9362
  %9486 = vmatpush1.bf16.msra.mxu0 %v9361
  %9487 = vmatprep.subr.bf16.mxu0 %v9366
  %9488 = vmatpush1.bf16.msra.mxu0 %v9365
  %9489 = vmatprep.subr.bf16.mxu0 %v9370
  %9490 = vmatpush1.bf16.msra.mxu0 %v9369
  %9491 = vmatprep.subr.bf16.mxu0 %v9374
  %9492 = vmatpush1.bf16.msra.mxu0 %v9373
  %9493 = vmatprep.subr.bf16.mxu0 %v9378
  %9494 = vmatpush1.bf16.msra.mxu0 %v9377
  %9495 = vmatprep.subr.bf16.mxu0 %v9382
  %9496 = vmatpush1.bf16.msra.mxu0 %v9381
  %9497 = vmatprep.subr.bf16.mxu0 %v9386
  %9498 = vmatpush1.bf16.msra.mxu0 %v9385
  %9499 = vmatprep.subr.bf16.mxu0 %v9390
  %9500 = vmatpush1.bf16.msra.mxu0 %v9389
  %9501 = vmatprep.subr.bf16.mxu0 %v9394
  %9502 = vmatpush1.bf16.msra.mxu0 %v9393
  %9503 = vmatprep.subr.bf16.mxu0 %v9398
  %9504 = vmatpush1.bf16.msra.mxu0 %v9397
  %9505 = vmatprep.subr.bf16.mxu0 %v9402
  %9506 = vmatpush1.bf16.msra.mxu0 %v9401
  %9507 = vmatprep.subr.bf16.mxu0 %v9406
  %9508 = vmatpush1.bf16.msra.mxu0 %v9405
  %9509 = vmatprep.subr.bf16.mxu0 %v9410
  %9510 = vmatpush1.bf16.msra.mxu0 %v9409
  %9511 = vmatprep.subr.bf16.mxu0 %v9414
  %9512 = vmatpush1.bf16.msra.mxu0 %v9413
  %9513 = vmatprep.mubr.bf16.mxu0 %v6128
  %9514 = vmatmul.mubr.bf16.gmra.mrb[0].mxu0 %v6127
  %v9515 = vpop.f32.mrb[0].mxu0
  %v9516 = vadd.f32 %v7161, %v9515
  %v9517 = vpop.f32.mrb[0].mxu0
  %v9518 = vadd.f32 %v7163, %v9517
  %v9519 = vpop.f32.mrb[0].mxu0
  %v9520 = vadd.f32 %v7165, %v9519
  %v9521 = vpop.f32.mrb[0].mxu0
  %v9522 = vadd.f32 %v7167, %v9521
  %9523 = vdwg.mxu0
  %9524 = vmatprep.subr.bf16.mxu0 %v9356
  %9525 = vmatpush1.bf16.msra.mxu0 %v9355
  %9526 = vmatprep.subr.bf16.mxu0 %v9360
  %9527 = vmatpush1.bf16.msra.mxu0 %v9359
  %9528 = vmatprep.subr.bf16.mxu0 %v9364
  %9529 = vmatpush1.bf16.msra.mxu0 %v9363
  %9530 = vmatprep.subr.bf16.mxu0 %v9368
  %9531 = vmatpush1.bf16.msra.mxu0 %v9367
  %9532 = vmatprep.subr.bf16.mxu0 %v9372
  %9533 = vmatpush1.bf16.msra.mxu0 %v9371
  %9534 = vmatprep.subr.bf16.mxu0 %v9376
  %9535 = vmatpush1.bf16.msra.mxu0 %v9375
  %9536 = vmatprep.subr.bf16.mxu0 %v9380
  %9537 = vmatpush1.bf16.msra.mxu0 %v9379
  %9538 = vmatprep.subr.bf16.mxu0 %v9384
  %9539 = vmatpush1.bf16.msra.mxu0 %v9383
  %9540 = vmatprep.subr.bf16.mxu0 %v9388
  %9541 = vmatpush1.bf16.msra.mxu0 %v9387
  %9542 = vmatprep.subr.bf16.mxu0 %v9392
  %9543 = vmatpush1.bf16.msra.mxu0 %v9391
  %9544 = vmatprep.subr.bf16.mxu0 %v9396
  %9545 = vmatpush1.bf16.msra.mxu0 %v9395
  %9546 = vmatprep.subr.bf16.mxu0 %v9400
  %9547 = vmatpush1.bf16.msra.mxu0 %v9399
  %9548 = vmatprep.subr.bf16.mxu0 %v9404
  %9549 = vmatpush1.bf16.msra.mxu0 %v9403
  %9550 = vmatprep.subr.bf16.mxu0 %v9408
  %9551 = vmatpush1.bf16.msra.mxu0 %v9407
  %9552 = vmatprep.subr.bf16.mxu0 %v9412
  %9553 = vmatpush1.bf16.msra.mxu0 %v9411
  %9554 = vmatprep.subr.bf16.mxu0 %v9416
  %9555 = vmatpush1.bf16.msra.mxu0 %v9415
  %9556 = vmatprep.mubr.bf16.mxu0 %v6128
  %9557 = vmatmul.mubr.bf16.gmra.mrb[0].mxu0 %v6127
  %v9558 = vpop.f32.mrb[0].mxu0
  %v9559 = vadd.f32 %v7204, %v9558
  %v9560 = vpop.f32.mrb[0].mxu0
  %v9561 = vadd.f32 %v7206, %v9560
  %v9562 = vpop.f32.mrb[0].mxu0
  %v9563 = vadd.f32 %v7208, %v9562
  %v9564 = vpop.f32.mrb[0].mxu0
  %v9565 = vadd.f32 %v7210, %v9564
  %9566 = vdwg.mxu0
  %v9631 = vunpack.c.l.b16 %v7213
  %v9632 = vunpack.c.h.b16 %v7213
  %v9633 = vunpack.c.l.b16 %v7214
  %v9634 = vunpack.c.h.b16 %v7214
  %v9635 = vunpack.c.l.b16 %v7215
  %v9636 = vunpack.c.h.b16 %v7215
  %v9637 = vunpack.c.l.b16 %v7216
  %v9638 = vunpack.c.h.b16 %v7216
  %v9639 = vunpack.c.l.b16 %v7217
  %v9640 = vunpack.c.h.b16 %v7217
  %v9641 = vunpack.c.l.b16 %v7218
  %v9642 = vunpack.c.h.b16 %v7218
  %v9643 = vunpack.c.l.b16 %v7219
  %v9644 = vunpack.c.h.b16 %v7219
  %v9645 = vunpack.c.l.b16 %v7220
  %v9646 = vunpack.c.h.b16 %v7220
  %v9647 = vunpack.c.l.b16 %v7221
  %v9648 = vunpack.c.h.b16 %v7221
  %v9649 = vunpack.c.l.b16 %v7222
  %v9650 = vunpack.c.h.b16 %v7222
  %v9651 = vunpack.c.l.b16 %v7223
  %v9652 = vunpack.c.h.b16 %v7223
  %v9653 = vunpack.c.l.b16 %v7224
  %v9654 = vunpack.c.h.b16 %v7224
  %v9655 = vunpack.c.l.b16 %v7225
  %v9656 = vunpack.c.h.b16 %v7225
  %v9657 = vunpack.c.l.b16 %v7226
  %v9658 = vunpack.c.h.b16 %v7226
  %v9659 = vunpack.c.l.b16 %v7227
  %v9660 = vunpack.c.h.b16 %v7227
  %v9661 = vunpack.c.l.b16 %v7228
  %v9662 = vunpack.c.h.b16 %v7228
  %v9663 = vunpack.c.l.b16 %v7229
  %v9664 = vunpack.c.h.b16 %v7229
  %v9665 = vunpack.c.l.b16 %v7230
  %v9666 = vunpack.c.h.b16 %v7230
  %v9667 = vunpack.c.l.b16 %v7231
  %v9668 = vunpack.c.h.b16 %v7231
  %v9669 = vunpack.c.l.b16 %v7232
  %v9670 = vunpack.c.h.b16 %v7232
  %v9671 = vunpack.c.l.b16 %v7233
  %v9672 = vunpack.c.h.b16 %v7233
  %v9673 = vunpack.c.l.b16 %v7234
  %v9674 = vunpack.c.h.b16 %v7234
  %v9675 = vunpack.c.l.b16 %v7235
  %v9676 = vunpack.c.h.b16 %v7235
  %v9677 = vunpack.c.l.b16 %v7236
  %v9678 = vunpack.c.h.b16 %v7236
  %v9679 = vunpack.c.l.b16 %v7237
  %v9680 = vunpack.c.h.b16 %v7237
  %v9681 = vunpack.c.l.b16 %v7238
  %v9682 = vunpack.c.h.b16 %v7238
  %v9683 = vunpack.c.l.b16 %v7239
  %v9684 = vunpack.c.h.b16 %v7239
  %v9685 = vunpack.c.l.b16 %v7240
  %v9686 = vunpack.c.h.b16 %v7240
  %v9687 = vunpack.c.l.b16 %v7241
  %v9688 = vunpack.c.h.b16 %v7241
  %v9689 = vunpack.c.l.b16 %v7242
  %v9690 = vunpack.c.h.b16 %v7242
  %v9691 = vunpack.c.l.b16 %v7243
  %v9692 = vunpack.c.h.b16 %v7243
  %v9693 = vunpack.c.l.b16 %v7244
  %v9694 = vunpack.c.h.b16 %v7244
  %v9695 = vunpack.c.l.b16 %v7245
  %v9696 = vunpack.c.h.b16 %v7245
  %v9697 = vunpack.c.l.b16 %v7246
  %v9698 = vunpack.c.h.b16 %v7246
  %v9699 = vunpack.c.l.b16 %v7247
  %v9700 = vunpack.c.h.b16 %v7247
  %v9701 = vunpack.c.l.b16 %v7248
  %v9702 = vunpack.c.h.b16 %v7248
  %v9703 = vunpack.c.l.b16 %v7249
  %v9704 = vunpack.c.h.b16 %v7249
  %v9705 = vunpack.c.l.b16 %v7250
  %v9706 = vunpack.c.h.b16 %v7250
  %v9707 = vunpack.c.l.b16 %v7251
  %v9708 = vunpack.c.h.b16 %v7251
  %v9709 = vunpack.c.l.b16 %v7252
  %v9710 = vunpack.c.h.b16 %v7252
  %v9711 = vunpack.c.l.b16 %v7253
  %v9712 = vunpack.c.h.b16 %v7253
  %v9713 = vunpack.c.l.b16 %v7254
  %v9714 = vunpack.c.h.b16 %v7254
  %v9715 = vunpack.c.l.b16 %v7255
  %v9716 = vunpack.c.h.b16 %v7255
  %v9717 = vunpack.c.l.b16 %v7256
  %v9718 = vunpack.c.h.b16 %v7256
  %v9719 = vunpack.c.l.b16 %v7257
  %v9720 = vunpack.c.h.b16 %v7257
  %v9721 = vunpack.c.l.b16 %v7258
  %v9722 = vunpack.c.h.b16 %v7258
  %v9723 = vunpack.c.l.b16 %v7259
  %v9724 = vunpack.c.h.b16 %v7259
  %v9725 = vunpack.c.l.b16 %v7260
  %v9726 = vunpack.c.h.b16 %v7260
  %v9727 = vunpack.c.l.b16 %v7261
  %v9728 = vunpack.c.h.b16 %v7261
  %v9729 = vunpack.c.l.b16 %v7262
  %v9730 = vunpack.c.h.b16 %v7262
  %v9731 = vunpack.c.l.b16 %v7263
  %v9732 = vunpack.c.h.b16 %v7263
  %v9733 = vunpack.c.l.b16 %v7264
  %v9734 = vunpack.c.h.b16 %v7264
  %v9735 = vunpack.c.l.b16 %v7265
  %v9736 = vunpack.c.h.b16 %v7265
  %v9737 = vunpack.c.l.b16 %v7266
  %v9738 = vunpack.c.h.b16 %v7266
  %v9739 = vunpack.c.l.b16 %v7267
  %v9740 = vunpack.c.h.b16 %v7267
  %v9741 = vunpack.c.l.b16 %v7268
  %v9742 = vunpack.c.h.b16 %v7268
  %v9743 = vunpack.c.l.b16 %v7269
  %v9744 = vunpack.c.h.b16 %v7269
  %v9745 = vunpack.c.l.b16 %v7270
  %v9746 = vunpack.c.h.b16 %v7270
  %v9747 = vunpack.c.l.b16 %v7271
  %v9748 = vunpack.c.h.b16 %v7271
  %v9749 = vunpack.c.l.b16 %v7272
  %v9750 = vunpack.c.h.b16 %v7272
  %v9751 = vunpack.c.l.b16 %v7273
  %v9752 = vunpack.c.h.b16 %v7273
  %v9753 = vunpack.c.l.b16 %v7274
  %v9754 = vunpack.c.h.b16 %v7274
  %v9755 = vunpack.c.l.b16 %v7275
  %v9756 = vunpack.c.h.b16 %v7275
  %v9757 = vunpack.c.l.b16 %v7276
  %v9758 = vunpack.c.h.b16 %v7276
  %v9759 = vpack.c.b16 %v9635, %v9631
  %v9760 = vpack.c.b16 %v9636, %v9632
  %v9761 = vpack.c.b16 %v9637, %v9633
  %v9762 = vpack.c.b16 %v9638, %v9634
  %v9763 = vpack.c.b16 %v9643, %v9639
  %v9764 = vpack.c.b16 %v9644, %v9640
  %v9765 = vpack.c.b16 %v9645, %v9641
  %v9766 = vpack.c.b16 %v9646, %v9642
  %v9767 = vpack.c.b16 %v9651, %v9647
  %v9768 = vpack.c.b16 %v9652, %v9648
  %v9769 = vpack.c.b16 %v9653, %v9649
  %v9770 = vpack.c.b16 %v9654, %v9650
  %v9771 = vpack.c.b16 %v9659, %v9655
  %v9772 = vpack.c.b16 %v9660, %v9656
  %v9773 = vpack.c.b16 %v9661, %v9657
  %v9774 = vpack.c.b16 %v9662, %v9658
  %v9775 = vpack.c.b16 %v9667, %v9663
  %v9776 = vpack.c.b16 %v9668, %v9664
  %v9777 = vpack.c.b16 %v9669, %v9665
  %v9778 = vpack.c.b16 %v9670, %v9666
  %v9779 = vpack.c.b16 %v9675, %v9671
  %v9780 = vpack.c.b16 %v9676, %v9672
  %v9781 = vpack.c.b16 %v9677, %v9673
  %v9782 = vpack.c.b16 %v9678, %v9674
  %v9783 = vpack.c.b16 %v9683, %v9679
  %v9784 = vpack.c.b16 %v9684, %v9680
  %v9785 = vpack.c.b16 %v9685, %v9681
  %v9786 = vpack.c.b16 %v9686, %v9682
  %v9787 = vpack.c.b16 %v9691, %v9687
  %v9788 = vpack.c.b16 %v9692, %v9688
  %v9789 = vpack.c.b16 %v9693, %v9689
  %v9790 = vpack.c.b16 %v9694, %v9690
  %v9791 = vpack.c.b16 %v9699, %v9695
  %v9792 = vpack.c.b16 %v9700, %v9696
  %v9793 = vpack.c.b16 %v9701, %v9697
  %v9794 = vpack.c.b16 %v9702, %v9698
  %v9795 = vpack.c.b16 %v9707, %v9703
  %v9796 = vpack.c.b16 %v9708, %v9704
  %v9797 = vpack.c.b16 %v9709, %v9705
  %v9798 = vpack.c.b16 %v9710, %v9706
  %v9799 = vpack.c.b16 %v9715, %v9711
  %v9800 = vpack.c.b16 %v9716, %v9712
  %v9801 = vpack.c.b16 %v9717, %v9713
  %v9802 = vpack.c.b16 %v9718, %v9714
  %v9803 = vpack.c.b16 %v9723, %v9719
  %v9804 = vpack.c.b16 %v9724, %v9720
  %v9805 = vpack.c.b16 %v9725, %v9721
  %v9806 = vpack.c.b16 %v9726, %v9722
  %v9807 = vpack.c.b16 %v9731, %v9727
  %v9808 = vpack.c.b16 %v9732, %v9728
  %v9809 = vpack.c.b16 %v9733, %v9729
  %v9810 = vpack.c.b16 %v9734, %v9730
  %v9811 = vpack.c.b16 %v9739, %v9735
  %v9812 = vpack.c.b16 %v9740, %v9736
  %v9813 = vpack.c.b16 %v9741, %v9737
  %v9814 = vpack.c.b16 %v9742, %v9738
  %v9815 = vpack.c.b16 %v9747, %v9743
  %v9816 = vpack.c.b16 %v9748, %v9744
  %v9817 = vpack.c.b16 %v9749, %v9745
  %v9818 = vpack.c.b16 %v9750, %v9746
  %v9819 = vpack.c.b16 %v9755, %v9751
  %v9820 = vpack.c.b16 %v9756, %v9752
  %v9821 = vpack.c.b16 %v9757, %v9753
  %v9822 = vpack.c.b16 %v9758, %v9754
  %9887 = vmatprep.subr.bf16.mxu0 %v9760
  %9888 = vmatpush1.bf16.msra.mxu0 %v9759
  %9889 = vmatprep.subr.bf16.mxu0 %v9764
  %9890 = vmatpush1.bf16.msra.mxu0 %v9763
  %9891 = vmatprep.subr.bf16.mxu0 %v9768
  %9892 = vmatpush1.bf16.msra.mxu0 %v9767
  %9893 = vmatprep.subr.bf16.mxu0 %v9772
  %9894 = vmatpush1.bf16.msra.mxu0 %v9771
  %9895 = vmatprep.subr.bf16.mxu0 %v9776
  %9896 = vmatpush1.bf16.msra.mxu0 %v9775
  %9897 = vmatprep.subr.bf16.mxu0 %v9780
  %9898 = vmatpush1.bf16.msra.mxu0 %v9779
  %9899 = vmatprep.subr.bf16.mxu0 %v9784
  %9900 = vmatpush1.bf16.msra.mxu0 %v9783
  %9901 = vmatprep.subr.bf16.mxu0 %v9788
  %9902 = vmatpush1.bf16.msra.mxu0 %v9787
  %9903 = vmatprep.subr.bf16.mxu0 %v9792
  %9904 = vmatpush1.bf16.msra.mxu0 %v9791
  %9905 = vmatprep.subr.bf16.mxu0 %v9796
  %9906 = vmatpush1.bf16.msra.mxu0 %v9795
  %9907 = vmatprep.subr.bf16.mxu0 %v9800
  %9908 = vmatpush1.bf16.msra.mxu0 %v9799
  %9909 = vmatprep.subr.bf16.mxu0 %v9804
  %9910 = vmatpush1.bf16.msra.mxu0 %v9803
  %9911 = vmatprep.subr.bf16.mxu0 %v9808
  %9912 = vmatpush1.bf16.msra.mxu0 %v9807
  %9913 = vmatprep.subr.bf16.mxu0 %v9812
  %9914 = vmatpush1.bf16.msra.mxu0 %v9811
  %9915 = vmatprep.subr.bf16.mxu0 %v9816
  %9916 = vmatpush1.bf16.msra.mxu0 %v9815
  %9917 = vmatprep.subr.bf16.mxu0 %v9820
  %9918 = vmatpush1.bf16.msra.mxu0 %v9819
  %9919 = vmatprep.mubr.bf16.mxu0 %v6132
  %9920 = vmatmul.mubr.bf16.gmra.mrb[0].mxu0 %v6131
  %v9921 = vpop.f32.mrb[0].mxu0
  %v9922 = vadd.f32 %v7697, %v9921
  %v9923 = vpop.f32.mrb[0].mxu0
  %v9924 = vadd.f32 %v7699, %v9923
  %v9925 = vpop.f32.mrb[0].mxu0
  %v9926 = vadd.f32 %v7701, %v9925
  %v9927 = vpop.f32.mrb[0].mxu0
  %v9928 = vadd.f32 %v7703, %v9927
  %9929 = vdwg.mxu0
  %9930 = vmatprep.subr.bf16.mxu0 %v9762
  %9931 = vmatpush1.bf16.msra.mxu0 %v9761
  %9932 = vmatprep.subr.bf16.mxu0 %v9766
  %9933 = vmatpush1.bf16.msra.mxu0 %v9765
  %9934 = vmatprep.subr.bf16.mxu0 %v9770
  %9935 = vmatpush1.bf16.msra.mxu0 %v9769
  %9936 = vmatprep.subr.bf16.mxu0 %v9774
  %9937 = vmatpush1.bf16.msra.mxu0 %v9773
  %9938 = vmatprep.subr.bf16.mxu0 %v9778
  %9939 = vmatpush1.bf16.msra.mxu0 %v9777
  %9940 = vmatprep.subr.bf16.mxu0 %v9782
  %9941 = vmatpush1.bf16.msra.mxu0 %v9781
  %9942 = vmatprep.subr.bf16.mxu0 %v9786
  %9943 = vmatpush1.bf16.msra.mxu0 %v9785
  %9944 = vmatprep.subr.bf16.mxu0 %v9790
  %9945 = vmatpush1.bf16.msra.mxu0 %v9789
  %9946 = vmatprep.subr.bf16.mxu0 %v9794
  %9947 = vmatpush1.bf16.msra.mxu0 %v9793
  %9948 = vmatprep.subr.bf16.mxu0 %v9798
  %9949 = vmatpush1.bf16.msra.mxu0 %v9797
  %9950 = vmatprep.subr.bf16.mxu0 %v9802
  %9951 = vmatpush1.bf16.msra.mxu0 %v9801
  %9952 = vmatprep.subr.bf16.mxu0 %v9806
  %9953 = vmatpush1.bf16.msra.mxu0 %v9805
  %9954 = vmatprep.subr.bf16.mxu0 %v9810
  %9955 = vmatpush1.bf16.msra.mxu0 %v9809
  %9956 = vmatprep.subr.bf16.mxu0 %v9814
  %9957 = vmatpush1.bf16.msra.mxu0 %v9813
  %9958 = vmatprep.subr.bf16.mxu0 %v9818
  %9959 = vmatpush1.bf16.msra.mxu0 %v9817
  %9960 = vmatprep.subr.bf16.mxu0 %v9822
  %9961 = vmatpush1.bf16.msra.mxu0 %v9821
  %9962 = vmatprep.mubr.bf16.mxu0 %v6132
  %9963 = vmatmul.mubr.bf16.gmra.mrb[0].mxu0 %v6131
  %v9964 = vpop.f32.mrb[0].mxu0
  %v9965 = vadd.f32 %v7740, %v9964
  %v9966 = vpop.f32.mrb[0].mxu0
  %v9967 = vadd.f32 %v7742, %v9966
  %v9968 = vpop.f32.mrb[0].mxu0
  %v9969 = vadd.f32 %v7744, %v9968
  %v9970 = vpop.f32.mrb[0].mxu0
  %v9971 = vadd.f32 %v7746, %v9970
  %9972 = vdwg.mxu0
  %v10037 = vunpack.c.l.b16 %v7749
  %v10038 = vunpack.c.h.b16 %v7749
  %v10039 = vunpack.c.l.b16 %v7750
  %v10040 = vunpack.c.h.b16 %v7750
  %v10041 = vunpack.c.l.b16 %v7751
  %v10042 = vunpack.c.h.b16 %v7751
  %v10043 = vunpack.c.l.b16 %v7752
  %v10044 = vunpack.c.h.b16 %v7752
  %v10045 = vunpack.c.l.b16 %v7753
  %v10046 = vunpack.c.h.b16 %v7753
  %v10047 = vunpack.c.l.b16 %v7754
  %v10048 = vunpack.c.h.b16 %v7754
  %v10049 = vunpack.c.l.b16 %v7755
  %v10050 = vunpack.c.h.b16 %v7755
  %v10051 = vunpack.c.l.b16 %v7756
  %v10052 = vunpack.c.h.b16 %v7756
  %v10053 = vunpack.c.l.b16 %v7757
  %v10054 = vunpack.c.h.b16 %v7757
  %v10055 = vunpack.c.l.b16 %v7758
  %v10056 = vunpack.c.h.b16 %v7758
  %v10057 = vunpack.c.l.b16 %v7759
  %v10058 = vunpack.c.h.b16 %v7759
  %v10059 = vunpack.c.l.b16 %v7760
  %v10060 = vunpack.c.h.b16 %v7760
  %v10061 = vunpack.c.l.b16 %v7761
  %v10062 = vunpack.c.h.b16 %v7761
  %v10063 = vunpack.c.l.b16 %v7762
  %v10064 = vunpack.c.h.b16 %v7762
  %v10065 = vunpack.c.l.b16 %v7763
  %v10066 = vunpack.c.h.b16 %v7763
  %v10067 = vunpack.c.l.b16 %v7764
  %v10068 = vunpack.c.h.b16 %v7764
  %v10069 = vunpack.c.l.b16 %v7765
  %v10070 = vunpack.c.h.b16 %v7765
  %v10071 = vunpack.c.l.b16 %v7766
  %v10072 = vunpack.c.h.b16 %v7766
  %v10073 = vunpack.c.l.b16 %v7767
  %v10074 = vunpack.c.h.b16 %v7767
  %v10075 = vunpack.c.l.b16 %v7768
  %v10076 = vunpack.c.h.b16 %v7768
  %v10077 = vunpack.c.l.b16 %v7769
  %v10078 = vunpack.c.h.b16 %v7769
  %v10079 = vunpack.c.l.b16 %v7770
  %v10080 = vunpack.c.h.b16 %v7770
  %v10081 = vunpack.c.l.b16 %v7771
  %v10082 = vunpack.c.h.b16 %v7771
  %v10083 = vunpack.c.l.b16 %v7772
  %v10084 = vunpack.c.h.b16 %v7772
  %v10085 = vunpack.c.l.b16 %v7773
  %v10086 = vunpack.c.h.b16 %v7773
  %v10087 = vunpack.c.l.b16 %v7774
  %v10088 = vunpack.c.h.b16 %v7774
  %v10089 = vunpack.c.l.b16 %v7775
  %v10090 = vunpack.c.h.b16 %v7775
  %v10091 = vunpack.c.l.b16 %v7776
  %v10092 = vunpack.c.h.b16 %v7776
  %v10093 = vunpack.c.l.b16 %v7777
  %v10094 = vunpack.c.h.b16 %v7777
  %v10095 = vunpack.c.l.b16 %v7778
  %v10096 = vunpack.c.h.b16 %v7778
  %v10097 = vunpack.c.l.b16 %v7779
  %v10098 = vunpack.c.h.b16 %v7779
  %v10099 = vunpack.c.l.b16 %v7780
  %v10100 = vunpack.c.h.b16 %v7780
  %v10101 = vunpack.c.l.b16 %v7781
  %v10102 = vunpack.c.h.b16 %v7781
  %v10103 = vunpack.c.l.b16 %v7782
  %v10104 = vunpack.c.h.b16 %v7782
  %v10105 = vunpack.c.l.b16 %v7783
  %v10106 = vunpack.c.h.b16 %v7783
  %v10107 = vunpack.c.l.b16 %v7784
  %v10108 = vunpack.c.h.b16 %v7784
  %v10109 = vunpack.c.l.b16 %v7785
  %v10110 = vunpack.c.h.b16 %v7785
  %v10111 = vunpack.c.l.b16 %v7786
  %v10112 = vunpack.c.h.b16 %v7786
  %v10113 = vunpack.c.l.b16 %v7787
  %v10114 = vunpack.c.h.b16 %v7787
  %v10115 = vunpack.c.l.b16 %v7788
  %v10116 = vunpack.c.h.b16 %v7788
  %v10117 = vunpack.c.l.b16 %v7789
  %v10118 = vunpack.c.h.b16 %v7789
  %v10119 = vunpack.c.l.b16 %v7790
  %v10120 = vunpack.c.h.b16 %v7790
  %v10121 = vunpack.c.l.b16 %v7791
  %v10122 = vunpack.c.h.b16 %v7791
  %v10123 = vunpack.c.l.b16 %v7792
  %v10124 = vunpack.c.h.b16 %v7792
  %v10125 = vunpack.c.l.b16 %v7793
  %v10126 = vunpack.c.h.b16 %v7793
  %v10127 = vunpack.c.l.b16 %v7794
  %v10128 = vunpack.c.h.b16 %v7794
  %v10129 = vunpack.c.l.b16 %v7795
  %v10130 = vunpack.c.h.b16 %v7795
  %v10131 = vunpack.c.l.b16 %v7796
  %v10132 = vunpack.c.h.b16 %v7796
  %v10133 = vunpack.c.l.b16 %v7797
  %v10134 = vunpack.c.h.b16 %v7797
  %v10135 = vunpack.c.l.b16 %v7798
  %v10136 = vunpack.c.h.b16 %v7798
  %v10137 = vunpack.c.l.b16 %v7799
  %v10138 = vunpack.c.h.b16 %v7799
  %v10139 = vunpack.c.l.b16 %v7800
  %v10140 = vunpack.c.h.b16 %v7800
  %v10141 = vunpack.c.l.b16 %v7801
  %v10142 = vunpack.c.h.b16 %v7801
  %v10143 = vunpack.c.l.b16 %v7802
  %v10144 = vunpack.c.h.b16 %v7802
  %v10145 = vunpack.c.l.b16 %v7803
  %v10146 = vunpack.c.h.b16 %v7803
  %v10147 = vunpack.c.l.b16 %v7804
  %v10148 = vunpack.c.h.b16 %v7804
  %v10149 = vunpack.c.l.b16 %v7805
  %v10150 = vunpack.c.h.b16 %v7805
  %v10151 = vunpack.c.l.b16 %v7806
  %v10152 = vunpack.c.h.b16 %v7806
  %v10153 = vunpack.c.l.b16 %v7807
  %v10154 = vunpack.c.h.b16 %v7807
  %v10155 = vunpack.c.l.b16 %v7808
  %v10156 = vunpack.c.h.b16 %v7808
  %v10157 = vunpack.c.l.b16 %v7809
  %v10158 = vunpack.c.h.b16 %v7809
  %v10159 = vunpack.c.l.b16 %v7810
  %v10160 = vunpack.c.h.b16 %v7810
  %v10161 = vunpack.c.l.b16 %v7811
  %v10162 = vunpack.c.h.b16 %v7811
  %v10163 = vunpack.c.l.b16 %v7812
  %v10164 = vunpack.c.h.b16 %v7812
  %v10165 = vpack.c.b16 %v10041, %v10037
  %v10166 = vpack.c.b16 %v10042, %v10038
  %v10167 = vpack.c.b16 %v10043, %v10039
  %v10168 = vpack.c.b16 %v10044, %v10040
  %v10169 = vpack.c.b16 %v10049, %v10045
  %v10170 = vpack.c.b16 %v10050, %v10046
  %v10171 = vpack.c.b16 %v10051, %v10047
  %v10172 = vpack.c.b16 %v10052, %v10048
  %v10173 = vpack.c.b16 %v10057, %v10053
  %v10174 = vpack.c.b16 %v10058, %v10054
  %v10175 = vpack.c.b16 %v10059, %v10055
  %v10176 = vpack.c.b16 %v10060, %v10056
  %v10177 = vpack.c.b16 %v10065, %v10061
  %v10178 = vpack.c.b16 %v10066, %v10062
  %v10179 = vpack.c.b16 %v10067, %v10063
  %v10180 = vpack.c.b16 %v10068, %v10064
  %v10181 = vpack.c.b16 %v10073, %v10069
  %v10182 = vpack.c.b16 %v10074, %v10070
  %v10183 = vpack.c.b16 %v10075, %v10071
  %v10184 = vpack.c.b16 %v10076, %v10072
  %v10185 = vpack.c.b16 %v10081, %v10077
  %v10186 = vpack.c.b16 %v10082, %v10078
  %v10187 = vpack.c.b16 %v10083, %v10079
  %v10188 = vpack.c.b16 %v10084, %v10080
  %v10189 = vpack.c.b16 %v10089, %v10085
  %v10190 = vpack.c.b16 %v10090, %v10086
  %v10191 = vpack.c.b16 %v10091, %v10087
  %v10192 = vpack.c.b16 %v10092, %v10088
  %v10193 = vpack.c.b16 %v10097, %v10093
  %v10194 = vpack.c.b16 %v10098, %v10094
  %v10195 = vpack.c.b16 %v10099, %v10095
  %v10196 = vpack.c.b16 %v10100, %v10096
  %v10197 = vpack.c.b16 %v10105, %v10101
  %v10198 = vpack.c.b16 %v10106, %v10102
  %v10199 = vpack.c.b16 %v10107, %v10103
  %v10200 = vpack.c.b16 %v10108, %v10104
  %v10201 = vpack.c.b16 %v10113, %v10109
  %v10202 = vpack.c.b16 %v10114, %v10110
  %v10203 = vpack.c.b16 %v10115, %v10111
  %v10204 = vpack.c.b16 %v10116, %v10112
  %v10205 = vpack.c.b16 %v10121, %v10117
  %v10206 = vpack.c.b16 %v10122, %v10118
  %v10207 = vpack.c.b16 %v10123, %v10119
  %v10208 = vpack.c.b16 %v10124, %v10120
  %v10209 = vpack.c.b16 %v10129, %v10125
  %v10210 = vpack.c.b16 %v10130, %v10126
  %v10211 = vpack.c.b16 %v10131, %v10127
  %v10212 = vpack.c.b16 %v10132, %v10128
  %v10213 = vpack.c.b16 %v10137, %v10133
  %v10214 = vpack.c.b16 %v10138, %v10134
  %v10215 = vpack.c.b16 %v10139, %v10135
  %v10216 = vpack.c.b16 %v10140, %v10136
  %v10217 = vpack.c.b16 %v10145, %v10141
  %v10218 = vpack.c.b16 %v10146, %v10142
  %v10219 = vpack.c.b16 %v10147, %v10143
  %v10220 = vpack.c.b16 %v10148, %v10144
  %v10221 = vpack.c.b16 %v10153, %v10149
  %v10222 = vpack.c.b16 %v10154, %v10150
  %v10223 = vpack.c.b16 %v10155, %v10151
  %v10224 = vpack.c.b16 %v10156, %v10152
  %v10225 = vpack.c.b16 %v10161, %v10157
  %v10226 = vpack.c.b16 %v10162, %v10158
  %v10227 = vpack.c.b16 %v10163, %v10159
  %v10228 = vpack.c.b16 %v10164, %v10160
  %10293 = vmatprep.subr.bf16.mxu0 %v10166
  %10294 = vmatpush1.bf16.msra.mxu0 %v10165
  %10295 = vmatprep.subr.bf16.mxu0 %v10170
  %10296 = vmatpush1.bf16.msra.mxu0 %v10169
  %10297 = vmatprep.subr.bf16.mxu0 %v10174
  %10298 = vmatpush1.bf16.msra.mxu0 %v10173
  %10299 = vmatprep.subr.bf16.mxu0 %v10178
  %10300 = vmatpush1.bf16.msra.mxu0 %v10177
  %10301 = vmatprep.subr.bf16.mxu0 %v10182
  %10302 = vmatpush1.bf16.msra.mxu0 %v10181
  %10303 = vmatprep.subr.bf16.mxu0 %v10186
  %10304 = vmatpush1.bf16.msra.mxu0 %v10185
  %10305 = vmatprep.subr.bf16.mxu0 %v10190
  %10306 = vmatpush1.bf16.msra.mxu0 %v10189
  %10307 = vmatprep.subr.bf16.mxu0 %v10194
  %10308 = vmatpush1.bf16.msra.mxu0 %v10193
  %10309 = vmatprep.subr.bf16.mxu0 %v10198
  %10310 = vmatpush1.bf16.msra.mxu0 %v10197
  %10311 = vmatprep.subr.bf16.mxu0 %v10202
  %10312 = vmatpush1.bf16.msra.mxu0 %v10201
  %10313 = vmatprep.subr.bf16.mxu0 %v10206
  %10314 = vmatpush1.bf16.msra.mxu0 %v10205
  %10315 = vmatprep.subr.bf16.mxu0 %v10210
  %10316 = vmatpush1.bf16.msra.mxu0 %v10209
  %10317 = vmatprep.subr.bf16.mxu0 %v10214
  %10318 = vmatpush1.bf16.msra.mxu0 %v10213
  %10319 = vmatprep.subr.bf16.mxu0 %v10218
  %10320 = vmatpush1.bf16.msra.mxu0 %v10217
  %10321 = vmatprep.subr.bf16.mxu0 %v10222
  %10322 = vmatpush1.bf16.msra.mxu0 %v10221
  %10323 = vmatprep.subr.bf16.mxu0 %v10226
  %10324 = vmatpush1.bf16.msra.mxu0 %v10225
  %10325 = vmatprep.mubr.bf16.mxu0 %v6136
  %10326 = vmatmul.mubr.bf16.gmra.mrb[0].mxu0 %v6135
  %v10327 = vpop.f32.mrb[0].mxu0
  %v10328 = vadd.f32 %v8233, %v10327
  %v10329 = vpop.f32.mrb[0].mxu0
  %v10330 = vadd.f32 %v8235, %v10329
  %v10331 = vpop.f32.mrb[0].mxu0
  %v10332 = vadd.f32 %v8237, %v10331
  %v10333 = vpop.f32.mrb[0].mxu0
  %v10334 = vadd.f32 %v8239, %v10333
  %10335 = vdwg.mxu0
  %10336 = vmatprep.subr.bf16.mxu0 %v10168
  %10337 = vmatpush1.bf16.msra.mxu0 %v10167
  %10338 = vmatprep.subr.bf16.mxu0 %v10172
  %10339 = vmatpush1.bf16.msra.mxu0 %v10171
  %10340 = vmatprep.subr.bf16.mxu0 %v10176
  %10341 = vmatpush1.bf16.msra.mxu0 %v10175
  %10342 = vmatprep.subr.bf16.mxu0 %v10180
  %10343 = vmatpush1.bf16.msra.mxu0 %v10179
  %10344 = vmatprep.subr.bf16.mxu0 %v10184
  %10345 = vmatpush1.bf16.msra.mxu0 %v10183
  %10346 = vmatprep.subr.bf16.mxu0 %v10188
  %10347 = vmatpush1.bf16.msra.mxu0 %v10187
  %10348 = vmatprep.subr.bf16.mxu0 %v10192
  %10349 = vmatpush1.bf16.msra.mxu0 %v10191
  %10350 = vmatprep.subr.bf16.mxu0 %v10196
  %10351 = vmatpush1.bf16.msra.mxu0 %v10195
  %10352 = vmatprep.subr.bf16.mxu0 %v10200
  %10353 = vmatpush1.bf16.msra.mxu0 %v10199
  %10354 = vmatprep.subr.bf16.mxu0 %v10204
  %10355 = vmatpush1.bf16.msra.mxu0 %v10203
  %10356 = vmatprep.subr.bf16.mxu0 %v10208
  %10357 = vmatpush1.bf16.msra.mxu0 %v10207
  %10358 = vmatprep.subr.bf16.mxu0 %v10212
  %10359 = vmatpush1.bf16.msra.mxu0 %v10211
  %10360 = vmatprep.subr.bf16.mxu0 %v10216
  %10361 = vmatpush1.bf16.msra.mxu0 %v10215
  %10362 = vmatprep.subr.bf16.mxu0 %v10220
  %10363 = vmatpush1.bf16.msra.mxu0 %v10219
  %10364 = vmatprep.subr.bf16.mxu0 %v10224
  %10365 = vmatpush1.bf16.msra.mxu0 %v10223
  %10366 = vmatprep.subr.bf16.mxu0 %v10228
  %10367 = vmatpush1.bf16.msra.mxu0 %v10227
  %10368 = vmatprep.mubr.bf16.mxu0 %v6136
  %10369 = vmatmul.mubr.bf16.gmra.mrb[0].mxu0 %v6135
  %v10370 = vpop.f32.mrb[0].mxu0
  %v10371 = vadd.f32 %v8276, %v10370
  %v10372 = vpop.f32.mrb[0].mxu0
  %v10373 = vadd.f32 %v8278, %v10372
  %v10374 = vpop.f32.mrb[0].mxu0
  %v10375 = vadd.f32 %v8280, %v10374
  %v10376 = vpop.f32.mrb[0].mxu0
  %v10377 = vadd.f32 %v8282, %v10376
  %10378 = vdwg.mxu0
  %v10379 = vadd.f32 %v9110, %v9516
  %v10380 = vadd.f32 %v9112, %v9518
  %v10381 = vadd.f32 %v9153, %v9559
  %v10382 = vadd.f32 %v9155, %v9561
  %v10383 = vadd.f32 %v9114, %v9520
  %v10384 = vadd.f32 %v9116, %v9522
  %v10385 = vadd.f32 %v9157, %v9563
  %v10386 = vadd.f32 %v9159, %v9565
  %v10387 = vadd.f32 %v9922, %v10328
  %v10388 = vadd.f32 %v9924, %v10330
  %v10389 = vadd.f32 %v9965, %v10371
  %v10390 = vadd.f32 %v9967, %v10373
  %v10391 = vadd.f32 %v9926, %v10332
  %v10392 = vadd.f32 %v9928, %v10334
  %v10393 = vadd.f32 %v9969, %v10375
  %v10394 = vadd.f32 %v9971, %v10377
  %v10395 = vadd.f32 %v10379, %v10387
  %v10396 = vadd.f32 %v10380, %v10388
  %v10397 = vadd.f32 %v10381, %v10389
  %v10398 = vadd.f32 %v10382, %v10390
  %v10399 = vadd.f32 %v10383, %v10391
  %v10400 = vadd.f32 %v10384, %v10392
  %v10401 = vadd.f32 %v10385, %v10393
  %v10402 = vadd.f32 %v10386, %v10394
  %v10403 = vadd.f32 %v10395, %v8704
  %v10404 = vadd.f32 %v10396, %v8706
  %v10405 = vadd.f32 %v10397, %v8747
  %v10406 = vadd.f32 %v10398, %v8749
  %v10407 = vadd.f32 %v10399, %v8708
  %v10408 = vadd.f32 %v10400, %v8710
  %v10409 = vadd.f32 %v10401, %v8751
  %v10410 = vadd.f32 %v10402, %v8753
  %v10411 = vld [vmem:[%s6] sm:$0xf]
  %v10413 = vlaneseq
  %v10414 = vshrl.u32 %v10413, 7
  %v10415 = vsub.s32 0, %v10414
  %v10416 = vrot.slane %v10411, %v10415
  %v10417 = vlaneseq
  %v10418 = vshrl.u32 %v10417, 7
  %v10419 = vsub.s32 1, %v10418
  %v10420 = vrot.slane %v10411, %v10419
  %v10421 = vlaneseq
  %v10422 = vshrl.u32 %v10421, 7
  %v10423 = vsub.s32 2, %v10422
  %v10424 = vrot.slane %v10411, %v10423
  %v10425 = vlaneseq
  %v10426 = vshrl.u32 %v10425, 7
  %v10427 = vsub.s32 3, %v10426
  %v10428 = vrot.slane %v10411, %v10427
  %v10433 = vadd.f32 %v10403, %v10416
  %v10434 = vadd.f32 %v10404, %v10420
  %v10435 = vadd.f32 %v10405, %v10424
  %v10436 = vadd.f32 %v10406, %v10428
  %v10437 = vadd.f32 %v10407, %v10416
  %v10438 = vadd.f32 %v10408, %v10420
  %v10439 = vadd.f32 %v10409, %v10424
  %v10440 = vadd.f32 %v10410, %v10428
  %v10441 = vmax.f32 %v10433, 0.0
  %v10442 = vmax.f32 %v10434, 0.0
  %v10443 = vmax.f32 %v10435, 0.0
  %v10444 = vmax.f32 %v10436, 0.0
  %v10445 = vmax.f32 %v10437, 0.0
  %v10446 = vmax.f32 %v10438, 0.0
  %v10447 = vmax.f32 %v10439, 0.0
  %v10448 = vmax.f32 %v10440, 0.0
  %v10449 = vpack.c.bf16 %v10445, %v10441
  %v10450 = vpack.c.bf16 %v10446, %v10442
  %v10451 = vpack.c.bf16 %v10447, %v10443
  %v10452 = vpack.c.bf16 %v10448, %v10444
  %v10453 = vld [vmem:[%s7] sm:$0xff]
  %v10454 = vld [vmem:[%s7 + $0x8] sm:$0xff]
  %v10455 = vld [vmem:[%s7 + $0x10] sm:$0xff]
  %v10456 = vld [vmem:[%s7 + $0x18] sm:$0xff]
  %v10457 = vld [vmem:[%s7 + $0x20] sm:$0xff]
  %v10458 = vld [vmem:[%s7 + $0x28] sm:$0xff]
  %v10459 = vld [vmem:[%s7 + $0x30] sm:$0xff]
  %v10460 = vld [vmem:[%s7 + $0x38] sm:$0xff]
  %v10461 = vld [vmem:[%s7 + $0x40] sm:$0xff]
  %v10462 = vld [vmem:[%s7 + $0x48] sm:$0xff]
  %v10463 = vld [vmem:[%s7 + $0x50] sm:$0xff]
  %v10464 = vld [vmem:[%s7 + $0x58] sm:$0xff]
  %v10465 = vld [vmem:[%s7 + $0x60] sm:$0xff]
  %v10466 = vld [vmem:[%s7 + $0x68] sm:$0xff]
  %v10467 = vld [vmem:[%s7 + $0x70] sm:$0xff]
  %v10468 = vld [vmem:[%s7 + $0x78] sm:$0xff]
  %v10469 = vld [vmem:[%s7 + $0x80] sm:$0xff]
  %v10470 = vld [vmem:[%s7 + $0x88] sm:$0xff]
  %v10471 = vld [vmem:[%s7 + $0x90] sm:$0xff]
  %v10472 = vld [vmem:[%s7 + $0x98] sm:$0xff]
  %v10473 = vld [vmem:[%s7 + $0xa0] sm:$0xff]
  %v10474 = vld [vmem:[%s7 + $0xa8] sm:$0xff]
  %v10475 = vld [vmem:[%s7 + $0xb0] sm:$0xff]
  %v10476 = vld [vmem:[%s7 + $0xb8] sm:$0xff]
  %v10477 = vld [vmem:[%s7 + $0xc0] sm:$0xff]
  %v10478 = vld [vmem:[%s7 + $0xc8] sm:$0xff]
  %v10479 = vld [vmem:[%s7 + $0xd0] sm:$0xff]
  %v10480 = vld [vmem:[%s7 + $0xd8] sm:$0xff]
  %v10481 = vld [vmem:[%s7 + $0xe0] sm:$0xff]
  %v10482 = vld [vmem:[%s7 + $0xe8] sm:$0xff]
  %v10483 = vld [vmem:[%s7 + $0xf0] sm:$0xff]
  %v10484 = vld [vmem:[%s7 + $0xf8] sm:$0xff]
  %v10485 = vld [vmem:[%s7 + $0x100] sm:$0xff]
  %v10486 = vld [vmem:[%s7 + $0x108] sm:$0xff]
  %v10487 = vld [vmem:[%s7 + $0x110] sm:$0xff]
  %v10488 = vld [vmem:[%s7 + $0x118] sm:$0xff]
  %v10489 = vld [vmem:[%s7 + $0x120] sm:$0xff]
  %v10490 = vld [vmem:[%s7 + $0x128] sm:$0xff]
  %v10491 = vld [vmem:[%s7 + $0x130] sm:$0xff]
  %v10492 = vld [vmem:[%s7 + $0x138] sm:$0xff]
  %v10493 = vld [vmem:[%s7 + $0x140] sm:$0xff]
  %v10494 = vld [vmem:[%s7 + $0x148] sm:$0xff]
  %v10495 = vld [vmem:[%s7 + $0x150] sm:$0xff]
  %v10496 = vld [vmem:[%s7 + $0x158] sm:$0xff]
  %v10497 = vld [vmem:[%s7 + $0x160] sm:$0xff]
  %v10498 = vld [vmem:[%s7 + $0x168] sm:$0xff]
  %v10499 = vld [vmem:[%s7 + $0x170] sm:$0xff]
  %v10500 = vld [vmem:[%s7 + $0x178] sm:$0xff]
  %v10501 = vld [vmem:[%s7 + $0x180] sm:$0xff]
  %v10502 = vld [vmem:[%s7 + $0x188] sm:$0xff]
  %v10503 = vld [vmem:[%s7 + $0x190] sm:$0xff]
  %v10504 = vld [vmem:[%s7 + $0x198] sm:$0xff]
  %v10505 = vld [vmem:[%s7 + $0x1a0] sm:$0xff]
  %v10506 = vld [vmem:[%s7 + $0x1a8] sm:$0xff]
  %v10507 = vld [vmem:[%s7 + $0x1b0] sm:$0xff]
  %v10508 = vld [vmem:[%s7 + $0x1b8] sm:$0xff]
  %v10509 = vld [vmem:[%s7 + $0x1c0] sm:$0xff]
  %v10510 = vld [vmem:[%s7 + $0x1c8] sm:$0xff]
  %v10511 = vld [vmem:[%s7 + $0x1d0] sm:$0xff]
  %v10512 = vld [vmem:[%s7 + $0x1d8] sm:$0xff]
  %v10513 = vld [vmem:[%s7 + $0x1e0] sm:$0xff]
  %v10514 = vld [vmem:[%s7 + $0x1e8] sm:$0xff]
  %v10515 = vld [vmem:[%s7 + $0x1f0] sm:$0xff]
  %v10516 = vld [vmem:[%s7 + $0x1f8] sm:$0xff]
  %v10517 = vld [vmem:[%s8] sm:$0x3]
  %v10519 = vlaneseq
  %v10520 = vshrl.u32 %v10519, 7
  %v10521 = vsub.s32 0, %v10520
  %v10522 = vrot.slane %v10517, %v10521
  %v10523 = vlaneseq
  %v10524 = vshrl.u32 %v10523, 7
  %v10525 = vsub.s32 1, %v10524
  %v10526 = vrot.slane %v10517, %v10525
  %v10593 = vunpack.c.l.b16 %v10453
  %v10594 = vunpack.c.h.b16 %v10453
  %v10595 = vunpack.c.l.b16 %v10454
  %v10596 = vunpack.c.h.b16 %v10454
  %v10597 = vunpack.c.l.b16 %v10455
  %v10598 = vunpack.c.h.b16 %v10455
  %v10599 = vunpack.c.l.b16 %v10456
  %v10600 = vunpack.c.h.b16 %v10456
  %v10601 = vunpack.c.l.b16 %v10457
  %v10602 = vunpack.c.h.b16 %v10457
  %v10603 = vunpack.c.l.b16 %v10458
  %v10604 = vunpack.c.h.b16 %v10458
  %v10605 = vunpack.c.l.b16 %v10459
  %v10606 = vunpack.c.h.b16 %v10459
  %v10607 = vunpack.c.l.b16 %v10460
  %v10608 = vunpack.c.h.b16 %v10460
  %v10609 = vunpack.c.l.b16 %v10461
  %v10610 = vunpack.c.h.b16 %v10461
  %v10611 = vunpack.c.l.b16 %v10462
  %v10612 = vunpack.c.h.b16 %v10462
  %v10613 = vunpack.c.l.b16 %v10463
  %v10614 = vunpack.c.h.b16 %v10463
  %v10615 = vunpack.c.l.b16 %v10464
  %v10616 = vunpack.c.h.b16 %v10464
  %v10617 = vunpack.c.l.b16 %v10465
  %v10618 = vunpack.c.h.b16 %v10465
  %v10619 = vunpack.c.l.b16 %v10466
  %v10620 = vunpack.c.h.b16 %v10466
  %v10621 = vunpack.c.l.b16 %v10467
  %v10622 = vunpack.c.h.b16 %v10467
  %v10623 = vunpack.c.l.b16 %v10468
  %v10624 = vunpack.c.h.b16 %v10468
  %v10625 = vunpack.c.l.b16 %v10469
  %v10626 = vunpack.c.h.b16 %v10469
  %v10627 = vunpack.c.l.b16 %v10470
  %v10628 = vunpack.c.h.b16 %v10470
  %v10629 = vunpack.c.l.b16 %v10471
  %v10630 = vunpack.c.h.b16 %v10471
  %v10631 = vunpack.c.l.b16 %v10472
  %v10632 = vunpack.c.h.b16 %v10472
  %v10633 = vunpack.c.l.b16 %v10473
  %v10634 = vunpack.c.h.b16 %v10473
  %v10635 = vunpack.c.l.b16 %v10474
  %v10636 = vunpack.c.h.b16 %v10474
  %v10637 = vunpack.c.l.b16 %v10475
  %v10638 = vunpack.c.h.b16 %v10475
  %v10639 = vunpack.c.l.b16 %v10476
  %v10640 = vunpack.c.h.b16 %v10476
  %v10641 = vunpack.c.l.b16 %v10477
  %v10642 = vunpack.c.h.b16 %v10477
  %v10643 = vunpack.c.l.b16 %v10478
  %v10644 = vunpack.c.h.b16 %v10478
  %v10645 = vunpack.c.l.b16 %v10479
  %v10646 = vunpack.c.h.b16 %v10479
  %v10647 = vunpack.c.l.b16 %v10480
  %v10648 = vunpack.c.h.b16 %v10480
  %v10649 = vunpack.c.l.b16 %v10481
  %v10650 = vunpack.c.h.b16 %v10481
  %v10651 = vunpack.c.l.b16 %v10482
  %v10652 = vunpack.c.h.b16 %v10482
  %v10653 = vunpack.c.l.b16 %v10483
  %v10654 = vunpack.c.h.b16 %v10483
  %v10655 = vunpack.c.l.b16 %v10484
  %v10656 = vunpack.c.h.b16 %v10484
  %v10657 = vunpack.c.l.b16 %v10485
  %v10658 = vunpack.c.h.b16 %v10485
  %v10659 = vunpack.c.l.b16 %v10486
  %v10660 = vunpack.c.h.b16 %v10486
  %v10661 = vunpack.c.l.b16 %v10487
  %v10662 = vunpack.c.h.b16 %v10487
  %v10663 = vunpack.c.l.b16 %v10488
  %v10664 = vunpack.c.h.b16 %v10488
  %v10665 = vunpack.c.l.b16 %v10489
  %v10666 = vunpack.c.h.b16 %v10489
  %v10667 = vunpack.c.l.b16 %v10490
  %v10668 = vunpack.c.h.b16 %v10490
  %v10669 = vunpack.c.l.b16 %v10491
  %v10670 = vunpack.c.h.b16 %v10491
  %v10671 = vunpack.c.l.b16 %v10492
  %v10672 = vunpack.c.h.b16 %v10492
  %v10673 = vunpack.c.l.b16 %v10493
  %v10674 = vunpack.c.h.b16 %v10493
  %v10675 = vunpack.c.l.b16 %v10494
  %v10676 = vunpack.c.h.b16 %v10494
  %v10677 = vunpack.c.l.b16 %v10495
  %v10678 = vunpack.c.h.b16 %v10495
  %v10679 = vunpack.c.l.b16 %v10496
  %v10680 = vunpack.c.h.b16 %v10496
  %v10681 = vunpack.c.l.b16 %v10497
  %v10682 = vunpack.c.h.b16 %v10497
  %v10683 = vunpack.c.l.b16 %v10498
  %v10684 = vunpack.c.h.b16 %v10498
  %v10685 = vunpack.c.l.b16 %v10499
  %v10686 = vunpack.c.h.b16 %v10499
  %v10687 = vunpack.c.l.b16 %v10500
  %v10688 = vunpack.c.h.b16 %v10500
  %v10689 = vunpack.c.l.b16 %v10501
  %v10690 = vunpack.c.h.b16 %v10501
  %v10691 = vunpack.c.l.b16 %v10502
  %v10692 = vunpack.c.h.b16 %v10502
  %v10693 = vunpack.c.l.b16 %v10503
  %v10694 = vunpack.c.h.b16 %v10503
  %v10695 = vunpack.c.l.b16 %v10504
  %v10696 = vunpack.c.h.b16 %v10504
  %v10697 = vunpack.c.l.b16 %v10505
  %v10698 = vunpack.c.h.b16 %v10505
  %v10699 = vunpack.c.l.b16 %v10506
  %v10700 = vunpack.c.h.b16 %v10506
  %v10701 = vunpack.c.l.b16 %v10507
  %v10702 = vunpack.c.h.b16 %v10507
  %v10703 = vunpack.c.l.b16 %v10508
  %v10704 = vunpack.c.h.b16 %v10508
  %v10705 = vunpack.c.l.b16 %v10509
  %v10706 = vunpack.c.h.b16 %v10509
  %v10707 = vunpack.c.l.b16 %v10510
  %v10708 = vunpack.c.h.b16 %v10510
  %v10709 = vunpack.c.l.b16 %v10511
  %v10710 = vunpack.c.h.b16 %v10511
  %v10711 = vunpack.c.l.b16 %v10512
  %v10712 = vunpack.c.h.b16 %v10512
  %v10713 = vunpack.c.l.b16 %v10513
  %v10714 = vunpack.c.h.b16 %v10513
  %v10715 = vunpack.c.l.b16 %v10514
  %v10716 = vunpack.c.h.b16 %v10514
  %v10717 = vunpack.c.l.b16 %v10515
  %v10718 = vunpack.c.h.b16 %v10515
  %v10719 = vunpack.c.l.b16 %v10516
  %v10720 = vunpack.c.h.b16 %v10516
  %v10721 = vpack.c.b16 %v10595, %v10593
  %v10722 = vpack.c.b16 %v10596, %v10594
  %v10723 = vpack.c.b16 %v10599, %v10597
  %v10724 = vpack.c.b16 %v10600, %v10598
  %v10725 = vpack.c.b16 %v10603, %v10601
  %v10726 = vpack.c.b16 %v10604, %v10602
  %v10727 = vpack.c.b16 %v10607, %v10605
  %v10728 = vpack.c.b16 %v10608, %v10606
  %v10729 = vpack.c.b16 %v10611, %v10609
  %v10730 = vpack.c.b16 %v10612, %v10610
  %v10731 = vpack.c.b16 %v10615, %v10613
  %v10732 = vpack.c.b16 %v10616, %v10614
  %v10733 = vpack.c.b16 %v10619, %v10617
  %v10734 = vpack.c.b16 %v10620, %v10618
  %v10735 = vpack.c.b16 %v10623, %v10621
  %v10736 = vpack.c.b16 %v10624, %v10622
  %v10737 = vpack.c.b16 %v10627, %v10625
  %v10738 = vpack.c.b16 %v10628, %v10626
  %v10739 = vpack.c.b16 %v10631, %v10629
  %v10740 = vpack.c.b16 %v10632, %v10630
  %v10741 = vpack.c.b16 %v10635, %v10633
  %v10742 = vpack.c.b16 %v10636, %v10634
  %v10743 = vpack.c.b16 %v10639, %v10637
  %v10744 = vpack.c.b16 %v10640, %v10638
  %v10745 = vpack.c.b16 %v10643, %v10641
  %v10746 = vpack.c.b16 %v10644, %v10642
  %v10747 = vpack.c.b16 %v10647, %v10645
  %v10748 = vpack.c.b16 %v10648, %v10646
  %v10749 = vpack.c.b16 %v10651, %v10649
  %v10750 = vpack.c.b16 %v10652, %v10650
  %v10751 = vpack.c.b16 %v10655, %v10653
  %v10752 = vpack.c.b16 %v10656, %v10654
  %v10753 = vpack.c.b16 %v10659, %v10657
  %v10754 = vpack.c.b16 %v10660, %v10658
  %v10755 = vpack.c.b16 %v10663, %v10661
  %v10756 = vpack.c.b16 %v10664, %v10662
  %v10757 = vpack.c.b16 %v10667, %v10665
  %v10758 = vpack.c.b16 %v10668, %v10666
  %v10759 = vpack.c.b16 %v10671, %v10669
  %v10760 = vpack.c.b16 %v10672, %v10670
  %v10761 = vpack.c.b16 %v10675, %v10673
  %v10762 = vpack.c.b16 %v10676, %v10674
  %v10763 = vpack.c.b16 %v10679, %v10677
  %v10764 = vpack.c.b16 %v10680, %v10678
  %v10765 = vpack.c.b16 %v10683, %v10681
  %v10766 = vpack.c.b16 %v10684, %v10682
  %v10767 = vpack.c.b16 %v10687, %v10685
  %v10768 = vpack.c.b16 %v10688, %v10686
  %v10769 = vpack.c.b16 %v10691, %v10689
  %v10770 = vpack.c.b16 %v10692, %v10690
  %v10771 = vpack.c.b16 %v10695, %v10693
  %v10772 = vpack.c.b16 %v10696, %v10694
  %v10773 = vpack.c.b16 %v10699, %v10697
  %v10774 = vpack.c.b16 %v10700, %v10698
  %v10775 = vpack.c.b16 %v10703, %v10701
  %v10776 = vpack.c.b16 %v10704, %v10702
  %v10777 = vpack.c.b16 %v10707, %v10705
  %v10778 = vpack.c.b16 %v10708, %v10706
  %v10779 = vpack.c.b16 %v10711, %v10709
  %v10780 = vpack.c.b16 %v10712, %v10710
  %v10781 = vpack.c.b16 %v10715, %v10713
  %v10782 = vpack.c.b16 %v10716, %v10714
  %v10783 = vpack.c.b16 %v10719, %v10717
  %v10784 = vpack.c.b16 %v10720, %v10718
  %10849 = vmatprep.subr.bf16.mxu0 %v10722
  %10850 = vmatpush1.bf16.msra.mxu0 %v10721
  %10851 = vmatprep.subr.bf16.mxu0 %v10724
  %10852 = vmatpush1.bf16.msra.mxu0 %v10723
  %10853 = vmatprep.subr.bf16.mxu0 %v10726
  %10854 = vmatpush1.bf16.msra.mxu0 %v10725
  %10855 = vmatprep.subr.bf16.mxu0 %v10728
  %10856 = vmatpush1.bf16.msra.mxu0 %v10727
  %10857 = vmatprep.subr.bf16.mxu0 %v10730
  %10858 = vmatpush1.bf16.msra.mxu0 %v10729
  %10859 = vmatprep.subr.bf16.mxu0 %v10732
  %10860 = vmatpush1.bf16.msra.mxu0 %v10731
  %10861 = vmatprep.subr.bf16.mxu0 %v10734
  %10862 = vmatpush1.bf16.msra.mxu0 %v10733
  %10863 = vmatprep.subr.bf16.mxu0 %v10736
  %10864 = vmatpush1.bf16.msra.mxu0 %v10735
  %10865 = vmatprep.subr.bf16.mxu0 %v10738
  %10866 = vmatpush1.bf16.msra.mxu0 %v10737
  %10867 = vmatprep.subr.bf16.mxu0 %v10740
  %10868 = vmatpush1.bf16.msra.mxu0 %v10739
  %10869 = vmatprep.subr.bf16.mxu0 %v10742
  %10870 = vmatpush1.bf16.msra.mxu0 %v10741
  %10871 = vmatprep.subr.bf16.mxu0 %v10744
  %10872 = vmatpush1.bf16.msra.mxu0 %v10743
  %10873 = vmatprep.subr.bf16.mxu0 %v10746
  %10874 = vmatpush1.bf16.msra.mxu0 %v10745
  %10875 = vmatprep.subr.bf16.mxu0 %v10748
  %10876 = vmatpush1.bf16.msra.mxu0 %v10747
  %10877 = vmatprep.subr.bf16.mxu0 %v10750
  %10878 = vmatpush1.bf16.msra.mxu0 %v10749
  %10879 = vmatprep.subr.bf16.mxu0 %v10752
  %10880 = vmatpush1.bf16.msra.mxu0 %v10751
  %10881 = vmatprep.mubr.bf16.mxu0 %v10450
  %10882 = vmatmul.mubr.bf16.gmra.mrb[0].mxu0 %v10449
  %v10883 = vpop.f32.mrb[0].mxu0
  %v10884 = vadd.f32 %v10522, %v10883
  %v10885 = vpop.f32.mrb[0].mxu0
  %v10886 = vadd.f32 %v10526, %v10885
  %v10887 = vpop.f32.mrb[0].mxu0
  %v10888 = vadd.f32 %v10522, %v10887
  %v10889 = vpop.f32.mrb[0].mxu0
  %v10890 = vadd.f32 %v10526, %v10889
  %10891 = vdwg.mxu0
  %10892 = vmatprep.subr.bf16.mxu0 %v10754
  %10893 = vmatpush1.bf16.msra.mxu0 %v10753
  %10894 = vmatprep.subr.bf16.mxu0 %v10756
  %10895 = vmatpush1.bf16.msra.mxu0 %v10755
  %10896 = vmatprep.subr.bf16.mxu0 %v10758
  %10897 = vmatpush1.bf16.msra.mxu0 %v10757
  %10898 = vmatprep.subr.bf16.mxu0 %v10760
  %10899 = vmatpush1.bf16.msra.mxu0 %v10759
  %10900 = vmatprep.subr.bf16.mxu0 %v10762
  %10901 = vmatpush1.bf16.msra.mxu0 %v10761
  %10902 = vmatprep.subr.bf16.mxu0 %v10764
  %10903 = vmatpush1.bf16.msra.mxu0 %v10763
  %10904 = vmatprep.subr.bf16.mxu0 %v10766
  %10905 = vmatpush1.bf16.msra.mxu0 %v10765
  %10906 = vmatprep.subr.bf16.mxu0 %v10768
  %10907 = vmatpush1.bf16.msra.mxu0 %v10767
  %10908 = vmatprep.subr.bf16.mxu0 %v10770
  %10909 = vmatpush1.bf16.msra.mxu0 %v10769
  %10910 = vmatprep.subr.bf16.mxu0 %v10772
  %10911 = vmatpush1.bf16.msra.mxu0 %v10771
  %10912 = vmatprep.subr.bf16.mxu0 %v10774
  %10913 = vmatpush1.bf16.msra.mxu0 %v10773
  %10914 = vmatprep.subr.bf16.mxu0 %v10776
  %10915 = vmatpush1.bf16.msra.mxu0 %v10775
  %10916 = vmatprep.subr.bf16.mxu0 %v10778
  %10917 = vmatpush1.bf16.msra.mxu0 %v10777
  %10918 = vmatprep.subr.bf16.mxu0 %v10780
  %10919 = vmatpush1.bf16.msra.mxu0 %v10779
  %10920 = vmatprep.subr.bf16.mxu0 %v10782
  %10921 = vmatpush1.bf16.msra.mxu0 %v10781
  %10922 = vmatprep.subr.bf16.mxu0 %v10784
  %10923 = vmatpush1.bf16.msra.mxu0 %v10783
  %10924 = vmatprep.mubr.bf16.mxu0 %v10452
  %10925 = vmatmul.mubr.bf16.gmra.mrb[0].mxu0 %v10451
  %v10926 = vpop.f32.mrb[0].mxu0
  %v10927 = vadd.f32 %v10884, %v10926
  %v10928 = vpop.f32.mrb[0].mxu0
  %v10929 = vadd.f32 %v10886, %v10928
  %v10930 = vpop.f32.mrb[0].mxu0
  %v10931 = vadd.f32 %v10888, %v10930
  %v10932 = vpop.f32.mrb[0].mxu0
  %v10933 = vadd.f32 %v10890, %v10932
  %10934 = vdwg.mxu0
  %v10935 = vmax.f32 %v10927, 0.0
  %v10936 = vmax.f32 %v10929, 0.0
  %v10937 = vmax.f32 %v10931, 0.0
  %v10938 = vmax.f32 %v10933, 0.0
  %v10939 = vpack.c.bf16 %v10937, %v10935
  %v10940 = vpack.c.bf16 %v10938, %v10936
  %v10941 = vld [vmem:[%s9] sm:$0xf]
  %v10942 = vld [vmem:[%s9 + $0x4] sm:$0xf]
  %v10943 = vld [vmem:[%s9 + $0x8] sm:$0xf]
  %v10944 = vld [vmem:[%s9 + $0xc] sm:$0xf]
  %v10945 = vld [vmem:[%s9 + $0x10] sm:$0xf]
  %v10946 = vld [vmem:[%s9 + $0x14] sm:$0xf]
  %v10947 = vld [vmem:[%s9 + $0x18] sm:$0xf]
  %v10948 = vld [vmem:[%s9 + $0x1c] sm:$0xf]
  %v10949 = vld [vmem:[%s9 + $0x20] sm:$0xf]
  %v10950 = vld [vmem:[%s9 + $0x24] sm:$0xf]
  %v10951 = vld [vmem:[%s9 + $0x28] sm:$0xf]
  %v10952 = vld [vmem:[%s9 + $0x2c] sm:$0xf]
  %v10953 = vld [vmem:[%s9 + $0x30] sm:$0xf]
  %v10954 = vld [vmem:[%s9 + $0x34] sm:$0xf]
  %v10955 = vld [vmem:[%s9 + $0x38] sm:$0xf]
  %v10956 = vld [vmem:[%s9 + $0x3c] sm:$0xf]
  %v10957 = vld [vmem:[%s9 + $0x40] sm:$0xf]
  %v10958 = vld [vmem:[%s9 + $0x44] sm:$0xf]
  %v10959 = vld [vmem:[%s9 + $0x48] sm:$0xf]
  %v10960 = vld [vmem:[%s9 + $0x4c] sm:$0xf]
  %v10961 = vld [vmem:[%s9 + $0x50] sm:$0xf]
  %v10962 = vld [vmem:[%s9 + $0x54] sm:$0xf]
  %v10963 = vld [vmem:[%s9 + $0x58] sm:$0xf]
  %v10964 = vld [vmem:[%s9 + $0x5c] sm:$0xf]
  %v10965 = vld [vmem:[%s9 + $0x60] sm:$0xf]
  %v10966 = vld [vmem:[%s9 + $0x64] sm:$0xf]
  %v10967 = vld [vmem:[%s9 + $0x68] sm:$0xf]
  %v10968 = vld [vmem:[%s9 + $0x6c] sm:$0xf]
  %v10969 = vld [vmem:[%s9 + $0x70] sm:$0xf]
  %v10970 = vld [vmem:[%s9 + $0x74] sm:$0xf]
  %v10971 = vld [vmem:[%s9 + $0x78] sm:$0xf]
  %v10972 = vld [vmem:[%s9 + $0x7c] sm:$0xf]
  %v10973 = vld [vmem:[%s10] sm:$0x1]
  %v10975 = vlaneseq
  %v10976 = vshrl.u32 %v10975, 7
  %v10977 = vsub.s32 0, %v10976
  %v10978 = vrot.slane %v10973, %v10977
  %v11012 = vunpack.c.l.b16 %v10941
  %v11013 = vunpack.c.l.b16 %v10942
  %v11014 = vunpack.c.l.b16 %v10943
  %v11015 = vunpack.c.l.b16 %v10944
  %v11016 = vunpack.c.l.b16 %v10945
  %v11017 = vunpack.c.l.b16 %v10946
  %v11018 = vunpack.c.l.b16 %v10947
  %v11019 = vunpack.c.l.b16 %v10948
  %v11020 = vunpack.c.l.b16 %v10949
  %v11021 = vunpack.c.l.b16 %v10950
  %v11022 = vunpack.c.l.b16 %v10951
  %v11023 = vunpack.c.l.b16 %v10952
  %v11024 = vunpack.c.l.b16 %v10953
  %v11025 = vunpack.c.l.b16 %v10954
  %v11026 = vunpack.c.l.b16 %v10955
  %v11027 = vunpack.c.l.b16 %v10956
  %v11028 = vunpack.c.l.b16 %v10957
  %v11029 = vunpack.c.l.b16 %v10958
  %v11030 = vunpack.c.l.b16 %v10959
  %v11031 = vunpack.c.l.b16 %v10960
  %v11032 = vunpack.c.l.b16 %v10961
  %v11033 = vunpack.c.l.b16 %v10962
  %v11034 = vunpack.c.l.b16 %v10963
  %v11035 = vunpack.c.l.b16 %v10964
  %v11036 = vunpack.c.l.b16 %v10965
  %v11037 = vunpack.c.l.b16 %v10966
  %v11038 = vunpack.c.l.b16 %v10967
  %v11039 = vunpack.c.l.b16 %v10968
  %v11040 = vunpack.c.l.b16 %v10969
  %v11041 = vunpack.c.l.b16 %v10970
  %v11042 = vunpack.c.l.b16 %v10971
  %v11043 = vunpack.c.l.b16 %v10972
  %v11044 = vpack.c.b16 %v11013, %v11012
  %v11045 = vpack.c.b16 %v11015, %v11014
  %v11046 = vpack.c.b16 %v11017, %v11016
  %v11047 = vpack.c.b16 %v11019, %v11018
  %v11048 = vpack.c.b16 %v11021, %v11020
  %v11049 = vpack.c.b16 %v11023, %v11022
  %v11050 = vpack.c.b16 %v11025, %v11024
  %v11051 = vpack.c.b16 %v11027, %v11026
  %v11052 = vpack.c.b16 %v11029, %v11028
  %v11053 = vpack.c.b16 %v11031, %v11030
  %v11054 = vpack.c.b16 %v11033, %v11032
  %v11055 = vpack.c.b16 %v11035, %v11034
  %v11056 = vpack.c.b16 %v11037, %v11036
  %v11057 = vpack.c.b16 %v11039, %v11038
  %v11058 = vpack.c.b16 %v11041, %v11040
  %v11059 = vpack.c.b16 %v11043, %v11042
  %11076 = vmatprep.subr.bf16.mxu0 0
  %11077 = vmatpush1.bf16.msra.mxu0 %v11044
  %11078 = vmatprep.subr.bf16.mxu0 0
  %11079 = vmatpush1.bf16.msra.mxu0 %v11045
  %11080 = vmatprep.subr.bf16.mxu0 0
  %11081 = vmatpush1.bf16.msra.mxu0 %v11046
  %11082 = vmatprep.subr.bf16.mxu0 0
  %11083 = vmatpush1.bf16.msra.mxu0 %v11047
  %11084 = vmatprep.subr.bf16.mxu0 0
  %11085 = vmatpush1.bf16.msra.mxu0 %v11048
  %11086 = vmatprep.subr.bf16.mxu0 0
  %11087 = vmatpush1.bf16.msra.mxu0 %v11049
  %11088 = vmatprep.subr.bf16.mxu0 0
  %11089 = vmatpush1.bf16.msra.mxu0 %v11050
  %11090 = vmatprep.subr.bf16.mxu0 0
  %11091 = vmatpush1.bf16.msra.mxu0 %v11051
  %11092 = vmatprep.subr.bf16.mxu0 0
  %11093 = vmatpush1.bf16.msra.mxu0 %v11052
  %11094 = vmatprep.subr.bf16.mxu0 0
  %11095 = vmatpush1.bf16.msra.mxu0 %v11053
  %11096 = vmatprep.subr.bf16.mxu0 0
  %11097 = vmatpush1.bf16.msra.mxu0 %v11054
  %11098 = vmatprep.subr.bf16.mxu0 0
  %11099 = vmatpush1.bf16.msra.mxu0 %v11055
  %11100 = vmatprep.subr.bf16.mxu0 0
  %11101 = vmatpush1.bf16.msra.mxu0 %v11056
  %11102 = vmatprep.subr.bf16.mxu0 0
  %11103 = vmatpush1.bf16.msra.mxu0 %v11057
  %11104 = vmatprep.subr.bf16.mxu0 0
  %11105 = vmatpush1.bf16.msra.mxu0 %v11058
  %11106 = vmatprep.subr.bf16.mxu0 0
  %11107 = vmatpush1.bf16.msra.mxu0 %v11059
  %11108 = vmatprep.mubr.bf16.mxu0 %v10940
  %11109 = vmatmul.mubr.bf16.gmra.mrb[0].mxu0 %v10939
  %v11110 = vpop.f32.mrb[0].mxu0
  %v11111 = vadd.f32 %v10978, %v11110
  %v11112 = vpop.f32.mrb[0].mxu0
  %v11113 = vpop.f32.mrb[0].mxu0
  %v11114 = vadd.f32 %v10978, %v11113
  %v11115 = vpop.f32.mrb[0].mxu0
  %11116 = vdwg.mxu0
  %11117 = vst [vmem:[%s11] sm:$0xff] %v11111
  %11118 = vst [vmem:[%s11 + $0x8] sm:$0xff] %v11114
  // Predicated region
  $region46: #{forward.1} parent=0 // pred_check
    _
  $region47: #{forward.1} parent=0 // pred_check_branch
    %11120 = sbr.rel (0) target = $region49
  $region48: #{forward.1} parent=0 // pred_region
    _
  $region49: #{forward.1} parent=0 // pred_fallthru
    _
  // Predicated region
  $region50: #{forward.1} parent=0 // pred_check
    _
  $region51: #{forward.1} parent=0 // pred_check_branch
    %11122 = sbr.rel (0) target = $region53
  $region52: #{forward.1} parent=0 // pred_region
    _
  $region53: #{forward.1} parent=0 // pred_fallthru
    _

</llo_original>
